<compile_context>
chip_gen: v7x
topology: tpu7x:2x2x1
jax: 0.10.0
libtpu: 0.0.40
codegen_flags: <defaults>
</compile_context>

<pallas_src>
import jax
import jax.numpy as jnp
from jax import lax
from jax.experimental import pallas as pl
from jax.experimental.pallas import tpu as pltpu

# MLP dims from the PyTorch module: 10 -> 512 -> 256 -> 128 -> 1
D_IN, D_H1, D_H2, D_H3, D_OUT = 10, 512, 256, 128, 1


def mlp_kernel(x_ref,                 # (T, 10)   bf16  (row-major batch tile)
               w1_ref, b1_ref,        # (512, 10) bf16, (512, 1) f32
               w2_ref, b2_ref,        # (256, 512) bf16, (256, 1) f32
               w3_ref, b3_ref,        # (128, 256) bf16, (128, 1) f32
               w4_ref, b4_ref,        # (128, 1)  f32,  (1, 1)   f32
               o_ref):                # (1, T)    f32   lane-dense logits row
    x = x_ref[...]                                                          # (T, 10) bf16

    # Layer 1: contract the K=10 axis of both operands -> (512, T) feature-major.
    h1 = lax.dot_general(w1_ref[...], x, (((1,), (1,)), ((), ())),
                         preferred_element_type=jnp.float32)                # (512, T) f32
    h1 = jnp.maximum(h1 + b1_ref[...], 0.0).astype(jnp.bfloat16)

    h2 = jnp.dot(w2_ref[...], h1, preferred_element_type=jnp.float32)       # (256, T)
    h2 = jnp.maximum(h2 + b2_ref[...], 0.0).astype(jnp.bfloat16)

    h3 = jnp.dot(w3_ref[...], h2, preferred_element_type=jnp.float32)       # (128, T)
    h3 = jnp.maximum(h3 + b3_ref[...], 0.0)                                 # f32

    # Final 128 -> 1 layer on VPU/XLU: elementwise multiply + sublane reduce,
    # producing the lane-dense (1, T) logits row directly.
    logits = jnp.sum(h3 * w4_ref[...], axis=0, keepdims=True) + b4_ref[...]  # (1, T)
    o_ref[...] = logits.astype(o_ref.dtype)


def _prep_params(params):
    """Cast matmul weights to bf16, reshape biases to column vectors."""
    w1 = params["w1"].astype(jnp.bfloat16)        # (512, 10)
    w2 = params["w2"].astype(jnp.bfloat16)        # (256, 512)
    w3 = params["w3"].astype(jnp.bfloat16)        # (128, 256)
    w4c = params["w4"].T.astype(jnp.float32)      # (128, 1)  column, stays f32 (VPU path)
    b1 = params["b1"].reshape(D_H1, 1).astype(jnp.float32)
    b2 = params["b2"].reshape(D_H2, 1).astype(jnp.float32)
    b3 = params["b3"].reshape(D_H3, 1).astype(jnp.float32)
    b4 = params["b4"].reshape(D_OUT, 1).astype(jnp.float32)
    return w1, b1, w2, b2, w3, b3, w4c, b4


def _choose_batch_tile(batch, requested=None, max_tile=1024, min_tile=256):
    """Generation-aware batch tile.

    - Caps at 1024 by default (fits comfortably in v5e's 16 MiB scoped-VMEM
      default; v6e/v7x have even more headroom).
    - Shrinks the tile (down to 256) until the grid has >= 4 steps when the
      batch is big enough, so both v7x TensorCores get >= 2 steps each.
    """
    if requested is not None:
        return requested
    tile = max_tile
    while tile > min_tile and -(-batch // tile) < 4:
        tile //= 2
    return tile


def neural_network_forward(x, params, *, batch_tile=None):
    """Pallas TPU implementation of NeuralNetwork.forward.

    x:      (B, 10) float array
    params: PyTorch-oriented weights w_k (out, in) and biases b_k (out,)
    returns (B, 1) float32
    """
    B = x.shape[0]
    tile = _choose_batch_tile(B, batch_tile)
    n_tiles = pl.cdiv(B, tile)
    B_pad = n_tiles * tile

    # Row-major contiguous bf16 input slab; ragged batches get a cheap
    # contiguous trailing-row pad (padded rows are sliced off after the call).
    xb = x.astype(jnp.bfloat16)
    if B_pad != B:
        xb = jnp.pad(xb, ((0, B_pad - B), (0, 0)))

    w1, b1, w2, b2, w3, b3, w4c, b4 = _prep_params(params)

    def resident(arr):
        # Constant block index on the single batch grid axis -> fetched once,
        # never re-DMA'd per grid step.
        return pl.BlockSpec(arr.shape, lambda i: (0, 0))

    cp_kwargs = dict(dimension_semantics=("parallel",))   # batch tiles shard across TCs
    if tile > 1024:
        # Only needed if a caller explicitly requests very large tiles.
        cp_kwargs["vmem_limit_bytes"] = 64 * 1024 * 1024

    out_row = pl.pallas_call(
        mlp_kernel,
        out_shape=jax.ShapeDtypeStruct((1, B_pad), jnp.float32),
        grid=(n_tiles,),
        in_specs=[
            pl.BlockSpec((tile, D_IN), lambda i: (i, 0)),     # contiguous x tile (T, 10)
            resident(w1), resident(b1),
            resident(w2), resident(b2),
            resident(w3), resident(b3),
            resident(w4c), resident(b4),
        ],
        out_specs=pl.BlockSpec((1, tile), lambda i: (0, i)),  # lane-dense logits row
        compiler_params=pltpu.CompilerParams(**cp_kwargs),
    )(xb, w1, b1, w2, b2, w3, b3, w4c, b4)

    return out_row[0, :B].reshape(B, 1)


def init_params(key):
    """Deterministic init mimicking nn.Linear default, PyTorch orientation (out, in)."""
    dims = [(D_H1, D_IN), (D_H2, D_H1), (D_H3, D_H2), (D_OUT, D_H3)]
    params = {}
    for idx, (fan_out, fan_in) in enumerate(dims, start=1):
        key, kw, kb = jax.random.split(key, 3)
        bound = 1.0 / (fan_in ** 0.5)
        params[f"w{idx}"] = jax.random.uniform(
            kw, (fan_out, fan_in), jnp.float32, -bound, bound)
        params[f"b{idx}"] = jax.random.uniform(
            kb, (fan_out,), jnp.float32, -bound, bound)
    return params


def reference_forward(x, params):
    h = jnp.maximum(x @ params["w1"].T + params["b1"], 0.0)
    h = jnp.maximum(h @ params["w2"].T + params["b2"], 0.0)
    h = jnp.maximum(h @ params["w3"].T + params["b3"], 0.0)
    return h @ params["w4"].T + params["b4"]


if __name__ == "__main__":
    key = jax.random.PRNGKey(0)
    key, kx = jax.random.split(key)
    params = init_params(key)

    # Primary check: large enough batch that the auto tile chooser picks
    # T=1024 with a 4-step "parallel" grid (>= 2 steps per v7x TensorCore).
    B = 4096
    x = jax.random.normal(kx, (B, D_IN), dtype=jnp.float32)
    out = jax.block_until_ready(neural_network_forward(x, params))
    ref = reference_forward(x, params)
    assert out.shape == (B, D_OUT)
    # bf16 MXU operands (x, W1-W3) vs f32 reference -> relaxed tolerance.
    assert jnp.allclose(out, ref, atol=5e-2, rtol=5e-2), (
        f"mismatch vs reference: max abs diff {float(jnp.max(jnp.abs(out - ref)))}")

    # Ragged-batch check (exercises the pad-and-slice path and tile shrinking).
    B2 = 300
    x2 = jax.random.normal(jax.random.PRNGKey(1), (B2, D_IN), dtype=jnp.float32)
    out2 = jax.block_until_ready(neural_network_forward(x2, params))
    ref2 = reference_forward(x2, params)
    assert out2.shape == (B2, D_OUT)
    assert jnp.allclose(out2, ref2, atol=5e-2, rtol=5e-2), "ragged-batch mismatch"

    # Tiny-batch sanity check (single padded tile).
    B3 = 8
    x3 = jax.random.normal(jax.random.PRNGKey(2), (B3, D_IN), dtype=jnp.float32)
    out3 = jax.block_until_ready(neural_network_forward(x3, params))
    ref3 = reference_forward(x3, params)
    assert out3.shape == (B3, D_OUT)
    assert jnp.allclose(out3, ref3, atol=5e-2, rtol=5e-2), "tiny-batch mismatch"

    print("KERNEL_OK")
</pallas_src>

<mosaic_0001>
module attributes {stable_mosaic.version = 11 : i64} {
  func.func @mlp_kernel(%arg0: i32, %arg1: memref<1024x10xbf16, #tpu.memory_space<vmem>>, %arg2: memref<512x10xbf16, #tpu.memory_space<vmem>>, %arg3: memref<512x1xf32, #tpu.memory_space<vmem>>, %arg4: memref<256x512xbf16, #tpu.memory_space<vmem>>, %arg5: memref<256x1xf32, #tpu.memory_space<vmem>>, %arg6: memref<128x256xbf16, #tpu.memory_space<vmem>>, %arg7: memref<128x1xf32, #tpu.memory_space<vmem>>, %arg8: memref<128x1xf32, #tpu.memory_space<vmem>>, %arg9: memref<1x1xf32, #tpu.memory_space<vmem>>, %arg10: memref<1x1024xf32, #tpu.memory_space<vmem>>) attributes {dimension_semantics = [#tpu.dimension_semantics<parallel>], iteration_bounds = array<i64: 4>, scalar_prefetch = 0 : i64, scratch_operands = 0 : i64, tpu.core_type = #tpu.core_type<tc>, window_params = [{transform_indices = @transform_0, window_bounds = array<i64: 1024, 10>}, {pipeline_mode = #tpu.pipeline_mode<synchronous>, transform_indices = @transform_1, window_bounds = array<i64: 512, 10>}, {pipeline_mode = #tpu.pipeline_mode<synchronous>, transform_indices = @transform_2, window_bounds = array<i64: 512, 1>}, {pipeline_mode = #tpu.pipeline_mode<synchronous>, transform_indices = @transform_3, window_bounds = array<i64: 256, 512>}, {pipeline_mode = #tpu.pipeline_mode<synchronous>, transform_indices = @transform_4, window_bounds = array<i64: 256, 1>}, {pipeline_mode = #tpu.pipeline_mode<synchronous>, transform_indices = @transform_5, window_bounds = array<i64: 128, 256>}, {pipeline_mode = #tpu.pipeline_mode<synchronous>, transform_indices = @transform_6, window_bounds = array<i64: 128, 1>}, {pipeline_mode = #tpu.pipeline_mode<synchronous>, transform_indices = @transform_7, window_bounds = array<i64: 128, 1>}, {pipeline_mode = #tpu.pipeline_mode<synchronous>, transform_indices = @transform_8, window_bounds = array<i64: 1, 1>}, {transform_indices = @transform_9, window_bounds = array<i64: 1, 1024>}]} {
    %c0 = arith.constant 0 : index
    %c0_0 = arith.constant 0 : index
    %0 = vector.load %arg1[%c0, %c0_0] : memref<1024x10xbf16, #tpu.memory_space<vmem>>, vector<1024x10xbf16>
    %c0_1 = arith.constant 0 : index
    %c0_2 = arith.constant 0 : index
    %1 = vector.load %arg2[%c0_1, %c0_2] : memref<512x10xbf16, #tpu.memory_space<vmem>>, vector<512x10xbf16>
    %cst = arith.constant dense<0.000000e+00> : vector<512x1024xf32>
    %2 = tpu.matmul %1, %0, %cst {dimension_numbers = #tpu.dot_dimension_numbers<[1], [1], [0], [0], [0, 0, 1, 0], [], []>} : vector<512x10xbf16>, vector<1024x10xbf16>, vector<512x1024xf32> -> vector<512x1024xf32>
    %c0_3 = arith.constant 0 : index
    %c0_4 = arith.constant 0 : index
    %3 = vector.load %arg3[%c0_3, %c0_4] : memref<512x1xf32, #tpu.memory_space<vmem>>, vector<512x1xf32>
    %4 = vector.broadcast %3 : vector<512x1xf32> to vector<512x1024xf32>
    %5 = arith.addf %2, %4 : vector<512x1024xf32>
    %cst_5 = arith.constant 0.000000e+00 : f32
    %6 = vector.broadcast %cst_5 : f32 to vector<512x1024xf32>
    %7 = arith.maximumf %5, %6 : vector<512x1024xf32>
    %8 = arith.truncf %7 : vector<512x1024xf32> to vector<512x1024xbf16>
    %c0_6 = arith.constant 0 : index
    %c0_7 = arith.constant 0 : index
    %9 = vector.load %arg4[%c0_6, %c0_7] : memref<256x512xbf16, #tpu.memory_space<vmem>>, vector<256x512xbf16>
    %cst_8 = arith.constant dense<0.000000e+00> : vector<256x1024xf32>
    %10 = tpu.matmul %9, %8, %cst_8 {dimension_numbers = #tpu.dot_dimension_numbers<[1], [0], [0], [1], [0, 0, 1, 1], [], []>} : vector<256x512xbf16>, vector<512x1024xbf16>, vector<256x1024xf32> -> vector<256x1024xf32>
    %c0_9 = arith.constant 0 : index
    %c0_10 = arith.constant 0 : index
    %11 = vector.load %arg5[%c0_9, %c0_10] : memref<256x1xf32, #tpu.memory_space<vmem>>, vector<256x1xf32>
    %12 = vector.broadcast %11 : vector<256x1xf32> to vector<256x1024xf32>
    %13 = arith.addf %10, %12 : vector<256x1024xf32>
    %cst_11 = arith.constant 0.000000e+00 : f32
    %14 = vector.broadcast %cst_11 : f32 to vector<256x1024xf32>
    %15 = arith.maximumf %13, %14 : vector<256x1024xf32>
    %16 = arith.truncf %15 : vector<256x1024xf32> to vector<256x1024xbf16>
    %c0_12 = arith.constant 0 : index
    %c0_13 = arith.constant 0 : index
    %17 = vector.load %arg6[%c0_12, %c0_13] : memref<128x256xbf16, #tpu.memory_space<vmem>>, vector<128x256xbf16>
    %cst_14 = arith.constant dense<0.000000e+00> : vector<128x1024xf32>
    %18 = tpu.matmul %17, %16, %cst_14 {dimension_numbers = #tpu.dot_dimension_numbers<[1], [0], [0], [1], [0, 0, 1, 1], [], []>} : vector<128x256xbf16>, vector<256x1024xbf16>, vector<128x1024xf32> -> vector<128x1024xf32>
    %c0_15 = arith.constant 0 : index
    %c0_16 = arith.constant 0 : index
    %19 = vector.load %arg7[%c0_15, %c0_16] : memref<128x1xf32, #tpu.memory_space<vmem>>, vector<128x1xf32>
    %20 = vector.broadcast %19 : vector<128x1xf32> to vector<128x1024xf32>
    %21 = arith.addf %18, %20 : vector<128x1024xf32>
    %cst_17 = arith.constant 0.000000e+00 : f32
    %22 = vector.broadcast %cst_17 : f32 to vector<128x1024xf32>
    %23 = arith.maximumf %21, %22 : vector<128x1024xf32>
    %c0_18 = arith.constant 0 : index
    %c0_19 = arith.constant 0 : index
    %24 = vector.load %arg8[%c0_18, %c0_19] : memref<128x1xf32, #tpu.memory_space<vmem>>, vector<128x1xf32>
    %25 = vector.broadcast %24 : vector<128x1xf32> to vector<128x1024xf32>
    %26 = arith.mulf %23, %25 : vector<128x1024xf32>
    %cst_20 = arith.constant dense<0.000000e+00> : vector<1024xf32>
    %27 = vector.multi_reduction <add>, %26, %cst_20 [0] : vector<128x1024xf32> to vector<1024xf32>
    %28 = vector.shape_cast %27 : vector<1024xf32> to vector<1x1024xf32>
    %c0_21 = arith.constant 0 : index
    %c0_22 = arith.constant 0 : index
    %29 = vector.load %arg9[%c0_21, %c0_22] : memref<1x1xf32, #tpu.memory_space<vmem>>, vector<1x1xf32>
    %30 = vector.broadcast %29 : vector<1x1xf32> to vector<1x1024xf32>
    %31 = arith.addf %28, %30 : vector<1x1024xf32>
    %c0_23 = arith.constant 0 : index
    %c0_24 = arith.constant 0 : index
    %32 = vector.load %arg10[%c0_23, %c0_24] : memref<1x1024xf32, #tpu.memory_space<vmem>>, vector<1x1024xf32>
    tpu.vector_store %arg10[%c0_23, %c0_24], %31 {strides = array<i32>} : memref<1x1024xf32, #tpu.memory_space<vmem>>, vector<1x1024xf32>,
    return
  }
  func.func @transform_0(%arg0: i32) -> (i32, i32) {
    %c0_i32 = arith.constant 0 : i32
    %c0_i32_0 = arith.constant 0 : i32
    return %arg0, %c0_i32 : i32, i32
  }
  func.func @transform_1(%arg0: i32) -> (i32, i32) {
    %c0_i32 = arith.constant 0 : i32
    %c0_i32_0 = arith.constant 0 : i32
    %c0_i32_1 = arith.constant 0 : i32
    return %c0_i32, %c0_i32_0 : i32, i32
  }
  func.func @transform_2(%arg0: i32) -> (i32, i32) {
    %c0_i32 = arith.constant 0 : i32
    %c0_i32_0 = arith.constant 0 : i32
    %c0_i32_1 = arith.constant 0 : i32
    return %c0_i32, %c0_i32_0 : i32, i32
  }
  func.func @transform_3(%arg0: i32) -> (i32, i32) {
    %c0_i32 = arith.constant 0 : i32
    %c0_i32_0 = arith.constant 0 : i32
    %c0_i32_1 = arith.constant 0 : i32
    return %c0_i32, %c0_i32_0 : i32, i32
  }
  func.func @transform_4(%arg0: i32) -> (i32, i32) {
    %c0_i32 = arith.constant 0 : i32
    %c0_i32_0 = arith.constant 0 : i32
    %c0_i32_1 = arith.constant 0 : i32
    return %c0_i32, %c0_i32_0 : i32, i32
  }
  func.func @transform_5(%arg0: i32) -> (i32, i32) {
    %c0_i32 = arith.constant 0 : i32
    %c0_i32_0 = arith.constant 0 : i32
    %c0_i32_1 = arith.constant 0 : i32
    return %c0_i32, %c0_i32_0 : i32, i32
  }
  func.func @transform_6(%arg0: i32) -> (i32, i32) {
    %c0_i32 = arith.constant 0 : i32
    %c0_i32_0 = arith.constant 0 : i32
    %c0_i32_1 = arith.constant 0 : i32
    return %c0_i32, %c0_i32_0 : i32, i32
  }
  func.func @transform_7(%arg0: i32) -> (i32, i32) {
    %c0_i32 = arith.constant 0 : i32
    %c0_i32_0 = arith.constant 0 : i32
    %c0_i32_1 = arith.constant 0 : i32
    return %c0_i32, %c0_i32_0 : i32, i32
  }
  func.func @transform_8(%arg0: i32) -> (i32, i32) {
    %c0_i32 = arith.constant 0 : i32
    %c0_i32_0 = arith.constant 0 : i32
    %c0_i32_1 = arith.constant 0 : i32
    return %c0_i32, %c0_i32_0 : i32, i32
  }
  func.func @transform_9(%arg0: i32) -> (i32, i32) {
    %c0_i32 = arith.constant 0 : i32
    %c0_i32_0 = arith.constant 0 : i32
    return %c0_i32, %arg0 : i32, i32
  }
}

</mosaic_0001>

<llo_original>
// kernel: tpu_custom_call.1
$region0: #{tpu_custom_call.1}
  #allocation0 [shape = 'u32[]', space=smem, size = 0x4, offset = 0x4, fixed_abs, tag = 'smem constant byte address 0x4 - core index']
  #allocation1 [shape = 'u32[144,128]{1,0:T(1,128)}', space=vmem, size = 0x12000, scoped, tag = 'internal scratch']
  #allocation2 [shape = 'f32[1,1]{1,0:T(1,128)S(1)}', space=vmem, size = 0x200, scoped, tag = 'scoped memory for tpu_custom_call.1']
  %s0 = inlined_call_operand.vmem [shape: bf16[4096,10], index: 0, kind: input, shape index: {}]
  %s1 = inlined_call_operand.vmem [shape: bf16[512,10], index: 1, kind: input, shape index: {}]
  %s2 = inlined_call_operand.vmem [shape: f32[512,1], index: 2, kind: input, shape index: {}]
  %s3 = inlined_call_operand.vmem [shape: bf16[256,512], index: 3, kind: input, shape index: {}]
  %s4 = inlined_call_operand.vmem [shape: f32[256,1], index: 4, kind: input, shape index: {}]
  %s5 = inlined_call_operand.vmem [shape: bf16[128,256], index: 5, kind: input, shape index: {}]
  %s6 = inlined_call_operand.vmem [shape: f32[128,1], index: 6, kind: input, shape index: {}]
  %s7 = inlined_call_operand.vmem [shape: f32[128,1], index: 7, kind: input, shape index: {}]
  %s8 = inlined_call_operand.<no memory space> [shape: f32[1,1], index: 8, kind: input, shape index: {}]
  %s9 = inlined_call_operand.hbm [shape: f32[1,4096], index: 9, kind: output, shape index: {}]
  %s10 = sld [smem:[#allocation0]]
  $region69: #{tpu_custom_call.1} parent=0
    _
  %s12 = ssub.s32 1, %s10
  %s13 = scalar_select 0, %s12, %s10
  %v14 = vstv %s8
  %15 = vst [vmem:[#allocation2] sm:$0x1] %v14
  $region1: #{tpu_custom_call.1} parent=0
    #allocation3 [shape = 'u8[8192]{0}', space=vmem, size = 0x2000, scoped, tag = 'output window, operand 0']
    #allocation4 [shape = 's32[2]{0}', space=sflag, size = 0x8, scoped, tag = 'scoped memory for tpu_custom_call.1']
    %16 = vsyncpa [#allocation4], 0
    %s17 = scalar_lea.sflag [#allocation4], 1
    %18 = vsyncpa %s17, 0
    loop: start=0, step=1, limit=6
    $region2: #{tpu_custom_call.1} parent=1 // loop_pre_header
      _
    $region3: #{tpu_custom_call.1} parent=1 // loop_header
      %s20 = sphi 0, %s24
      %p21 = scmp.ge.s32.totalorder %s20, 6
      %s30 = sphi 0, %s32
      %s33 = sphi 0, %s30
      %s34 = sphi 0, %s33
      %s50 = sphi 0, %s34
      %s54 = sphi 0, %s54
      %s56 = sphi 0, %s54
      %s57 = sphi 0, %s56
      %s71 = sphi 0, %s57
      %s75 = sphi 0, %s75
      %s77 = sphi 0, %s75
      %s78 = sphi 0, %s77
      %s92 = sphi 0, %s78
      %s96 = sphi 0, %s96
      %s98 = sphi 0, %s96
      %s99 = sphi 0, %s98
      %s113 = sphi 0, %s99
      %s117 = sphi 0, %s117
      %s119 = sphi 0, %s117
      %s120 = sphi 0, %s119
      %s134 = sphi 0, %s120
      %s138 = sphi 0, %s138
      %s140 = sphi 0, %s138
      %s141 = sphi 0, %s140
      %s155 = sphi 0, %s141
      %s159 = sphi 0, %s159
      %s161 = sphi 0, %s159
      %s162 = sphi 0, %s161
      %s176 = sphi 0, %s162
      %s180 = sphi 0, %s180
      %s182 = sphi 0, %s180
      %s183 = sphi 0, %s182
      %s197 = sphi 0, %s183
      %s201 = sphi 0, %s201
      %s203 = sphi 0, %s201
      %s204 = sphi 0, %s203
      %s218 = sphi 0, %s204
      %s224 = sphi 0, %s226
      %s227 = sphi 0, %s224
      %s228 = sphi 0, %s227
      %s244 = sphi 0, %s228
    $region4: #{tpu_custom_call.1} parent=1 // loop_header_branch
      %23 = sbr.rel (%p21) target = $region8
    $region5: #{tpu_custom_call.1} parent=1 // loop_body
      %s25 = ssub.s32 %s20, 1
      %s26 = ssub.s32 %s20, 2
      %s27 = sadd.s32 %s20, 1
      %s28 = ssub.s32 %s20, %s27
      %p29 = scmp.eq.s32.totalorder %s28, 0
      %s31 = sadd.s32 %s30, 1
      %s32 = scalar_select %p29, %s30, %s31
      %p35 = pneg %p29
      %p36 = scmp.eq.s32.totalorder %s20, 3
      %p37 = por %p35, %p36
      %p38 = scmp.ne.s32.totalorder %s30, %s33
      %p39 = scmp.eq.s32.totalorder %s20, 0
      %p40 = por %p38, %p39
      %p41 = scmp.ne.s32.totalorder %s30, %s33
      %p42 = scmp.eq.s32.totalorder %s25, 3
      %p43 = por %p41, %p42
      %p44 = scmp.ne.s32.totalorder %s33, %s34
      %p45 = scmp.eq.s32.totalorder %s25, 0
      %p46 = por %p44, %p45
      %p47 = scmp.ne.s32.totalorder %s33, %s34
      %p48 = scmp.eq.s32.totalorder %s26, 3
      %p49 = por %p47, %p48
      %p51 = scmp.ne.s32.totalorder %s34, %s50
      %p52 = scmp.eq.s32.totalorder %s26, 0
      %p53 = por %p51, %p52
      %s55 = sadd.s32 %s54, 1
      %p58 = scmp.eq.s32.totalorder %s20, 3
      %p59 = scmp.ne.s32.totalorder %s54, %s56
      %p60 = scmp.eq.s32.totalorder %s20, 0
      %p61 = por %p59, %p60
      %p62 = scmp.ne.s32.totalorder %s54, %s56
      %p63 = scmp.eq.s32.totalorder %s25, 3
      %p64 = por %p62, %p63
      %p65 = scmp.ne.s32.totalorder %s56, %s57
      %p66 = scmp.eq.s32.totalorder %s25, 0
      %p67 = por %p65, %p66
      %p68 = scmp.ne.s32.totalorder %s56, %s57
      %p69 = scmp.eq.s32.totalorder %s26, 3
      %p70 = por %p68, %p69
      %p72 = scmp.ne.s32.totalorder %s57, %s71
      %p73 = scmp.eq.s32.totalorder %s26, 0
      %p74 = por %p72, %p73
      %s76 = sadd.s32 %s75, 1
      %p79 = scmp.eq.s32.totalorder %s20, 3
      %p80 = scmp.ne.s32.totalorder %s75, %s77
      %p81 = scmp.eq.s32.totalorder %s20, 0
      %p82 = por %p80, %p81
      %p83 = scmp.ne.s32.totalorder %s75, %s77
      %p84 = scmp.eq.s32.totalorder %s25, 3
      %p85 = por %p83, %p84
      %p86 = scmp.ne.s32.totalorder %s77, %s78
      %p87 = scmp.eq.s32.totalorder %s25, 0
      %p88 = por %p86, %p87
      %p89 = scmp.ne.s32.totalorder %s77, %s78
      %p90 = scmp.eq.s32.totalorder %s26, 3
      %p91 = por %p89, %p90
      %p93 = scmp.ne.s32.totalorder %s78, %s92
      %p94 = scmp.eq.s32.totalorder %s26, 0
      %p95 = por %p93, %p94
      %s97 = sadd.s32 %s96, 1
      %p100 = scmp.eq.s32.totalorder %s20, 3
      %p101 = scmp.ne.s32.totalorder %s96, %s98
      %p102 = scmp.eq.s32.totalorder %s20, 0
      %p103 = por %p101, %p102
      %p104 = scmp.ne.s32.totalorder %s96, %s98
      %p105 = scmp.eq.s32.totalorder %s25, 3
      %p106 = por %p104, %p105
      %p107 = scmp.ne.s32.totalorder %s98, %s99
      %p108 = scmp.eq.s32.totalorder %s25, 0
      %p109 = por %p107, %p108
      %p110 = scmp.ne.s32.totalorder %s98, %s99
      %p111 = scmp.eq.s32.totalorder %s26, 3
      %p112 = por %p110, %p111
      %p114 = scmp.ne.s32.totalorder %s99, %s113
      %p115 = scmp.eq.s32.totalorder %s26, 0
      %p116 = por %p114, %p115
      %s118 = sadd.s32 %s117, 1
      %p121 = scmp.eq.s32.totalorder %s20, 3
      %p122 = scmp.ne.s32.totalorder %s117, %s119
      %p123 = scmp.eq.s32.totalorder %s20, 0
      %p124 = por %p122, %p123
      %p125 = scmp.ne.s32.totalorder %s117, %s119
      %p126 = scmp.eq.s32.totalorder %s25, 3
      %p127 = por %p125, %p126
      %p128 = scmp.ne.s32.totalorder %s119, %s120
      %p129 = scmp.eq.s32.totalorder %s25, 0
      %p130 = por %p128, %p129
      %p131 = scmp.ne.s32.totalorder %s119, %s120
      %p132 = scmp.eq.s32.totalorder %s26, 3
      %p133 = por %p131, %p132
      %p135 = scmp.ne.s32.totalorder %s120, %s134
      %p136 = scmp.eq.s32.totalorder %s26, 0
      %p137 = por %p135, %p136
      %s139 = sadd.s32 %s138, 1
      %p142 = scmp.eq.s32.totalorder %s20, 3
      %p143 = scmp.ne.s32.totalorder %s138, %s140
      %p144 = scmp.eq.s32.totalorder %s20, 0
      %p145 = por %p143, %p144
      %p146 = scmp.ne.s32.totalorder %s138, %s140
      %p147 = scmp.eq.s32.totalorder %s25, 3
      %p148 = por %p146, %p147
      %p149 = scmp.ne.s32.totalorder %s140, %s141
      %p150 = scmp.eq.s32.totalorder %s25, 0
      %p151 = por %p149, %p150
      %p152 = scmp.ne.s32.totalorder %s140, %s141
      %p153 = scmp.eq.s32.totalorder %s26, 3
      %p154 = por %p152, %p153
      %p156 = scmp.ne.s32.totalorder %s141, %s155
      %p157 = scmp.eq.s32.totalorder %s26, 0
      %p158 = por %p156, %p157
      %s160 = sadd.s32 %s159, 1
      %p163 = scmp.eq.s32.totalorder %s20, 3
      %p164 = scmp.ne.s32.totalorder %s159, %s161
      %p165 = scmp.eq.s32.totalorder %s20, 0
      %p166 = por %p164, %p165
      %p167 = scmp.ne.s32.totalorder %s159, %s161
      %p168 = scmp.eq.s32.totalorder %s25, 3
      %p169 = por %p167, %p168
      %p170 = scmp.ne.s32.totalorder %s161, %s162
      %p171 = scmp.eq.s32.totalorder %s25, 0
      %p172 = por %p170, %p171
      %p173 = scmp.ne.s32.totalorder %s161, %s162
      %p174 = scmp.eq.s32.totalorder %s26, 3
      %p175 = por %p173, %p174
      %p177 = scmp.ne.s32.totalorder %s162, %s176
      %p178 = scmp.eq.s32.totalorder %s26, 0
      %p179 = por %p177, %p178
      %s181 = sadd.s32 %s180, 1
      %p184 = scmp.eq.s32.totalorder %s20, 3
      %p185 = scmp.ne.s32.totalorder %s180, %s182
      %p186 = scmp.eq.s32.totalorder %s20, 0
      %p187 = por %p185, %p186
      %p188 = scmp.ne.s32.totalorder %s180, %s182
      %p189 = scmp.eq.s32.totalorder %s25, 3
      %p190 = por %p188, %p189
      %p191 = scmp.ne.s32.totalorder %s182, %s183
      %p192 = scmp.eq.s32.totalorder %s25, 0
      %p193 = por %p191, %p192
      %p194 = scmp.ne.s32.totalorder %s182, %s183
      %p195 = scmp.eq.s32.totalorder %s26, 3
      %p196 = por %p194, %p195
      %p198 = scmp.ne.s32.totalorder %s183, %s197
      %p199 = scmp.eq.s32.totalorder %s26, 0
      %p200 = por %p198, %p199
      %s202 = sadd.s32 %s201, 1
      %p205 = scmp.eq.s32.totalorder %s20, 3
      %p206 = scmp.ne.s32.totalorder %s201, %s203
      %p207 = scmp.eq.s32.totalorder %s20, 0
      %p208 = por %p206, %p207
      %p209 = scmp.ne.s32.totalorder %s201, %s203
      %p210 = scmp.eq.s32.totalorder %s25, 3
      %p211 = por %p209, %p210
      %p212 = scmp.ne.s32.totalorder %s203, %s204
      %p213 = scmp.eq.s32.totalorder %s25, 0
      %p214 = por %p212, %p213
      %p215 = scmp.ne.s32.totalorder %s203, %s204
      %p216 = scmp.eq.s32.totalorder %s26, 3
      %p217 = por %p215, %p216
      %p219 = scmp.ne.s32.totalorder %s204, %s218
      %p220 = scmp.eq.s32.totalorder %s26, 0
      %p221 = por %p219, %p220
      %s222 = ssub.s32 %s20, %s27
      %p223 = scmp.eq.s32.totalorder %s222, 0
      %s225 = sadd.s32 %s224, 1
      %s226 = scalar_select %p223, %s224, %s225
      %p229 = pneg %p223
      %p230 = scmp.eq.s32.totalorder %s20, 3
      %p231 = por %p229, %p230
      %p232 = scmp.ne.s32.totalorder %s224, %s227
      %p233 = scmp.eq.s32.totalorder %s20, 0
      %p234 = por %p232, %p233
      %p235 = scmp.ne.s32.totalorder %s224, %s227
      %p236 = scmp.eq.s32.totalorder %s25, 3
      %p237 = por %p235, %p236
      %p238 = scmp.ne.s32.totalorder %s227, %s228
      %p239 = scmp.eq.s32.totalorder %s25, 0
      %p240 = por %p238, %p239
      %p241 = scmp.ne.s32.totalorder %s227, %s228
      %p242 = scmp.eq.s32.totalorder %s26, 3
      %p243 = por %p241, %p242
      %p245 = scmp.ne.s32.totalorder %s228, %s244
      %p246 = scmp.eq.s32.totalorder %s26, 0
      %p247 = por %p245, %p246
      %p248 = scmp.le.s32.totalorder 1, %s20
      %p249 = scmp.lt.s32.totalorder %s20, 5
      %p250 = pnand %p248, %p249
      %p251 = pneg %p250
      // Predicated region
      $region9: #{tpu_custom_call.1} parent=5 // pred_check
        _
      $region10: #{tpu_custom_call.1} parent=5 // pred_check_branch
        %253 = sbr.rel (%p250) target = $region12
      $region11: #{tpu_custom_call.1} parent=5 // pred_region
        %s254 = ssub.s32 %s20, 1
        // Predicated region
        $region13: #{tpu_custom_call.1} parent=11 // pred_check
          %p255 = pneg %p67
        $region14: #{tpu_custom_call.1} parent=11 // pred_check_branch
          %257 = sbr.rel (%p255) target = $region16
        $region15: #{tpu_custom_call.1} parent=11 // pred_region
          _
        $region16: #{tpu_custom_call.1} parent=11 // pred_fallthru
          _
        // Predicated region
        $region17: #{tpu_custom_call.1} parent=11 // pred_check
          %p258 = pneg %p88
        $region18: #{tpu_custom_call.1} parent=11 // pred_check_branch
          %260 = sbr.rel (%p258) target = $region20
        $region19: #{tpu_custom_call.1} parent=11 // pred_region
          _
        $region20: #{tpu_custom_call.1} parent=11 // pred_fallthru
          _
        // Predicated region
        $region21: #{tpu_custom_call.1} parent=11 // pred_check
          %p261 = pneg %p109
        $region22: #{tpu_custom_call.1} parent=11 // pred_check_branch
          %263 = sbr.rel (%p261) target = $region24
        $region23: #{tpu_custom_call.1} parent=11 // pred_region
          _
        $region24: #{tpu_custom_call.1} parent=11 // pred_fallthru
          _
        // Predicated region
        $region25: #{tpu_custom_call.1} parent=11 // pred_check
          %p264 = pneg %p130
        $region26: #{tpu_custom_call.1} parent=11 // pred_check_branch
          %266 = sbr.rel (%p264) target = $region28
        $region27: #{tpu_custom_call.1} parent=11 // pred_region
          _
        $region28: #{tpu_custom_call.1} parent=11 // pred_fallthru
          _
        // Predicated region
        $region29: #{tpu_custom_call.1} parent=11 // pred_check
          %p267 = pneg %p151
        $region30: #{tpu_custom_call.1} parent=11 // pred_check_branch
          %269 = sbr.rel (%p267) target = $region32
        $region31: #{tpu_custom_call.1} parent=11 // pred_region
          _
        $region32: #{tpu_custom_call.1} parent=11 // pred_fallthru
          _
        // Predicated region
        $region33: #{tpu_custom_call.1} parent=11 // pred_check
          %p270 = pneg %p172
        $region34: #{tpu_custom_call.1} parent=11 // pred_check_branch
          %272 = sbr.rel (%p270) target = $region36
        $region35: #{tpu_custom_call.1} parent=11 // pred_region
          _
        $region36: #{tpu_custom_call.1} parent=11 // pred_fallthru
          _
        // Predicated region
        $region37: #{tpu_custom_call.1} parent=11 // pred_check
          %p273 = pneg %p193
        $region38: #{tpu_custom_call.1} parent=11 // pred_check_branch
          %275 = sbr.rel (%p273) target = $region40
        $region39: #{tpu_custom_call.1} parent=11 // pred_region
          _
        $region40: #{tpu_custom_call.1} parent=11 // pred_fallthru
          _
        // Predicated region
        $region41: #{tpu_custom_call.1} parent=11 // pred_check
          %p276 = pneg %p214
        $region42: #{tpu_custom_call.1} parent=11 // pred_check_branch
          %278 = sbr.rel (%p276) target = $region44
        $region43: #{tpu_custom_call.1} parent=11 // pred_region
          _
        $region44: #{tpu_custom_call.1} parent=11 // pred_fallthru
          _
      $region12: #{tpu_custom_call.1} parent=5 // pred_fallthru
        _
      %p279 = scmp.lt.s32.totalorder %s20, 4
      // Predicated region
      $region45: #{tpu_custom_call.1} parent=5 // pred_check
        %p280 = pneg %p279
      $region46: #{tpu_custom_call.1} parent=5 // pred_check_branch
        %282 = sbr.rel (%p280) target = $region48
      $region47: #{tpu_custom_call.1} parent=5 // pred_region
        // Predicated region
        $region49: #{tpu_custom_call.1} parent=47 // pred_check
          %p283 = pneg %p40
        $region50: #{tpu_custom_call.1} parent=47 // pred_check_branch
          %285 = sbr.rel (%p283) target = $region52
        $region51: #{tpu_custom_call.1} parent=47 // pred_region
          %s286 = smul.u32 128, %s20
          %p287 = scmp.lt.s32.totalorder %s286, 511
          %s288 = scalar_select %p287, %s286, 511
          %s289 = smul.addr %s288, 4
          %s290 = scalar_lea.vmem %s0, %s289
          %s291 = smul.u32 128, %s20
        $region52: #{tpu_custom_call.1} parent=47 // pred_fallthru
          _
      $region48: #{tpu_custom_call.1} parent=5 // pred_fallthru
        _
      %p292 = scmp.le.s32.totalorder 1, %s20
      %p293 = scmp.lt.s32.totalorder %s20, 5
      %p294 = pnand %p292, %p293
      %p295 = pneg %p294
      // Predicated region
      $region53: #{tpu_custom_call.1} parent=5 // pred_check
        _
      $region54: #{tpu_custom_call.1} parent=5 // pred_check_branch
        %297 = sbr.rel (%p294) target = $region56
      $region55: #{tpu_custom_call.1} parent=5 // pred_region
        %s298 = ssub.s32 %s20, 1
        %s299 = smul.u32 128, %s25
        %p300 = scmp.lt.s32.totalorder %s299, 511
        %s301 = scalar_select %p300, %s299, 511
        %s302 = smul.addr %s301, 4
        %s303 = scalar_lea.vmem %s0, %s302
        %p304 = pneg %p46
        %p305 = pneg %p43
        %p306 = pneg %p67
        %p307 = pneg %p64
        %p308 = pneg %p88
        %p309 = pneg %p85
        %p310 = pneg %p109
        %p311 = pneg %p106
        %p312 = pneg %p130
        %p313 = pneg %p127
        %p314 = pneg %p151
        %p315 = pneg %p148
        %p316 = pneg %p172
        %p317 = pneg %p169
        %p318 = pneg %p193
        %p319 = pneg %p190
        %p320 = pneg %p214
        %p321 = pneg %p211
        %p322 = pneg %p240
        %p323 = pneg %p237
        %s324 = sand.u32 %s227, 1
        %s325 = scalar_lea.sflag [#allocation4], %s324
        %s326 = sand.u32 %s227, 1
        %s327 = smul.addr %s326, 8
        %s328 = scalar_lea.vmem [#allocation3], %s327
        %s329 = smul.u32 128, %s25
        %p330 = scmp.lt.s32.totalorder %s329, 511
        %s331 = scalar_select %p330, %s329, 511
        %s332 = smul.addr %s331, 4
        %s333 = scalar_lea.vmem %s0, %s332
        %s334 = smul.u32 128, %s25
        %s335 = smul.u32 8, %s25
        %v337 = vld [vmem:[%s333] sm:$0xf]
        %v338 = vld [vmem:[%s333 + $0x4] sm:$0xf]
        %v339 = vld [vmem:[%s333 + $0x8] sm:$0xf]
        %v340 = vld [vmem:[%s333 + $0xc] sm:$0xf]
        %v341 = vld [vmem:[%s333 + $0x10] sm:$0xf]
        %v342 = vld [vmem:[%s333 + $0x14] sm:$0xf]
        %v343 = vld [vmem:[%s333 + $0x18] sm:$0xf]
        %v344 = vld [vmem:[%s333 + $0x1c] sm:$0xf]
        %v345 = vld [vmem:[%s333 + $0x20] sm:$0xf]
        %v346 = vld [vmem:[%s333 + $0x24] sm:$0xf]
        %v347 = vld [vmem:[%s333 + $0x28] sm:$0xf]
        %v348 = vld [vmem:[%s333 + $0x2c] sm:$0xf]
        %v349 = vld [vmem:[%s333 + $0x30] sm:$0xf]
        %v350 = vld [vmem:[%s333 + $0x34] sm:$0xf]
        %v351 = vld [vmem:[%s333 + $0x38] sm:$0xf]
        %v352 = vld [vmem:[%s333 + $0x3c] sm:$0xf]
        %v353 = vld [vmem:[%s333 + $0x40] sm:$0xf]
        %v354 = vld [vmem:[%s333 + $0x44] sm:$0xf]
        %v355 = vld [vmem:[%s333 + $0x48] sm:$0xf]
        %v356 = vld [vmem:[%s333 + $0x4c] sm:$0xf]
        %v357 = vld [vmem:[%s333 + $0x50] sm:$0xf]
        %v358 = vld [vmem:[%s333 + $0x54] sm:$0xf]
        %v359 = vld [vmem:[%s333 + $0x58] sm:$0xf]
        %v360 = vld [vmem:[%s333 + $0x5c] sm:$0xf]
        %v361 = vld [vmem:[%s333 + $0x60] sm:$0xf]
        %v362 = vld [vmem:[%s333 + $0x64] sm:$0xf]
        %v363 = vld [vmem:[%s333 + $0x68] sm:$0xf]
        %v364 = vld [vmem:[%s333 + $0x6c] sm:$0xf]
        %v365 = vld [vmem:[%s333 + $0x70] sm:$0xf]
        %v366 = vld [vmem:[%s333 + $0x74] sm:$0xf]
        %v367 = vld [vmem:[%s333 + $0x78] sm:$0xf]
        %v368 = vld [vmem:[%s333 + $0x7c] sm:$0xf]
        %v369 = vld [vmem:[%s333 + $0x80] sm:$0xf]
        %v370 = vld [vmem:[%s333 + $0x84] sm:$0xf]
        %v371 = vld [vmem:[%s333 + $0x88] sm:$0xf]
        %v372 = vld [vmem:[%s333 + $0x8c] sm:$0xf]
        %v373 = vld [vmem:[%s333 + $0x90] sm:$0xf]
        %v374 = vld [vmem:[%s333 + $0x94] sm:$0xf]
        %v375 = vld [vmem:[%s333 + $0x98] sm:$0xf]
        %v376 = vld [vmem:[%s333 + $0x9c] sm:$0xf]
        %v377 = vld [vmem:[%s333 + $0xa0] sm:$0xf]
        %v378 = vld [vmem:[%s333 + $0xa4] sm:$0xf]
        %v379 = vld [vmem:[%s333 + $0xa8] sm:$0xf]
        %v380 = vld [vmem:[%s333 + $0xac] sm:$0xf]
        %v381 = vld [vmem:[%s333 + $0xb0] sm:$0xf]
        %v382 = vld [vmem:[%s333 + $0xb4] sm:$0xf]
        %v383 = vld [vmem:[%s333 + $0xb8] sm:$0xf]
        %v384 = vld [vmem:[%s333 + $0xbc] sm:$0xf]
        %v385 = vld [vmem:[%s333 + $0xc0] sm:$0xf]
        %v386 = vld [vmem:[%s333 + $0xc4] sm:$0xf]
        %v387 = vld [vmem:[%s333 + $0xc8] sm:$0xf]
        %v388 = vld [vmem:[%s333 + $0xcc] sm:$0xf]
        %v389 = vld [vmem:[%s333 + $0xd0] sm:$0xf]
        %v390 = vld [vmem:[%s333 + $0xd4] sm:$0xf]
        %v391 = vld [vmem:[%s333 + $0xd8] sm:$0xf]
        %v392 = vld [vmem:[%s333 + $0xdc] sm:$0xf]
        %v393 = vld [vmem:[%s333 + $0xe0] sm:$0xf]
        %v394 = vld [vmem:[%s333 + $0xe4] sm:$0xf]
        %v395 = vld [vmem:[%s333 + $0xe8] sm:$0xf]
        %v396 = vld [vmem:[%s333 + $0xec] sm:$0xf]
        %v397 = vld [vmem:[%s333 + $0xf0] sm:$0xf]
        %v398 = vld [vmem:[%s333 + $0xf4] sm:$0xf]
        %v399 = vld [vmem:[%s333 + $0xf8] sm:$0xf]
        %v400 = vld [vmem:[%s333 + $0xfc] sm:$0xf]
        %v401 = vld [vmem:[%s333 + $0x100] sm:$0xf]
        %v402 = vld [vmem:[%s333 + $0x104] sm:$0xf]
        %v403 = vld [vmem:[%s333 + $0x108] sm:$0xf]
        %v404 = vld [vmem:[%s333 + $0x10c] sm:$0xf]
        %v405 = vld [vmem:[%s333 + $0x110] sm:$0xf]
        %v406 = vld [vmem:[%s333 + $0x114] sm:$0xf]
        %v407 = vld [vmem:[%s333 + $0x118] sm:$0xf]
        %v408 = vld [vmem:[%s333 + $0x11c] sm:$0xf]
        %v409 = vld [vmem:[%s333 + $0x120] sm:$0xf]
        %v410 = vld [vmem:[%s333 + $0x124] sm:$0xf]
        %v411 = vld [vmem:[%s333 + $0x128] sm:$0xf]
        %v412 = vld [vmem:[%s333 + $0x12c] sm:$0xf]
        %v413 = vld [vmem:[%s333 + $0x130] sm:$0xf]
        %v414 = vld [vmem:[%s333 + $0x134] sm:$0xf]
        %v415 = vld [vmem:[%s333 + $0x138] sm:$0xf]
        %v416 = vld [vmem:[%s333 + $0x13c] sm:$0xf]
        %v417 = vld [vmem:[%s333 + $0x140] sm:$0xf]
        %v418 = vld [vmem:[%s333 + $0x144] sm:$0xf]
        %v419 = vld [vmem:[%s333 + $0x148] sm:$0xf]
        %v420 = vld [vmem:[%s333 + $0x14c] sm:$0xf]
        %v421 = vld [vmem:[%s333 + $0x150] sm:$0xf]
        %v422 = vld [vmem:[%s333 + $0x154] sm:$0xf]
        %v423 = vld [vmem:[%s333 + $0x158] sm:$0xf]
        %v424 = vld [vmem:[%s333 + $0x15c] sm:$0xf]
        %v425 = vld [vmem:[%s333 + $0x160] sm:$0xf]
        %v426 = vld [vmem:[%s333 + $0x164] sm:$0xf]
        %v427 = vld [vmem:[%s333 + $0x168] sm:$0xf]
        %v428 = vld [vmem:[%s333 + $0x16c] sm:$0xf]
        %v429 = vld [vmem:[%s333 + $0x170] sm:$0xf]
        %v430 = vld [vmem:[%s333 + $0x174] sm:$0xf]
        %v431 = vld [vmem:[%s333 + $0x178] sm:$0xf]
        %v432 = vld [vmem:[%s333 + $0x17c] sm:$0xf]
        %v433 = vld [vmem:[%s333 + $0x180] sm:$0xf]
        %v434 = vld [vmem:[%s333 + $0x184] sm:$0xf]
        %v435 = vld [vmem:[%s333 + $0x188] sm:$0xf]
        %v436 = vld [vmem:[%s333 + $0x18c] sm:$0xf]
        %v437 = vld [vmem:[%s333 + $0x190] sm:$0xf]
        %v438 = vld [vmem:[%s333 + $0x194] sm:$0xf]
        %v439 = vld [vmem:[%s333 + $0x198] sm:$0xf]
        %v440 = vld [vmem:[%s333 + $0x19c] sm:$0xf]
        %v441 = vld [vmem:[%s333 + $0x1a0] sm:$0xf]
        %v442 = vld [vmem:[%s333 + $0x1a4] sm:$0xf]
        %v443 = vld [vmem:[%s333 + $0x1a8] sm:$0xf]
        %v444 = vld [vmem:[%s333 + $0x1ac] sm:$0xf]
        %v445 = vld [vmem:[%s333 + $0x1b0] sm:$0xf]
        %v446 = vld [vmem:[%s333 + $0x1b4] sm:$0xf]
        %v447 = vld [vmem:[%s333 + $0x1b8] sm:$0xf]
        %v448 = vld [vmem:[%s333 + $0x1bc] sm:$0xf]
        %v449 = vld [vmem:[%s333 + $0x1c0] sm:$0xf]
        %v450 = vld [vmem:[%s333 + $0x1c4] sm:$0xf]
        %v451 = vld [vmem:[%s333 + $0x1c8] sm:$0xf]
        %v452 = vld [vmem:[%s333 + $0x1cc] sm:$0xf]
        %v453 = vld [vmem:[%s333 + $0x1d0] sm:$0xf]
        %v454 = vld [vmem:[%s333 + $0x1d4] sm:$0xf]
        %v455 = vld [vmem:[%s333 + $0x1d8] sm:$0xf]
        %v456 = vld [vmem:[%s333 + $0x1dc] sm:$0xf]
        %v457 = vld [vmem:[%s333 + $0x1e0] sm:$0xf]
        %v458 = vld [vmem:[%s333 + $0x1e4] sm:$0xf]
        %v459 = vld [vmem:[%s333 + $0x1e8] sm:$0xf]
        %v460 = vld [vmem:[%s333 + $0x1ec] sm:$0xf]
        %v461 = vld [vmem:[%s333 + $0x1f0] sm:$0xf]
        %v462 = vld [vmem:[%s333 + $0x1f4] sm:$0xf]
        %v463 = vld [vmem:[%s333 + $0x1f8] sm:$0xf]
        %v464 = vld [vmem:[%s333 + $0x1fc] sm:$0xf]
        %v465 = vld [vmem:[%s1] sm:$0xf]
        %v466 = vld [vmem:[%s1 + $0x4] sm:$0xf]
        %v467 = vld [vmem:[%s1 + $0x8] sm:$0xf]
        %v468 = vld [vmem:[%s1 + $0xc] sm:$0xf]
        %v469 = vld [vmem:[%s1 + $0x10] sm:$0xf]
        %v470 = vld [vmem:[%s1 + $0x14] sm:$0xf]
        %v471 = vld [vmem:[%s1 + $0x18] sm:$0xf]
        %v472 = vld [vmem:[%s1 + $0x1c] sm:$0xf]
        %v473 = vld [vmem:[%s1 + $0x20] sm:$0xf]
        %v474 = vld [vmem:[%s1 + $0x24] sm:$0xf]
        %v475 = vld [vmem:[%s1 + $0x28] sm:$0xf]
        %v476 = vld [vmem:[%s1 + $0x2c] sm:$0xf]
        %v477 = vld [vmem:[%s1 + $0x30] sm:$0xf]
        %v478 = vld [vmem:[%s1 + $0x34] sm:$0xf]
        %v479 = vld [vmem:[%s1 + $0x38] sm:$0xf]
        %v480 = vld [vmem:[%s1 + $0x3c] sm:$0xf]
        %v481 = vld [vmem:[%s1 + $0x40] sm:$0xf]
        %v482 = vld [vmem:[%s1 + $0x44] sm:$0xf]
        %v483 = vld [vmem:[%s1 + $0x48] sm:$0xf]
        %v484 = vld [vmem:[%s1 + $0x4c] sm:$0xf]
        %v485 = vld [vmem:[%s1 + $0x50] sm:$0xf]
        %v486 = vld [vmem:[%s1 + $0x54] sm:$0xf]
        %v487 = vld [vmem:[%s1 + $0x58] sm:$0xf]
        %v488 = vld [vmem:[%s1 + $0x5c] sm:$0xf]
        %v489 = vld [vmem:[%s1 + $0x60] sm:$0xf]
        %v490 = vld [vmem:[%s1 + $0x64] sm:$0xf]
        %v491 = vld [vmem:[%s1 + $0x68] sm:$0xf]
        %v492 = vld [vmem:[%s1 + $0x6c] sm:$0xf]
        %v493 = vld [vmem:[%s1 + $0x70] sm:$0xf]
        %v494 = vld [vmem:[%s1 + $0x74] sm:$0xf]
        %v495 = vld [vmem:[%s1 + $0x78] sm:$0xf]
        %v496 = vld [vmem:[%s1 + $0x7c] sm:$0xf]
        %v497 = vld [vmem:[%s1 + $0x80] sm:$0xf]
        %v498 = vld [vmem:[%s1 + $0x84] sm:$0xf]
        %v499 = vld [vmem:[%s1 + $0x88] sm:$0xf]
        %v500 = vld [vmem:[%s1 + $0x8c] sm:$0xf]
        %v501 = vld [vmem:[%s1 + $0x90] sm:$0xf]
        %v502 = vld [vmem:[%s1 + $0x94] sm:$0xf]
        %v503 = vld [vmem:[%s1 + $0x98] sm:$0xf]
        %v504 = vld [vmem:[%s1 + $0x9c] sm:$0xf]
        %v505 = vld [vmem:[%s1 + $0xa0] sm:$0xf]
        %v506 = vld [vmem:[%s1 + $0xa4] sm:$0xf]
        %v507 = vld [vmem:[%s1 + $0xa8] sm:$0xf]
        %v508 = vld [vmem:[%s1 + $0xac] sm:$0xf]
        %v509 = vld [vmem:[%s1 + $0xb0] sm:$0xf]
        %v510 = vld [vmem:[%s1 + $0xb4] sm:$0xf]
        %v511 = vld [vmem:[%s1 + $0xb8] sm:$0xf]
        %v512 = vld [vmem:[%s1 + $0xbc] sm:$0xf]
        %v513 = vld [vmem:[%s1 + $0xc0] sm:$0xf]
        %v514 = vld [vmem:[%s1 + $0xc4] sm:$0xf]
        %v515 = vld [vmem:[%s1 + $0xc8] sm:$0xf]
        %v516 = vld [vmem:[%s1 + $0xcc] sm:$0xf]
        %v517 = vld [vmem:[%s1 + $0xd0] sm:$0xf]
        %v518 = vld [vmem:[%s1 + $0xd4] sm:$0xf]
        %v519 = vld [vmem:[%s1 + $0xd8] sm:$0xf]
        %v520 = vld [vmem:[%s1 + $0xdc] sm:$0xf]
        %v521 = vld [vmem:[%s1 + $0xe0] sm:$0xf]
        %v522 = vld [vmem:[%s1 + $0xe4] sm:$0xf]
        %v523 = vld [vmem:[%s1 + $0xe8] sm:$0xf]
        %v524 = vld [vmem:[%s1 + $0xec] sm:$0xf]
        %v525 = vld [vmem:[%s1 + $0xf0] sm:$0xf]
        %v526 = vld [vmem:[%s1 + $0xf4] sm:$0xf]
        %v527 = vld [vmem:[%s1 + $0xf8] sm:$0xf]
        %v528 = vld [vmem:[%s1 + $0xfc] sm:$0xf]
        %v529 = vld [vmem:[%s2] sm:$0xff]
        %v530 = vld [vmem:[%s2 + $0x8] sm:$0xff]
        %v531 = vld [vmem:[%s2 + $0x10] sm:$0xff]
        %v532 = vld [vmem:[%s2 + $0x18] sm:$0xff]
        %v533 = vld [vmem:[%s2 + $0x20] sm:$0xff]
        %v534 = vld [vmem:[%s2 + $0x28] sm:$0xff]
        %v535 = vld [vmem:[%s2 + $0x30] sm:$0xff]
        %v536 = vld [vmem:[%s2 + $0x38] sm:$0xff]
        %v537 = vld [vmem:[%s2 + $0x40] sm:$0xff]
        %v538 = vld [vmem:[%s2 + $0x48] sm:$0xff]
        %v539 = vld [vmem:[%s2 + $0x50] sm:$0xff]
        %v540 = vld [vmem:[%s2 + $0x58] sm:$0xff]
        %v541 = vld [vmem:[%s2 + $0x60] sm:$0xff]
        %v542 = vld [vmem:[%s2 + $0x68] sm:$0xff]
        %v543 = vld [vmem:[%s2 + $0x70] sm:$0xff]
        %v544 = vld [vmem:[%s2 + $0x78] sm:$0xff]
        %v545 = vld [vmem:[%s2 + $0x80] sm:$0xff]
        %v546 = vld [vmem:[%s2 + $0x88] sm:$0xff]
        %v547 = vld [vmem:[%s2 + $0x90] sm:$0xff]
        %v548 = vld [vmem:[%s2 + $0x98] sm:$0xff]
        %v549 = vld [vmem:[%s2 + $0xa0] sm:$0xff]
        %v550 = vld [vmem:[%s2 + $0xa8] sm:$0xff]
        %v551 = vld [vmem:[%s2 + $0xb0] sm:$0xff]
        %v552 = vld [vmem:[%s2 + $0xb8] sm:$0xff]
        %v553 = vld [vmem:[%s2 + $0xc0] sm:$0xff]
        %v554 = vld [vmem:[%s2 + $0xc8] sm:$0xff]
        %v555 = vld [vmem:[%s2 + $0xd0] sm:$0xff]
        %v556 = vld [vmem:[%s2 + $0xd8] sm:$0xff]
        %v557 = vld [vmem:[%s2 + $0xe0] sm:$0xff]
        %v558 = vld [vmem:[%s2 + $0xe8] sm:$0xff]
        %v559 = vld [vmem:[%s2 + $0xf0] sm:$0xff]
        %v560 = vld [vmem:[%s2 + $0xf8] sm:$0xff]
        %v561 = vld [vmem:[%s2 + $0x100] sm:$0xff]
        %v562 = vld [vmem:[%s2 + $0x108] sm:$0xff]
        %v563 = vld [vmem:[%s2 + $0x110] sm:$0xff]
        %v564 = vld [vmem:[%s2 + $0x118] sm:$0xff]
        %v565 = vld [vmem:[%s2 + $0x120] sm:$0xff]
        %v566 = vld [vmem:[%s2 + $0x128] sm:$0xff]
        %v567 = vld [vmem:[%s2 + $0x130] sm:$0xff]
        %v568 = vld [vmem:[%s2 + $0x138] sm:$0xff]
        %v569 = vld [vmem:[%s2 + $0x140] sm:$0xff]
        %v570 = vld [vmem:[%s2 + $0x148] sm:$0xff]
        %v571 = vld [vmem:[%s2 + $0x150] sm:$0xff]
        %v572 = vld [vmem:[%s2 + $0x158] sm:$0xff]
        %v573 = vld [vmem:[%s2 + $0x160] sm:$0xff]
        %v574 = vld [vmem:[%s2 + $0x168] sm:$0xff]
        %v575 = vld [vmem:[%s2 + $0x170] sm:$0xff]
        %v576 = vld [vmem:[%s2 + $0x178] sm:$0xff]
        %v577 = vld [vmem:[%s2 + $0x180] sm:$0xff]
        %v578 = vld [vmem:[%s2 + $0x188] sm:$0xff]
        %v579 = vld [vmem:[%s2 + $0x190] sm:$0xff]
        %v580 = vld [vmem:[%s2 + $0x198] sm:$0xff]
        %v581 = vld [vmem:[%s2 + $0x1a0] sm:$0xff]
        %v582 = vld [vmem:[%s2 + $0x1a8] sm:$0xff]
        %v583 = vld [vmem:[%s2 + $0x1b0] sm:$0xff]
        %v584 = vld [vmem:[%s2 + $0x1b8] sm:$0xff]
        %v585 = vld [vmem:[%s2 + $0x1c0] sm:$0xff]
        %v586 = vld [vmem:[%s2 + $0x1c8] sm:$0xff]
        %v587 = vld [vmem:[%s2 + $0x1d0] sm:$0xff]
        %v588 = vld [vmem:[%s2 + $0x1d8] sm:$0xff]
        %v589 = vld [vmem:[%s2 + $0x1e0] sm:$0xff]
        %v590 = vld [vmem:[%s2 + $0x1e8] sm:$0xff]
        %v591 = vld [vmem:[%s2 + $0x1f0] sm:$0xff]
        %v592 = vld [vmem:[%s2 + $0x1f8] sm:$0xff]
        %594 = vset.pattern.permute.xlu0 0
        %595 = vperm.xlu0 %594, %v529
        %v596 = vpop.permute.xlu0 %595
        %599 = vset.pattern.permute.xlu0 0
        %600 = vperm.xlu0 %599, %v530
        %v601 = vpop.permute.xlu0 %600
        %604 = vset.pattern.permute.xlu0 0
        %605 = vperm.xlu0 %604, %v531
        %v606 = vpop.permute.xlu0 %605
        %609 = vset.pattern.permute.xlu0 0
        %610 = vperm.xlu0 %609, %v532
        %v611 = vpop.permute.xlu0 %610
        %614 = vset.pattern.permute.xlu0 0
        %615 = vperm.xlu0 %614, %v533
        %v616 = vpop.permute.xlu0 %615
        %619 = vset.pattern.permute.xlu0 0
        %620 = vperm.xlu0 %619, %v534
        %v621 = vpop.permute.xlu0 %620
        %624 = vset.pattern.permute.xlu0 0
        %625 = vperm.xlu0 %624, %v535
        %v626 = vpop.permute.xlu0 %625
        %629 = vset.pattern.permute.xlu0 0
        %630 = vperm.xlu0 %629, %v536
        %v631 = vpop.permute.xlu0 %630
        %634 = vset.pattern.permute.xlu0 0
        %635 = vperm.xlu0 %634, %v537
        %v636 = vpop.permute.xlu0 %635
        %639 = vset.pattern.permute.xlu0 0
        %640 = vperm.xlu0 %639, %v538
        %v641 = vpop.permute.xlu0 %640
        %644 = vset.pattern.permute.xlu0 0
        %645 = vperm.xlu0 %644, %v539
        %v646 = vpop.permute.xlu0 %645
        %649 = vset.pattern.permute.xlu0 0
        %650 = vperm.xlu0 %649, %v540
        %v651 = vpop.permute.xlu0 %650
        %654 = vset.pattern.permute.xlu0 0
        %655 = vperm.xlu0 %654, %v541
        %v656 = vpop.permute.xlu0 %655
        %659 = vset.pattern.permute.xlu0 0
        %660 = vperm.xlu0 %659, %v542
        %v661 = vpop.permute.xlu0 %660
        %664 = vset.pattern.permute.xlu0 0
        %665 = vperm.xlu0 %664, %v543
        %v666 = vpop.permute.xlu0 %665
        %669 = vset.pattern.permute.xlu0 0
        %670 = vperm.xlu0 %669, %v544
        %v671 = vpop.permute.xlu0 %670
        %674 = vset.pattern.permute.xlu0 0
        %675 = vperm.xlu0 %674, %v545
        %v676 = vpop.permute.xlu0 %675
        %679 = vset.pattern.permute.xlu0 0
        %680 = vperm.xlu0 %679, %v546
        %v681 = vpop.permute.xlu0 %680
        %684 = vset.pattern.permute.xlu0 0
        %685 = vperm.xlu0 %684, %v547
        %v686 = vpop.permute.xlu0 %685
        %689 = vset.pattern.permute.xlu0 0
        %690 = vperm.xlu0 %689, %v548
        %v691 = vpop.permute.xlu0 %690
        %694 = vset.pattern.permute.xlu0 0
        %695 = vperm.xlu0 %694, %v549
        %v696 = vpop.permute.xlu0 %695
        %699 = vset.pattern.permute.xlu0 0
        %700 = vperm.xlu0 %699, %v550
        %v701 = vpop.permute.xlu0 %700
        %704 = vset.pattern.permute.xlu0 0
        %705 = vperm.xlu0 %704, %v551
        %v706 = vpop.permute.xlu0 %705
        %709 = vset.pattern.permute.xlu0 0
        %710 = vperm.xlu0 %709, %v552
        %v711 = vpop.permute.xlu0 %710
        %714 = vset.pattern.permute.xlu0 0
        %715 = vperm.xlu0 %714, %v553
        %v716 = vpop.permute.xlu0 %715
        %719 = vset.pattern.permute.xlu0 0
        %720 = vperm.xlu0 %719, %v554
        %v721 = vpop.permute.xlu0 %720
        %724 = vset.pattern.permute.xlu0 0
        %725 = vperm.xlu0 %724, %v555
        %v726 = vpop.permute.xlu0 %725
        %729 = vset.pattern.permute.xlu0 0
        %730 = vperm.xlu0 %729, %v556
        %v731 = vpop.permute.xlu0 %730
        %734 = vset.pattern.permute.xlu0 0
        %735 = vperm.xlu0 %734, %v557
        %v736 = vpop.permute.xlu0 %735
        %739 = vset.pattern.permute.xlu0 0
        %740 = vperm.xlu0 %739, %v558
        %v741 = vpop.permute.xlu0 %740
        %744 = vset.pattern.permute.xlu0 0
        %745 = vperm.xlu0 %744, %v559
        %v746 = vpop.permute.xlu0 %745
        %749 = vset.pattern.permute.xlu0 0
        %750 = vperm.xlu0 %749, %v560
        %v751 = vpop.permute.xlu0 %750
        %754 = vset.pattern.permute.xlu0 0
        %755 = vperm.xlu0 %754, %v561
        %v756 = vpop.permute.xlu0 %755
        %759 = vset.pattern.permute.xlu0 0
        %760 = vperm.xlu0 %759, %v562
        %v761 = vpop.permute.xlu0 %760
        %764 = vset.pattern.permute.xlu0 0
        %765 = vperm.xlu0 %764, %v563
        %v766 = vpop.permute.xlu0 %765
        %769 = vset.pattern.permute.xlu0 0
        %770 = vperm.xlu0 %769, %v564
        %v771 = vpop.permute.xlu0 %770
        %774 = vset.pattern.permute.xlu0 0
        %775 = vperm.xlu0 %774, %v565
        %v776 = vpop.permute.xlu0 %775
        %779 = vset.pattern.permute.xlu0 0
        %780 = vperm.xlu0 %779, %v566
        %v781 = vpop.permute.xlu0 %780
        %784 = vset.pattern.permute.xlu0 0
        %785 = vperm.xlu0 %784, %v567
        %v786 = vpop.permute.xlu0 %785
        %789 = vset.pattern.permute.xlu0 0
        %790 = vperm.xlu0 %789, %v568
        %v791 = vpop.permute.xlu0 %790
        %794 = vset.pattern.permute.xlu0 0
        %795 = vperm.xlu0 %794, %v569
        %v796 = vpop.permute.xlu0 %795
        %799 = vset.pattern.permute.xlu0 0
        %800 = vperm.xlu0 %799, %v570
        %v801 = vpop.permute.xlu0 %800
        %804 = vset.pattern.permute.xlu0 0
        %805 = vperm.xlu0 %804, %v571
        %v806 = vpop.permute.xlu0 %805
        %809 = vset.pattern.permute.xlu0 0
        %810 = vperm.xlu0 %809, %v572
        %v811 = vpop.permute.xlu0 %810
        %814 = vset.pattern.permute.xlu0 0
        %815 = vperm.xlu0 %814, %v573
        %v816 = vpop.permute.xlu0 %815
        %819 = vset.pattern.permute.xlu0 0
        %820 = vperm.xlu0 %819, %v574
        %v821 = vpop.permute.xlu0 %820
        %824 = vset.pattern.permute.xlu0 0
        %825 = vperm.xlu0 %824, %v575
        %v826 = vpop.permute.xlu0 %825
        %829 = vset.pattern.permute.xlu0 0
        %830 = vperm.xlu0 %829, %v576
        %v831 = vpop.permute.xlu0 %830
        %834 = vset.pattern.permute.xlu0 0
        %835 = vperm.xlu0 %834, %v577
        %v836 = vpop.permute.xlu0 %835
        %839 = vset.pattern.permute.xlu0 0
        %840 = vperm.xlu0 %839, %v578
        %v841 = vpop.permute.xlu0 %840
        %844 = vset.pattern.permute.xlu0 0
        %845 = vperm.xlu0 %844, %v579
        %v846 = vpop.permute.xlu0 %845
        %849 = vset.pattern.permute.xlu0 0
        %850 = vperm.xlu0 %849, %v580
        %v851 = vpop.permute.xlu0 %850
        %854 = vset.pattern.permute.xlu0 0
        %855 = vperm.xlu0 %854, %v581
        %v856 = vpop.permute.xlu0 %855
        %859 = vset.pattern.permute.xlu0 0
        %860 = vperm.xlu0 %859, %v582
        %v861 = vpop.permute.xlu0 %860
        %864 = vset.pattern.permute.xlu0 0
        %865 = vperm.xlu0 %864, %v583
        %v866 = vpop.permute.xlu0 %865
        %869 = vset.pattern.permute.xlu0 0
        %870 = vperm.xlu0 %869, %v584
        %v871 = vpop.permute.xlu0 %870
        %874 = vset.pattern.permute.xlu0 0
        %875 = vperm.xlu0 %874, %v585
        %v876 = vpop.permute.xlu0 %875
        %879 = vset.pattern.permute.xlu0 0
        %880 = vperm.xlu0 %879, %v586
        %v881 = vpop.permute.xlu0 %880
        %884 = vset.pattern.permute.xlu0 0
        %885 = vperm.xlu0 %884, %v587
        %v886 = vpop.permute.xlu0 %885
        %889 = vset.pattern.permute.xlu0 0
        %890 = vperm.xlu0 %889, %v588
        %v891 = vpop.permute.xlu0 %890
        %894 = vset.pattern.permute.xlu0 0
        %895 = vperm.xlu0 %894, %v589
        %v896 = vpop.permute.xlu0 %895
        %899 = vset.pattern.permute.xlu0 0
        %900 = vperm.xlu0 %899, %v590
        %v901 = vpop.permute.xlu0 %900
        %904 = vset.pattern.permute.xlu0 0
        %905 = vperm.xlu0 %904, %v591
        %v906 = vpop.permute.xlu0 %905
        %909 = vset.pattern.permute.xlu0 0
        %910 = vperm.xlu0 %909, %v592
        %v911 = vpop.permute.xlu0 %910
        %v977 = vunpack.c.l.b16 %v465
        %v978 = vunpack.c.l.b16 %v466
        %v979 = vunpack.c.l.b16 %v467
        %v980 = vunpack.c.l.b16 %v468
        %v981 = vunpack.c.l.b16 %v469
        %v982 = vunpack.c.l.b16 %v470
        %v983 = vunpack.c.l.b16 %v471
        %v984 = vunpack.c.l.b16 %v472
        %v985 = vunpack.c.l.b16 %v473
        %v986 = vunpack.c.l.b16 %v474
        %v987 = vunpack.c.l.b16 %v475
        %v988 = vunpack.c.l.b16 %v476
        %v989 = vunpack.c.l.b16 %v477
        %v990 = vunpack.c.l.b16 %v478
        %v991 = vunpack.c.l.b16 %v479
        %v992 = vunpack.c.l.b16 %v480
        %v993 = vunpack.c.l.b16 %v481
        %v994 = vunpack.c.l.b16 %v482
        %v995 = vunpack.c.l.b16 %v483
        %v996 = vunpack.c.l.b16 %v484
        %v997 = vunpack.c.l.b16 %v485
        %v998 = vunpack.c.l.b16 %v486
        %v999 = vunpack.c.l.b16 %v487
        %v1000 = vunpack.c.l.b16 %v488
        %v1001 = vunpack.c.l.b16 %v489
        %v1002 = vunpack.c.l.b16 %v490
        %v1003 = vunpack.c.l.b16 %v491
        %v1004 = vunpack.c.l.b16 %v492
        %v1005 = vunpack.c.l.b16 %v493
        %v1006 = vunpack.c.l.b16 %v494
        %v1007 = vunpack.c.l.b16 %v495
        %v1008 = vunpack.c.l.b16 %v496
        %v1009 = vunpack.c.l.b16 %v497
        %v1010 = vunpack.c.l.b16 %v498
        %v1011 = vunpack.c.l.b16 %v499
        %v1012 = vunpack.c.l.b16 %v500
        %v1013 = vunpack.c.l.b16 %v501
        %v1014 = vunpack.c.l.b16 %v502
        %v1015 = vunpack.c.l.b16 %v503
        %v1016 = vunpack.c.l.b16 %v504
        %v1017 = vunpack.c.l.b16 %v505
        %v1018 = vunpack.c.l.b16 %v506
        %v1019 = vunpack.c.l.b16 %v507
        %v1020 = vunpack.c.l.b16 %v508
        %v1021 = vunpack.c.l.b16 %v509
        %v1022 = vunpack.c.l.b16 %v510
        %v1023 = vunpack.c.l.b16 %v511
        %v1024 = vunpack.c.l.b16 %v512
        %v1025 = vunpack.c.l.b16 %v513
        %v1026 = vunpack.c.l.b16 %v514
        %v1027 = vunpack.c.l.b16 %v515
        %v1028 = vunpack.c.l.b16 %v516
        %v1029 = vunpack.c.l.b16 %v517
        %v1030 = vunpack.c.l.b16 %v518
        %v1031 = vunpack.c.l.b16 %v519
        %v1032 = vunpack.c.l.b16 %v520
        %v1033 = vunpack.c.l.b16 %v521
        %v1034 = vunpack.c.l.b16 %v522
        %v1035 = vunpack.c.l.b16 %v523
        %v1036 = vunpack.c.l.b16 %v524
        %v1037 = vunpack.c.l.b16 %v525
        %v1038 = vunpack.c.l.b16 %v526
        %v1039 = vunpack.c.l.b16 %v527
        %v1040 = vunpack.c.l.b16 %v528
        %v1041 = vpack.c.b16 %v978, %v977
        %v1042 = vpack.c.b16 %v980, %v979
        %v1043 = vpack.c.b16 %v982, %v981
        %v1044 = vpack.c.b16 %v984, %v983
        %v1045 = vpack.c.b16 %v986, %v985
        %v1046 = vpack.c.b16 %v988, %v987
        %v1047 = vpack.c.b16 %v990, %v989
        %v1048 = vpack.c.b16 %v992, %v991
        %v1049 = vpack.c.b16 %v994, %v993
        %v1050 = vpack.c.b16 %v996, %v995
        %v1051 = vpack.c.b16 %v998, %v997
        %v1052 = vpack.c.b16 %v1000, %v999
        %v1053 = vpack.c.b16 %v1002, %v1001
        %v1054 = vpack.c.b16 %v1004, %v1003
        %v1055 = vpack.c.b16 %v1006, %v1005
        %v1056 = vpack.c.b16 %v1008, %v1007
        %v1057 = vpack.c.b16 %v1010, %v1009
        %v1058 = vpack.c.b16 %v1012, %v1011
        %v1059 = vpack.c.b16 %v1014, %v1013
        %v1060 = vpack.c.b16 %v1016, %v1015
        %v1061 = vpack.c.b16 %v1018, %v1017
        %v1062 = vpack.c.b16 %v1020, %v1019
        %v1063 = vpack.c.b16 %v1022, %v1021
        %v1064 = vpack.c.b16 %v1024, %v1023
        %v1065 = vpack.c.b16 %v1026, %v1025
        %v1066 = vpack.c.b16 %v1028, %v1027
        %v1067 = vpack.c.b16 %v1030, %v1029
        %v1068 = vpack.c.b16 %v1032, %v1031
        %v1069 = vpack.c.b16 %v1034, %v1033
        %v1070 = vpack.c.b16 %v1036, %v1035
        %v1071 = vpack.c.b16 %v1038, %v1037
        %v1072 = vpack.c.b16 %v1040, %v1039
        %v1201 = vunpack.c.l.b16 %v337
        %v1202 = vunpack.c.l.b16 %v338
        %v1203 = vunpack.c.l.b16 %v339
        %v1204 = vunpack.c.l.b16 %v340
        %v1205 = vunpack.c.l.b16 %v341
        %v1206 = vunpack.c.l.b16 %v342
        %v1207 = vunpack.c.l.b16 %v343
        %v1208 = vunpack.c.l.b16 %v344
        %v1209 = vunpack.c.l.b16 %v345
        %v1210 = vunpack.c.l.b16 %v346
        %v1211 = vunpack.c.l.b16 %v347
        %v1212 = vunpack.c.l.b16 %v348
        %v1213 = vunpack.c.l.b16 %v349
        %v1214 = vunpack.c.l.b16 %v350
        %v1215 = vunpack.c.l.b16 %v351
        %v1216 = vunpack.c.l.b16 %v352
        %v1217 = vunpack.c.l.b16 %v353
        %v1218 = vunpack.c.l.b16 %v354
        %v1219 = vunpack.c.l.b16 %v355
        %v1220 = vunpack.c.l.b16 %v356
        %v1221 = vunpack.c.l.b16 %v357
        %v1222 = vunpack.c.l.b16 %v358
        %v1223 = vunpack.c.l.b16 %v359
        %v1224 = vunpack.c.l.b16 %v360
        %v1225 = vunpack.c.l.b16 %v361
        %v1226 = vunpack.c.l.b16 %v362
        %v1227 = vunpack.c.l.b16 %v363
        %v1228 = vunpack.c.l.b16 %v364
        %v1229 = vunpack.c.l.b16 %v365
        %v1230 = vunpack.c.l.b16 %v366
        %v1231 = vunpack.c.l.b16 %v367
        %v1232 = vunpack.c.l.b16 %v368
        %v1233 = vunpack.c.l.b16 %v369
        %v1234 = vunpack.c.l.b16 %v370
        %v1235 = vunpack.c.l.b16 %v371
        %v1236 = vunpack.c.l.b16 %v372
        %v1237 = vunpack.c.l.b16 %v373
        %v1238 = vunpack.c.l.b16 %v374
        %v1239 = vunpack.c.l.b16 %v375
        %v1240 = vunpack.c.l.b16 %v376
        %v1241 = vunpack.c.l.b16 %v377
        %v1242 = vunpack.c.l.b16 %v378
        %v1243 = vunpack.c.l.b16 %v379
        %v1244 = vunpack.c.l.b16 %v380
        %v1245 = vunpack.c.l.b16 %v381
        %v1246 = vunpack.c.l.b16 %v382
        %v1247 = vunpack.c.l.b16 %v383
        %v1248 = vunpack.c.l.b16 %v384
        %v1249 = vunpack.c.l.b16 %v385
        %v1250 = vunpack.c.l.b16 %v386
        %v1251 = vunpack.c.l.b16 %v387
        %v1252 = vunpack.c.l.b16 %v388
        %v1253 = vunpack.c.l.b16 %v389
        %v1254 = vunpack.c.l.b16 %v390
        %v1255 = vunpack.c.l.b16 %v391
        %v1256 = vunpack.c.l.b16 %v392
        %v1257 = vunpack.c.l.b16 %v393
        %v1258 = vunpack.c.l.b16 %v394
        %v1259 = vunpack.c.l.b16 %v395
        %v1260 = vunpack.c.l.b16 %v396
        %v1261 = vunpack.c.l.b16 %v397
        %v1262 = vunpack.c.l.b16 %v398
        %v1263 = vunpack.c.l.b16 %v399
        %v1264 = vunpack.c.l.b16 %v400
        %v1265 = vunpack.c.l.b16 %v401
        %v1266 = vunpack.c.l.b16 %v402
        %v1267 = vunpack.c.l.b16 %v403
        %v1268 = vunpack.c.l.b16 %v404
        %v1269 = vunpack.c.l.b16 %v405
        %v1270 = vunpack.c.l.b16 %v406
        %v1271 = vunpack.c.l.b16 %v407
        %v1272 = vunpack.c.l.b16 %v408
        %v1273 = vunpack.c.l.b16 %v409
        %v1274 = vunpack.c.l.b16 %v410
        %v1275 = vunpack.c.l.b16 %v411
        %v1276 = vunpack.c.l.b16 %v412
        %v1277 = vunpack.c.l.b16 %v413
        %v1278 = vunpack.c.l.b16 %v414
        %v1279 = vunpack.c.l.b16 %v415
        %v1280 = vunpack.c.l.b16 %v416
        %v1281 = vunpack.c.l.b16 %v417
        %v1282 = vunpack.c.l.b16 %v418
        %v1283 = vunpack.c.l.b16 %v419
        %v1284 = vunpack.c.l.b16 %v420
        %v1285 = vunpack.c.l.b16 %v421
        %v1286 = vunpack.c.l.b16 %v422
        %v1287 = vunpack.c.l.b16 %v423
        %v1288 = vunpack.c.l.b16 %v424
        %v1289 = vunpack.c.l.b16 %v425
        %v1290 = vunpack.c.l.b16 %v426
        %v1291 = vunpack.c.l.b16 %v427
        %v1292 = vunpack.c.l.b16 %v428
        %v1293 = vunpack.c.l.b16 %v429
        %v1294 = vunpack.c.l.b16 %v430
        %v1295 = vunpack.c.l.b16 %v431
        %v1296 = vunpack.c.l.b16 %v432
        %v1297 = vunpack.c.l.b16 %v433
        %v1298 = vunpack.c.l.b16 %v434
        %v1299 = vunpack.c.l.b16 %v435
        %v1300 = vunpack.c.l.b16 %v436
        %v1301 = vunpack.c.l.b16 %v437
        %v1302 = vunpack.c.l.b16 %v438
        %v1303 = vunpack.c.l.b16 %v439
        %v1304 = vunpack.c.l.b16 %v440
        %v1305 = vunpack.c.l.b16 %v441
        %v1306 = vunpack.c.l.b16 %v442
        %v1307 = vunpack.c.l.b16 %v443
        %v1308 = vunpack.c.l.b16 %v444
        %v1309 = vunpack.c.l.b16 %v445
        %v1310 = vunpack.c.l.b16 %v446
        %v1311 = vunpack.c.l.b16 %v447
        %v1312 = vunpack.c.l.b16 %v448
        %v1313 = vunpack.c.l.b16 %v449
        %v1314 = vunpack.c.l.b16 %v450
        %v1315 = vunpack.c.l.b16 %v451
        %v1316 = vunpack.c.l.b16 %v452
        %v1317 = vunpack.c.l.b16 %v453
        %v1318 = vunpack.c.l.b16 %v454
        %v1319 = vunpack.c.l.b16 %v455
        %v1320 = vunpack.c.l.b16 %v456
        %v1321 = vunpack.c.l.b16 %v457
        %v1322 = vunpack.c.l.b16 %v458
        %v1323 = vunpack.c.l.b16 %v459
        %v1324 = vunpack.c.l.b16 %v460
        %v1325 = vunpack.c.l.b16 %v461
        %v1326 = vunpack.c.l.b16 %v462
        %v1327 = vunpack.c.l.b16 %v463
        %v1328 = vunpack.c.l.b16 %v464
        %v1329 = vpack.c.b16 %v1202, %v1201
        %v1330 = vpack.c.b16 %v1204, %v1203
        %v1331 = vpack.c.b16 %v1206, %v1205
        %v1332 = vpack.c.b16 %v1208, %v1207
        %v1333 = vpack.c.b16 %v1210, %v1209
        %v1334 = vpack.c.b16 %v1212, %v1211
        %v1335 = vpack.c.b16 %v1214, %v1213
        %v1336 = vpack.c.b16 %v1216, %v1215
        %v1337 = vpack.c.b16 %v1218, %v1217
        %v1338 = vpack.c.b16 %v1220, %v1219
        %v1339 = vpack.c.b16 %v1222, %v1221
        %v1340 = vpack.c.b16 %v1224, %v1223
        %v1341 = vpack.c.b16 %v1226, %v1225
        %v1342 = vpack.c.b16 %v1228, %v1227
        %v1343 = vpack.c.b16 %v1230, %v1229
        %v1344 = vpack.c.b16 %v1232, %v1231
        %v1345 = vpack.c.b16 %v1234, %v1233
        %v1346 = vpack.c.b16 %v1236, %v1235
        %v1347 = vpack.c.b16 %v1238, %v1237
        %v1348 = vpack.c.b16 %v1240, %v1239
        %v1349 = vpack.c.b16 %v1242, %v1241
        %v1350 = vpack.c.b16 %v1244, %v1243
        %v1351 = vpack.c.b16 %v1246, %v1245
        %v1352 = vpack.c.b16 %v1248, %v1247
        %v1353 = vpack.c.b16 %v1250, %v1249
        %v1354 = vpack.c.b16 %v1252, %v1251
        %v1355 = vpack.c.b16 %v1254, %v1253
        %v1356 = vpack.c.b16 %v1256, %v1255
        %v1357 = vpack.c.b16 %v1258, %v1257
        %v1358 = vpack.c.b16 %v1260, %v1259
        %v1359 = vpack.c.b16 %v1262, %v1261
        %v1360 = vpack.c.b16 %v1264, %v1263
        %v1361 = vpack.c.b16 %v1266, %v1265
        %v1362 = vpack.c.b16 %v1268, %v1267
        %v1363 = vpack.c.b16 %v1270, %v1269
        %v1364 = vpack.c.b16 %v1272, %v1271
        %v1365 = vpack.c.b16 %v1274, %v1273
        %v1366 = vpack.c.b16 %v1276, %v1275
        %v1367 = vpack.c.b16 %v1278, %v1277
        %v1368 = vpack.c.b16 %v1280, %v1279
        %v1369 = vpack.c.b16 %v1282, %v1281
        %v1370 = vpack.c.b16 %v1284, %v1283
        %v1371 = vpack.c.b16 %v1286, %v1285
        %v1372 = vpack.c.b16 %v1288, %v1287
        %v1373 = vpack.c.b16 %v1290, %v1289
        %v1374 = vpack.c.b16 %v1292, %v1291
        %v1375 = vpack.c.b16 %v1294, %v1293
        %v1376 = vpack.c.b16 %v1296, %v1295
        %v1377 = vpack.c.b16 %v1298, %v1297
        %v1378 = vpack.c.b16 %v1300, %v1299
        %v1379 = vpack.c.b16 %v1302, %v1301
        %v1380 = vpack.c.b16 %v1304, %v1303
        %v1381 = vpack.c.b16 %v1306, %v1305
        %v1382 = vpack.c.b16 %v1308, %v1307
        %v1383 = vpack.c.b16 %v1310, %v1309
        %v1384 = vpack.c.b16 %v1312, %v1311
        %v1385 = vpack.c.b16 %v1314, %v1313
        %v1386 = vpack.c.b16 %v1316, %v1315
        %v1387 = vpack.c.b16 %v1318, %v1317
        %v1388 = vpack.c.b16 %v1320, %v1319
        %v1389 = vpack.c.b16 %v1322, %v1321
        %v1390 = vpack.c.b16 %v1324, %v1323
        %v1391 = vpack.c.b16 %v1326, %v1325
        %v1392 = vpack.c.b16 %v1328, %v1327
        %vm1393 = vcmask 80896
        %v1395 = vsel %vm1393, %v1041, 0
        %v1398 = vsel %vm1393, %v1042, 0
        %v1401 = vsel %vm1393, %v1043, 0
        %v1404 = vsel %vm1393, %v1044, 0
        %v1407 = vsel %vm1393, %v1045, 0
        %v1410 = vsel %vm1393, %v1046, 0
        %v1413 = vsel %vm1393, %v1047, 0
        %v1416 = vsel %vm1393, %v1048, 0
        %v1419 = vsel %vm1393, %v1049, 0
        %v1422 = vsel %vm1393, %v1050, 0
        %v1425 = vsel %vm1393, %v1051, 0
        %v1428 = vsel %vm1393, %v1052, 0
        %v1431 = vsel %vm1393, %v1053, 0
        %v1434 = vsel %vm1393, %v1054, 0
        %v1437 = vsel %vm1393, %v1055, 0
        %v1440 = vsel %vm1393, %v1056, 0
        %v1443 = vsel %vm1393, %v1057, 0
        %v1446 = vsel %vm1393, %v1058, 0
        %v1449 = vsel %vm1393, %v1059, 0
        %v1452 = vsel %vm1393, %v1060, 0
        %v1455 = vsel %vm1393, %v1061, 0
        %v1458 = vsel %vm1393, %v1062, 0
        %v1461 = vsel %vm1393, %v1063, 0
        %v1464 = vsel %vm1393, %v1064, 0
        %v1467 = vsel %vm1393, %v1065, 0
        %v1470 = vsel %vm1393, %v1066, 0
        %v1473 = vsel %vm1393, %v1067, 0
        %v1476 = vsel %vm1393, %v1068, 0
        %v1479 = vsel %vm1393, %v1069, 0
        %v1482 = vsel %vm1393, %v1070, 0
        %v1485 = vsel %vm1393, %v1071, 0
        %v1488 = vsel %vm1393, %v1072, 0
        %v1491 = vsel %vm1393, %v1329, 0
        %v1494 = vsel %vm1393, %v1330, 0
        %v1497 = vsel %vm1393, %v1331, 0
        %v1500 = vsel %vm1393, %v1332, 0
        %v1503 = vsel %vm1393, %v1333, 0
        %v1506 = vsel %vm1393, %v1334, 0
        %v1509 = vsel %vm1393, %v1335, 0
        %v1512 = vsel %vm1393, %v1336, 0
        %v1515 = vsel %vm1393, %v1337, 0
        %v1518 = vsel %vm1393, %v1338, 0
        %v1521 = vsel %vm1393, %v1339, 0
        %v1524 = vsel %vm1393, %v1340, 0
        %v1527 = vsel %vm1393, %v1341, 0
        %v1530 = vsel %vm1393, %v1342, 0
        %v1533 = vsel %vm1393, %v1343, 0
        %v1536 = vsel %vm1393, %v1344, 0
        %v1539 = vsel %vm1393, %v1345, 0
        %v1542 = vsel %vm1393, %v1346, 0
        %v1545 = vsel %vm1393, %v1347, 0
        %v1548 = vsel %vm1393, %v1348, 0
        %v1551 = vsel %vm1393, %v1349, 0
        %v1554 = vsel %vm1393, %v1350, 0
        %v1557 = vsel %vm1393, %v1351, 0
        %v1560 = vsel %vm1393, %v1352, 0
        %v1563 = vsel %vm1393, %v1353, 0
        %v1566 = vsel %vm1393, %v1354, 0
        %v1569 = vsel %vm1393, %v1355, 0
        %v1572 = vsel %vm1393, %v1356, 0
        %v1575 = vsel %vm1393, %v1357, 0
        %v1578 = vsel %vm1393, %v1358, 0
        %v1581 = vsel %vm1393, %v1359, 0
        %v1584 = vsel %vm1393, %v1360, 0
        %v1587 = vsel %vm1393, %v1361, 0
        %v1590 = vsel %vm1393, %v1362, 0
        %v1593 = vsel %vm1393, %v1363, 0
        %v1596 = vsel %vm1393, %v1364, 0
        %v1599 = vsel %vm1393, %v1365, 0
        %v1602 = vsel %vm1393, %v1366, 0
        %v1605 = vsel %vm1393, %v1367, 0
        %v1608 = vsel %vm1393, %v1368, 0
        %v1611 = vsel %vm1393, %v1369, 0
        %v1614 = vsel %vm1393, %v1370, 0
        %v1617 = vsel %vm1393, %v1371, 0
        %v1620 = vsel %vm1393, %v1372, 0
        %v1623 = vsel %vm1393, %v1373, 0
        %v1626 = vsel %vm1393, %v1374, 0
        %v1629 = vsel %vm1393, %v1375, 0
        %v1632 = vsel %vm1393, %v1376, 0
        %v1635 = vsel %vm1393, %v1377, 0
        %v1638 = vsel %vm1393, %v1378, 0
        %v1641 = vsel %vm1393, %v1379, 0
        %v1644 = vsel %vm1393, %v1380, 0
        %v1647 = vsel %vm1393, %v1381, 0
        %v1650 = vsel %vm1393, %v1382, 0
        %v1653 = vsel %vm1393, %v1383, 0
        %v1656 = vsel %vm1393, %v1384, 0
        %v1659 = vsel %vm1393, %v1385, 0
        %v1662 = vsel %vm1393, %v1386, 0
        %v1665 = vsel %vm1393, %v1387, 0
        %v1668 = vsel %vm1393, %v1388, 0
        %v1671 = vsel %vm1393, %v1389, 0
        %v1674 = vsel %vm1393, %v1390, 0
        %v1677 = vsel %vm1393, %v1391, 0
        %v1680 = vsel %vm1393, %v1392, 0
        %1682 = vmatprep.subr.bf16.mxu0 0
        %1683 = vmatpush1.bf16.xpose.msra.mxu0 %v1491
        %1684 = vmatprep.subr.bf16.mxu0 0
        %1685 = vmatpush1.bf16.xpose.msra.mxu0 %v1494
        %1686 = vmatprep.subr.bf16.mxu0 0
        %1687 = vmatpush1.bf16.xpose.msra.mxu0 %v1497
        %1688 = vmatprep.subr.bf16.mxu0 0
        %1689 = vmatpush1.bf16.xpose.msra.mxu0 %v1500
        %1690 = vmatprep.subr.bf16.mxu0 0
        %1691 = vmatpush1.bf16.xpose.msra.mxu0 %v1503
        %1692 = vmatprep.subr.bf16.mxu0 0
        %1693 = vmatpush1.bf16.xpose.msra.mxu0 %v1506
        %1694 = vmatprep.subr.bf16.mxu0 0
        %1695 = vmatpush1.bf16.xpose.msra.mxu0 %v1509
        %1696 = vmatprep.subr.bf16.mxu0 0
        %1697 = vmatpush1.bf16.xpose.msra.mxu0 %v1512
        %1698 = vmatprep.subr.bf16.mxu0 0
        %1699 = vmatpush1.bf16.xpose.msra.mxu0 %v1515
        %1700 = vmatprep.subr.bf16.mxu0 0
        %1701 = vmatpush1.bf16.xpose.msra.mxu0 %v1518
        %1702 = vmatprep.subr.bf16.mxu0 0
        %1703 = vmatpush1.bf16.xpose.msra.mxu0 %v1521
        %1704 = vmatprep.subr.bf16.mxu0 0
        %1705 = vmatpush1.bf16.xpose.msra.mxu0 %v1524
        %1706 = vmatprep.subr.bf16.mxu0 0
        %1707 = vmatpush1.bf16.xpose.msra.mxu0 %v1527
        %1708 = vmatprep.subr.bf16.mxu0 0
        %1709 = vmatpush1.bf16.xpose.msra.mxu0 %v1530
        %1710 = vmatprep.subr.bf16.mxu0 0
        %1711 = vmatpush1.bf16.xpose.msra.mxu0 %v1533
        %1712 = vmatprep.subr.bf16.mxu0 0
        %1713 = vmatpush1.bf16.xpose.msra.mxu0 %v1536
        %1714 = vmatprep.mubr.bf16.mxu0 0
        %1715 = vmatmul.mubr.bf16.gmra.mrb[0].mxu0 %v1395
        %v1716 = vpop.f32.mrb[0].mxu0
        %v1717 = vadd.f32 %v596, %v1716
        %v1718 = vpop.f32.mrb[0].mxu0
        %v1719 = vadd.f32 %v596, %v1718
        %v1720 = vpop.f32.mrb[0].mxu0
        %v1721 = vadd.f32 %v601, %v1720
        %v1722 = vpop.f32.mrb[0].mxu0
        %v1723 = vadd.f32 %v601, %v1722
        %1724 = vmatprep.mubr.bf16.mxu0 0
        %1725 = vmatmul.mubr.bf16.gmra.mrb[0].mxu0 %v1398
        %v1726 = vpop.f32.mrb[0].mxu0
        %v1727 = vadd.f32 %v606, %v1726
        %v1728 = vpop.f32.mrb[0].mxu0
        %v1729 = vadd.f32 %v606, %v1728
        %v1730 = vpop.f32.mrb[0].mxu0
        %v1731 = vadd.f32 %v611, %v1730
        %v1732 = vpop.f32.mrb[0].mxu0
        %v1733 = vadd.f32 %v611, %v1732
        %1734 = vmatprep.mubr.bf16.mxu0 0
        %1735 = vmatmul.mubr.bf16.gmra.mrb[0].mxu0 %v1401
        %v1736 = vpop.f32.mrb[0].mxu0
        %v1737 = vadd.f32 %v616, %v1736
        %v1738 = vpop.f32.mrb[0].mxu0
        %v1739 = vadd.f32 %v616, %v1738
        %v1740 = vpop.f32.mrb[0].mxu0
        %v1741 = vadd.f32 %v621, %v1740
        %v1742 = vpop.f32.mrb[0].mxu0
        %v1743 = vadd.f32 %v621, %v1742
        %1744 = vmatprep.mubr.bf16.mxu0 0
        %1745 = vmatmul.mubr.bf16.gmra.mrb[0].mxu0 %v1404
        %v1746 = vpop.f32.mrb[0].mxu0
        %v1747 = vadd.f32 %v626, %v1746
        %v1748 = vpop.f32.mrb[0].mxu0
        %v1749 = vadd.f32 %v626, %v1748
        %v1750 = vpop.f32.mrb[0].mxu0
        %v1751 = vadd.f32 %v631, %v1750
        %v1752 = vpop.f32.mrb[0].mxu0
        %v1753 = vadd.f32 %v631, %v1752
        %1754 = vmatprep.mubr.bf16.mxu0 0
        %1755 = vmatmul.mubr.bf16.gmra.mrb[0].mxu0 %v1407
        %v1756 = vpop.f32.mrb[0].mxu0
        %v1757 = vadd.f32 %v636, %v1756
        %v1758 = vpop.f32.mrb[0].mxu0
        %v1759 = vadd.f32 %v636, %v1758
        %v1760 = vpop.f32.mrb[0].mxu0
        %v1761 = vadd.f32 %v641, %v1760
        %v1762 = vpop.f32.mrb[0].mxu0
        %v1763 = vadd.f32 %v641, %v1762
        %1764 = vmatprep.mubr.bf16.mxu0 0
        %1765 = vmatmul.mubr.bf16.gmra.mrb[0].mxu0 %v1410
        %v1766 = vpop.f32.mrb[0].mxu0
        %v1767 = vadd.f32 %v646, %v1766
        %v1768 = vpop.f32.mrb[0].mxu0
        %v1769 = vadd.f32 %v646, %v1768
        %v1770 = vpop.f32.mrb[0].mxu0
        %v1771 = vadd.f32 %v651, %v1770
        %v1772 = vpop.f32.mrb[0].mxu0
        %v1773 = vadd.f32 %v651, %v1772
        %1774 = vmatprep.mubr.bf16.mxu0 0
        %1775 = vmatmul.mubr.bf16.gmra.mrb[0].mxu0 %v1413
        %v1776 = vpop.f32.mrb[0].mxu0
        %v1777 = vadd.f32 %v656, %v1776
        %v1778 = vpop.f32.mrb[0].mxu0
        %v1779 = vadd.f32 %v656, %v1778
        %v1780 = vpop.f32.mrb[0].mxu0
        %v1781 = vadd.f32 %v661, %v1780
        %v1782 = vpop.f32.mrb[0].mxu0
        %v1783 = vadd.f32 %v661, %v1782
        %1784 = vmatprep.mubr.bf16.mxu0 0
        %1785 = vmatmul.mubr.bf16.gmra.mrb[0].mxu0 %v1416
        %v1786 = vpop.f32.mrb[0].mxu0
        %v1787 = vadd.f32 %v666, %v1786
        %v1788 = vpop.f32.mrb[0].mxu0
        %v1789 = vadd.f32 %v666, %v1788
        %v1790 = vpop.f32.mrb[0].mxu0
        %v1791 = vadd.f32 %v671, %v1790
        %v1792 = vpop.f32.mrb[0].mxu0
        %v1793 = vadd.f32 %v671, %v1792
        %1794 = vmatprep.mubr.bf16.mxu0 0
        %1795 = vmatmul.mubr.bf16.gmra.mrb[0].mxu0 %v1419
        %v1796 = vpop.f32.mrb[0].mxu0
        %v1797 = vadd.f32 %v676, %v1796
        %v1798 = vpop.f32.mrb[0].mxu0
        %v1799 = vadd.f32 %v676, %v1798
        %v1800 = vpop.f32.mrb[0].mxu0
        %v1801 = vadd.f32 %v681, %v1800
        %v1802 = vpop.f32.mrb[0].mxu0
        %v1803 = vadd.f32 %v681, %v1802
        %1804 = vmatprep.mubr.bf16.mxu0 0
        %1805 = vmatmul.mubr.bf16.gmra.mrb[0].mxu0 %v1422
        %v1806 = vpop.f32.mrb[0].mxu0
        %v1807 = vadd.f32 %v686, %v1806
        %v1808 = vpop.f32.mrb[0].mxu0
        %v1809 = vadd.f32 %v686, %v1808
        %v1810 = vpop.f32.mrb[0].mxu0
        %v1811 = vadd.f32 %v691, %v1810
        %v1812 = vpop.f32.mrb[0].mxu0
        %v1813 = vadd.f32 %v691, %v1812
        %1814 = vmatprep.mubr.bf16.mxu0 0
        %1815 = vmatmul.mubr.bf16.gmra.mrb[0].mxu0 %v1425
        %v1816 = vpop.f32.mrb[0].mxu0
        %v1817 = vadd.f32 %v696, %v1816
        %v1818 = vpop.f32.mrb[0].mxu0
        %v1819 = vadd.f32 %v696, %v1818
        %v1820 = vpop.f32.mrb[0].mxu0
        %v1821 = vadd.f32 %v701, %v1820
        %v1822 = vpop.f32.mrb[0].mxu0
        %v1823 = vadd.f32 %v701, %v1822
        %1824 = vmatprep.mubr.bf16.mxu0 0
        %1825 = vmatmul.mubr.bf16.gmra.mrb[0].mxu0 %v1428
        %v1826 = vpop.f32.mrb[0].mxu0
        %v1827 = vadd.f32 %v706, %v1826
        %v1828 = vpop.f32.mrb[0].mxu0
        %v1829 = vadd.f32 %v706, %v1828
        %v1830 = vpop.f32.mrb[0].mxu0
        %v1831 = vadd.f32 %v711, %v1830
        %v1832 = vpop.f32.mrb[0].mxu0
        %v1833 = vadd.f32 %v711, %v1832
        %1834 = vmatprep.mubr.bf16.mxu0 0
        %1835 = vmatmul.mubr.bf16.gmra.mrb[0].mxu0 %v1431
        %v1836 = vpop.f32.mrb[0].mxu0
        %v1837 = vadd.f32 %v716, %v1836
        %v1838 = vpop.f32.mrb[0].mxu0
        %v1839 = vadd.f32 %v716, %v1838
        %v1840 = vpop.f32.mrb[0].mxu0
        %v1841 = vadd.f32 %v721, %v1840
        %v1842 = vpop.f32.mrb[0].mxu0
        %v1843 = vadd.f32 %v721, %v1842
        %1844 = vmatprep.mubr.bf16.mxu0 0
        %1845 = vmatmul.mubr.bf16.gmra.mrb[0].mxu0 %v1434
        %v1846 = vpop.f32.mrb[0].mxu0
        %v1847 = vadd.f32 %v726, %v1846
        %v1848 = vpop.f32.mrb[0].mxu0
        %v1849 = vadd.f32 %v726, %v1848
        %v1850 = vpop.f32.mrb[0].mxu0
        %v1851 = vadd.f32 %v731, %v1850
        %v1852 = vpop.f32.mrb[0].mxu0
        %v1853 = vadd.f32 %v731, %v1852
        %1854 = vmatprep.mubr.bf16.mxu0 0
        %1855 = vmatmul.mubr.bf16.gmra.mrb[0].mxu0 %v1437
        %v1856 = vpop.f32.mrb[0].mxu0
        %v1857 = vadd.f32 %v736, %v1856
        %v1858 = vpop.f32.mrb[0].mxu0
        %v1859 = vadd.f32 %v736, %v1858
        %v1860 = vpop.f32.mrb[0].mxu0
        %v1861 = vadd.f32 %v741, %v1860
        %v1862 = vpop.f32.mrb[0].mxu0
        %v1863 = vadd.f32 %v741, %v1862
        %1864 = vmatprep.mubr.bf16.mxu0 0
        %1865 = vmatmul.mubr.bf16.gmra.mrb[0].mxu0 %v1440
        %v1866 = vpop.f32.mrb[0].mxu0
        %v1867 = vadd.f32 %v746, %v1866
        %v1868 = vpop.f32.mrb[0].mxu0
        %v1869 = vadd.f32 %v746, %v1868
        %v1870 = vpop.f32.mrb[0].mxu0
        %v1871 = vadd.f32 %v751, %v1870
        %v1872 = vpop.f32.mrb[0].mxu0
        %v1873 = vadd.f32 %v751, %v1872
        %1874 = vmatprep.mubr.bf16.mxu0 0
        %1875 = vmatmul.mubr.bf16.gmra.mrb[0].mxu0 %v1443
        %v1876 = vpop.f32.mrb[0].mxu0
        %v1877 = vadd.f32 %v756, %v1876
        %v1878 = vpop.f32.mrb[0].mxu0
        %v1879 = vadd.f32 %v756, %v1878
        %v1880 = vpop.f32.mrb[0].mxu0
        %v1881 = vadd.f32 %v761, %v1880
        %v1882 = vpop.f32.mrb[0].mxu0
        %v1883 = vadd.f32 %v761, %v1882
        %1884 = vmatprep.mubr.bf16.mxu0 0
        %1885 = vmatmul.mubr.bf16.gmra.mrb[0].mxu0 %v1446
        %v1886 = vpop.f32.mrb[0].mxu0
        %v1887 = vadd.f32 %v766, %v1886
        %v1888 = vpop.f32.mrb[0].mxu0
        %v1889 = vadd.f32 %v766, %v1888
        %v1890 = vpop.f32.mrb[0].mxu0
        %v1891 = vadd.f32 %v771, %v1890
        %v1892 = vpop.f32.mrb[0].mxu0
        %v1893 = vadd.f32 %v771, %v1892
        %1894 = vmatprep.mubr.bf16.mxu0 0
        %1895 = vmatmul.mubr.bf16.gmra.mrb[0].mxu0 %v1449
        %v1896 = vpop.f32.mrb[0].mxu0
        %v1897 = vadd.f32 %v776, %v1896
        %v1898 = vpop.f32.mrb[0].mxu0
        %v1899 = vadd.f32 %v776, %v1898
        %v1900 = vpop.f32.mrb[0].mxu0
        %v1901 = vadd.f32 %v781, %v1900
        %v1902 = vpop.f32.mrb[0].mxu0
        %v1903 = vadd.f32 %v781, %v1902
        %1904 = vmatprep.mubr.bf16.mxu0 0
        %1905 = vmatmul.mubr.bf16.gmra.mrb[0].mxu0 %v1452
        %v1906 = vpop.f32.mrb[0].mxu0
        %v1907 = vadd.f32 %v786, %v1906
        %v1908 = vpop.f32.mrb[0].mxu0
        %v1909 = vadd.f32 %v786, %v1908
        %v1910 = vpop.f32.mrb[0].mxu0
        %v1911 = vadd.f32 %v791, %v1910
        %v1912 = vpop.f32.mrb[0].mxu0
        %v1913 = vadd.f32 %v791, %v1912
        %1914 = vmatprep.mubr.bf16.mxu0 0
        %1915 = vmatmul.mubr.bf16.gmra.mrb[0].mxu0 %v1455
        %v1916 = vpop.f32.mrb[0].mxu0
        %v1917 = vadd.f32 %v796, %v1916
        %v1918 = vpop.f32.mrb[0].mxu0
        %v1919 = vadd.f32 %v796, %v1918
        %v1920 = vpop.f32.mrb[0].mxu0
        %v1921 = vadd.f32 %v801, %v1920
        %v1922 = vpop.f32.mrb[0].mxu0
        %v1923 = vadd.f32 %v801, %v1922
        %1924 = vmatprep.mubr.bf16.mxu0 0
        %1925 = vmatmul.mubr.bf16.gmra.mrb[0].mxu0 %v1458
        %v1926 = vpop.f32.mrb[0].mxu0
        %v1927 = vadd.f32 %v806, %v1926
        %v1928 = vpop.f32.mrb[0].mxu0
        %v1929 = vadd.f32 %v806, %v1928
        %v1930 = vpop.f32.mrb[0].mxu0
        %v1931 = vadd.f32 %v811, %v1930
        %v1932 = vpop.f32.mrb[0].mxu0
        %v1933 = vadd.f32 %v811, %v1932
        %1934 = vmatprep.mubr.bf16.mxu0 0
        %1935 = vmatmul.mubr.bf16.gmra.mrb[0].mxu0 %v1461
        %v1936 = vpop.f32.mrb[0].mxu0
        %v1937 = vadd.f32 %v816, %v1936
        %v1938 = vpop.f32.mrb[0].mxu0
        %v1939 = vadd.f32 %v816, %v1938
        %v1940 = vpop.f32.mrb[0].mxu0
        %v1941 = vadd.f32 %v821, %v1940
        %v1942 = vpop.f32.mrb[0].mxu0
        %v1943 = vadd.f32 %v821, %v1942
        %1944 = vmatprep.mubr.bf16.mxu0 0
        %1945 = vmatmul.mubr.bf16.gmra.mrb[0].mxu0 %v1464
        %v1946 = vpop.f32.mrb[0].mxu0
        %v1947 = vadd.f32 %v826, %v1946
        %v1948 = vpop.f32.mrb[0].mxu0
        %v1949 = vadd.f32 %v826, %v1948
        %v1950 = vpop.f32.mrb[0].mxu0
        %v1951 = vadd.f32 %v831, %v1950
        %v1952 = vpop.f32.mrb[0].mxu0
        %v1953 = vadd.f32 %v831, %v1952
        %1954 = vmatprep.mubr.bf16.mxu0 0
        %1955 = vmatmul.mubr.bf16.gmra.mrb[0].mxu0 %v1467
        %v1956 = vpop.f32.mrb[0].mxu0
        %v1957 = vadd.f32 %v836, %v1956
        %v1958 = vpop.f32.mrb[0].mxu0
        %v1959 = vadd.f32 %v836, %v1958
        %v1960 = vpop.f32.mrb[0].mxu0
        %v1961 = vadd.f32 %v841, %v1960
        %v1962 = vpop.f32.mrb[0].mxu0
        %v1963 = vadd.f32 %v841, %v1962
        %1964 = vmatprep.mubr.bf16.mxu0 0
        %1965 = vmatmul.mubr.bf16.gmra.mrb[0].mxu0 %v1470
        %v1966 = vpop.f32.mrb[0].mxu0
        %v1967 = vadd.f32 %v846, %v1966
        %v1968 = vpop.f32.mrb[0].mxu0
        %v1969 = vadd.f32 %v846, %v1968
        %v1970 = vpop.f32.mrb[0].mxu0
        %v1971 = vadd.f32 %v851, %v1970
        %v1972 = vpop.f32.mrb[0].mxu0
        %v1973 = vadd.f32 %v851, %v1972
        %1974 = vmatprep.mubr.bf16.mxu0 0
        %1975 = vmatmul.mubr.bf16.gmra.mrb[0].mxu0 %v1473
        %v1976 = vpop.f32.mrb[0].mxu0
        %v1977 = vadd.f32 %v856, %v1976
        %v1978 = vpop.f32.mrb[0].mxu0
        %v1979 = vadd.f32 %v856, %v1978
        %v1980 = vpop.f32.mrb[0].mxu0
        %v1981 = vadd.f32 %v861, %v1980
        %v1982 = vpop.f32.mrb[0].mxu0
        %v1983 = vadd.f32 %v861, %v1982
        %1984 = vmatprep.mubr.bf16.mxu0 0
        %1985 = vmatmul.mubr.bf16.gmra.mrb[0].mxu0 %v1476
        %v1986 = vpop.f32.mrb[0].mxu0
        %v1987 = vadd.f32 %v866, %v1986
        %v1988 = vpop.f32.mrb[0].mxu0
        %v1989 = vadd.f32 %v866, %v1988
        %v1990 = vpop.f32.mrb[0].mxu0
        %v1991 = vadd.f32 %v871, %v1990
        %v1992 = vpop.f32.mrb[0].mxu0
        %v1993 = vadd.f32 %v871, %v1992
        %1994 = vmatprep.mubr.bf16.mxu0 0
        %1995 = vmatmul.mubr.bf16.gmra.mrb[0].mxu0 %v1479
        %v1996 = vpop.f32.mrb[0].mxu0
        %v1997 = vadd.f32 %v876, %v1996
        %v1998 = vpop.f32.mrb[0].mxu0
        %v1999 = vadd.f32 %v876, %v1998
        %v2000 = vpop.f32.mrb[0].mxu0
        %v2001 = vadd.f32 %v881, %v2000
        %v2002 = vpop.f32.mrb[0].mxu0
        %v2003 = vadd.f32 %v881, %v2002
        %2004 = vmatprep.mubr.bf16.mxu0 0
        %2005 = vmatmul.mubr.bf16.gmra.mrb[0].mxu0 %v1482
        %v2006 = vpop.f32.mrb[0].mxu0
        %v2007 = vadd.f32 %v886, %v2006
        %v2008 = vpop.f32.mrb[0].mxu0
        %v2009 = vadd.f32 %v886, %v2008
        %v2010 = vpop.f32.mrb[0].mxu0
        %v2011 = vadd.f32 %v891, %v2010
        %v2012 = vpop.f32.mrb[0].mxu0
        %v2013 = vadd.f32 %v891, %v2012
        %2014 = vmatprep.mubr.bf16.mxu0 0
        %2015 = vmatmul.mubr.bf16.gmra.mrb[0].mxu0 %v1485
        %v2016 = vpop.f32.mrb[0].mxu0
        %v2017 = vadd.f32 %v896, %v2016
        %v2018 = vpop.f32.mrb[0].mxu0
        %v2019 = vadd.f32 %v896, %v2018
        %v2020 = vpop.f32.mrb[0].mxu0
        %v2021 = vadd.f32 %v901, %v2020
        %v2022 = vpop.f32.mrb[0].mxu0
        %v2023 = vadd.f32 %v901, %v2022
        %2024 = vmatprep.mubr.bf16.mxu0 0
        %2025 = vmatmul.mubr.bf16.gmra.mrb[0].mxu0 %v1488
        %v2026 = vpop.f32.mrb[0].mxu0
        %v2027 = vadd.f32 %v906, %v2026
        %v2028 = vpop.f32.mrb[0].mxu0
        %v2029 = vadd.f32 %v906, %v2028
        %v2030 = vpop.f32.mrb[0].mxu0
        %v2031 = vadd.f32 %v911, %v2030
        %v2032 = vpop.f32.mrb[0].mxu0
        %v2033 = vadd.f32 %v911, %v2032
        %2034 = vdwg.mxu0
        %2035 = vmatprep.subr.bf16.mxu0 0
        %2036 = vmatpush1.bf16.xpose.msra.mxu0 %v1539
        %2037 = vmatprep.subr.bf16.mxu0 0
        %2038 = vmatpush1.bf16.xpose.msra.mxu0 %v1542
        %2039 = vmatprep.subr.bf16.mxu0 0
        %2040 = vmatpush1.bf16.xpose.msra.mxu0 %v1545
        %2041 = vmatprep.subr.bf16.mxu0 0
        %2042 = vmatpush1.bf16.xpose.msra.mxu0 %v1548
        %2043 = vmatprep.subr.bf16.mxu0 0
        %2044 = vmatpush1.bf16.xpose.msra.mxu0 %v1551
        %2045 = vmatprep.subr.bf16.mxu0 0
        %2046 = vmatpush1.bf16.xpose.msra.mxu0 %v1554
        %2047 = vmatprep.subr.bf16.mxu0 0
        %2048 = vmatpush1.bf16.xpose.msra.mxu0 %v1557
        %2049 = vmatprep.subr.bf16.mxu0 0
        %2050 = vmatpush1.bf16.xpose.msra.mxu0 %v1560
        %2051 = vmatprep.subr.bf16.mxu0 0
        %2052 = vmatpush1.bf16.xpose.msra.mxu0 %v1563
        %2053 = vmatprep.subr.bf16.mxu0 0
        %2054 = vmatpush1.bf16.xpose.msra.mxu0 %v1566
        %2055 = vmatprep.subr.bf16.mxu0 0
        %2056 = vmatpush1.bf16.xpose.msra.mxu0 %v1569
        %2057 = vmatprep.subr.bf16.mxu0 0
        %2058 = vmatpush1.bf16.xpose.msra.mxu0 %v1572
        %2059 = vmatprep.subr.bf16.mxu0 0
        %2060 = vmatpush1.bf16.xpose.msra.mxu0 %v1575
        %2061 = vmatprep.subr.bf16.mxu0 0
        %2062 = vmatpush1.bf16.xpose.msra.mxu0 %v1578
        %2063 = vmatprep.subr.bf16.mxu0 0
        %2064 = vmatpush1.bf16.xpose.msra.mxu0 %v1581
        %2065 = vmatprep.subr.bf16.mxu0 0
        %2066 = vmatpush1.bf16.xpose.msra.mxu0 %v1584
        %2067 = vmatprep.mubr.bf16.mxu0 0
        %2068 = vmatmul.mubr.bf16.gmra.mrb[0].mxu0 %v1395
        %v2069 = vpop.f32.mrb[0].mxu0
        %v2070 = vadd.f32 %v596, %v2069
        %v2071 = vpop.f32.mrb[0].mxu0
        %v2072 = vadd.f32 %v596, %v2071
        %v2073 = vpop.f32.mrb[0].mxu0
        %v2074 = vadd.f32 %v601, %v2073
        %v2075 = vpop.f32.mrb[0].mxu0
        %v2076 = vadd.f32 %v601, %v2075
        %2077 = vmatprep.mubr.bf16.mxu0 0
        %2078 = vmatmul.mubr.bf16.gmra.mrb[0].mxu0 %v1398
        %v2079 = vpop.f32.mrb[0].mxu0
        %v2080 = vadd.f32 %v606, %v2079
        %v2081 = vpop.f32.mrb[0].mxu0
        %v2082 = vadd.f32 %v606, %v2081
        %v2083 = vpop.f32.mrb[0].mxu0
        %v2084 = vadd.f32 %v611, %v2083
        %v2085 = vpop.f32.mrb[0].mxu0
        %v2086 = vadd.f32 %v611, %v2085
        %2087 = vmatprep.mubr.bf16.mxu0 0
        %2088 = vmatmul.mubr.bf16.gmra.mrb[0].mxu0 %v1401
        %v2089 = vpop.f32.mrb[0].mxu0
        %v2090 = vadd.f32 %v616, %v2089
        %v2091 = vpop.f32.mrb[0].mxu0
        %v2092 = vadd.f32 %v616, %v2091
        %v2093 = vpop.f32.mrb[0].mxu0
        %v2094 = vadd.f32 %v621, %v2093
        %v2095 = vpop.f32.mrb[0].mxu0
        %v2096 = vadd.f32 %v621, %v2095
        %2097 = vmatprep.mubr.bf16.mxu0 0
        %2098 = vmatmul.mubr.bf16.gmra.mrb[0].mxu0 %v1404
        %v2099 = vpop.f32.mrb[0].mxu0
        %v2100 = vadd.f32 %v626, %v2099
        %v2101 = vpop.f32.mrb[0].mxu0
        %v2102 = vadd.f32 %v626, %v2101
        %v2103 = vpop.f32.mrb[0].mxu0
        %v2104 = vadd.f32 %v631, %v2103
        %v2105 = vpop.f32.mrb[0].mxu0
        %v2106 = vadd.f32 %v631, %v2105
        %2107 = vmatprep.mubr.bf16.mxu0 0
        %2108 = vmatmul.mubr.bf16.gmra.mrb[0].mxu0 %v1407
        %v2109 = vpop.f32.mrb[0].mxu0
        %v2110 = vadd.f32 %v636, %v2109
        %v2111 = vpop.f32.mrb[0].mxu0
        %v2112 = vadd.f32 %v636, %v2111
        %v2113 = vpop.f32.mrb[0].mxu0
        %v2114 = vadd.f32 %v641, %v2113
        %v2115 = vpop.f32.mrb[0].mxu0
        %v2116 = vadd.f32 %v641, %v2115
        %2117 = vmatprep.mubr.bf16.mxu0 0
        %2118 = vmatmul.mubr.bf16.gmra.mrb[0].mxu0 %v1410
        %v2119 = vpop.f32.mrb[0].mxu0
        %v2120 = vadd.f32 %v646, %v2119
        %v2121 = vpop.f32.mrb[0].mxu0
        %v2122 = vadd.f32 %v646, %v2121
        %v2123 = vpop.f32.mrb[0].mxu0
        %v2124 = vadd.f32 %v651, %v2123
        %v2125 = vpop.f32.mrb[0].mxu0
        %v2126 = vadd.f32 %v651, %v2125
        %2127 = vmatprep.mubr.bf16.mxu0 0
        %2128 = vmatmul.mubr.bf16.gmra.mrb[0].mxu0 %v1413
        %v2129 = vpop.f32.mrb[0].mxu0
        %v2130 = vadd.f32 %v656, %v2129
        %v2131 = vpop.f32.mrb[0].mxu0
        %v2132 = vadd.f32 %v656, %v2131
        %v2133 = vpop.f32.mrb[0].mxu0
        %v2134 = vadd.f32 %v661, %v2133
        %v2135 = vpop.f32.mrb[0].mxu0
        %v2136 = vadd.f32 %v661, %v2135
        %2137 = vmatprep.mubr.bf16.mxu0 0
        %2138 = vmatmul.mubr.bf16.gmra.mrb[0].mxu0 %v1416
        %v2139 = vpop.f32.mrb[0].mxu0
        %v2140 = vadd.f32 %v666, %v2139
        %v2141 = vpop.f32.mrb[0].mxu0
        %v2142 = vadd.f32 %v666, %v2141
        %v2143 = vpop.f32.mrb[0].mxu0
        %v2144 = vadd.f32 %v671, %v2143
        %v2145 = vpop.f32.mrb[0].mxu0
        %v2146 = vadd.f32 %v671, %v2145
        %2147 = vmatprep.mubr.bf16.mxu0 0
        %2148 = vmatmul.mubr.bf16.gmra.mrb[0].mxu0 %v1419
        %v2149 = vpop.f32.mrb[0].mxu0
        %v2150 = vadd.f32 %v676, %v2149
        %v2151 = vpop.f32.mrb[0].mxu0
        %v2152 = vadd.f32 %v676, %v2151
        %v2153 = vpop.f32.mrb[0].mxu0
        %v2154 = vadd.f32 %v681, %v2153
        %v2155 = vpop.f32.mrb[0].mxu0
        %v2156 = vadd.f32 %v681, %v2155
        %2157 = vmatprep.mubr.bf16.mxu0 0
        %2158 = vmatmul.mubr.bf16.gmra.mrb[0].mxu0 %v1422
        %v2159 = vpop.f32.mrb[0].mxu0
        %v2160 = vadd.f32 %v686, %v2159
        %v2161 = vpop.f32.mrb[0].mxu0
        %v2162 = vadd.f32 %v686, %v2161
        %v2163 = vpop.f32.mrb[0].mxu0
        %v2164 = vadd.f32 %v691, %v2163
        %v2165 = vpop.f32.mrb[0].mxu0
        %v2166 = vadd.f32 %v691, %v2165
        %2167 = vmatprep.mubr.bf16.mxu0 0
        %2168 = vmatmul.mubr.bf16.gmra.mrb[0].mxu0 %v1425
        %v2169 = vpop.f32.mrb[0].mxu0
        %v2170 = vadd.f32 %v696, %v2169
        %v2171 = vpop.f32.mrb[0].mxu0
        %v2172 = vadd.f32 %v696, %v2171
        %v2173 = vpop.f32.mrb[0].mxu0
        %v2174 = vadd.f32 %v701, %v2173
        %v2175 = vpop.f32.mrb[0].mxu0
        %v2176 = vadd.f32 %v701, %v2175
        %2177 = vmatprep.mubr.bf16.mxu0 0
        %2178 = vmatmul.mubr.bf16.gmra.mrb[0].mxu0 %v1428
        %v2179 = vpop.f32.mrb[0].mxu0
        %v2180 = vadd.f32 %v706, %v2179
        %v2181 = vpop.f32.mrb[0].mxu0
        %v2182 = vadd.f32 %v706, %v2181
        %v2183 = vpop.f32.mrb[0].mxu0
        %v2184 = vadd.f32 %v711, %v2183
        %v2185 = vpop.f32.mrb[0].mxu0
        %v2186 = vadd.f32 %v711, %v2185
        %2187 = vmatprep.mubr.bf16.mxu0 0
        %2188 = vmatmul.mubr.bf16.gmra.mrb[0].mxu0 %v1431
        %v2189 = vpop.f32.mrb[0].mxu0
        %v2190 = vadd.f32 %v716, %v2189
        %v2191 = vpop.f32.mrb[0].mxu0
        %v2192 = vadd.f32 %v716, %v2191
        %v2193 = vpop.f32.mrb[0].mxu0
        %v2194 = vadd.f32 %v721, %v2193
        %v2195 = vpop.f32.mrb[0].mxu0
        %v2196 = vadd.f32 %v721, %v2195
        %2197 = vmatprep.mubr.bf16.mxu0 0
        %2198 = vmatmul.mubr.bf16.gmra.mrb[0].mxu0 %v1434
        %v2199 = vpop.f32.mrb[0].mxu0
        %v2200 = vadd.f32 %v726, %v2199
        %v2201 = vpop.f32.mrb[0].mxu0
        %v2202 = vadd.f32 %v726, %v2201
        %v2203 = vpop.f32.mrb[0].mxu0
        %v2204 = vadd.f32 %v731, %v2203
        %v2205 = vpop.f32.mrb[0].mxu0
        %v2206 = vadd.f32 %v731, %v2205
        %2207 = vmatprep.mubr.bf16.mxu0 0
        %2208 = vmatmul.mubr.bf16.gmra.mrb[0].mxu0 %v1437
        %v2209 = vpop.f32.mrb[0].mxu0
        %v2210 = vadd.f32 %v736, %v2209
        %v2211 = vpop.f32.mrb[0].mxu0
        %v2212 = vadd.f32 %v736, %v2211
        %v2213 = vpop.f32.mrb[0].mxu0
        %v2214 = vadd.f32 %v741, %v2213
        %v2215 = vpop.f32.mrb[0].mxu0
        %v2216 = vadd.f32 %v741, %v2215
        %2217 = vmatprep.mubr.bf16.mxu0 0
        %2218 = vmatmul.mubr.bf16.gmra.mrb[0].mxu0 %v1440
        %v2219 = vpop.f32.mrb[0].mxu0
        %v2220 = vadd.f32 %v746, %v2219
        %v2221 = vpop.f32.mrb[0].mxu0
        %v2222 = vadd.f32 %v746, %v2221
        %v2223 = vpop.f32.mrb[0].mxu0
        %v2224 = vadd.f32 %v751, %v2223
        %v2225 = vpop.f32.mrb[0].mxu0
        %v2226 = vadd.f32 %v751, %v2225
        %2227 = vmatprep.mubr.bf16.mxu0 0
        %2228 = vmatmul.mubr.bf16.gmra.mrb[0].mxu0 %v1443
        %v2229 = vpop.f32.mrb[0].mxu0
        %v2230 = vadd.f32 %v756, %v2229
        %v2231 = vpop.f32.mrb[0].mxu0
        %v2232 = vadd.f32 %v756, %v2231
        %v2233 = vpop.f32.mrb[0].mxu0
        %v2234 = vadd.f32 %v761, %v2233
        %v2235 = vpop.f32.mrb[0].mxu0
        %v2236 = vadd.f32 %v761, %v2235
        %2237 = vmatprep.mubr.bf16.mxu0 0
        %2238 = vmatmul.mubr.bf16.gmra.mrb[0].mxu0 %v1446
        %v2239 = vpop.f32.mrb[0].mxu0
        %v2240 = vadd.f32 %v766, %v2239
        %v2241 = vpop.f32.mrb[0].mxu0
        %v2242 = vadd.f32 %v766, %v2241
        %v2243 = vpop.f32.mrb[0].mxu0
        %v2244 = vadd.f32 %v771, %v2243
        %v2245 = vpop.f32.mrb[0].mxu0
        %v2246 = vadd.f32 %v771, %v2245
        %2247 = vmatprep.mubr.bf16.mxu0 0
        %2248 = vmatmul.mubr.bf16.gmra.mrb[0].mxu0 %v1449
        %v2249 = vpop.f32.mrb[0].mxu0
        %v2250 = vadd.f32 %v776, %v2249
        %v2251 = vpop.f32.mrb[0].mxu0
        %v2252 = vadd.f32 %v776, %v2251
        %v2253 = vpop.f32.mrb[0].mxu0
        %v2254 = vadd.f32 %v781, %v2253
        %v2255 = vpop.f32.mrb[0].mxu0
        %v2256 = vadd.f32 %v781, %v2255
        %2257 = vmatprep.mubr.bf16.mxu0 0
        %2258 = vmatmul.mubr.bf16.gmra.mrb[0].mxu0 %v1452
        %v2259 = vpop.f32.mrb[0].mxu0
        %v2260 = vadd.f32 %v786, %v2259
        %v2261 = vpop.f32.mrb[0].mxu0
        %v2262 = vadd.f32 %v786, %v2261
        %v2263 = vpop.f32.mrb[0].mxu0
        %v2264 = vadd.f32 %v791, %v2263
        %v2265 = vpop.f32.mrb[0].mxu0
        %v2266 = vadd.f32 %v791, %v2265
        %2267 = vmatprep.mubr.bf16.mxu0 0
        %2268 = vmatmul.mubr.bf16.gmra.mrb[0].mxu0 %v1455
        %v2269 = vpop.f32.mrb[0].mxu0
        %v2270 = vadd.f32 %v796, %v2269
        %v2271 = vpop.f32.mrb[0].mxu0
        %v2272 = vadd.f32 %v796, %v2271
        %v2273 = vpop.f32.mrb[0].mxu0
        %v2274 = vadd.f32 %v801, %v2273
        %v2275 = vpop.f32.mrb[0].mxu0
        %v2276 = vadd.f32 %v801, %v2275
        %2277 = vmatprep.mubr.bf16.mxu0 0
        %2278 = vmatmul.mubr.bf16.gmra.mrb[0].mxu0 %v1458
        %v2279 = vpop.f32.mrb[0].mxu0
        %v2280 = vadd.f32 %v806, %v2279
        %v2281 = vpop.f32.mrb[0].mxu0
        %v2282 = vadd.f32 %v806, %v2281
        %v2283 = vpop.f32.mrb[0].mxu0
        %v2284 = vadd.f32 %v811, %v2283
        %v2285 = vpop.f32.mrb[0].mxu0
        %v2286 = vadd.f32 %v811, %v2285
        %2287 = vmatprep.mubr.bf16.mxu0 0
        %2288 = vmatmul.mubr.bf16.gmra.mrb[0].mxu0 %v1461
        %v2289 = vpop.f32.mrb[0].mxu0
        %v2290 = vadd.f32 %v816, %v2289
        %v2291 = vpop.f32.mrb[0].mxu0
        %v2292 = vadd.f32 %v816, %v2291
        %v2293 = vpop.f32.mrb[0].mxu0
        %v2294 = vadd.f32 %v821, %v2293
        %v2295 = vpop.f32.mrb[0].mxu0
        %v2296 = vadd.f32 %v821, %v2295
        %2297 = vmatprep.mubr.bf16.mxu0 0
        %2298 = vmatmul.mubr.bf16.gmra.mrb[0].mxu0 %v1464
        %v2299 = vpop.f32.mrb[0].mxu0
        %v2300 = vadd.f32 %v826, %v2299
        %v2301 = vpop.f32.mrb[0].mxu0
        %v2302 = vadd.f32 %v826, %v2301
        %v2303 = vpop.f32.mrb[0].mxu0
        %v2304 = vadd.f32 %v831, %v2303
        %v2305 = vpop.f32.mrb[0].mxu0
        %v2306 = vadd.f32 %v831, %v2305
        %2307 = vmatprep.mubr.bf16.mxu0 0
        %2308 = vmatmul.mubr.bf16.gmra.mrb[0].mxu0 %v1467
        %v2309 = vpop.f32.mrb[0].mxu0
        %v2310 = vadd.f32 %v836, %v2309
        %v2311 = vpop.f32.mrb[0].mxu0
        %v2312 = vadd.f32 %v836, %v2311
        %v2313 = vpop.f32.mrb[0].mxu0
        %v2314 = vadd.f32 %v841, %v2313
        %v2315 = vpop.f32.mrb[0].mxu0
        %v2316 = vadd.f32 %v841, %v2315
        %2317 = vmatprep.mubr.bf16.mxu0 0
        %2318 = vmatmul.mubr.bf16.gmra.mrb[0].mxu0 %v1470
        %v2319 = vpop.f32.mrb[0].mxu0
        %v2320 = vadd.f32 %v846, %v2319
        %v2321 = vpop.f32.mrb[0].mxu0
        %v2322 = vadd.f32 %v846, %v2321
        %v2323 = vpop.f32.mrb[0].mxu0
        %v2324 = vadd.f32 %v851, %v2323
        %v2325 = vpop.f32.mrb[0].mxu0
        %v2326 = vadd.f32 %v851, %v2325
        %2327 = vmatprep.mubr.bf16.mxu0 0
        %2328 = vmatmul.mubr.bf16.gmra.mrb[0].mxu0 %v1473
        %v2329 = vpop.f32.mrb[0].mxu0
        %v2330 = vadd.f32 %v856, %v2329
        %v2331 = vpop.f32.mrb[0].mxu0
        %v2332 = vadd.f32 %v856, %v2331
        %v2333 = vpop.f32.mrb[0].mxu0
        %v2334 = vadd.f32 %v861, %v2333
        %v2335 = vpop.f32.mrb[0].mxu0
        %v2336 = vadd.f32 %v861, %v2335
        %2337 = vmatprep.mubr.bf16.mxu0 0
        %2338 = vmatmul.mubr.bf16.gmra.mrb[0].mxu0 %v1476
        %v2339 = vpop.f32.mrb[0].mxu0
        %v2340 = vadd.f32 %v866, %v2339
        %v2341 = vpop.f32.mrb[0].mxu0
        %v2342 = vadd.f32 %v866, %v2341
        %v2343 = vpop.f32.mrb[0].mxu0
        %v2344 = vadd.f32 %v871, %v2343
        %v2345 = vpop.f32.mrb[0].mxu0
        %v2346 = vadd.f32 %v871, %v2345
        %2347 = vmatprep.mubr.bf16.mxu0 0
        %2348 = vmatmul.mubr.bf16.gmra.mrb[0].mxu0 %v1479
        %v2349 = vpop.f32.mrb[0].mxu0
        %v2350 = vadd.f32 %v876, %v2349
        %v2351 = vpop.f32.mrb[0].mxu0
        %v2352 = vadd.f32 %v876, %v2351
        %v2353 = vpop.f32.mrb[0].mxu0
        %v2354 = vadd.f32 %v881, %v2353
        %v2355 = vpop.f32.mrb[0].mxu0
        %v2356 = vadd.f32 %v881, %v2355
        %2357 = vmatprep.mubr.bf16.mxu0 0
        %2358 = vmatmul.mubr.bf16.gmra.mrb[0].mxu0 %v1482
        %v2359 = vpop.f32.mrb[0].mxu0
        %v2360 = vadd.f32 %v886, %v2359
        %v2361 = vpop.f32.mrb[0].mxu0
        %v2362 = vadd.f32 %v886, %v2361
        %v2363 = vpop.f32.mrb[0].mxu0
        %v2364 = vadd.f32 %v891, %v2363
        %v2365 = vpop.f32.mrb[0].mxu0
        %v2366 = vadd.f32 %v891, %v2365
        %2367 = vmatprep.mubr.bf16.mxu0 0
        %2368 = vmatmul.mubr.bf16.gmra.mrb[0].mxu0 %v1485
        %v2369 = vpop.f32.mrb[0].mxu0
        %v2370 = vadd.f32 %v896, %v2369
        %v2371 = vpop.f32.mrb[0].mxu0
        %v2372 = vadd.f32 %v896, %v2371
        %v2373 = vpop.f32.mrb[0].mxu0
        %v2374 = vadd.f32 %v901, %v2373
        %v2375 = vpop.f32.mrb[0].mxu0
        %v2376 = vadd.f32 %v901, %v2375
        %2377 = vmatprep.mubr.bf16.mxu0 0
        %2378 = vmatmul.mubr.bf16.gmra.mrb[0].mxu0 %v1488
        %v2379 = vpop.f32.mrb[0].mxu0
        %v2380 = vadd.f32 %v906, %v2379
        %v2381 = vpop.f32.mrb[0].mxu0
        %v2382 = vadd.f32 %v906, %v2381
        %v2383 = vpop.f32.mrb[0].mxu0
        %v2384 = vadd.f32 %v911, %v2383
        %v2385 = vpop.f32.mrb[0].mxu0
        %v2386 = vadd.f32 %v911, %v2385
        %2387 = vdwg.mxu0
        %2388 = vmatprep.subr.bf16.mxu0 0
        %2389 = vmatpush1.bf16.xpose.msra.mxu0 %v1587
        %2390 = vmatprep.subr.bf16.mxu0 0
        %2391 = vmatpush1.bf16.xpose.msra.mxu0 %v1590
        %2392 = vmatprep.subr.bf16.mxu0 0
        %2393 = vmatpush1.bf16.xpose.msra.mxu0 %v1593
        %2394 = vmatprep.subr.bf16.mxu0 0
        %2395 = vmatpush1.bf16.xpose.msra.mxu0 %v1596
        %2396 = vmatprep.subr.bf16.mxu0 0
        %2397 = vmatpush1.bf16.xpose.msra.mxu0 %v1599
        %2398 = vmatprep.subr.bf16.mxu0 0
        %2399 = vmatpush1.bf16.xpose.msra.mxu0 %v1602
        %2400 = vmatprep.subr.bf16.mxu0 0
        %2401 = vmatpush1.bf16.xpose.msra.mxu0 %v1605
        %2402 = vmatprep.subr.bf16.mxu0 0
        %2403 = vmatpush1.bf16.xpose.msra.mxu0 %v1608
        %2404 = vmatprep.subr.bf16.mxu0 0
        %2405 = vmatpush1.bf16.xpose.msra.mxu0 %v1611
        %2406 = vmatprep.subr.bf16.mxu0 0
        %2407 = vmatpush1.bf16.xpose.msra.mxu0 %v1614
        %2408 = vmatprep.subr.bf16.mxu0 0
        %2409 = vmatpush1.bf16.xpose.msra.mxu0 %v1617
        %2410 = vmatprep.subr.bf16.mxu0 0
        %2411 = vmatpush1.bf16.xpose.msra.mxu0 %v1620
        %2412 = vmatprep.subr.bf16.mxu0 0
        %2413 = vmatpush1.bf16.xpose.msra.mxu0 %v1623
        %2414 = vmatprep.subr.bf16.mxu0 0
        %2415 = vmatpush1.bf16.xpose.msra.mxu0 %v1626
        %2416 = vmatprep.subr.bf16.mxu0 0
        %2417 = vmatpush1.bf16.xpose.msra.mxu0 %v1629
        %2418 = vmatprep.subr.bf16.mxu0 0
        %2419 = vmatpush1.bf16.xpose.msra.mxu0 %v1632
        %2420 = vmatprep.mubr.bf16.mxu0 0
        %2421 = vmatmul.mubr.bf16.gmra.mrb[0].mxu0 %v1395
        %v2422 = vpop.f32.mrb[0].mxu0
        %v2423 = vadd.f32 %v596, %v2422
        %v2424 = vpop.f32.mrb[0].mxu0
        %v2425 = vadd.f32 %v596, %v2424
        %v2426 = vpop.f32.mrb[0].mxu0
        %v2427 = vadd.f32 %v601, %v2426
        %v2428 = vpop.f32.mrb[0].mxu0
        %v2429 = vadd.f32 %v601, %v2428
        %2430 = vmatprep.mubr.bf16.mxu0 0
        %2431 = vmatmul.mubr.bf16.gmra.mrb[0].mxu0 %v1398
        %v2432 = vpop.f32.mrb[0].mxu0
        %v2433 = vadd.f32 %v606, %v2432
        %v2434 = vpop.f32.mrb[0].mxu0
        %v2435 = vadd.f32 %v606, %v2434
        %v2436 = vpop.f32.mrb[0].mxu0
        %v2437 = vadd.f32 %v611, %v2436
        %v2438 = vpop.f32.mrb[0].mxu0
        %v2439 = vadd.f32 %v611, %v2438
        %2440 = vmatprep.mubr.bf16.mxu0 0
        %2441 = vmatmul.mubr.bf16.gmra.mrb[0].mxu0 %v1401
        %v2442 = vpop.f32.mrb[0].mxu0
        %v2443 = vadd.f32 %v616, %v2442
        %v2444 = vpop.f32.mrb[0].mxu0
        %v2445 = vadd.f32 %v616, %v2444
        %v2446 = vpop.f32.mrb[0].mxu0
        %v2447 = vadd.f32 %v621, %v2446
        %v2448 = vpop.f32.mrb[0].mxu0
        %v2449 = vadd.f32 %v621, %v2448
        %2450 = vmatprep.mubr.bf16.mxu0 0
        %2451 = vmatmul.mubr.bf16.gmra.mrb[0].mxu0 %v1404
        %v2452 = vpop.f32.mrb[0].mxu0
        %v2453 = vadd.f32 %v626, %v2452
        %v2454 = vpop.f32.mrb[0].mxu0
        %v2455 = vadd.f32 %v626, %v2454
        %v2456 = vpop.f32.mrb[0].mxu0
        %v2457 = vadd.f32 %v631, %v2456
        %v2458 = vpop.f32.mrb[0].mxu0
        %v2459 = vadd.f32 %v631, %v2458
        %2460 = vmatprep.mubr.bf16.mxu0 0
        %2461 = vmatmul.mubr.bf16.gmra.mrb[0].mxu0 %v1407
        %v2462 = vpop.f32.mrb[0].mxu0
        %v2463 = vadd.f32 %v636, %v2462
        %v2464 = vpop.f32.mrb[0].mxu0
        %v2465 = vadd.f32 %v636, %v2464
        %v2466 = vpop.f32.mrb[0].mxu0
        %v2467 = vadd.f32 %v641, %v2466
        %v2468 = vpop.f32.mrb[0].mxu0
        %v2469 = vadd.f32 %v641, %v2468
        %2470 = vmatprep.mubr.bf16.mxu0 0
        %2471 = vmatmul.mubr.bf16.gmra.mrb[0].mxu0 %v1410
        %v2472 = vpop.f32.mrb[0].mxu0
        %v2473 = vadd.f32 %v646, %v2472
        %v2474 = vpop.f32.mrb[0].mxu0
        %v2475 = vadd.f32 %v646, %v2474
        %v2476 = vpop.f32.mrb[0].mxu0
        %v2477 = vadd.f32 %v651, %v2476
        %v2478 = vpop.f32.mrb[0].mxu0
        %v2479 = vadd.f32 %v651, %v2478
        %2480 = vmatprep.mubr.bf16.mxu0 0
        %2481 = vmatmul.mubr.bf16.gmra.mrb[0].mxu0 %v1413
        %v2482 = vpop.f32.mrb[0].mxu0
        %v2483 = vadd.f32 %v656, %v2482
        %v2484 = vpop.f32.mrb[0].mxu0
        %v2485 = vadd.f32 %v656, %v2484
        %v2486 = vpop.f32.mrb[0].mxu0
        %v2487 = vadd.f32 %v661, %v2486
        %v2488 = vpop.f32.mrb[0].mxu0
        %v2489 = vadd.f32 %v661, %v2488
        %2490 = vmatprep.mubr.bf16.mxu0 0
        %2491 = vmatmul.mubr.bf16.gmra.mrb[0].mxu0 %v1416
        %v2492 = vpop.f32.mrb[0].mxu0
        %v2493 = vadd.f32 %v666, %v2492
        %v2494 = vpop.f32.mrb[0].mxu0
        %v2495 = vadd.f32 %v666, %v2494
        %v2496 = vpop.f32.mrb[0].mxu0
        %v2497 = vadd.f32 %v671, %v2496
        %v2498 = vpop.f32.mrb[0].mxu0
        %v2499 = vadd.f32 %v671, %v2498
        %2500 = vmatprep.mubr.bf16.mxu0 0
        %2501 = vmatmul.mubr.bf16.gmra.mrb[0].mxu0 %v1419
        %v2502 = vpop.f32.mrb[0].mxu0
        %v2503 = vadd.f32 %v676, %v2502
        %v2504 = vpop.f32.mrb[0].mxu0
        %v2505 = vadd.f32 %v676, %v2504
        %v2506 = vpop.f32.mrb[0].mxu0
        %v2507 = vadd.f32 %v681, %v2506
        %v2508 = vpop.f32.mrb[0].mxu0
        %v2509 = vadd.f32 %v681, %v2508
        %2510 = vmatprep.mubr.bf16.mxu0 0
        %2511 = vmatmul.mubr.bf16.gmra.mrb[0].mxu0 %v1422
        %v2512 = vpop.f32.mrb[0].mxu0
        %v2513 = vadd.f32 %v686, %v2512
        %v2514 = vpop.f32.mrb[0].mxu0
        %v2515 = vadd.f32 %v686, %v2514
        %v2516 = vpop.f32.mrb[0].mxu0
        %v2517 = vadd.f32 %v691, %v2516
        %v2518 = vpop.f32.mrb[0].mxu0
        %v2519 = vadd.f32 %v691, %v2518
        %2520 = vmatprep.mubr.bf16.mxu0 0
        %2521 = vmatmul.mubr.bf16.gmra.mrb[0].mxu0 %v1425
        %v2522 = vpop.f32.mrb[0].mxu0
        %v2523 = vadd.f32 %v696, %v2522
        %v2524 = vpop.f32.mrb[0].mxu0
        %v2525 = vadd.f32 %v696, %v2524
        %v2526 = vpop.f32.mrb[0].mxu0
        %v2527 = vadd.f32 %v701, %v2526
        %v2528 = vpop.f32.mrb[0].mxu0
        %v2529 = vadd.f32 %v701, %v2528
        %2530 = vmatprep.mubr.bf16.mxu0 0
        %2531 = vmatmul.mubr.bf16.gmra.mrb[0].mxu0 %v1428
        %v2532 = vpop.f32.mrb[0].mxu0
        %v2533 = vadd.f32 %v706, %v2532
        %v2534 = vpop.f32.mrb[0].mxu0
        %v2535 = vadd.f32 %v706, %v2534
        %v2536 = vpop.f32.mrb[0].mxu0
        %v2537 = vadd.f32 %v711, %v2536
        %v2538 = vpop.f32.mrb[0].mxu0
        %v2539 = vadd.f32 %v711, %v2538
        %2540 = vmatprep.mubr.bf16.mxu0 0
        %2541 = vmatmul.mubr.bf16.gmra.mrb[0].mxu0 %v1431
        %v2542 = vpop.f32.mrb[0].mxu0
        %v2543 = vadd.f32 %v716, %v2542
        %v2544 = vpop.f32.mrb[0].mxu0
        %v2545 = vadd.f32 %v716, %v2544
        %v2546 = vpop.f32.mrb[0].mxu0
        %v2547 = vadd.f32 %v721, %v2546
        %v2548 = vpop.f32.mrb[0].mxu0
        %v2549 = vadd.f32 %v721, %v2548
        %2550 = vmatprep.mubr.bf16.mxu0 0
        %2551 = vmatmul.mubr.bf16.gmra.mrb[0].mxu0 %v1434
        %v2552 = vpop.f32.mrb[0].mxu0
        %v2553 = vadd.f32 %v726, %v2552
        %v2554 = vpop.f32.mrb[0].mxu0
        %v2555 = vadd.f32 %v726, %v2554
        %v2556 = vpop.f32.mrb[0].mxu0
        %v2557 = vadd.f32 %v731, %v2556
        %v2558 = vpop.f32.mrb[0].mxu0
        %v2559 = vadd.f32 %v731, %v2558
        %2560 = vmatprep.mubr.bf16.mxu0 0
        %2561 = vmatmul.mubr.bf16.gmra.mrb[0].mxu0 %v1437
        %v2562 = vpop.f32.mrb[0].mxu0
        %v2563 = vadd.f32 %v736, %v2562
        %v2564 = vpop.f32.mrb[0].mxu0
        %v2565 = vadd.f32 %v736, %v2564
        %v2566 = vpop.f32.mrb[0].mxu0
        %v2567 = vadd.f32 %v741, %v2566
        %v2568 = vpop.f32.mrb[0].mxu0
        %v2569 = vadd.f32 %v741, %v2568
        %2570 = vmatprep.mubr.bf16.mxu0 0
        %2571 = vmatmul.mubr.bf16.gmra.mrb[0].mxu0 %v1440
        %v2572 = vpop.f32.mrb[0].mxu0
        %v2573 = vadd.f32 %v746, %v2572
        %v2574 = vpop.f32.mrb[0].mxu0
        %v2575 = vadd.f32 %v746, %v2574
        %v2576 = vpop.f32.mrb[0].mxu0
        %v2577 = vadd.f32 %v751, %v2576
        %v2578 = vpop.f32.mrb[0].mxu0
        %v2579 = vadd.f32 %v751, %v2578
        %2580 = vmatprep.mubr.bf16.mxu0 0
        %2581 = vmatmul.mubr.bf16.gmra.mrb[0].mxu0 %v1443
        %v2582 = vpop.f32.mrb[0].mxu0
        %v2583 = vadd.f32 %v756, %v2582
        %v2584 = vpop.f32.mrb[0].mxu0
        %v2585 = vadd.f32 %v756, %v2584
        %v2586 = vpop.f32.mrb[0].mxu0
        %v2587 = vadd.f32 %v761, %v2586
        %v2588 = vpop.f32.mrb[0].mxu0
        %v2589 = vadd.f32 %v761, %v2588
        %2590 = vmatprep.mubr.bf16.mxu0 0
        %2591 = vmatmul.mubr.bf16.gmra.mrb[0].mxu0 %v1446
        %v2592 = vpop.f32.mrb[0].mxu0
        %v2593 = vadd.f32 %v766, %v2592
        %v2594 = vpop.f32.mrb[0].mxu0
        %v2595 = vadd.f32 %v766, %v2594
        %v2596 = vpop.f32.mrb[0].mxu0
        %v2597 = vadd.f32 %v771, %v2596
        %v2598 = vpop.f32.mrb[0].mxu0
        %v2599 = vadd.f32 %v771, %v2598
        %2600 = vmatprep.mubr.bf16.mxu0 0
        %2601 = vmatmul.mubr.bf16.gmra.mrb[0].mxu0 %v1449
        %v2602 = vpop.f32.mrb[0].mxu0
        %v2603 = vadd.f32 %v776, %v2602
        %v2604 = vpop.f32.mrb[0].mxu0
        %v2605 = vadd.f32 %v776, %v2604
        %v2606 = vpop.f32.mrb[0].mxu0
        %v2607 = vadd.f32 %v781, %v2606
        %v2608 = vpop.f32.mrb[0].mxu0
        %v2609 = vadd.f32 %v781, %v2608
        %2610 = vmatprep.mubr.bf16.mxu0 0
        %2611 = vmatmul.mubr.bf16.gmra.mrb[0].mxu0 %v1452
        %v2612 = vpop.f32.mrb[0].mxu0
        %v2613 = vadd.f32 %v786, %v2612
        %v2614 = vpop.f32.mrb[0].mxu0
        %v2615 = vadd.f32 %v786, %v2614
        %v2616 = vpop.f32.mrb[0].mxu0
        %v2617 = vadd.f32 %v791, %v2616
        %v2618 = vpop.f32.mrb[0].mxu0
        %v2619 = vadd.f32 %v791, %v2618
        %2620 = vmatprep.mubr.bf16.mxu0 0
        %2621 = vmatmul.mubr.bf16.gmra.mrb[0].mxu0 %v1455
        %v2622 = vpop.f32.mrb[0].mxu0
        %v2623 = vadd.f32 %v796, %v2622
        %v2624 = vpop.f32.mrb[0].mxu0
        %v2625 = vadd.f32 %v796, %v2624
        %v2626 = vpop.f32.mrb[0].mxu0
        %v2627 = vadd.f32 %v801, %v2626
        %v2628 = vpop.f32.mrb[0].mxu0
        %v2629 = vadd.f32 %v801, %v2628
        %2630 = vmatprep.mubr.bf16.mxu0 0
        %2631 = vmatmul.mubr.bf16.gmra.mrb[0].mxu0 %v1458
        %v2632 = vpop.f32.mrb[0].mxu0
        %v2633 = vadd.f32 %v806, %v2632
        %v2634 = vpop.f32.mrb[0].mxu0
        %v2635 = vadd.f32 %v806, %v2634
        %v2636 = vpop.f32.mrb[0].mxu0
        %v2637 = vadd.f32 %v811, %v2636
        %v2638 = vpop.f32.mrb[0].mxu0
        %v2639 = vadd.f32 %v811, %v2638
        %2640 = vmatprep.mubr.bf16.mxu0 0
        %2641 = vmatmul.mubr.bf16.gmra.mrb[0].mxu0 %v1461
        %v2642 = vpop.f32.mrb[0].mxu0
        %v2643 = vadd.f32 %v816, %v2642
        %v2644 = vpop.f32.mrb[0].mxu0
        %v2645 = vadd.f32 %v816, %v2644
        %v2646 = vpop.f32.mrb[0].mxu0
        %v2647 = vadd.f32 %v821, %v2646
        %v2648 = vpop.f32.mrb[0].mxu0
        %v2649 = vadd.f32 %v821, %v2648
        %2650 = vmatprep.mubr.bf16.mxu0 0
        %2651 = vmatmul.mubr.bf16.gmra.mrb[0].mxu0 %v1464
        %v2652 = vpop.f32.mrb[0].mxu0
        %v2653 = vadd.f32 %v826, %v2652
        %v2654 = vpop.f32.mrb[0].mxu0
        %v2655 = vadd.f32 %v826, %v2654
        %v2656 = vpop.f32.mrb[0].mxu0
        %v2657 = vadd.f32 %v831, %v2656
        %v2658 = vpop.f32.mrb[0].mxu0
        %v2659 = vadd.f32 %v831, %v2658
        %2660 = vmatprep.mubr.bf16.mxu0 0
        %2661 = vmatmul.mubr.bf16.gmra.mrb[0].mxu0 %v1467
        %v2662 = vpop.f32.mrb[0].mxu0
        %v2663 = vadd.f32 %v836, %v2662
        %v2664 = vpop.f32.mrb[0].mxu0
        %v2665 = vadd.f32 %v836, %v2664
        %v2666 = vpop.f32.mrb[0].mxu0
        %v2667 = vadd.f32 %v841, %v2666
        %v2668 = vpop.f32.mrb[0].mxu0
        %v2669 = vadd.f32 %v841, %v2668
        %2670 = vmatprep.mubr.bf16.mxu0 0
        %2671 = vmatmul.mubr.bf16.gmra.mrb[0].mxu0 %v1470
        %v2672 = vpop.f32.mrb[0].mxu0
        %v2673 = vadd.f32 %v846, %v2672
        %v2674 = vpop.f32.mrb[0].mxu0
        %v2675 = vadd.f32 %v846, %v2674
        %v2676 = vpop.f32.mrb[0].mxu0
        %v2677 = vadd.f32 %v851, %v2676
        %v2678 = vpop.f32.mrb[0].mxu0
        %v2679 = vadd.f32 %v851, %v2678
        %2680 = vmatprep.mubr.bf16.mxu0 0
        %2681 = vmatmul.mubr.bf16.gmra.mrb[0].mxu0 %v1473
        %v2682 = vpop.f32.mrb[0].mxu0
        %v2683 = vadd.f32 %v856, %v2682
        %v2684 = vpop.f32.mrb[0].mxu0
        %v2685 = vadd.f32 %v856, %v2684
        %v2686 = vpop.f32.mrb[0].mxu0
        %v2687 = vadd.f32 %v861, %v2686
        %v2688 = vpop.f32.mrb[0].mxu0
        %v2689 = vadd.f32 %v861, %v2688
        %2690 = vmatprep.mubr.bf16.mxu0 0
        %2691 = vmatmul.mubr.bf16.gmra.mrb[0].mxu0 %v1476
        %v2692 = vpop.f32.mrb[0].mxu0
        %v2693 = vadd.f32 %v866, %v2692
        %v2694 = vpop.f32.mrb[0].mxu0
        %v2695 = vadd.f32 %v866, %v2694
        %v2696 = vpop.f32.mrb[0].mxu0
        %v2697 = vadd.f32 %v871, %v2696
        %v2698 = vpop.f32.mrb[0].mxu0
        %v2699 = vadd.f32 %v871, %v2698
        %2700 = vmatprep.mubr.bf16.mxu0 0
        %2701 = vmatmul.mubr.bf16.gmra.mrb[0].mxu0 %v1479
        %v2702 = vpop.f32.mrb[0].mxu0
        %v2703 = vadd.f32 %v876, %v2702
        %v2704 = vpop.f32.mrb[0].mxu0
        %v2705 = vadd.f32 %v876, %v2704
        %v2706 = vpop.f32.mrb[0].mxu0
        %v2707 = vadd.f32 %v881, %v2706
        %v2708 = vpop.f32.mrb[0].mxu0
        %v2709 = vadd.f32 %v881, %v2708
        %2710 = vmatprep.mubr.bf16.mxu0 0
        %2711 = vmatmul.mubr.bf16.gmra.mrb[0].mxu0 %v1482
        %v2712 = vpop.f32.mrb[0].mxu0
        %v2713 = vadd.f32 %v886, %v2712
        %v2714 = vpop.f32.mrb[0].mxu0
        %v2715 = vadd.f32 %v886, %v2714
        %v2716 = vpop.f32.mrb[0].mxu0
        %v2717 = vadd.f32 %v891, %v2716
        %v2718 = vpop.f32.mrb[0].mxu0
        %v2719 = vadd.f32 %v891, %v2718
        %2720 = vmatprep.mubr.bf16.mxu0 0
        %2721 = vmatmul.mubr.bf16.gmra.mrb[0].mxu0 %v1485
        %v2722 = vpop.f32.mrb[0].mxu0
        %v2723 = vadd.f32 %v896, %v2722
        %v2724 = vpop.f32.mrb[0].mxu0
        %v2725 = vadd.f32 %v896, %v2724
        %v2726 = vpop.f32.mrb[0].mxu0
        %v2727 = vadd.f32 %v901, %v2726
        %v2728 = vpop.f32.mrb[0].mxu0
        %v2729 = vadd.f32 %v901, %v2728
        %2730 = vmatprep.mubr.bf16.mxu0 0
        %2731 = vmatmul.mubr.bf16.gmra.mrb[0].mxu0 %v1488
        %v2732 = vpop.f32.mrb[0].mxu0
        %v2733 = vadd.f32 %v906, %v2732
        %v2734 = vpop.f32.mrb[0].mxu0
        %v2735 = vadd.f32 %v906, %v2734
        %v2736 = vpop.f32.mrb[0].mxu0
        %v2737 = vadd.f32 %v911, %v2736
        %v2738 = vpop.f32.mrb[0].mxu0
        %v2739 = vadd.f32 %v911, %v2738
        %2740 = vdwg.mxu0
        %2741 = vmatprep.subr.bf16.mxu0 0
        %2742 = vmatpush1.bf16.xpose.msra.mxu0 %v1635
        %2743 = vmatprep.subr.bf16.mxu0 0
        %2744 = vmatpush1.bf16.xpose.msra.mxu0 %v1638
        %2745 = vmatprep.subr.bf16.mxu0 0
        %2746 = vmatpush1.bf16.xpose.msra.mxu0 %v1641
        %2747 = vmatprep.subr.bf16.mxu0 0
        %2748 = vmatpush1.bf16.xpose.msra.mxu0 %v1644
        %2749 = vmatprep.subr.bf16.mxu0 0
        %2750 = vmatpush1.bf16.xpose.msra.mxu0 %v1647
        %2751 = vmatprep.subr.bf16.mxu0 0
        %2752 = vmatpush1.bf16.xpose.msra.mxu0 %v1650
        %2753 = vmatprep.subr.bf16.mxu0 0
        %2754 = vmatpush1.bf16.xpose.msra.mxu0 %v1653
        %2755 = vmatprep.subr.bf16.mxu0 0
        %2756 = vmatpush1.bf16.xpose.msra.mxu0 %v1656
        %2757 = vmatprep.subr.bf16.mxu0 0
        %2758 = vmatpush1.bf16.xpose.msra.mxu0 %v1659
        %2759 = vmatprep.subr.bf16.mxu0 0
        %2760 = vmatpush1.bf16.xpose.msra.mxu0 %v1662
        %2761 = vmatprep.subr.bf16.mxu0 0
        %2762 = vmatpush1.bf16.xpose.msra.mxu0 %v1665
        %2763 = vmatprep.subr.bf16.mxu0 0
        %2764 = vmatpush1.bf16.xpose.msra.mxu0 %v1668
        %2765 = vmatprep.subr.bf16.mxu0 0
        %2766 = vmatpush1.bf16.xpose.msra.mxu0 %v1671
        %2767 = vmatprep.subr.bf16.mxu0 0
        %2768 = vmatpush1.bf16.xpose.msra.mxu0 %v1674
        %2769 = vmatprep.subr.bf16.mxu0 0
        %2770 = vmatpush1.bf16.xpose.msra.mxu0 %v1677
        %2771 = vmatprep.subr.bf16.mxu0 0
        %2772 = vmatpush1.bf16.xpose.msra.mxu0 %v1680
        %2773 = vmatprep.mubr.bf16.mxu0 0
        %2774 = vmatmul.mubr.bf16.gmra.mrb[0].mxu0 %v1395
        %v2775 = vpop.f32.mrb[0].mxu0
        %v2776 = vadd.f32 %v596, %v2775
        %v2777 = vpop.f32.mrb[0].mxu0
        %v2778 = vadd.f32 %v596, %v2777
        %v2779 = vpop.f32.mrb[0].mxu0
        %v2780 = vadd.f32 %v601, %v2779
        %v2781 = vpop.f32.mrb[0].mxu0
        %v2782 = vadd.f32 %v601, %v2781
        %2783 = vmatprep.mubr.bf16.mxu0 0
        %2784 = vmatmul.mubr.bf16.gmra.mrb[0].mxu0 %v1398
        %v2785 = vpop.f32.mrb[0].mxu0
        %v2786 = vadd.f32 %v606, %v2785
        %v2787 = vpop.f32.mrb[0].mxu0
        %v2788 = vadd.f32 %v606, %v2787
        %v2789 = vpop.f32.mrb[0].mxu0
        %v2790 = vadd.f32 %v611, %v2789
        %v2791 = vpop.f32.mrb[0].mxu0
        %v2792 = vadd.f32 %v611, %v2791
        %2793 = vmatprep.mubr.bf16.mxu0 0
        %2794 = vmatmul.mubr.bf16.gmra.mrb[0].mxu0 %v1401
        %v2795 = vpop.f32.mrb[0].mxu0
        %v2796 = vadd.f32 %v616, %v2795
        %v2797 = vpop.f32.mrb[0].mxu0
        %v2798 = vadd.f32 %v616, %v2797
        %v2799 = vpop.f32.mrb[0].mxu0
        %v2800 = vadd.f32 %v621, %v2799
        %v2801 = vpop.f32.mrb[0].mxu0
        %v2802 = vadd.f32 %v621, %v2801
        %2803 = vmatprep.mubr.bf16.mxu0 0
        %2804 = vmatmul.mubr.bf16.gmra.mrb[0].mxu0 %v1404
        %v2805 = vpop.f32.mrb[0].mxu0
        %v2806 = vadd.f32 %v626, %v2805
        %v2807 = vpop.f32.mrb[0].mxu0
        %v2808 = vadd.f32 %v626, %v2807
        %v2809 = vpop.f32.mrb[0].mxu0
        %v2810 = vadd.f32 %v631, %v2809
        %v2811 = vpop.f32.mrb[0].mxu0
        %v2812 = vadd.f32 %v631, %v2811
        %2813 = vmatprep.mubr.bf16.mxu0 0
        %2814 = vmatmul.mubr.bf16.gmra.mrb[0].mxu0 %v1407
        %v2815 = vpop.f32.mrb[0].mxu0
        %v2816 = vadd.f32 %v636, %v2815
        %v2817 = vpop.f32.mrb[0].mxu0
        %v2818 = vadd.f32 %v636, %v2817
        %v2819 = vpop.f32.mrb[0].mxu0
        %v2820 = vadd.f32 %v641, %v2819
        %v2821 = vpop.f32.mrb[0].mxu0
        %v2822 = vadd.f32 %v641, %v2821
        %2823 = vmatprep.mubr.bf16.mxu0 0
        %2824 = vmatmul.mubr.bf16.gmra.mrb[0].mxu0 %v1410
        %v2825 = vpop.f32.mrb[0].mxu0
        %v2826 = vadd.f32 %v646, %v2825
        %v2827 = vpop.f32.mrb[0].mxu0
        %v2828 = vadd.f32 %v646, %v2827
        %v2829 = vpop.f32.mrb[0].mxu0
        %v2830 = vadd.f32 %v651, %v2829
        %v2831 = vpop.f32.mrb[0].mxu0
        %v2832 = vadd.f32 %v651, %v2831
        %2833 = vmatprep.mubr.bf16.mxu0 0
        %2834 = vmatmul.mubr.bf16.gmra.mrb[0].mxu0 %v1413
        %v2835 = vpop.f32.mrb[0].mxu0
        %v2836 = vadd.f32 %v656, %v2835
        %v2837 = vpop.f32.mrb[0].mxu0
        %v2838 = vadd.f32 %v656, %v2837
        %v2839 = vpop.f32.mrb[0].mxu0
        %v2840 = vadd.f32 %v661, %v2839
        %v2841 = vpop.f32.mrb[0].mxu0
        %v2842 = vadd.f32 %v661, %v2841
        %2843 = vmatprep.mubr.bf16.mxu0 0
        %2844 = vmatmul.mubr.bf16.gmra.mrb[0].mxu0 %v1416
        %v2845 = vpop.f32.mrb[0].mxu0
        %v2846 = vadd.f32 %v666, %v2845
        %v2847 = vpop.f32.mrb[0].mxu0
        %v2848 = vadd.f32 %v666, %v2847
        %v2849 = vpop.f32.mrb[0].mxu0
        %v2850 = vadd.f32 %v671, %v2849
        %v2851 = vpop.f32.mrb[0].mxu0
        %v2852 = vadd.f32 %v671, %v2851
        %2853 = vmatprep.mubr.bf16.mxu0 0
        %2854 = vmatmul.mubr.bf16.gmra.mrb[0].mxu0 %v1419
        %v2855 = vpop.f32.mrb[0].mxu0
        %v2856 = vadd.f32 %v676, %v2855
        %v2857 = vpop.f32.mrb[0].mxu0
        %v2858 = vadd.f32 %v676, %v2857
        %v2859 = vpop.f32.mrb[0].mxu0
        %v2860 = vadd.f32 %v681, %v2859
        %v2861 = vpop.f32.mrb[0].mxu0
        %v2862 = vadd.f32 %v681, %v2861
        %2863 = vmatprep.mubr.bf16.mxu0 0
        %2864 = vmatmul.mubr.bf16.gmra.mrb[0].mxu0 %v1422
        %v2865 = vpop.f32.mrb[0].mxu0
        %v2866 = vadd.f32 %v686, %v2865
        %v2867 = vpop.f32.mrb[0].mxu0
        %v2868 = vadd.f32 %v686, %v2867
        %v2869 = vpop.f32.mrb[0].mxu0
        %v2870 = vadd.f32 %v691, %v2869
        %v2871 = vpop.f32.mrb[0].mxu0
        %v2872 = vadd.f32 %v691, %v2871
        %2873 = vmatprep.mubr.bf16.mxu0 0
        %2874 = vmatmul.mubr.bf16.gmra.mrb[0].mxu0 %v1425
        %v2875 = vpop.f32.mrb[0].mxu0
        %v2876 = vadd.f32 %v696, %v2875
        %v2877 = vpop.f32.mrb[0].mxu0
        %v2878 = vadd.f32 %v696, %v2877
        %v2879 = vpop.f32.mrb[0].mxu0
        %v2880 = vadd.f32 %v701, %v2879
        %v2881 = vpop.f32.mrb[0].mxu0
        %v2882 = vadd.f32 %v701, %v2881
        %2883 = vmatprep.mubr.bf16.mxu0 0
        %2884 = vmatmul.mubr.bf16.gmra.mrb[0].mxu0 %v1428
        %v2885 = vpop.f32.mrb[0].mxu0
        %v2886 = vadd.f32 %v706, %v2885
        %v2887 = vpop.f32.mrb[0].mxu0
        %v2888 = vadd.f32 %v706, %v2887
        %v2889 = vpop.f32.mrb[0].mxu0
        %v2890 = vadd.f32 %v711, %v2889
        %v2891 = vpop.f32.mrb[0].mxu0
        %v2892 = vadd.f32 %v711, %v2891
        %2893 = vmatprep.mubr.bf16.mxu0 0
        %2894 = vmatmul.mubr.bf16.gmra.mrb[0].mxu0 %v1431
        %v2895 = vpop.f32.mrb[0].mxu0
        %v2896 = vadd.f32 %v716, %v2895
        %v2897 = vpop.f32.mrb[0].mxu0
        %v2898 = vadd.f32 %v716, %v2897
        %v2899 = vpop.f32.mrb[0].mxu0
        %v2900 = vadd.f32 %v721, %v2899
        %v2901 = vpop.f32.mrb[0].mxu0
        %v2902 = vadd.f32 %v721, %v2901
        %2903 = vmatprep.mubr.bf16.mxu0 0
        %2904 = vmatmul.mubr.bf16.gmra.mrb[0].mxu0 %v1434
        %v2905 = vpop.f32.mrb[0].mxu0
        %v2906 = vadd.f32 %v726, %v2905
        %v2907 = vpop.f32.mrb[0].mxu0
        %v2908 = vadd.f32 %v726, %v2907
        %v2909 = vpop.f32.mrb[0].mxu0
        %v2910 = vadd.f32 %v731, %v2909
        %v2911 = vpop.f32.mrb[0].mxu0
        %v2912 = vadd.f32 %v731, %v2911
        %2913 = vmatprep.mubr.bf16.mxu0 0
        %2914 = vmatmul.mubr.bf16.gmra.mrb[0].mxu0 %v1437
        %v2915 = vpop.f32.mrb[0].mxu0
        %v2916 = vadd.f32 %v736, %v2915
        %v2917 = vpop.f32.mrb[0].mxu0
        %v2918 = vadd.f32 %v736, %v2917
        %v2919 = vpop.f32.mrb[0].mxu0
        %v2920 = vadd.f32 %v741, %v2919
        %v2921 = vpop.f32.mrb[0].mxu0
        %v2922 = vadd.f32 %v741, %v2921
        %2923 = vmatprep.mubr.bf16.mxu0 0
        %2924 = vmatmul.mubr.bf16.gmra.mrb[0].mxu0 %v1440
        %v2925 = vpop.f32.mrb[0].mxu0
        %v2926 = vadd.f32 %v746, %v2925
        %v2927 = vpop.f32.mrb[0].mxu0
        %v2928 = vadd.f32 %v746, %v2927
        %v2929 = vpop.f32.mrb[0].mxu0
        %v2930 = vadd.f32 %v751, %v2929
        %v2931 = vpop.f32.mrb[0].mxu0
        %v2932 = vadd.f32 %v751, %v2931
        %2933 = vmatprep.mubr.bf16.mxu0 0
        %2934 = vmatmul.mubr.bf16.gmra.mrb[0].mxu0 %v1443
        %v2935 = vpop.f32.mrb[0].mxu0
        %v2936 = vadd.f32 %v756, %v2935
        %v2937 = vpop.f32.mrb[0].mxu0
        %v2938 = vadd.f32 %v756, %v2937
        %v2939 = vpop.f32.mrb[0].mxu0
        %v2940 = vadd.f32 %v761, %v2939
        %v2941 = vpop.f32.mrb[0].mxu0
        %v2942 = vadd.f32 %v761, %v2941
        %2943 = vmatprep.mubr.bf16.mxu0 0
        %2944 = vmatmul.mubr.bf16.gmra.mrb[0].mxu0 %v1446
        %v2945 = vpop.f32.mrb[0].mxu0
        %v2946 = vadd.f32 %v766, %v2945
        %v2947 = vpop.f32.mrb[0].mxu0
        %v2948 = vadd.f32 %v766, %v2947
        %v2949 = vpop.f32.mrb[0].mxu0
        %v2950 = vadd.f32 %v771, %v2949
        %v2951 = vpop.f32.mrb[0].mxu0
        %v2952 = vadd.f32 %v771, %v2951
        %2953 = vmatprep.mubr.bf16.mxu0 0
        %2954 = vmatmul.mubr.bf16.gmra.mrb[0].mxu0 %v1449
        %v2955 = vpop.f32.mrb[0].mxu0
        %v2956 = vadd.f32 %v776, %v2955
        %v2957 = vpop.f32.mrb[0].mxu0
        %v2958 = vadd.f32 %v776, %v2957
        %v2959 = vpop.f32.mrb[0].mxu0
        %v2960 = vadd.f32 %v781, %v2959
        %v2961 = vpop.f32.mrb[0].mxu0
        %v2962 = vadd.f32 %v781, %v2961
        %2963 = vmatprep.mubr.bf16.mxu0 0
        %2964 = vmatmul.mubr.bf16.gmra.mrb[0].mxu0 %v1452
        %v2965 = vpop.f32.mrb[0].mxu0
        %v2966 = vadd.f32 %v786, %v2965
        %v2967 = vpop.f32.mrb[0].mxu0
        %v2968 = vadd.f32 %v786, %v2967
        %v2969 = vpop.f32.mrb[0].mxu0
        %v2970 = vadd.f32 %v791, %v2969
        %v2971 = vpop.f32.mrb[0].mxu0
        %v2972 = vadd.f32 %v791, %v2971
        %2973 = vmatprep.mubr.bf16.mxu0 0
        %2974 = vmatmul.mubr.bf16.gmra.mrb[0].mxu0 %v1455
        %v2975 = vpop.f32.mrb[0].mxu0
        %v2976 = vadd.f32 %v796, %v2975
        %v2977 = vpop.f32.mrb[0].mxu0
        %v2978 = vadd.f32 %v796, %v2977
        %v2979 = vpop.f32.mrb[0].mxu0
        %v2980 = vadd.f32 %v801, %v2979
        %v2981 = vpop.f32.mrb[0].mxu0
        %v2982 = vadd.f32 %v801, %v2981
        %2983 = vmatprep.mubr.bf16.mxu0 0
        %2984 = vmatmul.mubr.bf16.gmra.mrb[0].mxu0 %v1458
        %v2985 = vpop.f32.mrb[0].mxu0
        %v2986 = vadd.f32 %v806, %v2985
        %v2987 = vpop.f32.mrb[0].mxu0
        %v2988 = vadd.f32 %v806, %v2987
        %v2989 = vpop.f32.mrb[0].mxu0
        %v2990 = vadd.f32 %v811, %v2989
        %v2991 = vpop.f32.mrb[0].mxu0
        %v2992 = vadd.f32 %v811, %v2991
        %2993 = vmatprep.mubr.bf16.mxu0 0
        %2994 = vmatmul.mubr.bf16.gmra.mrb[0].mxu0 %v1461
        %v2995 = vpop.f32.mrb[0].mxu0
        %v2996 = vadd.f32 %v816, %v2995
        %v2997 = vpop.f32.mrb[0].mxu0
        %v2998 = vadd.f32 %v816, %v2997
        %v2999 = vpop.f32.mrb[0].mxu0
        %v3000 = vadd.f32 %v821, %v2999
        %v3001 = vpop.f32.mrb[0].mxu0
        %v3002 = vadd.f32 %v821, %v3001
        %3003 = vmatprep.mubr.bf16.mxu0 0
        %3004 = vmatmul.mubr.bf16.gmra.mrb[0].mxu0 %v1464
        %v3005 = vpop.f32.mrb[0].mxu0
        %v3006 = vadd.f32 %v826, %v3005
        %v3007 = vpop.f32.mrb[0].mxu0
        %v3008 = vadd.f32 %v826, %v3007
        %v3009 = vpop.f32.mrb[0].mxu0
        %v3010 = vadd.f32 %v831, %v3009
        %v3011 = vpop.f32.mrb[0].mxu0
        %v3012 = vadd.f32 %v831, %v3011
        %3013 = vmatprep.mubr.bf16.mxu0 0
        %3014 = vmatmul.mubr.bf16.gmra.mrb[0].mxu0 %v1467
        %v3015 = vpop.f32.mrb[0].mxu0
        %v3016 = vadd.f32 %v836, %v3015
        %v3017 = vpop.f32.mrb[0].mxu0
        %v3018 = vadd.f32 %v836, %v3017
        %v3019 = vpop.f32.mrb[0].mxu0
        %v3020 = vadd.f32 %v841, %v3019
        %v3021 = vpop.f32.mrb[0].mxu0
        %v3022 = vadd.f32 %v841, %v3021
        %3023 = vmatprep.mubr.bf16.mxu0 0
        %3024 = vmatmul.mubr.bf16.gmra.mrb[0].mxu0 %v1470
        %v3025 = vpop.f32.mrb[0].mxu0
        %v3026 = vadd.f32 %v846, %v3025
        %v3027 = vpop.f32.mrb[0].mxu0
        %v3028 = vadd.f32 %v846, %v3027
        %v3029 = vpop.f32.mrb[0].mxu0
        %v3030 = vadd.f32 %v851, %v3029
        %v3031 = vpop.f32.mrb[0].mxu0
        %v3032 = vadd.f32 %v851, %v3031
        %3033 = vmatprep.mubr.bf16.mxu0 0
        %3034 = vmatmul.mubr.bf16.gmra.mrb[0].mxu0 %v1473
        %v3035 = vpop.f32.mrb[0].mxu0
        %v3036 = vadd.f32 %v856, %v3035
        %v3037 = vpop.f32.mrb[0].mxu0
        %v3038 = vadd.f32 %v856, %v3037
        %v3039 = vpop.f32.mrb[0].mxu0
        %v3040 = vadd.f32 %v861, %v3039
        %v3041 = vpop.f32.mrb[0].mxu0
        %v3042 = vadd.f32 %v861, %v3041
        %3043 = vmatprep.mubr.bf16.mxu0 0
        %3044 = vmatmul.mubr.bf16.gmra.mrb[0].mxu0 %v1476
        %v3045 = vpop.f32.mrb[0].mxu0
        %v3046 = vadd.f32 %v866, %v3045
        %v3047 = vpop.f32.mrb[0].mxu0
        %v3048 = vadd.f32 %v866, %v3047
        %v3049 = vpop.f32.mrb[0].mxu0
        %v3050 = vadd.f32 %v871, %v3049
        %v3051 = vpop.f32.mrb[0].mxu0
        %v3052 = vadd.f32 %v871, %v3051
        %3053 = vmatprep.mubr.bf16.mxu0 0
        %3054 = vmatmul.mubr.bf16.gmra.mrb[0].mxu0 %v1479
        %v3055 = vpop.f32.mrb[0].mxu0
        %v3056 = vadd.f32 %v876, %v3055
        %v3057 = vpop.f32.mrb[0].mxu0
        %v3058 = vadd.f32 %v876, %v3057
        %v3059 = vpop.f32.mrb[0].mxu0
        %v3060 = vadd.f32 %v881, %v3059
        %v3061 = vpop.f32.mrb[0].mxu0
        %v3062 = vadd.f32 %v881, %v3061
        %3063 = vmatprep.mubr.bf16.mxu0 0
        %3064 = vmatmul.mubr.bf16.gmra.mrb[0].mxu0 %v1482
        %v3065 = vpop.f32.mrb[0].mxu0
        %v3066 = vadd.f32 %v886, %v3065
        %v3067 = vpop.f32.mrb[0].mxu0
        %v3068 = vadd.f32 %v886, %v3067
        %v3069 = vpop.f32.mrb[0].mxu0
        %v3070 = vadd.f32 %v891, %v3069
        %v3071 = vpop.f32.mrb[0].mxu0
        %v3072 = vadd.f32 %v891, %v3071
        %3073 = vmatprep.mubr.bf16.mxu0 0
        %3074 = vmatmul.mubr.bf16.gmra.mrb[0].mxu0 %v1485
        %v3075 = vpop.f32.mrb[0].mxu0
        %v3076 = vadd.f32 %v896, %v3075
        %v3077 = vpop.f32.mrb[0].mxu0
        %v3078 = vadd.f32 %v896, %v3077
        %v3079 = vpop.f32.mrb[0].mxu0
        %v3080 = vadd.f32 %v901, %v3079
        %v3081 = vpop.f32.mrb[0].mxu0
        %v3082 = vadd.f32 %v901, %v3081
        %3083 = vmatprep.mubr.bf16.mxu0 0
        %3084 = vmatmul.mubr.bf16.gmra.mrb[0].mxu0 %v1488
        %v3085 = vpop.f32.mrb[0].mxu0
        %v3086 = vadd.f32 %v906, %v3085
        %v3087 = vpop.f32.mrb[0].mxu0
        %v3088 = vadd.f32 %v906, %v3087
        %v3089 = vpop.f32.mrb[0].mxu0
        %v3090 = vadd.f32 %v911, %v3089
        %v3091 = vpop.f32.mrb[0].mxu0
        %v3092 = vadd.f32 %v911, %v3091
        %3093 = vdwg.mxu0
        %v3094 = vmax.f32 %v1717, 0.0
        %v3095 = vmax.f32 %v1719, 0.0
        %v3096 = vmax.f32 %v2070, 0.0
        %v3097 = vmax.f32 %v2072, 0.0
        %v3098 = vmax.f32 %v2423, 0.0
        %v3099 = vmax.f32 %v2425, 0.0
        %v3100 = vmax.f32 %v2776, 0.0
        %v3101 = vmax.f32 %v2778, 0.0
        %v3102 = vmax.f32 %v1721, 0.0
        %v3103 = vmax.f32 %v1723, 0.0
        %v3104 = vmax.f32 %v2074, 0.0
        %v3105 = vmax.f32 %v2076, 0.0
        %v3106 = vmax.f32 %v2427, 0.0
        %v3107 = vmax.f32 %v2429, 0.0
        %v3108 = vmax.f32 %v2780, 0.0
        %v3109 = vmax.f32 %v2782, 0.0
        %v3110 = vmax.f32 %v1727, 0.0
        %v3111 = vmax.f32 %v1729, 0.0
        %v3112 = vmax.f32 %v2080, 0.0
        %v3113 = vmax.f32 %v2082, 0.0
        %v3114 = vmax.f32 %v2433, 0.0
        %v3115 = vmax.f32 %v2435, 0.0
        %v3116 = vmax.f32 %v2786, 0.0
        %v3117 = vmax.f32 %v2788, 0.0
        %v3118 = vmax.f32 %v1731, 0.0
        %v3119 = vmax.f32 %v1733, 0.0
        %v3120 = vmax.f32 %v2084, 0.0
        %v3121 = vmax.f32 %v2086, 0.0
        %v3122 = vmax.f32 %v2437, 0.0
        %v3123 = vmax.f32 %v2439, 0.0
        %v3124 = vmax.f32 %v2790, 0.0
        %v3125 = vmax.f32 %v2792, 0.0
        %v3126 = vmax.f32 %v1737, 0.0
        %v3127 = vmax.f32 %v1739, 0.0
        %v3128 = vmax.f32 %v2090, 0.0
        %v3129 = vmax.f32 %v2092, 0.0
        %v3130 = vmax.f32 %v2443, 0.0
        %v3131 = vmax.f32 %v2445, 0.0
        %v3132 = vmax.f32 %v2796, 0.0
        %v3133 = vmax.f32 %v2798, 0.0
        %v3134 = vmax.f32 %v1741, 0.0
        %v3135 = vmax.f32 %v1743, 0.0
        %v3136 = vmax.f32 %v2094, 0.0
        %v3137 = vmax.f32 %v2096, 0.0
        %v3138 = vmax.f32 %v2447, 0.0
        %v3139 = vmax.f32 %v2449, 0.0
        %v3140 = vmax.f32 %v2800, 0.0
        %v3141 = vmax.f32 %v2802, 0.0
        %v3142 = vmax.f32 %v1747, 0.0
        %v3143 = vmax.f32 %v1749, 0.0
        %v3144 = vmax.f32 %v2100, 0.0
        %v3145 = vmax.f32 %v2102, 0.0
        %v3146 = vmax.f32 %v2453, 0.0
        %v3147 = vmax.f32 %v2455, 0.0
        %v3148 = vmax.f32 %v2806, 0.0
        %v3149 = vmax.f32 %v2808, 0.0
        %v3150 = vmax.f32 %v1751, 0.0
        %v3151 = vmax.f32 %v1753, 0.0
        %v3152 = vmax.f32 %v2104, 0.0
        %v3153 = vmax.f32 %v2106, 0.0
        %v3154 = vmax.f32 %v2457, 0.0
        %v3155 = vmax.f32 %v2459, 0.0
        %v3156 = vmax.f32 %v2810, 0.0
        %v3157 = vmax.f32 %v2812, 0.0
        %v3158 = vmax.f32 %v1757, 0.0
        %v3159 = vmax.f32 %v1759, 0.0
        %v3160 = vmax.f32 %v2110, 0.0
        %v3161 = vmax.f32 %v2112, 0.0
        %v3162 = vmax.f32 %v2463, 0.0
        %v3163 = vmax.f32 %v2465, 0.0
        %v3164 = vmax.f32 %v2816, 0.0
        %v3165 = vmax.f32 %v2818, 0.0
        %v3166 = vmax.f32 %v1761, 0.0
        %v3167 = vmax.f32 %v1763, 0.0
        %v3168 = vmax.f32 %v2114, 0.0
        %v3169 = vmax.f32 %v2116, 0.0
        %v3170 = vmax.f32 %v2467, 0.0
        %v3171 = vmax.f32 %v2469, 0.0
        %v3172 = vmax.f32 %v2820, 0.0
        %v3173 = vmax.f32 %v2822, 0.0
        %v3174 = vmax.f32 %v1767, 0.0
        %v3175 = vmax.f32 %v1769, 0.0
        %v3176 = vmax.f32 %v2120, 0.0
        %v3177 = vmax.f32 %v2122, 0.0
        %v3178 = vmax.f32 %v2473, 0.0
        %v3179 = vmax.f32 %v2475, 0.0
        %v3180 = vmax.f32 %v2826, 0.0
        %v3181 = vmax.f32 %v2828, 0.0
        %v3182 = vmax.f32 %v1771, 0.0
        %v3183 = vmax.f32 %v1773, 0.0
        %v3184 = vmax.f32 %v2124, 0.0
        %v3185 = vmax.f32 %v2126, 0.0
        %v3186 = vmax.f32 %v2477, 0.0
        %v3187 = vmax.f32 %v2479, 0.0
        %v3188 = vmax.f32 %v2830, 0.0
        %v3189 = vmax.f32 %v2832, 0.0
        %v3190 = vmax.f32 %v1777, 0.0
        %v3191 = vmax.f32 %v1779, 0.0
        %v3192 = vmax.f32 %v2130, 0.0
        %v3193 = vmax.f32 %v2132, 0.0
        %v3194 = vmax.f32 %v2483, 0.0
        %v3195 = vmax.f32 %v2485, 0.0
        %v3196 = vmax.f32 %v2836, 0.0
        %v3197 = vmax.f32 %v2838, 0.0
        %v3198 = vmax.f32 %v1781, 0.0
        %v3199 = vmax.f32 %v1783, 0.0
        %v3200 = vmax.f32 %v2134, 0.0
        %v3201 = vmax.f32 %v2136, 0.0
        %v3202 = vmax.f32 %v2487, 0.0
        %v3203 = vmax.f32 %v2489, 0.0
        %v3204 = vmax.f32 %v2840, 0.0
        %v3205 = vmax.f32 %v2842, 0.0
        %v3206 = vmax.f32 %v1787, 0.0
        %v3207 = vmax.f32 %v1789, 0.0
        %v3208 = vmax.f32 %v2140, 0.0
        %v3209 = vmax.f32 %v2142, 0.0
        %v3210 = vmax.f32 %v2493, 0.0
        %v3211 = vmax.f32 %v2495, 0.0
        %v3212 = vmax.f32 %v2846, 0.0
        %v3213 = vmax.f32 %v2848, 0.0
        %v3214 = vmax.f32 %v1791, 0.0
        %v3215 = vmax.f32 %v1793, 0.0
        %v3216 = vmax.f32 %v2144, 0.0
        %v3217 = vmax.f32 %v2146, 0.0
        %v3218 = vmax.f32 %v2497, 0.0
        %v3219 = vmax.f32 %v2499, 0.0
        %v3220 = vmax.f32 %v2850, 0.0
        %v3221 = vmax.f32 %v2852, 0.0
        %v3222 = vmax.f32 %v1797, 0.0
        %v3223 = vmax.f32 %v1799, 0.0
        %v3224 = vmax.f32 %v2150, 0.0
        %v3225 = vmax.f32 %v2152, 0.0
        %v3226 = vmax.f32 %v2503, 0.0
        %v3227 = vmax.f32 %v2505, 0.0
        %v3228 = vmax.f32 %v2856, 0.0
        %v3229 = vmax.f32 %v2858, 0.0
        %v3230 = vmax.f32 %v1801, 0.0
        %v3231 = vmax.f32 %v1803, 0.0
        %v3232 = vmax.f32 %v2154, 0.0
        %v3233 = vmax.f32 %v2156, 0.0
        %v3234 = vmax.f32 %v2507, 0.0
        %v3235 = vmax.f32 %v2509, 0.0
        %v3236 = vmax.f32 %v2860, 0.0
        %v3237 = vmax.f32 %v2862, 0.0
        %v3238 = vmax.f32 %v1807, 0.0
        %v3239 = vmax.f32 %v1809, 0.0
        %v3240 = vmax.f32 %v2160, 0.0
        %v3241 = vmax.f32 %v2162, 0.0
        %v3242 = vmax.f32 %v2513, 0.0
        %v3243 = vmax.f32 %v2515, 0.0
        %v3244 = vmax.f32 %v2866, 0.0
        %v3245 = vmax.f32 %v2868, 0.0
        %v3246 = vmax.f32 %v1811, 0.0
        %v3247 = vmax.f32 %v1813, 0.0
        %v3248 = vmax.f32 %v2164, 0.0
        %v3249 = vmax.f32 %v2166, 0.0
        %v3250 = vmax.f32 %v2517, 0.0
        %v3251 = vmax.f32 %v2519, 0.0
        %v3252 = vmax.f32 %v2870, 0.0
        %v3253 = vmax.f32 %v2872, 0.0
        %v3254 = vmax.f32 %v1817, 0.0
        %v3255 = vmax.f32 %v1819, 0.0
        %v3256 = vmax.f32 %v2170, 0.0
        %v3257 = vmax.f32 %v2172, 0.0
        %v3258 = vmax.f32 %v2523, 0.0
        %v3259 = vmax.f32 %v2525, 0.0
        %v3260 = vmax.f32 %v2876, 0.0
        %v3261 = vmax.f32 %v2878, 0.0
        %v3262 = vmax.f32 %v1821, 0.0
        %v3263 = vmax.f32 %v1823, 0.0
        %v3264 = vmax.f32 %v2174, 0.0
        %v3265 = vmax.f32 %v2176, 0.0
        %v3266 = vmax.f32 %v2527, 0.0
        %v3267 = vmax.f32 %v2529, 0.0
        %v3268 = vmax.f32 %v2880, 0.0
        %v3269 = vmax.f32 %v2882, 0.0
        %v3270 = vmax.f32 %v1827, 0.0
        %v3271 = vmax.f32 %v1829, 0.0
        %v3272 = vmax.f32 %v2180, 0.0
        %v3273 = vmax.f32 %v2182, 0.0
        %v3274 = vmax.f32 %v2533, 0.0
        %v3275 = vmax.f32 %v2535, 0.0
        %v3276 = vmax.f32 %v2886, 0.0
        %v3277 = vmax.f32 %v2888, 0.0
        %v3278 = vmax.f32 %v1831, 0.0
        %v3279 = vmax.f32 %v1833, 0.0
        %v3280 = vmax.f32 %v2184, 0.0
        %v3281 = vmax.f32 %v2186, 0.0
        %v3282 = vmax.f32 %v2537, 0.0
        %v3283 = vmax.f32 %v2539, 0.0
        %v3284 = vmax.f32 %v2890, 0.0
        %v3285 = vmax.f32 %v2892, 0.0
        %v3286 = vmax.f32 %v1837, 0.0
        %v3287 = vmax.f32 %v1839, 0.0
        %v3288 = vmax.f32 %v2190, 0.0
        %v3289 = vmax.f32 %v2192, 0.0
        %v3290 = vmax.f32 %v2543, 0.0
        %v3291 = vmax.f32 %v2545, 0.0
        %v3292 = vmax.f32 %v2896, 0.0
        %v3293 = vmax.f32 %v2898, 0.0
        %v3294 = vmax.f32 %v1841, 0.0
        %v3295 = vmax.f32 %v1843, 0.0
        %v3296 = vmax.f32 %v2194, 0.0
        %v3297 = vmax.f32 %v2196, 0.0
        %v3298 = vmax.f32 %v2547, 0.0
        %v3299 = vmax.f32 %v2549, 0.0
        %v3300 = vmax.f32 %v2900, 0.0
        %v3301 = vmax.f32 %v2902, 0.0
        %v3302 = vmax.f32 %v1847, 0.0
        %v3303 = vmax.f32 %v1849, 0.0
        %v3304 = vmax.f32 %v2200, 0.0
        %v3305 = vmax.f32 %v2202, 0.0
        %v3306 = vmax.f32 %v2553, 0.0
        %v3307 = vmax.f32 %v2555, 0.0
        %v3308 = vmax.f32 %v2906, 0.0
        %v3309 = vmax.f32 %v2908, 0.0
        %v3310 = vmax.f32 %v1851, 0.0
        %v3311 = vmax.f32 %v1853, 0.0
        %v3312 = vmax.f32 %v2204, 0.0
        %v3313 = vmax.f32 %v2206, 0.0
        %v3314 = vmax.f32 %v2557, 0.0
        %v3315 = vmax.f32 %v2559, 0.0
        %v3316 = vmax.f32 %v2910, 0.0
        %v3317 = vmax.f32 %v2912, 0.0
        %v3318 = vmax.f32 %v1857, 0.0
        %v3319 = vmax.f32 %v1859, 0.0
        %v3320 = vmax.f32 %v2210, 0.0
        %v3321 = vmax.f32 %v2212, 0.0
        %v3322 = vmax.f32 %v2563, 0.0
        %v3323 = vmax.f32 %v2565, 0.0
        %v3324 = vmax.f32 %v2916, 0.0
        %v3325 = vmax.f32 %v2918, 0.0
        %v3326 = vmax.f32 %v1861, 0.0
        %v3327 = vmax.f32 %v1863, 0.0
        %v3328 = vmax.f32 %v2214, 0.0
        %v3329 = vmax.f32 %v2216, 0.0
        %v3330 = vmax.f32 %v2567, 0.0
        %v3331 = vmax.f32 %v2569, 0.0
        %v3332 = vmax.f32 %v2920, 0.0
        %v3333 = vmax.f32 %v2922, 0.0
        %v3334 = vmax.f32 %v1867, 0.0
        %v3335 = vmax.f32 %v1869, 0.0
        %v3336 = vmax.f32 %v2220, 0.0
        %v3337 = vmax.f32 %v2222, 0.0
        %v3338 = vmax.f32 %v2573, 0.0
        %v3339 = vmax.f32 %v2575, 0.0
        %v3340 = vmax.f32 %v2926, 0.0
        %v3341 = vmax.f32 %v2928, 0.0
        %v3342 = vmax.f32 %v1871, 0.0
        %v3343 = vmax.f32 %v1873, 0.0
        %v3344 = vmax.f32 %v2224, 0.0
        %v3345 = vmax.f32 %v2226, 0.0
        %v3346 = vmax.f32 %v2577, 0.0
        %v3347 = vmax.f32 %v2579, 0.0
        %v3348 = vmax.f32 %v2930, 0.0
        %v3349 = vmax.f32 %v2932, 0.0
        %v3350 = vmax.f32 %v1877, 0.0
        %v3351 = vmax.f32 %v1879, 0.0
        %v3352 = vmax.f32 %v2230, 0.0
        %v3353 = vmax.f32 %v2232, 0.0
        %v3354 = vmax.f32 %v2583, 0.0
        %v3355 = vmax.f32 %v2585, 0.0
        %v3356 = vmax.f32 %v2936, 0.0
        %v3357 = vmax.f32 %v2938, 0.0
        %v3358 = vmax.f32 %v1881, 0.0
        %v3359 = vmax.f32 %v1883, 0.0
        %v3360 = vmax.f32 %v2234, 0.0
        %v3361 = vmax.f32 %v2236, 0.0
        %v3362 = vmax.f32 %v2587, 0.0
        %v3363 = vmax.f32 %v2589, 0.0
        %v3364 = vmax.f32 %v2940, 0.0
        %v3365 = vmax.f32 %v2942, 0.0
        %v3366 = vmax.f32 %v1887, 0.0
        %v3367 = vmax.f32 %v1889, 0.0
        %v3368 = vmax.f32 %v2240, 0.0
        %v3369 = vmax.f32 %v2242, 0.0
        %v3370 = vmax.f32 %v2593, 0.0
        %v3371 = vmax.f32 %v2595, 0.0
        %v3372 = vmax.f32 %v2946, 0.0
        %v3373 = vmax.f32 %v2948, 0.0
        %v3374 = vmax.f32 %v1891, 0.0
        %v3375 = vmax.f32 %v1893, 0.0
        %v3376 = vmax.f32 %v2244, 0.0
        %v3377 = vmax.f32 %v2246, 0.0
        %v3378 = vmax.f32 %v2597, 0.0
        %v3379 = vmax.f32 %v2599, 0.0
        %v3380 = vmax.f32 %v2950, 0.0
        %v3381 = vmax.f32 %v2952, 0.0
        %v3382 = vmax.f32 %v1897, 0.0
        %v3383 = vmax.f32 %v1899, 0.0
        %v3384 = vmax.f32 %v2250, 0.0
        %v3385 = vmax.f32 %v2252, 0.0
        %v3386 = vmax.f32 %v2603, 0.0
        %v3387 = vmax.f32 %v2605, 0.0
        %v3388 = vmax.f32 %v2956, 0.0
        %v3389 = vmax.f32 %v2958, 0.0
        %v3390 = vmax.f32 %v1901, 0.0
        %v3391 = vmax.f32 %v1903, 0.0
        %v3392 = vmax.f32 %v2254, 0.0
        %v3393 = vmax.f32 %v2256, 0.0
        %v3394 = vmax.f32 %v2607, 0.0
        %v3395 = vmax.f32 %v2609, 0.0
        %v3396 = vmax.f32 %v2960, 0.0
        %v3397 = vmax.f32 %v2962, 0.0
        %v3398 = vmax.f32 %v1907, 0.0
        %v3399 = vmax.f32 %v1909, 0.0
        %v3400 = vmax.f32 %v2260, 0.0
        %v3401 = vmax.f32 %v2262, 0.0
        %v3402 = vmax.f32 %v2613, 0.0
        %v3403 = vmax.f32 %v2615, 0.0
        %v3404 = vmax.f32 %v2966, 0.0
        %v3405 = vmax.f32 %v2968, 0.0
        %v3406 = vmax.f32 %v1911, 0.0
        %v3407 = vmax.f32 %v1913, 0.0
        %v3408 = vmax.f32 %v2264, 0.0
        %v3409 = vmax.f32 %v2266, 0.0
        %v3410 = vmax.f32 %v2617, 0.0
        %v3411 = vmax.f32 %v2619, 0.0
        %v3412 = vmax.f32 %v2970, 0.0
        %v3413 = vmax.f32 %v2972, 0.0
        %v3414 = vmax.f32 %v1917, 0.0
        %v3415 = vmax.f32 %v1919, 0.0
        %v3416 = vmax.f32 %v2270, 0.0
        %v3417 = vmax.f32 %v2272, 0.0
        %v3418 = vmax.f32 %v2623, 0.0
        %v3419 = vmax.f32 %v2625, 0.0
        %v3420 = vmax.f32 %v2976, 0.0
        %v3421 = vmax.f32 %v2978, 0.0
        %v3422 = vmax.f32 %v1921, 0.0
        %v3423 = vmax.f32 %v1923, 0.0
        %v3424 = vmax.f32 %v2274, 0.0
        %v3425 = vmax.f32 %v2276, 0.0
        %v3426 = vmax.f32 %v2627, 0.0
        %v3427 = vmax.f32 %v2629, 0.0
        %v3428 = vmax.f32 %v2980, 0.0
        %v3429 = vmax.f32 %v2982, 0.0
        %v3430 = vmax.f32 %v1927, 0.0
        %v3431 = vmax.f32 %v1929, 0.0
        %v3432 = vmax.f32 %v2280, 0.0
        %v3433 = vmax.f32 %v2282, 0.0
        %v3434 = vmax.f32 %v2633, 0.0
        %v3435 = vmax.f32 %v2635, 0.0
        %v3436 = vmax.f32 %v2986, 0.0
        %v3437 = vmax.f32 %v2988, 0.0
        %v3438 = vmax.f32 %v1931, 0.0
        %v3439 = vmax.f32 %v1933, 0.0
        %v3440 = vmax.f32 %v2284, 0.0
        %v3441 = vmax.f32 %v2286, 0.0
        %v3442 = vmax.f32 %v2637, 0.0
        %v3443 = vmax.f32 %v2639, 0.0
        %v3444 = vmax.f32 %v2990, 0.0
        %v3445 = vmax.f32 %v2992, 0.0
        %v3446 = vmax.f32 %v1937, 0.0
        %v3447 = vmax.f32 %v1939, 0.0
        %v3448 = vmax.f32 %v2290, 0.0
        %v3449 = vmax.f32 %v2292, 0.0
        %v3450 = vmax.f32 %v2643, 0.0
        %v3451 = vmax.f32 %v2645, 0.0
        %v3452 = vmax.f32 %v2996, 0.0
        %v3453 = vmax.f32 %v2998, 0.0
        %v3454 = vmax.f32 %v1941, 0.0
        %v3455 = vmax.f32 %v1943, 0.0
        %v3456 = vmax.f32 %v2294, 0.0
        %v3457 = vmax.f32 %v2296, 0.0
        %v3458 = vmax.f32 %v2647, 0.0
        %v3459 = vmax.f32 %v2649, 0.0
        %v3460 = vmax.f32 %v3000, 0.0
        %v3461 = vmax.f32 %v3002, 0.0
        %v3462 = vmax.f32 %v1947, 0.0
        %v3463 = vmax.f32 %v1949, 0.0
        %v3464 = vmax.f32 %v2300, 0.0
        %v3465 = vmax.f32 %v2302, 0.0
        %v3466 = vmax.f32 %v2653, 0.0
        %v3467 = vmax.f32 %v2655, 0.0
        %v3468 = vmax.f32 %v3006, 0.0
        %v3469 = vmax.f32 %v3008, 0.0
        %v3470 = vmax.f32 %v1951, 0.0
        %v3471 = vmax.f32 %v1953, 0.0
        %v3472 = vmax.f32 %v2304, 0.0
        %v3473 = vmax.f32 %v2306, 0.0
        %v3474 = vmax.f32 %v2657, 0.0
        %v3475 = vmax.f32 %v2659, 0.0
        %v3476 = vmax.f32 %v3010, 0.0
        %v3477 = vmax.f32 %v3012, 0.0
        %v3478 = vmax.f32 %v1957, 0.0
        %v3479 = vmax.f32 %v1959, 0.0
        %v3480 = vmax.f32 %v2310, 0.0
        %v3481 = vmax.f32 %v2312, 0.0
        %v3482 = vmax.f32 %v2663, 0.0
        %v3483 = vmax.f32 %v2665, 0.0
        %v3484 = vmax.f32 %v3016, 0.0
        %v3485 = vmax.f32 %v3018, 0.0
        %v3486 = vmax.f32 %v1961, 0.0
        %v3487 = vmax.f32 %v1963, 0.0
        %v3488 = vmax.f32 %v2314, 0.0
        %v3489 = vmax.f32 %v2316, 0.0
        %v3490 = vmax.f32 %v2667, 0.0
        %v3491 = vmax.f32 %v2669, 0.0
        %v3492 = vmax.f32 %v3020, 0.0
        %v3493 = vmax.f32 %v3022, 0.0
        %v3494 = vmax.f32 %v1967, 0.0
        %v3495 = vmax.f32 %v1969, 0.0
        %v3496 = vmax.f32 %v2320, 0.0
        %v3497 = vmax.f32 %v2322, 0.0
        %v3498 = vmax.f32 %v2673, 0.0
        %v3499 = vmax.f32 %v2675, 0.0
        %v3500 = vmax.f32 %v3026, 0.0
        %v3501 = vmax.f32 %v3028, 0.0
        %v3502 = vmax.f32 %v1971, 0.0
        %v3503 = vmax.f32 %v1973, 0.0
        %v3504 = vmax.f32 %v2324, 0.0
        %v3505 = vmax.f32 %v2326, 0.0
        %v3506 = vmax.f32 %v2677, 0.0
        %v3507 = vmax.f32 %v2679, 0.0
        %v3508 = vmax.f32 %v3030, 0.0
        %v3509 = vmax.f32 %v3032, 0.0
        %v3510 = vmax.f32 %v1977, 0.0
        %v3511 = vmax.f32 %v1979, 0.0
        %v3512 = vmax.f32 %v2330, 0.0
        %v3513 = vmax.f32 %v2332, 0.0
        %v3514 = vmax.f32 %v2683, 0.0
        %v3515 = vmax.f32 %v2685, 0.0
        %v3516 = vmax.f32 %v3036, 0.0
        %v3517 = vmax.f32 %v3038, 0.0
        %v3518 = vmax.f32 %v1981, 0.0
        %v3519 = vmax.f32 %v1983, 0.0
        %v3520 = vmax.f32 %v2334, 0.0
        %v3521 = vmax.f32 %v2336, 0.0
        %v3522 = vmax.f32 %v2687, 0.0
        %v3523 = vmax.f32 %v2689, 0.0
        %v3524 = vmax.f32 %v3040, 0.0
        %v3525 = vmax.f32 %v3042, 0.0
        %v3526 = vmax.f32 %v1987, 0.0
        %v3527 = vmax.f32 %v1989, 0.0
        %v3528 = vmax.f32 %v2340, 0.0
        %v3529 = vmax.f32 %v2342, 0.0
        %v3530 = vmax.f32 %v2693, 0.0
        %v3531 = vmax.f32 %v2695, 0.0
        %v3532 = vmax.f32 %v3046, 0.0
        %v3533 = vmax.f32 %v3048, 0.0
        %v3534 = vmax.f32 %v1991, 0.0
        %v3535 = vmax.f32 %v1993, 0.0
        %v3536 = vmax.f32 %v2344, 0.0
        %v3537 = vmax.f32 %v2346, 0.0
        %v3538 = vmax.f32 %v2697, 0.0
        %v3539 = vmax.f32 %v2699, 0.0
        %v3540 = vmax.f32 %v3050, 0.0
        %v3541 = vmax.f32 %v3052, 0.0
        %v3542 = vmax.f32 %v1997, 0.0
        %v3543 = vmax.f32 %v1999, 0.0
        %v3544 = vmax.f32 %v2350, 0.0
        %v3545 = vmax.f32 %v2352, 0.0
        %v3546 = vmax.f32 %v2703, 0.0
        %v3547 = vmax.f32 %v2705, 0.0
        %v3548 = vmax.f32 %v3056, 0.0
        %v3549 = vmax.f32 %v3058, 0.0
        %v3550 = vmax.f32 %v2001, 0.0
        %v3551 = vmax.f32 %v2003, 0.0
        %v3552 = vmax.f32 %v2354, 0.0
        %v3553 = vmax.f32 %v2356, 0.0
        %v3554 = vmax.f32 %v2707, 0.0
        %v3555 = vmax.f32 %v2709, 0.0
        %v3556 = vmax.f32 %v3060, 0.0
        %v3557 = vmax.f32 %v3062, 0.0
        %v3558 = vmax.f32 %v2007, 0.0
        %v3559 = vmax.f32 %v2009, 0.0
        %v3560 = vmax.f32 %v2360, 0.0
        %v3561 = vmax.f32 %v2362, 0.0
        %v3562 = vmax.f32 %v2713, 0.0
        %v3563 = vmax.f32 %v2715, 0.0
        %v3564 = vmax.f32 %v3066, 0.0
        %v3565 = vmax.f32 %v3068, 0.0
        %v3566 = vmax.f32 %v2011, 0.0
        %v3567 = vmax.f32 %v2013, 0.0
        %v3568 = vmax.f32 %v2364, 0.0
        %v3569 = vmax.f32 %v2366, 0.0
        %v3570 = vmax.f32 %v2717, 0.0
        %v3571 = vmax.f32 %v2719, 0.0
        %v3572 = vmax.f32 %v3070, 0.0
        %v3573 = vmax.f32 %v3072, 0.0
        %v3574 = vmax.f32 %v2017, 0.0
        %v3575 = vmax.f32 %v2019, 0.0
        %v3576 = vmax.f32 %v2370, 0.0
        %v3577 = vmax.f32 %v2372, 0.0
        %v3578 = vmax.f32 %v2723, 0.0
        %v3579 = vmax.f32 %v2725, 0.0
        %v3580 = vmax.f32 %v3076, 0.0
        %v3581 = vmax.f32 %v3078, 0.0
        %v3582 = vmax.f32 %v2021, 0.0
        %v3583 = vmax.f32 %v2023, 0.0
        %v3584 = vmax.f32 %v2374, 0.0
        %v3585 = vmax.f32 %v2376, 0.0
        %v3586 = vmax.f32 %v2727, 0.0
        %v3587 = vmax.f32 %v2729, 0.0
        %v3588 = vmax.f32 %v3080, 0.0
        %v3589 = vmax.f32 %v3082, 0.0
        %v3590 = vmax.f32 %v2027, 0.0
        %v3591 = vmax.f32 %v2029, 0.0
        %v3592 = vmax.f32 %v2380, 0.0
        %v3593 = vmax.f32 %v2382, 0.0
        %v3594 = vmax.f32 %v2733, 0.0
        %v3595 = vmax.f32 %v2735, 0.0
        %v3596 = vmax.f32 %v3086, 0.0
        %v3597 = vmax.f32 %v3088, 0.0
        %v3598 = vmax.f32 %v2031, 0.0
        %v3599 = vmax.f32 %v2033, 0.0
        %v3600 = vmax.f32 %v2384, 0.0
        %v3601 = vmax.f32 %v2386, 0.0
        %v3602 = vmax.f32 %v2737, 0.0
        %v3603 = vmax.f32 %v2739, 0.0
        %v3604 = vmax.f32 %v3090, 0.0
        %v3605 = vmax.f32 %v3092, 0.0
        %v3606 = vpack.c.bf16 %v3102, %v3094
        %v3607 = vpack.c.bf16 %v3103, %v3095
        %v3608 = vpack.c.bf16 %v3104, %v3096
        %v3609 = vpack.c.bf16 %v3105, %v3097
        %v3610 = vpack.c.bf16 %v3106, %v3098
        %v3611 = vpack.c.bf16 %v3107, %v3099
        %v3612 = vpack.c.bf16 %v3108, %v3100
        %v3613 = vpack.c.bf16 %v3109, %v3101
        %v3614 = vpack.c.bf16 %v3118, %v3110
        %v3615 = vpack.c.bf16 %v3119, %v3111
        %v3616 = vpack.c.bf16 %v3120, %v3112
        %v3617 = vpack.c.bf16 %v3121, %v3113
        %v3618 = vpack.c.bf16 %v3122, %v3114
        %v3619 = vpack.c.bf16 %v3123, %v3115
        %v3620 = vpack.c.bf16 %v3124, %v3116
        %v3621 = vpack.c.bf16 %v3125, %v3117
        %v3622 = vpack.c.bf16 %v3134, %v3126
        %v3623 = vpack.c.bf16 %v3135, %v3127
        %v3624 = vpack.c.bf16 %v3136, %v3128
        %v3625 = vpack.c.bf16 %v3137, %v3129
        %v3626 = vpack.c.bf16 %v3138, %v3130
        %v3627 = vpack.c.bf16 %v3139, %v3131
        %v3628 = vpack.c.bf16 %v3140, %v3132
        %v3629 = vpack.c.bf16 %v3141, %v3133
        %v3630 = vpack.c.bf16 %v3150, %v3142
        %v3631 = vpack.c.bf16 %v3151, %v3143
        %v3632 = vpack.c.bf16 %v3152, %v3144
        %v3633 = vpack.c.bf16 %v3153, %v3145
        %v3634 = vpack.c.bf16 %v3154, %v3146
        %v3635 = vpack.c.bf16 %v3155, %v3147
        %v3636 = vpack.c.bf16 %v3156, %v3148
        %v3637 = vpack.c.bf16 %v3157, %v3149
        %v3638 = vpack.c.bf16 %v3166, %v3158
        %v3639 = vpack.c.bf16 %v3167, %v3159
        %v3640 = vpack.c.bf16 %v3168, %v3160
        %v3641 = vpack.c.bf16 %v3169, %v3161
        %v3642 = vpack.c.bf16 %v3170, %v3162
        %v3643 = vpack.c.bf16 %v3171, %v3163
        %v3644 = vpack.c.bf16 %v3172, %v3164
        %v3645 = vpack.c.bf16 %v3173, %v3165
        %v3646 = vpack.c.bf16 %v3182, %v3174
        %v3647 = vpack.c.bf16 %v3183, %v3175
        %v3648 = vpack.c.bf16 %v3184, %v3176
        %v3649 = vpack.c.bf16 %v3185, %v3177
        %v3650 = vpack.c.bf16 %v3186, %v3178
        %v3651 = vpack.c.bf16 %v3187, %v3179
        %v3652 = vpack.c.bf16 %v3188, %v3180
        %v3653 = vpack.c.bf16 %v3189, %v3181
        %v3654 = vpack.c.bf16 %v3198, %v3190
        %v3655 = vpack.c.bf16 %v3199, %v3191
        %v3656 = vpack.c.bf16 %v3200, %v3192
        %v3657 = vpack.c.bf16 %v3201, %v3193
        %v3658 = vpack.c.bf16 %v3202, %v3194
        %v3659 = vpack.c.bf16 %v3203, %v3195
        %v3660 = vpack.c.bf16 %v3204, %v3196
        %v3661 = vpack.c.bf16 %v3205, %v3197
        %v3662 = vpack.c.bf16 %v3214, %v3206
        %v3663 = vpack.c.bf16 %v3215, %v3207
        %v3664 = vpack.c.bf16 %v3216, %v3208
        %v3665 = vpack.c.bf16 %v3217, %v3209
        %v3666 = vpack.c.bf16 %v3218, %v3210
        %v3667 = vpack.c.bf16 %v3219, %v3211
        %v3668 = vpack.c.bf16 %v3220, %v3212
        %v3669 = vpack.c.bf16 %v3221, %v3213
        %v3670 = vpack.c.bf16 %v3230, %v3222
        %v3671 = vpack.c.bf16 %v3231, %v3223
        %v3672 = vpack.c.bf16 %v3232, %v3224
        %v3673 = vpack.c.bf16 %v3233, %v3225
        %v3674 = vpack.c.bf16 %v3234, %v3226
        %v3675 = vpack.c.bf16 %v3235, %v3227
        %v3676 = vpack.c.bf16 %v3236, %v3228
        %v3677 = vpack.c.bf16 %v3237, %v3229
        %v3678 = vpack.c.bf16 %v3246, %v3238
        %v3679 = vpack.c.bf16 %v3247, %v3239
        %v3680 = vpack.c.bf16 %v3248, %v3240
        %v3681 = vpack.c.bf16 %v3249, %v3241
        %v3682 = vpack.c.bf16 %v3250, %v3242
        %v3683 = vpack.c.bf16 %v3251, %v3243
        %v3684 = vpack.c.bf16 %v3252, %v3244
        %v3685 = vpack.c.bf16 %v3253, %v3245
        %v3686 = vpack.c.bf16 %v3262, %v3254
        %v3687 = vpack.c.bf16 %v3263, %v3255
        %v3688 = vpack.c.bf16 %v3264, %v3256
        %v3689 = vpack.c.bf16 %v3265, %v3257
        %v3690 = vpack.c.bf16 %v3266, %v3258
        %v3691 = vpack.c.bf16 %v3267, %v3259
        %v3692 = vpack.c.bf16 %v3268, %v3260
        %v3693 = vpack.c.bf16 %v3269, %v3261
        %v3694 = vpack.c.bf16 %v3278, %v3270
        %v3695 = vpack.c.bf16 %v3279, %v3271
        %v3696 = vpack.c.bf16 %v3280, %v3272
        %v3697 = vpack.c.bf16 %v3281, %v3273
        %v3698 = vpack.c.bf16 %v3282, %v3274
        %v3699 = vpack.c.bf16 %v3283, %v3275
        %v3700 = vpack.c.bf16 %v3284, %v3276
        %v3701 = vpack.c.bf16 %v3285, %v3277
        %v3702 = vpack.c.bf16 %v3294, %v3286
        %v3703 = vpack.c.bf16 %v3295, %v3287
        %v3704 = vpack.c.bf16 %v3296, %v3288
        %v3705 = vpack.c.bf16 %v3297, %v3289
        %v3706 = vpack.c.bf16 %v3298, %v3290
        %v3707 = vpack.c.bf16 %v3299, %v3291
        %v3708 = vpack.c.bf16 %v3300, %v3292
        %v3709 = vpack.c.bf16 %v3301, %v3293
        %v3710 = vpack.c.bf16 %v3310, %v3302
        %v3711 = vpack.c.bf16 %v3311, %v3303
        %v3712 = vpack.c.bf16 %v3312, %v3304
        %v3713 = vpack.c.bf16 %v3313, %v3305
        %v3714 = vpack.c.bf16 %v3314, %v3306
        %v3715 = vpack.c.bf16 %v3315, %v3307
        %v3716 = vpack.c.bf16 %v3316, %v3308
        %v3717 = vpack.c.bf16 %v3317, %v3309
        %v3718 = vpack.c.bf16 %v3326, %v3318
        %v3719 = vpack.c.bf16 %v3327, %v3319
        %v3720 = vpack.c.bf16 %v3328, %v3320
        %v3721 = vpack.c.bf16 %v3329, %v3321
        %v3722 = vpack.c.bf16 %v3330, %v3322
        %v3723 = vpack.c.bf16 %v3331, %v3323
        %v3724 = vpack.c.bf16 %v3332, %v3324
        %v3725 = vpack.c.bf16 %v3333, %v3325
        %v3726 = vpack.c.bf16 %v3342, %v3334
        %v3727 = vpack.c.bf16 %v3343, %v3335
        %v3728 = vpack.c.bf16 %v3344, %v3336
        %v3729 = vpack.c.bf16 %v3345, %v3337
        %v3730 = vpack.c.bf16 %v3346, %v3338
        %v3731 = vpack.c.bf16 %v3347, %v3339
        %v3732 = vpack.c.bf16 %v3348, %v3340
        %v3733 = vpack.c.bf16 %v3349, %v3341
        %v3734 = vpack.c.bf16 %v3358, %v3350
        %v3735 = vpack.c.bf16 %v3359, %v3351
        %v3736 = vpack.c.bf16 %v3360, %v3352
        %v3737 = vpack.c.bf16 %v3361, %v3353
        %v3738 = vpack.c.bf16 %v3362, %v3354
        %v3739 = vpack.c.bf16 %v3363, %v3355
        %v3740 = vpack.c.bf16 %v3364, %v3356
        %v3741 = vpack.c.bf16 %v3365, %v3357
        %v3742 = vpack.c.bf16 %v3374, %v3366
        %v3743 = vpack.c.bf16 %v3375, %v3367
        %v3744 = vpack.c.bf16 %v3376, %v3368
        %v3745 = vpack.c.bf16 %v3377, %v3369
        %v3746 = vpack.c.bf16 %v3378, %v3370
        %v3747 = vpack.c.bf16 %v3379, %v3371
        %v3748 = vpack.c.bf16 %v3380, %v3372
        %v3749 = vpack.c.bf16 %v3381, %v3373
        %v3750 = vpack.c.bf16 %v3390, %v3382
        %v3751 = vpack.c.bf16 %v3391, %v3383
        %v3752 = vpack.c.bf16 %v3392, %v3384
        %v3753 = vpack.c.bf16 %v3393, %v3385
        %v3754 = vpack.c.bf16 %v3394, %v3386
        %v3755 = vpack.c.bf16 %v3395, %v3387
        %v3756 = vpack.c.bf16 %v3396, %v3388
        %v3757 = vpack.c.bf16 %v3397, %v3389
        %v3758 = vpack.c.bf16 %v3406, %v3398
        %v3759 = vpack.c.bf16 %v3407, %v3399
        %v3760 = vpack.c.bf16 %v3408, %v3400
        %v3761 = vpack.c.bf16 %v3409, %v3401
        %v3762 = vpack.c.bf16 %v3410, %v3402
        %v3763 = vpack.c.bf16 %v3411, %v3403
        %v3764 = vpack.c.bf16 %v3412, %v3404
        %v3765 = vpack.c.bf16 %v3413, %v3405
        %v3766 = vpack.c.bf16 %v3422, %v3414
        %v3767 = vpack.c.bf16 %v3423, %v3415
        %v3768 = vpack.c.bf16 %v3424, %v3416
        %v3769 = vpack.c.bf16 %v3425, %v3417
        %v3770 = vpack.c.bf16 %v3426, %v3418
        %v3771 = vpack.c.bf16 %v3427, %v3419
        %v3772 = vpack.c.bf16 %v3428, %v3420
        %v3773 = vpack.c.bf16 %v3429, %v3421
        %v3774 = vpack.c.bf16 %v3438, %v3430
        %v3775 = vpack.c.bf16 %v3439, %v3431
        %v3776 = vpack.c.bf16 %v3440, %v3432
        %v3777 = vpack.c.bf16 %v3441, %v3433
        %v3778 = vpack.c.bf16 %v3442, %v3434
        %v3779 = vpack.c.bf16 %v3443, %v3435
        %v3780 = vpack.c.bf16 %v3444, %v3436
        %v3781 = vpack.c.bf16 %v3445, %v3437
        %v3782 = vpack.c.bf16 %v3454, %v3446
        %v3783 = vpack.c.bf16 %v3455, %v3447
        %v3784 = vpack.c.bf16 %v3456, %v3448
        %v3785 = vpack.c.bf16 %v3457, %v3449
        %v3786 = vpack.c.bf16 %v3458, %v3450
        %v3787 = vpack.c.bf16 %v3459, %v3451
        %v3788 = vpack.c.bf16 %v3460, %v3452
        %v3789 = vpack.c.bf16 %v3461, %v3453
        %v3790 = vpack.c.bf16 %v3470, %v3462
        %v3791 = vpack.c.bf16 %v3471, %v3463
        %v3792 = vpack.c.bf16 %v3472, %v3464
        %v3793 = vpack.c.bf16 %v3473, %v3465
        %v3794 = vpack.c.bf16 %v3474, %v3466
        %v3795 = vpack.c.bf16 %v3475, %v3467
        %v3796 = vpack.c.bf16 %v3476, %v3468
        %v3797 = vpack.c.bf16 %v3477, %v3469
        %v3798 = vpack.c.bf16 %v3486, %v3478
        %v3799 = vpack.c.bf16 %v3487, %v3479
        %v3800 = vpack.c.bf16 %v3488, %v3480
        %v3801 = vpack.c.bf16 %v3489, %v3481
        %v3802 = vpack.c.bf16 %v3490, %v3482
        %v3803 = vpack.c.bf16 %v3491, %v3483
        %v3804 = vpack.c.bf16 %v3492, %v3484
        %v3805 = vpack.c.bf16 %v3493, %v3485
        %v3806 = vpack.c.bf16 %v3502, %v3494
        %v3807 = vpack.c.bf16 %v3503, %v3495
        %v3808 = vpack.c.bf16 %v3504, %v3496
        %v3809 = vpack.c.bf16 %v3505, %v3497
        %v3810 = vpack.c.bf16 %v3506, %v3498
        %v3811 = vpack.c.bf16 %v3507, %v3499
        %v3812 = vpack.c.bf16 %v3508, %v3500
        %v3813 = vpack.c.bf16 %v3509, %v3501
        %v3814 = vpack.c.bf16 %v3518, %v3510
        %v3815 = vpack.c.bf16 %v3519, %v3511
        %v3816 = vpack.c.bf16 %v3520, %v3512
        %v3817 = vpack.c.bf16 %v3521, %v3513
        %v3818 = vpack.c.bf16 %v3522, %v3514
        %v3819 = vpack.c.bf16 %v3523, %v3515
        %v3820 = vpack.c.bf16 %v3524, %v3516
        %v3821 = vpack.c.bf16 %v3525, %v3517
        %v3822 = vpack.c.bf16 %v3534, %v3526
        %v3823 = vpack.c.bf16 %v3535, %v3527
        %v3824 = vpack.c.bf16 %v3536, %v3528
        %v3825 = vpack.c.bf16 %v3537, %v3529
        %v3826 = vpack.c.bf16 %v3538, %v3530
        %v3827 = vpack.c.bf16 %v3539, %v3531
        %v3828 = vpack.c.bf16 %v3540, %v3532
        %v3829 = vpack.c.bf16 %v3541, %v3533
        %v3830 = vpack.c.bf16 %v3550, %v3542
        %v3831 = vpack.c.bf16 %v3551, %v3543
        %v3832 = vpack.c.bf16 %v3552, %v3544
        %v3833 = vpack.c.bf16 %v3553, %v3545
        %v3834 = vpack.c.bf16 %v3554, %v3546
        %v3835 = vpack.c.bf16 %v3555, %v3547
        %v3836 = vpack.c.bf16 %v3556, %v3548
        %v3837 = vpack.c.bf16 %v3557, %v3549
        %v3838 = vpack.c.bf16 %v3566, %v3558
        %v3839 = vpack.c.bf16 %v3567, %v3559
        %v3840 = vpack.c.bf16 %v3568, %v3560
        %v3841 = vpack.c.bf16 %v3569, %v3561
        %v3842 = vpack.c.bf16 %v3570, %v3562
        %v3843 = vpack.c.bf16 %v3571, %v3563
        %v3844 = vpack.c.bf16 %v3572, %v3564
        %v3845 = vpack.c.bf16 %v3573, %v3565
        %v3846 = vpack.c.bf16 %v3582, %v3574
        %v3847 = vpack.c.bf16 %v3583, %v3575
        %v3848 = vpack.c.bf16 %v3584, %v3576
        %v3849 = vpack.c.bf16 %v3585, %v3577
        %v3850 = vpack.c.bf16 %v3586, %v3578
        %v3851 = vpack.c.bf16 %v3587, %v3579
        %v3852 = vpack.c.bf16 %v3588, %v3580
        %v3853 = vpack.c.bf16 %v3589, %v3581
        %v3854 = vpack.c.bf16 %v3598, %v3590
        %v3855 = vpack.c.bf16 %v3599, %v3591
        %v3856 = vpack.c.bf16 %v3600, %v3592
        %v3857 = vpack.c.bf16 %v3601, %v3593
        %v3858 = vpack.c.bf16 %v3602, %v3594
        %v3859 = vpack.c.bf16 %v3603, %v3595
        %v3860 = vpack.c.bf16 %v3604, %v3596
        %v3861 = vpack.c.bf16 %v3605, %v3597
        %v3862 = vld [vmem:[%s3] sm:$0xff]
        %v3863 = vld [vmem:[%s3 + $0x8] sm:$0xff]
        %v3864 = vld [vmem:[%s3 + $0x10] sm:$0xff]
        %v3865 = vld [vmem:[%s3 + $0x18] sm:$0xff]
        %v3866 = vld [vmem:[%s3 + $0x20] sm:$0xff]
        %v3867 = vld [vmem:[%s3 + $0x28] sm:$0xff]
        %v3868 = vld [vmem:[%s3 + $0x30] sm:$0xff]
        %v3869 = vld [vmem:[%s3 + $0x38] sm:$0xff]
        %v3870 = vld [vmem:[%s3 + $0x40] sm:$0xff]
        %v3871 = vld [vmem:[%s3 + $0x48] sm:$0xff]
        %v3872 = vld [vmem:[%s3 + $0x50] sm:$0xff]
        %v3873 = vld [vmem:[%s3 + $0x58] sm:$0xff]
        %v3874 = vld [vmem:[%s3 + $0x60] sm:$0xff]
        %v3875 = vld [vmem:[%s3 + $0x68] sm:$0xff]
        %v3876 = vld [vmem:[%s3 + $0x70] sm:$0xff]
        %v3877 = vld [vmem:[%s3 + $0x78] sm:$0xff]
        %v3878 = vld [vmem:[%s3 + $0x80] sm:$0xff]
        %v3879 = vld [vmem:[%s3 + $0x88] sm:$0xff]
        %v3880 = vld [vmem:[%s3 + $0x90] sm:$0xff]
        %v3881 = vld [vmem:[%s3 + $0x98] sm:$0xff]
        %v3882 = vld [vmem:[%s3 + $0xa0] sm:$0xff]
        %v3883 = vld [vmem:[%s3 + $0xa8] sm:$0xff]
        %v3884 = vld [vmem:[%s3 + $0xb0] sm:$0xff]
        %v3885 = vld [vmem:[%s3 + $0xb8] sm:$0xff]
        %v3886 = vld [vmem:[%s3 + $0xc0] sm:$0xff]
        %v3887 = vld [vmem:[%s3 + $0xc8] sm:$0xff]
        %v3888 = vld [vmem:[%s3 + $0xd0] sm:$0xff]
        %v3889 = vld [vmem:[%s3 + $0xd8] sm:$0xff]
        %v3890 = vld [vmem:[%s3 + $0xe0] sm:$0xff]
        %v3891 = vld [vmem:[%s3 + $0xe8] sm:$0xff]
        %v3892 = vld [vmem:[%s3 + $0xf0] sm:$0xff]
        %v3893 = vld [vmem:[%s3 + $0xf8] sm:$0xff]
        %v3894 = vld [vmem:[%s3 + $0x100] sm:$0xff]
        %v3895 = vld [vmem:[%s3 + $0x108] sm:$0xff]
        %v3896 = vld [vmem:[%s3 + $0x110] sm:$0xff]
        %v3897 = vld [vmem:[%s3 + $0x118] sm:$0xff]
        %v3898 = vld [vmem:[%s3 + $0x120] sm:$0xff]
        %v3899 = vld [vmem:[%s3 + $0x128] sm:$0xff]
        %v3900 = vld [vmem:[%s3 + $0x130] sm:$0xff]
        %v3901 = vld [vmem:[%s3 + $0x138] sm:$0xff]
        %v3902 = vld [vmem:[%s3 + $0x140] sm:$0xff]
        %v3903 = vld [vmem:[%s3 + $0x148] sm:$0xff]
        %v3904 = vld [vmem:[%s3 + $0x150] sm:$0xff]
        %v3905 = vld [vmem:[%s3 + $0x158] sm:$0xff]
        %v3906 = vld [vmem:[%s3 + $0x160] sm:$0xff]
        %v3907 = vld [vmem:[%s3 + $0x168] sm:$0xff]
        %v3908 = vld [vmem:[%s3 + $0x170] sm:$0xff]
        %v3909 = vld [vmem:[%s3 + $0x178] sm:$0xff]
        %v3910 = vld [vmem:[%s3 + $0x180] sm:$0xff]
        %v3911 = vld [vmem:[%s3 + $0x188] sm:$0xff]
        %v3912 = vld [vmem:[%s3 + $0x190] sm:$0xff]
        %v3913 = vld [vmem:[%s3 + $0x198] sm:$0xff]
        %v3914 = vld [vmem:[%s3 + $0x1a0] sm:$0xff]
        %v3915 = vld [vmem:[%s3 + $0x1a8] sm:$0xff]
        %v3916 = vld [vmem:[%s3 + $0x1b0] sm:$0xff]
        %v3917 = vld [vmem:[%s3 + $0x1b8] sm:$0xff]
        %v3918 = vld [vmem:[%s3 + $0x1c0] sm:$0xff]
        %v3919 = vld [vmem:[%s3 + $0x1c8] sm:$0xff]
        %v3920 = vld [vmem:[%s3 + $0x1d0] sm:$0xff]
        %v3921 = vld [vmem:[%s3 + $0x1d8] sm:$0xff]
        %v3922 = vld [vmem:[%s3 + $0x1e0] sm:$0xff]
        %v3923 = vld [vmem:[%s3 + $0x1e8] sm:$0xff]
        %v3924 = vld [vmem:[%s3 + $0x1f0] sm:$0xff]
        %v3925 = vld [vmem:[%s3 + $0x1f8] sm:$0xff]
        %v3926 = vld [vmem:[%s4] sm:$0xff]
        %v3927 = vld [vmem:[%s4 + $0x8] sm:$0xff]
        %v3928 = vld [vmem:[%s4 + $0x10] sm:$0xff]
        %v3929 = vld [vmem:[%s4 + $0x18] sm:$0xff]
        %v3930 = vld [vmem:[%s4 + $0x20] sm:$0xff]
        %v3931 = vld [vmem:[%s4 + $0x28] sm:$0xff]
        %v3932 = vld [vmem:[%s4 + $0x30] sm:$0xff]
        %v3933 = vld [vmem:[%s4 + $0x38] sm:$0xff]
        %v3934 = vld [vmem:[%s4 + $0x40] sm:$0xff]
        %v3935 = vld [vmem:[%s4 + $0x48] sm:$0xff]
        %v3936 = vld [vmem:[%s4 + $0x50] sm:$0xff]
        %v3937 = vld [vmem:[%s4 + $0x58] sm:$0xff]
        %v3938 = vld [vmem:[%s4 + $0x60] sm:$0xff]
        %v3939 = vld [vmem:[%s4 + $0x68] sm:$0xff]
        %v3940 = vld [vmem:[%s4 + $0x70] sm:$0xff]
        %v3941 = vld [vmem:[%s4 + $0x78] sm:$0xff]
        %v3942 = vld [vmem:[%s4 + $0x80] sm:$0xff]
        %v3943 = vld [vmem:[%s4 + $0x88] sm:$0xff]
        %v3944 = vld [vmem:[%s4 + $0x90] sm:$0xff]
        %v3945 = vld [vmem:[%s4 + $0x98] sm:$0xff]
        %v3946 = vld [vmem:[%s4 + $0xa0] sm:$0xff]
        %v3947 = vld [vmem:[%s4 + $0xa8] sm:$0xff]
        %v3948 = vld [vmem:[%s4 + $0xb0] sm:$0xff]
        %v3949 = vld [vmem:[%s4 + $0xb8] sm:$0xff]
        %v3950 = vld [vmem:[%s4 + $0xc0] sm:$0xff]
        %v3951 = vld [vmem:[%s4 + $0xc8] sm:$0xff]
        %v3952 = vld [vmem:[%s4 + $0xd0] sm:$0xff]
        %v3953 = vld [vmem:[%s4 + $0xd8] sm:$0xff]
        %v3954 = vld [vmem:[%s4 + $0xe0] sm:$0xff]
        %v3955 = vld [vmem:[%s4 + $0xe8] sm:$0xff]
        %v3956 = vld [vmem:[%s4 + $0xf0] sm:$0xff]
        %v3957 = vld [vmem:[%s4 + $0xf8] sm:$0xff]
        %3959 = vset.pattern.permute.xlu0 0
        %3960 = vperm.xlu0 %3959, %v3926
        %v3961 = vpop.permute.xlu0 %3960
        %3964 = vset.pattern.permute.xlu0 0
        %3965 = vperm.xlu0 %3964, %v3927
        %v3966 = vpop.permute.xlu0 %3965
        %3969 = vset.pattern.permute.xlu0 0
        %3970 = vperm.xlu0 %3969, %v3928
        %v3971 = vpop.permute.xlu0 %3970
        %3974 = vset.pattern.permute.xlu0 0
        %3975 = vperm.xlu0 %3974, %v3929
        %v3976 = vpop.permute.xlu0 %3975
        %3979 = vset.pattern.permute.xlu0 0
        %3980 = vperm.xlu0 %3979, %v3930
        %v3981 = vpop.permute.xlu0 %3980
        %3984 = vset.pattern.permute.xlu0 0
        %3985 = vperm.xlu0 %3984, %v3931
        %v3986 = vpop.permute.xlu0 %3985
        %3989 = vset.pattern.permute.xlu0 0
        %3990 = vperm.xlu0 %3989, %v3932
        %v3991 = vpop.permute.xlu0 %3990
        %3994 = vset.pattern.permute.xlu0 0
        %3995 = vperm.xlu0 %3994, %v3933
        %v3996 = vpop.permute.xlu0 %3995
        %3999 = vset.pattern.permute.xlu0 0
        %4000 = vperm.xlu0 %3999, %v3934
        %v4001 = vpop.permute.xlu0 %4000
        %4004 = vset.pattern.permute.xlu0 0
        %4005 = vperm.xlu0 %4004, %v3935
        %v4006 = vpop.permute.xlu0 %4005
        %4009 = vset.pattern.permute.xlu0 0
        %4010 = vperm.xlu0 %4009, %v3936
        %v4011 = vpop.permute.xlu0 %4010
        %4014 = vset.pattern.permute.xlu0 0
        %4015 = vperm.xlu0 %4014, %v3937
        %v4016 = vpop.permute.xlu0 %4015
        %4019 = vset.pattern.permute.xlu0 0
        %4020 = vperm.xlu0 %4019, %v3938
        %v4021 = vpop.permute.xlu0 %4020
        %4024 = vset.pattern.permute.xlu0 0
        %4025 = vperm.xlu0 %4024, %v3939
        %v4026 = vpop.permute.xlu0 %4025
        %4029 = vset.pattern.permute.xlu0 0
        %4030 = vperm.xlu0 %4029, %v3940
        %v4031 = vpop.permute.xlu0 %4030
        %4034 = vset.pattern.permute.xlu0 0
        %4035 = vperm.xlu0 %4034, %v3941
        %v4036 = vpop.permute.xlu0 %4035
        %4039 = vset.pattern.permute.xlu0 0
        %4040 = vperm.xlu0 %4039, %v3942
        %v4041 = vpop.permute.xlu0 %4040
        %4044 = vset.pattern.permute.xlu0 0
        %4045 = vperm.xlu0 %4044, %v3943
        %v4046 = vpop.permute.xlu0 %4045
        %4049 = vset.pattern.permute.xlu0 0
        %4050 = vperm.xlu0 %4049, %v3944
        %v4051 = vpop.permute.xlu0 %4050
        %4054 = vset.pattern.permute.xlu0 0
        %4055 = vperm.xlu0 %4054, %v3945
        %v4056 = vpop.permute.xlu0 %4055
        %4059 = vset.pattern.permute.xlu0 0
        %4060 = vperm.xlu0 %4059, %v3946
        %v4061 = vpop.permute.xlu0 %4060
        %4064 = vset.pattern.permute.xlu0 0
        %4065 = vperm.xlu0 %4064, %v3947
        %v4066 = vpop.permute.xlu0 %4065
        %4069 = vset.pattern.permute.xlu0 0
        %4070 = vperm.xlu0 %4069, %v3948
        %v4071 = vpop.permute.xlu0 %4070
        %4074 = vset.pattern.permute.xlu0 0
        %4075 = vperm.xlu0 %4074, %v3949
        %v4076 = vpop.permute.xlu0 %4075
        %4079 = vset.pattern.permute.xlu0 0
        %4080 = vperm.xlu0 %4079, %v3950
        %v4081 = vpop.permute.xlu0 %4080
        %4084 = vset.pattern.permute.xlu0 0
        %4085 = vperm.xlu0 %4084, %v3951
        %v4086 = vpop.permute.xlu0 %4085
        %4089 = vset.pattern.permute.xlu0 0
        %4090 = vperm.xlu0 %4089, %v3952
        %v4091 = vpop.permute.xlu0 %4090
        %4094 = vset.pattern.permute.xlu0 0
        %4095 = vperm.xlu0 %4094, %v3953
        %v4096 = vpop.permute.xlu0 %4095
        %4099 = vset.pattern.permute.xlu0 0
        %4100 = vperm.xlu0 %4099, %v3954
        %v4101 = vpop.permute.xlu0 %4100
        %4104 = vset.pattern.permute.xlu0 0
        %4105 = vperm.xlu0 %4104, %v3955
        %v4106 = vpop.permute.xlu0 %4105
        %4109 = vset.pattern.permute.xlu0 0
        %4110 = vperm.xlu0 %4109, %v3956
        %v4111 = vpop.permute.xlu0 %4110
        %4114 = vset.pattern.permute.xlu0 0
        %4115 = vperm.xlu0 %4114, %v3957
        %v4116 = vpop.permute.xlu0 %4115
        %v4182 = vunpack.c.l.b16 %v3862
        %v4183 = vunpack.c.h.b16 %v3862
        %v4184 = vunpack.c.l.b16 %v3863
        %v4185 = vunpack.c.h.b16 %v3863
        %v4186 = vunpack.c.l.b16 %v3864
        %v4187 = vunpack.c.h.b16 %v3864
        %v4188 = vunpack.c.l.b16 %v3865
        %v4189 = vunpack.c.h.b16 %v3865
        %v4190 = vunpack.c.l.b16 %v3866
        %v4191 = vunpack.c.h.b16 %v3866
        %v4192 = vunpack.c.l.b16 %v3867
        %v4193 = vunpack.c.h.b16 %v3867
        %v4194 = vunpack.c.l.b16 %v3868
        %v4195 = vunpack.c.h.b16 %v3868
        %v4196 = vunpack.c.l.b16 %v3869
        %v4197 = vunpack.c.h.b16 %v3869
        %v4198 = vunpack.c.l.b16 %v3870
        %v4199 = vunpack.c.h.b16 %v3870
        %v4200 = vunpack.c.l.b16 %v3871
        %v4201 = vunpack.c.h.b16 %v3871
        %v4202 = vunpack.c.l.b16 %v3872
        %v4203 = vunpack.c.h.b16 %v3872
        %v4204 = vunpack.c.l.b16 %v3873
        %v4205 = vunpack.c.h.b16 %v3873
        %v4206 = vunpack.c.l.b16 %v3874
        %v4207 = vunpack.c.h.b16 %v3874
        %v4208 = vunpack.c.l.b16 %v3875
        %v4209 = vunpack.c.h.b16 %v3875
        %v4210 = vunpack.c.l.b16 %v3876
        %v4211 = vunpack.c.h.b16 %v3876
        %v4212 = vunpack.c.l.b16 %v3877
        %v4213 = vunpack.c.h.b16 %v3877
        %v4214 = vunpack.c.l.b16 %v3878
        %v4215 = vunpack.c.h.b16 %v3878
        %v4216 = vunpack.c.l.b16 %v3879
        %v4217 = vunpack.c.h.b16 %v3879
        %v4218 = vunpack.c.l.b16 %v3880
        %v4219 = vunpack.c.h.b16 %v3880
        %v4220 = vunpack.c.l.b16 %v3881
        %v4221 = vunpack.c.h.b16 %v3881
        %v4222 = vunpack.c.l.b16 %v3882
        %v4223 = vunpack.c.h.b16 %v3882
        %v4224 = vunpack.c.l.b16 %v3883
        %v4225 = vunpack.c.h.b16 %v3883
        %v4226 = vunpack.c.l.b16 %v3884
        %v4227 = vunpack.c.h.b16 %v3884
        %v4228 = vunpack.c.l.b16 %v3885
        %v4229 = vunpack.c.h.b16 %v3885
        %v4230 = vunpack.c.l.b16 %v3886
        %v4231 = vunpack.c.h.b16 %v3886
        %v4232 = vunpack.c.l.b16 %v3887
        %v4233 = vunpack.c.h.b16 %v3887
        %v4234 = vunpack.c.l.b16 %v3888
        %v4235 = vunpack.c.h.b16 %v3888
        %v4236 = vunpack.c.l.b16 %v3889
        %v4237 = vunpack.c.h.b16 %v3889
        %v4238 = vunpack.c.l.b16 %v3890
        %v4239 = vunpack.c.h.b16 %v3890
        %v4240 = vunpack.c.l.b16 %v3891
        %v4241 = vunpack.c.h.b16 %v3891
        %v4242 = vunpack.c.l.b16 %v3892
        %v4243 = vunpack.c.h.b16 %v3892
        %v4244 = vunpack.c.l.b16 %v3893
        %v4245 = vunpack.c.h.b16 %v3893
        %v4246 = vunpack.c.l.b16 %v3894
        %v4247 = vunpack.c.h.b16 %v3894
        %v4248 = vunpack.c.l.b16 %v3895
        %v4249 = vunpack.c.h.b16 %v3895
        %v4250 = vunpack.c.l.b16 %v3896
        %v4251 = vunpack.c.h.b16 %v3896
        %v4252 = vunpack.c.l.b16 %v3897
        %v4253 = vunpack.c.h.b16 %v3897
        %v4254 = vunpack.c.l.b16 %v3898
        %v4255 = vunpack.c.h.b16 %v3898
        %v4256 = vunpack.c.l.b16 %v3899
        %v4257 = vunpack.c.h.b16 %v3899
        %v4258 = vunpack.c.l.b16 %v3900
        %v4259 = vunpack.c.h.b16 %v3900
        %v4260 = vunpack.c.l.b16 %v3901
        %v4261 = vunpack.c.h.b16 %v3901
        %v4262 = vunpack.c.l.b16 %v3902
        %v4263 = vunpack.c.h.b16 %v3902
        %v4264 = vunpack.c.l.b16 %v3903
        %v4265 = vunpack.c.h.b16 %v3903
        %v4266 = vunpack.c.l.b16 %v3904
        %v4267 = vunpack.c.h.b16 %v3904
        %v4268 = vunpack.c.l.b16 %v3905
        %v4269 = vunpack.c.h.b16 %v3905
        %v4270 = vunpack.c.l.b16 %v3906
        %v4271 = vunpack.c.h.b16 %v3906
        %v4272 = vunpack.c.l.b16 %v3907
        %v4273 = vunpack.c.h.b16 %v3907
        %v4274 = vunpack.c.l.b16 %v3908
        %v4275 = vunpack.c.h.b16 %v3908
        %v4276 = vunpack.c.l.b16 %v3909
        %v4277 = vunpack.c.h.b16 %v3909
        %v4278 = vunpack.c.l.b16 %v3910
        %v4279 = vunpack.c.h.b16 %v3910
        %v4280 = vunpack.c.l.b16 %v3911
        %v4281 = vunpack.c.h.b16 %v3911
        %v4282 = vunpack.c.l.b16 %v3912
        %v4283 = vunpack.c.h.b16 %v3912
        %v4284 = vunpack.c.l.b16 %v3913
        %v4285 = vunpack.c.h.b16 %v3913
        %v4286 = vunpack.c.l.b16 %v3914
        %v4287 = vunpack.c.h.b16 %v3914
        %v4288 = vunpack.c.l.b16 %v3915
        %v4289 = vunpack.c.h.b16 %v3915
        %v4290 = vunpack.c.l.b16 %v3916
        %v4291 = vunpack.c.h.b16 %v3916
        %v4292 = vunpack.c.l.b16 %v3917
        %v4293 = vunpack.c.h.b16 %v3917
        %v4294 = vunpack.c.l.b16 %v3918
        %v4295 = vunpack.c.h.b16 %v3918
        %v4296 = vunpack.c.l.b16 %v3919
        %v4297 = vunpack.c.h.b16 %v3919
        %v4298 = vunpack.c.l.b16 %v3920
        %v4299 = vunpack.c.h.b16 %v3920
        %v4300 = vunpack.c.l.b16 %v3921
        %v4301 = vunpack.c.h.b16 %v3921
        %v4302 = vunpack.c.l.b16 %v3922
        %v4303 = vunpack.c.h.b16 %v3922
        %v4304 = vunpack.c.l.b16 %v3923
        %v4305 = vunpack.c.h.b16 %v3923
        %v4306 = vunpack.c.l.b16 %v3924
        %v4307 = vunpack.c.h.b16 %v3924
        %v4308 = vunpack.c.l.b16 %v3925
        %v4309 = vunpack.c.h.b16 %v3925
        %v4310 = vpack.c.b16 %v4186, %v4182
        %v4311 = vpack.c.b16 %v4187, %v4183
        %v4312 = vpack.c.b16 %v4188, %v4184
        %v4313 = vpack.c.b16 %v4189, %v4185
        %v4314 = vpack.c.b16 %v4194, %v4190
        %v4315 = vpack.c.b16 %v4195, %v4191
        %v4316 = vpack.c.b16 %v4196, %v4192
        %v4317 = vpack.c.b16 %v4197, %v4193
        %v4318 = vpack.c.b16 %v4202, %v4198
        %v4319 = vpack.c.b16 %v4203, %v4199
        %v4320 = vpack.c.b16 %v4204, %v4200
        %v4321 = vpack.c.b16 %v4205, %v4201
        %v4322 = vpack.c.b16 %v4210, %v4206
        %v4323 = vpack.c.b16 %v4211, %v4207
        %v4324 = vpack.c.b16 %v4212, %v4208
        %v4325 = vpack.c.b16 %v4213, %v4209
        %v4326 = vpack.c.b16 %v4218, %v4214
        %v4327 = vpack.c.b16 %v4219, %v4215
        %v4328 = vpack.c.b16 %v4220, %v4216
        %v4329 = vpack.c.b16 %v4221, %v4217
        %v4330 = vpack.c.b16 %v4226, %v4222
        %v4331 = vpack.c.b16 %v4227, %v4223
        %v4332 = vpack.c.b16 %v4228, %v4224
        %v4333 = vpack.c.b16 %v4229, %v4225
        %v4334 = vpack.c.b16 %v4234, %v4230
        %v4335 = vpack.c.b16 %v4235, %v4231
        %v4336 = vpack.c.b16 %v4236, %v4232
        %v4337 = vpack.c.b16 %v4237, %v4233
        %v4338 = vpack.c.b16 %v4242, %v4238
        %v4339 = vpack.c.b16 %v4243, %v4239
        %v4340 = vpack.c.b16 %v4244, %v4240
        %v4341 = vpack.c.b16 %v4245, %v4241
        %v4342 = vpack.c.b16 %v4250, %v4246
        %v4343 = vpack.c.b16 %v4251, %v4247
        %v4344 = vpack.c.b16 %v4252, %v4248
        %v4345 = vpack.c.b16 %v4253, %v4249
        %v4346 = vpack.c.b16 %v4258, %v4254
        %v4347 = vpack.c.b16 %v4259, %v4255
        %v4348 = vpack.c.b16 %v4260, %v4256
        %v4349 = vpack.c.b16 %v4261, %v4257
        %v4350 = vpack.c.b16 %v4266, %v4262
        %v4351 = vpack.c.b16 %v4267, %v4263
        %v4352 = vpack.c.b16 %v4268, %v4264
        %v4353 = vpack.c.b16 %v4269, %v4265
        %v4354 = vpack.c.b16 %v4274, %v4270
        %v4355 = vpack.c.b16 %v4275, %v4271
        %v4356 = vpack.c.b16 %v4276, %v4272
        %v4357 = vpack.c.b16 %v4277, %v4273
        %v4358 = vpack.c.b16 %v4282, %v4278
        %v4359 = vpack.c.b16 %v4283, %v4279
        %v4360 = vpack.c.b16 %v4284, %v4280
        %v4361 = vpack.c.b16 %v4285, %v4281
        %v4362 = vpack.c.b16 %v4290, %v4286
        %v4363 = vpack.c.b16 %v4291, %v4287
        %v4364 = vpack.c.b16 %v4292, %v4288
        %v4365 = vpack.c.b16 %v4293, %v4289
        %v4366 = vpack.c.b16 %v4298, %v4294
        %v4367 = vpack.c.b16 %v4299, %v4295
        %v4368 = vpack.c.b16 %v4300, %v4296
        %v4369 = vpack.c.b16 %v4301, %v4297
        %v4370 = vpack.c.b16 %v4306, %v4302
        %v4371 = vpack.c.b16 %v4307, %v4303
        %v4372 = vpack.c.b16 %v4308, %v4304
        %v4373 = vpack.c.b16 %v4309, %v4305
        %4438 = vmatprep.subr.bf16.mxu0 %v3607
        %4439 = vmatpush1.bf16.msra.mxu0 %v3606
        %4440 = vmatprep.subr.bf16.mxu0 %v3615
        %4441 = vmatpush1.bf16.msra.mxu0 %v3614
        %4442 = vmatprep.subr.bf16.mxu0 %v3623
        %4443 = vmatpush1.bf16.msra.mxu0 %v3622
        %4444 = vmatprep.subr.bf16.mxu0 %v3631
        %4445 = vmatpush1.bf16.msra.mxu0 %v3630
        %4446 = vmatprep.subr.bf16.mxu0 %v3639
        %4447 = vmatpush1.bf16.msra.mxu0 %v3638
        %4448 = vmatprep.subr.bf16.mxu0 %v3647
        %4449 = vmatpush1.bf16.msra.mxu0 %v3646
        %4450 = vmatprep.subr.bf16.mxu0 %v3655
        %4451 = vmatpush1.bf16.msra.mxu0 %v3654
        %4452 = vmatprep.subr.bf16.mxu0 %v3663
        %4453 = vmatpush1.bf16.msra.mxu0 %v3662
        %4454 = vmatprep.subr.bf16.mxu0 %v3671
        %4455 = vmatpush1.bf16.msra.mxu0 %v3670
        %4456 = vmatprep.subr.bf16.mxu0 %v3679
        %4457 = vmatpush1.bf16.msra.mxu0 %v3678
        %4458 = vmatprep.subr.bf16.mxu0 %v3687
        %4459 = vmatpush1.bf16.msra.mxu0 %v3686
        %4460 = vmatprep.subr.bf16.mxu0 %v3695
        %4461 = vmatpush1.bf16.msra.mxu0 %v3694
        %4462 = vmatprep.subr.bf16.mxu0 %v3703
        %4463 = vmatpush1.bf16.msra.mxu0 %v3702
        %4464 = vmatprep.subr.bf16.mxu0 %v3711
        %4465 = vmatpush1.bf16.msra.mxu0 %v3710
        %4466 = vmatprep.subr.bf16.mxu0 %v3719
        %4467 = vmatpush1.bf16.msra.mxu0 %v3718
        %4468 = vmatprep.subr.bf16.mxu0 %v3727
        %4469 = vmatpush1.bf16.msra.mxu0 %v3726
        %4470 = vmatprep.mubr.bf16.mxu0 %v4311
        %4471 = vmatmul.mubr.bf16.gmra.mrb[0].mxu0 %v4310
        %v4472 = vpop.f32.mrb[0].mxu0
        %v4473 = vadd.f32 %v3961, %v4472
        %v4474 = vpop.f32.mrb[0].mxu0
        %v4475 = vadd.f32 %v3961, %v4474
        %v4476 = vpop.f32.mrb[0].mxu0
        %v4477 = vadd.f32 %v3966, %v4476
        %v4478 = vpop.f32.mrb[0].mxu0
        %v4479 = vadd.f32 %v3966, %v4478
        %4480 = vmatprep.mubr.bf16.mxu0 %v4315
        %4481 = vmatmul.mubr.bf16.gmra.mrb[0].mxu0 %v4314
        %v4482 = vpop.f32.mrb[0].mxu0
        %v4483 = vadd.f32 %v3971, %v4482
        %v4484 = vpop.f32.mrb[0].mxu0
        %v4485 = vadd.f32 %v3971, %v4484
        %v4486 = vpop.f32.mrb[0].mxu0
        %v4487 = vadd.f32 %v3976, %v4486
        %v4488 = vpop.f32.mrb[0].mxu0
        %v4489 = vadd.f32 %v3976, %v4488
        %4490 = vmatprep.mubr.bf16.mxu0 %v4319
        %4491 = vmatmul.mubr.bf16.gmra.mrb[0].mxu0 %v4318
        %v4492 = vpop.f32.mrb[0].mxu0
        %v4493 = vadd.f32 %v3981, %v4492
        %v4494 = vpop.f32.mrb[0].mxu0
        %v4495 = vadd.f32 %v3981, %v4494
        %v4496 = vpop.f32.mrb[0].mxu0
        %v4497 = vadd.f32 %v3986, %v4496
        %v4498 = vpop.f32.mrb[0].mxu0
        %v4499 = vadd.f32 %v3986, %v4498
        %4500 = vmatprep.mubr.bf16.mxu0 %v4323
        %4501 = vmatmul.mubr.bf16.gmra.mrb[0].mxu0 %v4322
        %v4502 = vpop.f32.mrb[0].mxu0
        %v4503 = vadd.f32 %v3991, %v4502
        %v4504 = vpop.f32.mrb[0].mxu0
        %v4505 = vadd.f32 %v3991, %v4504
        %v4506 = vpop.f32.mrb[0].mxu0
        %v4507 = vadd.f32 %v3996, %v4506
        %v4508 = vpop.f32.mrb[0].mxu0
        %v4509 = vadd.f32 %v3996, %v4508
        %4510 = vmatprep.mubr.bf16.mxu0 %v4327
        %4511 = vmatmul.mubr.bf16.gmra.mrb[0].mxu0 %v4326
        %v4512 = vpop.f32.mrb[0].mxu0
        %v4513 = vadd.f32 %v4001, %v4512
        %v4514 = vpop.f32.mrb[0].mxu0
        %v4515 = vadd.f32 %v4001, %v4514
        %v4516 = vpop.f32.mrb[0].mxu0
        %v4517 = vadd.f32 %v4006, %v4516
        %v4518 = vpop.f32.mrb[0].mxu0
        %v4519 = vadd.f32 %v4006, %v4518
        %4520 = vmatprep.mubr.bf16.mxu0 %v4331
        %4521 = vmatmul.mubr.bf16.gmra.mrb[0].mxu0 %v4330
        %v4522 = vpop.f32.mrb[0].mxu0
        %v4523 = vadd.f32 %v4011, %v4522
        %v4524 = vpop.f32.mrb[0].mxu0
        %v4525 = vadd.f32 %v4011, %v4524
        %v4526 = vpop.f32.mrb[0].mxu0
        %v4527 = vadd.f32 %v4016, %v4526
        %v4528 = vpop.f32.mrb[0].mxu0
        %v4529 = vadd.f32 %v4016, %v4528
        %4530 = vmatprep.mubr.bf16.mxu0 %v4335
        %4531 = vmatmul.mubr.bf16.gmra.mrb[0].mxu0 %v4334
        %v4532 = vpop.f32.mrb[0].mxu0
        %v4533 = vadd.f32 %v4021, %v4532
        %v4534 = vpop.f32.mrb[0].mxu0
        %v4535 = vadd.f32 %v4021, %v4534
        %v4536 = vpop.f32.mrb[0].mxu0
        %v4537 = vadd.f32 %v4026, %v4536
        %v4538 = vpop.f32.mrb[0].mxu0
        %v4539 = vadd.f32 %v4026, %v4538
        %4540 = vmatprep.mubr.bf16.mxu0 %v4339
        %4541 = vmatmul.mubr.bf16.gmra.mrb[0].mxu0 %v4338
        %v4542 = vpop.f32.mrb[0].mxu0
        %v4543 = vadd.f32 %v4031, %v4542
        %v4544 = vpop.f32.mrb[0].mxu0
        %v4545 = vadd.f32 %v4031, %v4544
        %v4546 = vpop.f32.mrb[0].mxu0
        %v4547 = vadd.f32 %v4036, %v4546
        %v4548 = vpop.f32.mrb[0].mxu0
        %v4549 = vadd.f32 %v4036, %v4548
        %4550 = vmatprep.mubr.bf16.mxu0 %v4343
        %4551 = vmatmul.mubr.bf16.gmra.mrb[0].mxu0 %v4342
        %v4552 = vpop.f32.mrb[0].mxu0
        %v4553 = vadd.f32 %v4041, %v4552
        %v4554 = vpop.f32.mrb[0].mxu0
        %v4555 = vadd.f32 %v4041, %v4554
        %v4556 = vpop.f32.mrb[0].mxu0
        %v4557 = vadd.f32 %v4046, %v4556
        %v4558 = vpop.f32.mrb[0].mxu0
        %v4559 = vadd.f32 %v4046, %v4558
        %4560 = vmatprep.mubr.bf16.mxu0 %v4347
        %4561 = vmatmul.mubr.bf16.gmra.mrb[0].mxu0 %v4346
        %v4562 = vpop.f32.mrb[0].mxu0
        %v4563 = vadd.f32 %v4051, %v4562
        %v4564 = vpop.f32.mrb[0].mxu0
        %v4565 = vadd.f32 %v4051, %v4564
        %v4566 = vpop.f32.mrb[0].mxu0
        %v4567 = vadd.f32 %v4056, %v4566
        %v4568 = vpop.f32.mrb[0].mxu0
        %v4569 = vadd.f32 %v4056, %v4568
        %4570 = vmatprep.mubr.bf16.mxu0 %v4351
        %4571 = vmatmul.mubr.bf16.gmra.mrb[0].mxu0 %v4350
        %v4572 = vpop.f32.mrb[0].mxu0
        %v4573 = vadd.f32 %v4061, %v4572
        %v4574 = vpop.f32.mrb[0].mxu0
        %v4575 = vadd.f32 %v4061, %v4574
        %v4576 = vpop.f32.mrb[0].mxu0
        %v4577 = vadd.f32 %v4066, %v4576
        %v4578 = vpop.f32.mrb[0].mxu0
        %v4579 = vadd.f32 %v4066, %v4578
        %4580 = vmatprep.mubr.bf16.mxu0 %v4355
        %4581 = vmatmul.mubr.bf16.gmra.mrb[0].mxu0 %v4354
        %v4582 = vpop.f32.mrb[0].mxu0
        %v4583 = vadd.f32 %v4071, %v4582
        %v4584 = vpop.f32.mrb[0].mxu0
        %v4585 = vadd.f32 %v4071, %v4584
        %v4586 = vpop.f32.mrb[0].mxu0
        %v4587 = vadd.f32 %v4076, %v4586
        %v4588 = vpop.f32.mrb[0].mxu0
        %v4589 = vadd.f32 %v4076, %v4588
        %4590 = vmatprep.mubr.bf16.mxu0 %v4359
        %4591 = vmatmul.mubr.bf16.gmra.mrb[0].mxu0 %v4358
        %v4592 = vpop.f32.mrb[0].mxu0
        %v4593 = vadd.f32 %v4081, %v4592
        %v4594 = vpop.f32.mrb[0].mxu0
        %v4595 = vadd.f32 %v4081, %v4594
        %v4596 = vpop.f32.mrb[0].mxu0
        %v4597 = vadd.f32 %v4086, %v4596
        %v4598 = vpop.f32.mrb[0].mxu0
        %v4599 = vadd.f32 %v4086, %v4598
        %4600 = vmatprep.mubr.bf16.mxu0 %v4363
        %4601 = vmatmul.mubr.bf16.gmra.mrb[0].mxu0 %v4362
        %v4602 = vpop.f32.mrb[0].mxu0
        %v4603 = vadd.f32 %v4091, %v4602
        %v4604 = vpop.f32.mrb[0].mxu0
        %v4605 = vadd.f32 %v4091, %v4604
        %v4606 = vpop.f32.mrb[0].mxu0
        %v4607 = vadd.f32 %v4096, %v4606
        %v4608 = vpop.f32.mrb[0].mxu0
        %v4609 = vadd.f32 %v4096, %v4608
        %4610 = vmatprep.mubr.bf16.mxu0 %v4367
        %4611 = vmatmul.mubr.bf16.gmra.mrb[0].mxu0 %v4366
        %v4612 = vpop.f32.mrb[0].mxu0
        %v4613 = vadd.f32 %v4101, %v4612
        %v4614 = vpop.f32.mrb[0].mxu0
        %v4615 = vadd.f32 %v4101, %v4614
        %v4616 = vpop.f32.mrb[0].mxu0
        %v4617 = vadd.f32 %v4106, %v4616
        %v4618 = vpop.f32.mrb[0].mxu0
        %v4619 = vadd.f32 %v4106, %v4618
        %4620 = vmatprep.mubr.bf16.mxu0 %v4371
        %4621 = vmatmul.mubr.bf16.gmra.mrb[0].mxu0 %v4370
        %v4622 = vpop.f32.mrb[0].mxu0
        %v4623 = vadd.f32 %v4111, %v4622
        %v4624 = vpop.f32.mrb[0].mxu0
        %v4625 = vadd.f32 %v4111, %v4624
        %v4626 = vpop.f32.mrb[0].mxu0
        %v4627 = vadd.f32 %v4116, %v4626
        %v4628 = vpop.f32.mrb[0].mxu0
        %v4629 = vadd.f32 %v4116, %v4628
        %4630 = vdwg.mxu0
        %4631 = vmatprep.subr.bf16.mxu0 %v3735
        %4632 = vmatpush1.bf16.msra.mxu0 %v3734
        %4633 = vmatprep.subr.bf16.mxu0 %v3743
        %4634 = vmatpush1.bf16.msra.mxu0 %v3742
        %4635 = vmatprep.subr.bf16.mxu0 %v3751
        %4636 = vmatpush1.bf16.msra.mxu0 %v3750
        %4637 = vmatprep.subr.bf16.mxu0 %v3759
        %4638 = vmatpush1.bf16.msra.mxu0 %v3758
        %4639 = vmatprep.subr.bf16.mxu0 %v3767
        %4640 = vmatpush1.bf16.msra.mxu0 %v3766
        %4641 = vmatprep.subr.bf16.mxu0 %v3775
        %4642 = vmatpush1.bf16.msra.mxu0 %v3774
        %4643 = vmatprep.subr.bf16.mxu0 %v3783
        %4644 = vmatpush1.bf16.msra.mxu0 %v3782
        %4645 = vmatprep.subr.bf16.mxu0 %v3791
        %4646 = vmatpush1.bf16.msra.mxu0 %v3790
        %4647 = vmatprep.subr.bf16.mxu0 %v3799
        %4648 = vmatpush1.bf16.msra.mxu0 %v3798
        %4649 = vmatprep.subr.bf16.mxu0 %v3807
        %4650 = vmatpush1.bf16.msra.mxu0 %v3806
        %4651 = vmatprep.subr.bf16.mxu0 %v3815
        %4652 = vmatpush1.bf16.msra.mxu0 %v3814
        %4653 = vmatprep.subr.bf16.mxu0 %v3823
        %4654 = vmatpush1.bf16.msra.mxu0 %v3822
        %4655 = vmatprep.subr.bf16.mxu0 %v3831
        %4656 = vmatpush1.bf16.msra.mxu0 %v3830
        %4657 = vmatprep.subr.bf16.mxu0 %v3839
        %4658 = vmatpush1.bf16.msra.mxu0 %v3838
        %4659 = vmatprep.subr.bf16.mxu0 %v3847
        %4660 = vmatpush1.bf16.msra.mxu0 %v3846
        %4661 = vmatprep.subr.bf16.mxu0 %v3855
        %4662 = vmatpush1.bf16.msra.mxu0 %v3854
        %4663 = vmatprep.mubr.bf16.mxu0 %v4313
        %4664 = vmatmul.mubr.bf16.gmra.mrb[0].mxu0 %v4312
        %v4665 = vpop.f32.mrb[0].mxu0
        %v4666 = vadd.f32 %v4473, %v4665
        %v4667 = vpop.f32.mrb[0].mxu0
        %v4668 = vadd.f32 %v4475, %v4667
        %v4669 = vpop.f32.mrb[0].mxu0
        %v4670 = vadd.f32 %v4477, %v4669
        %v4671 = vpop.f32.mrb[0].mxu0
        %v4672 = vadd.f32 %v4479, %v4671
        %4673 = vmatprep.mubr.bf16.mxu0 %v4317
        %4674 = vmatmul.mubr.bf16.gmra.mrb[0].mxu0 %v4316
        %v4675 = vpop.f32.mrb[0].mxu0
        %v4676 = vadd.f32 %v4483, %v4675
        %v4677 = vpop.f32.mrb[0].mxu0
        %v4678 = vadd.f32 %v4485, %v4677
        %v4679 = vpop.f32.mrb[0].mxu0
        %v4680 = vadd.f32 %v4487, %v4679
        %v4681 = vpop.f32.mrb[0].mxu0
        %v4682 = vadd.f32 %v4489, %v4681
        %4683 = vmatprep.mubr.bf16.mxu0 %v4321
        %4684 = vmatmul.mubr.bf16.gmra.mrb[0].mxu0 %v4320
        %v4685 = vpop.f32.mrb[0].mxu0
        %v4686 = vadd.f32 %v4493, %v4685
        %v4687 = vpop.f32.mrb[0].mxu0
        %v4688 = vadd.f32 %v4495, %v4687
        %v4689 = vpop.f32.mrb[0].mxu0
        %v4690 = vadd.f32 %v4497, %v4689
        %v4691 = vpop.f32.mrb[0].mxu0
        %v4692 = vadd.f32 %v4499, %v4691
        %4693 = vmatprep.mubr.bf16.mxu0 %v4325
        %4694 = vmatmul.mubr.bf16.gmra.mrb[0].mxu0 %v4324
        %v4695 = vpop.f32.mrb[0].mxu0
        %v4696 = vadd.f32 %v4503, %v4695
        %v4697 = vpop.f32.mrb[0].mxu0
        %v4698 = vadd.f32 %v4505, %v4697
        %v4699 = vpop.f32.mrb[0].mxu0
        %v4700 = vadd.f32 %v4507, %v4699
        %v4701 = vpop.f32.mrb[0].mxu0
        %v4702 = vadd.f32 %v4509, %v4701
        %4703 = vmatprep.mubr.bf16.mxu0 %v4329
        %4704 = vmatmul.mubr.bf16.gmra.mrb[0].mxu0 %v4328
        %v4705 = vpop.f32.mrb[0].mxu0
        %v4706 = vadd.f32 %v4513, %v4705
        %v4707 = vpop.f32.mrb[0].mxu0
        %v4708 = vadd.f32 %v4515, %v4707
        %v4709 = vpop.f32.mrb[0].mxu0
        %v4710 = vadd.f32 %v4517, %v4709
        %v4711 = vpop.f32.mrb[0].mxu0
        %v4712 = vadd.f32 %v4519, %v4711
        %4713 = vmatprep.mubr.bf16.mxu0 %v4333
        %4714 = vmatmul.mubr.bf16.gmra.mrb[0].mxu0 %v4332
        %v4715 = vpop.f32.mrb[0].mxu0
        %v4716 = vadd.f32 %v4523, %v4715
        %v4717 = vpop.f32.mrb[0].mxu0
        %v4718 = vadd.f32 %v4525, %v4717
        %v4719 = vpop.f32.mrb[0].mxu0
        %v4720 = vadd.f32 %v4527, %v4719
        %v4721 = vpop.f32.mrb[0].mxu0
        %v4722 = vadd.f32 %v4529, %v4721
        %4723 = vmatprep.mubr.bf16.mxu0 %v4337
        %4724 = vmatmul.mubr.bf16.gmra.mrb[0].mxu0 %v4336
        %v4725 = vpop.f32.mrb[0].mxu0
        %v4726 = vadd.f32 %v4533, %v4725
        %v4727 = vpop.f32.mrb[0].mxu0
        %v4728 = vadd.f32 %v4535, %v4727
        %v4729 = vpop.f32.mrb[0].mxu0
        %v4730 = vadd.f32 %v4537, %v4729
        %v4731 = vpop.f32.mrb[0].mxu0
        %v4732 = vadd.f32 %v4539, %v4731
        %4733 = vmatprep.mubr.bf16.mxu0 %v4341
        %4734 = vmatmul.mubr.bf16.gmra.mrb[0].mxu0 %v4340
        %v4735 = vpop.f32.mrb[0].mxu0
        %v4736 = vadd.f32 %v4543, %v4735
        %v4737 = vpop.f32.mrb[0].mxu0
        %v4738 = vadd.f32 %v4545, %v4737
        %v4739 = vpop.f32.mrb[0].mxu0
        %v4740 = vadd.f32 %v4547, %v4739
        %v4741 = vpop.f32.mrb[0].mxu0
        %v4742 = vadd.f32 %v4549, %v4741
        %4743 = vmatprep.mubr.bf16.mxu0 %v4345
        %4744 = vmatmul.mubr.bf16.gmra.mrb[0].mxu0 %v4344
        %v4745 = vpop.f32.mrb[0].mxu0
        %v4746 = vadd.f32 %v4553, %v4745
        %v4747 = vpop.f32.mrb[0].mxu0
        %v4748 = vadd.f32 %v4555, %v4747
        %v4749 = vpop.f32.mrb[0].mxu0
        %v4750 = vadd.f32 %v4557, %v4749
        %v4751 = vpop.f32.mrb[0].mxu0
        %v4752 = vadd.f32 %v4559, %v4751
        %4753 = vmatprep.mubr.bf16.mxu0 %v4349
        %4754 = vmatmul.mubr.bf16.gmra.mrb[0].mxu0 %v4348
        %v4755 = vpop.f32.mrb[0].mxu0
        %v4756 = vadd.f32 %v4563, %v4755
        %v4757 = vpop.f32.mrb[0].mxu0
        %v4758 = vadd.f32 %v4565, %v4757
        %v4759 = vpop.f32.mrb[0].mxu0
        %v4760 = vadd.f32 %v4567, %v4759
        %v4761 = vpop.f32.mrb[0].mxu0
        %v4762 = vadd.f32 %v4569, %v4761
        %4763 = vmatprep.mubr.bf16.mxu0 %v4353
        %4764 = vmatmul.mubr.bf16.gmra.mrb[0].mxu0 %v4352
        %v4765 = vpop.f32.mrb[0].mxu0
        %v4766 = vadd.f32 %v4573, %v4765
        %v4767 = vpop.f32.mrb[0].mxu0
        %v4768 = vadd.f32 %v4575, %v4767
        %v4769 = vpop.f32.mrb[0].mxu0
        %v4770 = vadd.f32 %v4577, %v4769
        %v4771 = vpop.f32.mrb[0].mxu0
        %v4772 = vadd.f32 %v4579, %v4771
        %4773 = vmatprep.mubr.bf16.mxu0 %v4357
        %4774 = vmatmul.mubr.bf16.gmra.mrb[0].mxu0 %v4356
        %v4775 = vpop.f32.mrb[0].mxu0
        %v4776 = vadd.f32 %v4583, %v4775
        %v4777 = vpop.f32.mrb[0].mxu0
        %v4778 = vadd.f32 %v4585, %v4777
        %v4779 = vpop.f32.mrb[0].mxu0
        %v4780 = vadd.f32 %v4587, %v4779
        %v4781 = vpop.f32.mrb[0].mxu0
        %v4782 = vadd.f32 %v4589, %v4781
        %4783 = vmatprep.mubr.bf16.mxu0 %v4361
        %4784 = vmatmul.mubr.bf16.gmra.mrb[0].mxu0 %v4360
        %v4785 = vpop.f32.mrb[0].mxu0
        %v4786 = vadd.f32 %v4593, %v4785
        %v4787 = vpop.f32.mrb[0].mxu0
        %v4788 = vadd.f32 %v4595, %v4787
        %v4789 = vpop.f32.mrb[0].mxu0
        %v4790 = vadd.f32 %v4597, %v4789
        %v4791 = vpop.f32.mrb[0].mxu0
        %v4792 = vadd.f32 %v4599, %v4791
        %4793 = vmatprep.mubr.bf16.mxu0 %v4365
        %4794 = vmatmul.mubr.bf16.gmra.mrb[0].mxu0 %v4364
        %v4795 = vpop.f32.mrb[0].mxu0
        %v4796 = vadd.f32 %v4603, %v4795
        %v4797 = vpop.f32.mrb[0].mxu0
        %v4798 = vadd.f32 %v4605, %v4797
        %v4799 = vpop.f32.mrb[0].mxu0
        %v4800 = vadd.f32 %v4607, %v4799
        %v4801 = vpop.f32.mrb[0].mxu0
        %v4802 = vadd.f32 %v4609, %v4801
        %4803 = vmatprep.mubr.bf16.mxu0 %v4369
        %4804 = vmatmul.mubr.bf16.gmra.mrb[0].mxu0 %v4368
        %v4805 = vpop.f32.mrb[0].mxu0
        %v4806 = vadd.f32 %v4613, %v4805
        %v4807 = vpop.f32.mrb[0].mxu0
        %v4808 = vadd.f32 %v4615, %v4807
        %v4809 = vpop.f32.mrb[0].mxu0
        %v4810 = vadd.f32 %v4617, %v4809
        %v4811 = vpop.f32.mrb[0].mxu0
        %v4812 = vadd.f32 %v4619, %v4811
        %4813 = vmatprep.mubr.bf16.mxu0 %v4373
        %4814 = vmatmul.mubr.bf16.gmra.mrb[0].mxu0 %v4372
        %v4815 = vpop.f32.mrb[0].mxu0
        %v4816 = vadd.f32 %v4623, %v4815
        %v4817 = vpop.f32.mrb[0].mxu0
        %v4818 = vadd.f32 %v4625, %v4817
        %v4819 = vpop.f32.mrb[0].mxu0
        %v4820 = vadd.f32 %v4627, %v4819
        %v4821 = vpop.f32.mrb[0].mxu0
        %v4822 = vadd.f32 %v4629, %v4821
        %4823 = vdwg.mxu0
        %4824 = vmatprep.subr.bf16.mxu0 %v3609
        %4825 = vmatpush1.bf16.msra.mxu0 %v3608
        %4826 = vmatprep.subr.bf16.mxu0 %v3617
        %4827 = vmatpush1.bf16.msra.mxu0 %v3616
        %4828 = vmatprep.subr.bf16.mxu0 %v3625
        %4829 = vmatpush1.bf16.msra.mxu0 %v3624
        %4830 = vmatprep.subr.bf16.mxu0 %v3633
        %4831 = vmatpush1.bf16.msra.mxu0 %v3632
        %4832 = vmatprep.subr.bf16.mxu0 %v3641
        %4833 = vmatpush1.bf16.msra.mxu0 %v3640
        %4834 = vmatprep.subr.bf16.mxu0 %v3649
        %4835 = vmatpush1.bf16.msra.mxu0 %v3648
        %4836 = vmatprep.subr.bf16.mxu0 %v3657
        %4837 = vmatpush1.bf16.msra.mxu0 %v3656
        %4838 = vmatprep.subr.bf16.mxu0 %v3665
        %4839 = vmatpush1.bf16.msra.mxu0 %v3664
        %4840 = vmatprep.subr.bf16.mxu0 %v3673
        %4841 = vmatpush1.bf16.msra.mxu0 %v3672
        %4842 = vmatprep.subr.bf16.mxu0 %v3681
        %4843 = vmatpush1.bf16.msra.mxu0 %v3680
        %4844 = vmatprep.subr.bf16.mxu0 %v3689
        %4845 = vmatpush1.bf16.msra.mxu0 %v3688
        %4846 = vmatprep.subr.bf16.mxu0 %v3697
        %4847 = vmatpush1.bf16.msra.mxu0 %v3696
        %4848 = vmatprep.subr.bf16.mxu0 %v3705
        %4849 = vmatpush1.bf16.msra.mxu0 %v3704
        %4850 = vmatprep.subr.bf16.mxu0 %v3713
        %4851 = vmatpush1.bf16.msra.mxu0 %v3712
        %4852 = vmatprep.subr.bf16.mxu0 %v3721
        %4853 = vmatpush1.bf16.msra.mxu0 %v3720
        %4854 = vmatprep.subr.bf16.mxu0 %v3729
        %4855 = vmatpush1.bf16.msra.mxu0 %v3728
        %4856 = vmatprep.mubr.bf16.mxu0 %v4311
        %4857 = vmatmul.mubr.bf16.gmra.mrb[0].mxu0 %v4310
        %v4858 = vpop.f32.mrb[0].mxu0
        %v4859 = vadd.f32 %v3961, %v4858
        %v4860 = vpop.f32.mrb[0].mxu0
        %v4861 = vadd.f32 %v3961, %v4860
        %v4862 = vpop.f32.mrb[0].mxu0
        %v4863 = vadd.f32 %v3966, %v4862
        %v4864 = vpop.f32.mrb[0].mxu0
        %v4865 = vadd.f32 %v3966, %v4864
        %4866 = vmatprep.mubr.bf16.mxu0 %v4315
        %4867 = vmatmul.mubr.bf16.gmra.mrb[0].mxu0 %v4314
        %v4868 = vpop.f32.mrb[0].mxu0
        %v4869 = vadd.f32 %v3971, %v4868
        %v4870 = vpop.f32.mrb[0].mxu0
        %v4871 = vadd.f32 %v3971, %v4870
        %v4872 = vpop.f32.mrb[0].mxu0
        %v4873 = vadd.f32 %v3976, %v4872
        %v4874 = vpop.f32.mrb[0].mxu0
        %v4875 = vadd.f32 %v3976, %v4874
        %4876 = vmatprep.mubr.bf16.mxu0 %v4319
        %4877 = vmatmul.mubr.bf16.gmra.mrb[0].mxu0 %v4318
        %v4878 = vpop.f32.mrb[0].mxu0
        %v4879 = vadd.f32 %v3981, %v4878
        %v4880 = vpop.f32.mrb[0].mxu0
        %v4881 = vadd.f32 %v3981, %v4880
        %v4882 = vpop.f32.mrb[0].mxu0
        %v4883 = vadd.f32 %v3986, %v4882
        %v4884 = vpop.f32.mrb[0].mxu0
        %v4885 = vadd.f32 %v3986, %v4884
        %4886 = vmatprep.mubr.bf16.mxu0 %v4323
        %4887 = vmatmul.mubr.bf16.gmra.mrb[0].mxu0 %v4322
        %v4888 = vpop.f32.mrb[0].mxu0
        %v4889 = vadd.f32 %v3991, %v4888
        %v4890 = vpop.f32.mrb[0].mxu0
        %v4891 = vadd.f32 %v3991, %v4890
        %v4892 = vpop.f32.mrb[0].mxu0
        %v4893 = vadd.f32 %v3996, %v4892
        %v4894 = vpop.f32.mrb[0].mxu0
        %v4895 = vadd.f32 %v3996, %v4894
        %4896 = vmatprep.mubr.bf16.mxu0 %v4327
        %4897 = vmatmul.mubr.bf16.gmra.mrb[0].mxu0 %v4326
        %v4898 = vpop.f32.mrb[0].mxu0
        %v4899 = vadd.f32 %v4001, %v4898
        %v4900 = vpop.f32.mrb[0].mxu0
        %v4901 = vadd.f32 %v4001, %v4900
        %v4902 = vpop.f32.mrb[0].mxu0
        %v4903 = vadd.f32 %v4006, %v4902
        %v4904 = vpop.f32.mrb[0].mxu0
        %v4905 = vadd.f32 %v4006, %v4904
        %4906 = vmatprep.mubr.bf16.mxu0 %v4331
        %4907 = vmatmul.mubr.bf16.gmra.mrb[0].mxu0 %v4330
        %v4908 = vpop.f32.mrb[0].mxu0
        %v4909 = vadd.f32 %v4011, %v4908
        %v4910 = vpop.f32.mrb[0].mxu0
        %v4911 = vadd.f32 %v4011, %v4910
        %v4912 = vpop.f32.mrb[0].mxu0
        %v4913 = vadd.f32 %v4016, %v4912
        %v4914 = vpop.f32.mrb[0].mxu0
        %v4915 = vadd.f32 %v4016, %v4914
        %4916 = vmatprep.mubr.bf16.mxu0 %v4335
        %4917 = vmatmul.mubr.bf16.gmra.mrb[0].mxu0 %v4334
        %v4918 = vpop.f32.mrb[0].mxu0
        %v4919 = vadd.f32 %v4021, %v4918
        %v4920 = vpop.f32.mrb[0].mxu0
        %v4921 = vadd.f32 %v4021, %v4920
        %v4922 = vpop.f32.mrb[0].mxu0
        %v4923 = vadd.f32 %v4026, %v4922
        %v4924 = vpop.f32.mrb[0].mxu0
        %v4925 = vadd.f32 %v4026, %v4924
        %4926 = vmatprep.mubr.bf16.mxu0 %v4339
        %4927 = vmatmul.mubr.bf16.gmra.mrb[0].mxu0 %v4338
        %v4928 = vpop.f32.mrb[0].mxu0
        %v4929 = vadd.f32 %v4031, %v4928
        %v4930 = vpop.f32.mrb[0].mxu0
        %v4931 = vadd.f32 %v4031, %v4930
        %v4932 = vpop.f32.mrb[0].mxu0
        %v4933 = vadd.f32 %v4036, %v4932
        %v4934 = vpop.f32.mrb[0].mxu0
        %v4935 = vadd.f32 %v4036, %v4934
        %4936 = vmatprep.mubr.bf16.mxu0 %v4343
        %4937 = vmatmul.mubr.bf16.gmra.mrb[0].mxu0 %v4342
        %v4938 = vpop.f32.mrb[0].mxu0
        %v4939 = vadd.f32 %v4041, %v4938
        %v4940 = vpop.f32.mrb[0].mxu0
        %v4941 = vadd.f32 %v4041, %v4940
        %v4942 = vpop.f32.mrb[0].mxu0
        %v4943 = vadd.f32 %v4046, %v4942
        %v4944 = vpop.f32.mrb[0].mxu0
        %v4945 = vadd.f32 %v4046, %v4944
        %4946 = vmatprep.mubr.bf16.mxu0 %v4347
        %4947 = vmatmul.mubr.bf16.gmra.mrb[0].mxu0 %v4346
        %v4948 = vpop.f32.mrb[0].mxu0
        %v4949 = vadd.f32 %v4051, %v4948
        %v4950 = vpop.f32.mrb[0].mxu0
        %v4951 = vadd.f32 %v4051, %v4950
        %v4952 = vpop.f32.mrb[0].mxu0
        %v4953 = vadd.f32 %v4056, %v4952
        %v4954 = vpop.f32.mrb[0].mxu0
        %v4955 = vadd.f32 %v4056, %v4954
        %4956 = vmatprep.mubr.bf16.mxu0 %v4351
        %4957 = vmatmul.mubr.bf16.gmra.mrb[0].mxu0 %v4350
        %v4958 = vpop.f32.mrb[0].mxu0
        %v4959 = vadd.f32 %v4061, %v4958
        %v4960 = vpop.f32.mrb[0].mxu0
        %v4961 = vadd.f32 %v4061, %v4960
        %v4962 = vpop.f32.mrb[0].mxu0
        %v4963 = vadd.f32 %v4066, %v4962
        %v4964 = vpop.f32.mrb[0].mxu0
        %v4965 = vadd.f32 %v4066, %v4964
        %4966 = vmatprep.mubr.bf16.mxu0 %v4355
        %4967 = vmatmul.mubr.bf16.gmra.mrb[0].mxu0 %v4354
        %v4968 = vpop.f32.mrb[0].mxu0
        %v4969 = vadd.f32 %v4071, %v4968
        %v4970 = vpop.f32.mrb[0].mxu0
        %v4971 = vadd.f32 %v4071, %v4970
        %v4972 = vpop.f32.mrb[0].mxu0
        %v4973 = vadd.f32 %v4076, %v4972
        %v4974 = vpop.f32.mrb[0].mxu0
        %v4975 = vadd.f32 %v4076, %v4974
        %4976 = vmatprep.mubr.bf16.mxu0 %v4359
        %4977 = vmatmul.mubr.bf16.gmra.mrb[0].mxu0 %v4358
        %v4978 = vpop.f32.mrb[0].mxu0
        %v4979 = vadd.f32 %v4081, %v4978
        %v4980 = vpop.f32.mrb[0].mxu0
        %v4981 = vadd.f32 %v4081, %v4980
        %v4982 = vpop.f32.mrb[0].mxu0
        %v4983 = vadd.f32 %v4086, %v4982
        %v4984 = vpop.f32.mrb[0].mxu0
        %v4985 = vadd.f32 %v4086, %v4984
        %4986 = vmatprep.mubr.bf16.mxu0 %v4363
        %4987 = vmatmul.mubr.bf16.gmra.mrb[0].mxu0 %v4362
        %v4988 = vpop.f32.mrb[0].mxu0
        %v4989 = vadd.f32 %v4091, %v4988
        %v4990 = vpop.f32.mrb[0].mxu0
        %v4991 = vadd.f32 %v4091, %v4990
        %v4992 = vpop.f32.mrb[0].mxu0
        %v4993 = vadd.f32 %v4096, %v4992
        %v4994 = vpop.f32.mrb[0].mxu0
        %v4995 = vadd.f32 %v4096, %v4994
        %4996 = vmatprep.mubr.bf16.mxu0 %v4367
        %4997 = vmatmul.mubr.bf16.gmra.mrb[0].mxu0 %v4366
        %v4998 = vpop.f32.mrb[0].mxu0
        %v4999 = vadd.f32 %v4101, %v4998
        %v5000 = vpop.f32.mrb[0].mxu0
        %v5001 = vadd.f32 %v4101, %v5000
        %v5002 = vpop.f32.mrb[0].mxu0
        %v5003 = vadd.f32 %v4106, %v5002
        %v5004 = vpop.f32.mrb[0].mxu0
        %v5005 = vadd.f32 %v4106, %v5004
        %5006 = vmatprep.mubr.bf16.mxu0 %v4371
        %5007 = vmatmul.mubr.bf16.gmra.mrb[0].mxu0 %v4370
        %v5008 = vpop.f32.mrb[0].mxu0
        %v5009 = vadd.f32 %v4111, %v5008
        %v5010 = vpop.f32.mrb[0].mxu0
        %v5011 = vadd.f32 %v4111, %v5010
        %v5012 = vpop.f32.mrb[0].mxu0
        %v5013 = vadd.f32 %v4116, %v5012
        %v5014 = vpop.f32.mrb[0].mxu0
        %v5015 = vadd.f32 %v4116, %v5014
        %5016 = vdwg.mxu0
        %5017 = vmatprep.subr.bf16.mxu0 %v3737
        %5018 = vmatpush1.bf16.msra.mxu0 %v3736
        %5019 = vmatprep.subr.bf16.mxu0 %v3745
        %5020 = vmatpush1.bf16.msra.mxu0 %v3744
        %5021 = vmatprep.subr.bf16.mxu0 %v3753
        %5022 = vmatpush1.bf16.msra.mxu0 %v3752
        %5023 = vmatprep.subr.bf16.mxu0 %v3761
        %5024 = vmatpush1.bf16.msra.mxu0 %v3760
        %5025 = vmatprep.subr.bf16.mxu0 %v3769
        %5026 = vmatpush1.bf16.msra.mxu0 %v3768
        %5027 = vmatprep.subr.bf16.mxu0 %v3777
        %5028 = vmatpush1.bf16.msra.mxu0 %v3776
        %5029 = vmatprep.subr.bf16.mxu0 %v3785
        %5030 = vmatpush1.bf16.msra.mxu0 %v3784
        %5031 = vmatprep.subr.bf16.mxu0 %v3793
        %5032 = vmatpush1.bf16.msra.mxu0 %v3792
        %5033 = vmatprep.subr.bf16.mxu0 %v3801
        %5034 = vmatpush1.bf16.msra.mxu0 %v3800
        %5035 = vmatprep.subr.bf16.mxu0 %v3809
        %5036 = vmatpush1.bf16.msra.mxu0 %v3808
        %5037 = vmatprep.subr.bf16.mxu0 %v3817
        %5038 = vmatpush1.bf16.msra.mxu0 %v3816
        %5039 = vmatprep.subr.bf16.mxu0 %v3825
        %5040 = vmatpush1.bf16.msra.mxu0 %v3824
        %5041 = vmatprep.subr.bf16.mxu0 %v3833
        %5042 = vmatpush1.bf16.msra.mxu0 %v3832
        %5043 = vmatprep.subr.bf16.mxu0 %v3841
        %5044 = vmatpush1.bf16.msra.mxu0 %v3840
        %5045 = vmatprep.subr.bf16.mxu0 %v3849
        %5046 = vmatpush1.bf16.msra.mxu0 %v3848
        %5047 = vmatprep.subr.bf16.mxu0 %v3857
        %5048 = vmatpush1.bf16.msra.mxu0 %v3856
        %5049 = vmatprep.mubr.bf16.mxu0 %v4313
        %5050 = vmatmul.mubr.bf16.gmra.mrb[0].mxu0 %v4312
        %v5051 = vpop.f32.mrb[0].mxu0
        %v5052 = vadd.f32 %v4859, %v5051
        %v5053 = vpop.f32.mrb[0].mxu0
        %v5054 = vadd.f32 %v4861, %v5053
        %v5055 = vpop.f32.mrb[0].mxu0
        %v5056 = vadd.f32 %v4863, %v5055
        %v5057 = vpop.f32.mrb[0].mxu0
        %v5058 = vadd.f32 %v4865, %v5057
        %5059 = vmatprep.mubr.bf16.mxu0 %v4317
        %5060 = vmatmul.mubr.bf16.gmra.mrb[0].mxu0 %v4316
        %v5061 = vpop.f32.mrb[0].mxu0
        %v5062 = vadd.f32 %v4869, %v5061
        %v5063 = vpop.f32.mrb[0].mxu0
        %v5064 = vadd.f32 %v4871, %v5063
        %v5065 = vpop.f32.mrb[0].mxu0
        %v5066 = vadd.f32 %v4873, %v5065
        %v5067 = vpop.f32.mrb[0].mxu0
        %v5068 = vadd.f32 %v4875, %v5067
        %5069 = vmatprep.mubr.bf16.mxu0 %v4321
        %5070 = vmatmul.mubr.bf16.gmra.mrb[0].mxu0 %v4320
        %v5071 = vpop.f32.mrb[0].mxu0
        %v5072 = vadd.f32 %v4879, %v5071
        %v5073 = vpop.f32.mrb[0].mxu0
        %v5074 = vadd.f32 %v4881, %v5073
        %v5075 = vpop.f32.mrb[0].mxu0
        %v5076 = vadd.f32 %v4883, %v5075
        %v5077 = vpop.f32.mrb[0].mxu0
        %v5078 = vadd.f32 %v4885, %v5077
        %5079 = vmatprep.mubr.bf16.mxu0 %v4325
        %5080 = vmatmul.mubr.bf16.gmra.mrb[0].mxu0 %v4324
        %v5081 = vpop.f32.mrb[0].mxu0
        %v5082 = vadd.f32 %v4889, %v5081
        %v5083 = vpop.f32.mrb[0].mxu0
        %v5084 = vadd.f32 %v4891, %v5083
        %v5085 = vpop.f32.mrb[0].mxu0
        %v5086 = vadd.f32 %v4893, %v5085
        %v5087 = vpop.f32.mrb[0].mxu0
        %v5088 = vadd.f32 %v4895, %v5087
        %5089 = vmatprep.mubr.bf16.mxu0 %v4329
        %5090 = vmatmul.mubr.bf16.gmra.mrb[0].mxu0 %v4328
        %v5091 = vpop.f32.mrb[0].mxu0
        %v5092 = vadd.f32 %v4899, %v5091
        %v5093 = vpop.f32.mrb[0].mxu0
        %v5094 = vadd.f32 %v4901, %v5093
        %v5095 = vpop.f32.mrb[0].mxu0
        %v5096 = vadd.f32 %v4903, %v5095
        %v5097 = vpop.f32.mrb[0].mxu0
        %v5098 = vadd.f32 %v4905, %v5097
        %5099 = vmatprep.mubr.bf16.mxu0 %v4333
        %5100 = vmatmul.mubr.bf16.gmra.mrb[0].mxu0 %v4332
        %v5101 = vpop.f32.mrb[0].mxu0
        %v5102 = vadd.f32 %v4909, %v5101
        %v5103 = vpop.f32.mrb[0].mxu0
        %v5104 = vadd.f32 %v4911, %v5103
        %v5105 = vpop.f32.mrb[0].mxu0
        %v5106 = vadd.f32 %v4913, %v5105
        %v5107 = vpop.f32.mrb[0].mxu0
        %v5108 = vadd.f32 %v4915, %v5107
        %5109 = vmatprep.mubr.bf16.mxu0 %v4337
        %5110 = vmatmul.mubr.bf16.gmra.mrb[0].mxu0 %v4336
        %v5111 = vpop.f32.mrb[0].mxu0
        %v5112 = vadd.f32 %v4919, %v5111
        %v5113 = vpop.f32.mrb[0].mxu0
        %v5114 = vadd.f32 %v4921, %v5113
        %v5115 = vpop.f32.mrb[0].mxu0
        %v5116 = vadd.f32 %v4923, %v5115
        %v5117 = vpop.f32.mrb[0].mxu0
        %v5118 = vadd.f32 %v4925, %v5117
        %5119 = vmatprep.mubr.bf16.mxu0 %v4341
        %5120 = vmatmul.mubr.bf16.gmra.mrb[0].mxu0 %v4340
        %v5121 = vpop.f32.mrb[0].mxu0
        %v5122 = vadd.f32 %v4929, %v5121
        %v5123 = vpop.f32.mrb[0].mxu0
        %v5124 = vadd.f32 %v4931, %v5123
        %v5125 = vpop.f32.mrb[0].mxu0
        %v5126 = vadd.f32 %v4933, %v5125
        %v5127 = vpop.f32.mrb[0].mxu0
        %v5128 = vadd.f32 %v4935, %v5127
        %5129 = vmatprep.mubr.bf16.mxu0 %v4345
        %5130 = vmatmul.mubr.bf16.gmra.mrb[0].mxu0 %v4344
        %v5131 = vpop.f32.mrb[0].mxu0
        %v5132 = vadd.f32 %v4939, %v5131
        %v5133 = vpop.f32.mrb[0].mxu0
        %v5134 = vadd.f32 %v4941, %v5133
        %v5135 = vpop.f32.mrb[0].mxu0
        %v5136 = vadd.f32 %v4943, %v5135
        %v5137 = vpop.f32.mrb[0].mxu0
        %v5138 = vadd.f32 %v4945, %v5137
        %5139 = vmatprep.mubr.bf16.mxu0 %v4349
        %5140 = vmatmul.mubr.bf16.gmra.mrb[0].mxu0 %v4348
        %v5141 = vpop.f32.mrb[0].mxu0
        %v5142 = vadd.f32 %v4949, %v5141
        %v5143 = vpop.f32.mrb[0].mxu0
        %v5144 = vadd.f32 %v4951, %v5143
        %v5145 = vpop.f32.mrb[0].mxu0
        %v5146 = vadd.f32 %v4953, %v5145
        %v5147 = vpop.f32.mrb[0].mxu0
        %v5148 = vadd.f32 %v4955, %v5147
        %5149 = vmatprep.mubr.bf16.mxu0 %v4353
        %5150 = vmatmul.mubr.bf16.gmra.mrb[0].mxu0 %v4352
        %v5151 = vpop.f32.mrb[0].mxu0
        %v5152 = vadd.f32 %v4959, %v5151
        %v5153 = vpop.f32.mrb[0].mxu0
        %v5154 = vadd.f32 %v4961, %v5153
        %v5155 = vpop.f32.mrb[0].mxu0
        %v5156 = vadd.f32 %v4963, %v5155
        %v5157 = vpop.f32.mrb[0].mxu0
        %v5158 = vadd.f32 %v4965, %v5157
        %5159 = vmatprep.mubr.bf16.mxu0 %v4357
        %5160 = vmatmul.mubr.bf16.gmra.mrb[0].mxu0 %v4356
        %v5161 = vpop.f32.mrb[0].mxu0
        %v5162 = vadd.f32 %v4969, %v5161
        %v5163 = vpop.f32.mrb[0].mxu0
        %v5164 = vadd.f32 %v4971, %v5163
        %v5165 = vpop.f32.mrb[0].mxu0
        %v5166 = vadd.f32 %v4973, %v5165
        %v5167 = vpop.f32.mrb[0].mxu0
        %v5168 = vadd.f32 %v4975, %v5167
        %5169 = vmatprep.mubr.bf16.mxu0 %v4361
        %5170 = vmatmul.mubr.bf16.gmra.mrb[0].mxu0 %v4360
        %v5171 = vpop.f32.mrb[0].mxu0
        %v5172 = vadd.f32 %v4979, %v5171
        %v5173 = vpop.f32.mrb[0].mxu0
        %v5174 = vadd.f32 %v4981, %v5173
        %v5175 = vpop.f32.mrb[0].mxu0
        %v5176 = vadd.f32 %v4983, %v5175
        %v5177 = vpop.f32.mrb[0].mxu0
        %v5178 = vadd.f32 %v4985, %v5177
        %5179 = vmatprep.mubr.bf16.mxu0 %v4365
        %5180 = vmatmul.mubr.bf16.gmra.mrb[0].mxu0 %v4364
        %v5181 = vpop.f32.mrb[0].mxu0
        %v5182 = vadd.f32 %v4989, %v5181
        %v5183 = vpop.f32.mrb[0].mxu0
        %v5184 = vadd.f32 %v4991, %v5183
        %v5185 = vpop.f32.mrb[0].mxu0
        %v5186 = vadd.f32 %v4993, %v5185
        %v5187 = vpop.f32.mrb[0].mxu0
        %v5188 = vadd.f32 %v4995, %v5187
        %5189 = vmatprep.mubr.bf16.mxu0 %v4369
        %5190 = vmatmul.mubr.bf16.gmra.mrb[0].mxu0 %v4368
        %v5191 = vpop.f32.mrb[0].mxu0
        %v5192 = vadd.f32 %v4999, %v5191
        %v5193 = vpop.f32.mrb[0].mxu0
        %v5194 = vadd.f32 %v5001, %v5193
        %v5195 = vpop.f32.mrb[0].mxu0
        %v5196 = vadd.f32 %v5003, %v5195
        %v5197 = vpop.f32.mrb[0].mxu0
        %v5198 = vadd.f32 %v5005, %v5197
        %5199 = vmatprep.mubr.bf16.mxu0 %v4373
        %5200 = vmatmul.mubr.bf16.gmra.mrb[0].mxu0 %v4372
        %v5201 = vpop.f32.mrb[0].mxu0
        %v5202 = vadd.f32 %v5009, %v5201
        %v5203 = vpop.f32.mrb[0].mxu0
        %v5204 = vadd.f32 %v5011, %v5203
        %v5205 = vpop.f32.mrb[0].mxu0
        %v5206 = vadd.f32 %v5013, %v5205
        %v5207 = vpop.f32.mrb[0].mxu0
        %v5208 = vadd.f32 %v5015, %v5207
        %5209 = vdwg.mxu0
        %5210 = vmatprep.subr.bf16.mxu0 %v3611
        %5211 = vmatpush1.bf16.msra.mxu0 %v3610
        %5212 = vmatprep.subr.bf16.mxu0 %v3619
        %5213 = vmatpush1.bf16.msra.mxu0 %v3618
        %5214 = vmatprep.subr.bf16.mxu0 %v3627
        %5215 = vmatpush1.bf16.msra.mxu0 %v3626
        %5216 = vmatprep.subr.bf16.mxu0 %v3635
        %5217 = vmatpush1.bf16.msra.mxu0 %v3634
        %5218 = vmatprep.subr.bf16.mxu0 %v3643
        %5219 = vmatpush1.bf16.msra.mxu0 %v3642
        %5220 = vmatprep.subr.bf16.mxu0 %v3651
        %5221 = vmatpush1.bf16.msra.mxu0 %v3650
        %5222 = vmatprep.subr.bf16.mxu0 %v3659
        %5223 = vmatpush1.bf16.msra.mxu0 %v3658
        %5224 = vmatprep.subr.bf16.mxu0 %v3667
        %5225 = vmatpush1.bf16.msra.mxu0 %v3666
        %5226 = vmatprep.subr.bf16.mxu0 %v3675
        %5227 = vmatpush1.bf16.msra.mxu0 %v3674
        %5228 = vmatprep.subr.bf16.mxu0 %v3683
        %5229 = vmatpush1.bf16.msra.mxu0 %v3682
        %5230 = vmatprep.subr.bf16.mxu0 %v3691
        %5231 = vmatpush1.bf16.msra.mxu0 %v3690
        %5232 = vmatprep.subr.bf16.mxu0 %v3699
        %5233 = vmatpush1.bf16.msra.mxu0 %v3698
        %5234 = vmatprep.subr.bf16.mxu0 %v3707
        %5235 = vmatpush1.bf16.msra.mxu0 %v3706
        %5236 = vmatprep.subr.bf16.mxu0 %v3715
        %5237 = vmatpush1.bf16.msra.mxu0 %v3714
        %5238 = vmatprep.subr.bf16.mxu0 %v3723
        %5239 = vmatpush1.bf16.msra.mxu0 %v3722
        %5240 = vmatprep.subr.bf16.mxu0 %v3731
        %5241 = vmatpush1.bf16.msra.mxu0 %v3730
        %5242 = vmatprep.mubr.bf16.mxu0 %v4311
        %5243 = vmatmul.mubr.bf16.gmra.mrb[0].mxu0 %v4310
        %v5244 = vpop.f32.mrb[0].mxu0
        %v5245 = vadd.f32 %v3961, %v5244
        %v5246 = vpop.f32.mrb[0].mxu0
        %v5247 = vadd.f32 %v3961, %v5246
        %v5248 = vpop.f32.mrb[0].mxu0
        %v5249 = vadd.f32 %v3966, %v5248
        %v5250 = vpop.f32.mrb[0].mxu0
        %v5251 = vadd.f32 %v3966, %v5250
        %5252 = vmatprep.mubr.bf16.mxu0 %v4315
        %5253 = vmatmul.mubr.bf16.gmra.mrb[0].mxu0 %v4314
        %v5254 = vpop.f32.mrb[0].mxu0
        %v5255 = vadd.f32 %v3971, %v5254
        %v5256 = vpop.f32.mrb[0].mxu0
        %v5257 = vadd.f32 %v3971, %v5256
        %v5258 = vpop.f32.mrb[0].mxu0
        %v5259 = vadd.f32 %v3976, %v5258
        %v5260 = vpop.f32.mrb[0].mxu0
        %v5261 = vadd.f32 %v3976, %v5260
        %5262 = vmatprep.mubr.bf16.mxu0 %v4319
        %5263 = vmatmul.mubr.bf16.gmra.mrb[0].mxu0 %v4318
        %v5264 = vpop.f32.mrb[0].mxu0
        %v5265 = vadd.f32 %v3981, %v5264
        %v5266 = vpop.f32.mrb[0].mxu0
        %v5267 = vadd.f32 %v3981, %v5266
        %v5268 = vpop.f32.mrb[0].mxu0
        %v5269 = vadd.f32 %v3986, %v5268
        %v5270 = vpop.f32.mrb[0].mxu0
        %v5271 = vadd.f32 %v3986, %v5270
        %5272 = vmatprep.mubr.bf16.mxu0 %v4323
        %5273 = vmatmul.mubr.bf16.gmra.mrb[0].mxu0 %v4322
        %v5274 = vpop.f32.mrb[0].mxu0
        %v5275 = vadd.f32 %v3991, %v5274
        %v5276 = vpop.f32.mrb[0].mxu0
        %v5277 = vadd.f32 %v3991, %v5276
        %v5278 = vpop.f32.mrb[0].mxu0
        %v5279 = vadd.f32 %v3996, %v5278
        %v5280 = vpop.f32.mrb[0].mxu0
        %v5281 = vadd.f32 %v3996, %v5280
        %5282 = vmatprep.mubr.bf16.mxu0 %v4327
        %5283 = vmatmul.mubr.bf16.gmra.mrb[0].mxu0 %v4326
        %v5284 = vpop.f32.mrb[0].mxu0
        %v5285 = vadd.f32 %v4001, %v5284
        %v5286 = vpop.f32.mrb[0].mxu0
        %v5287 = vadd.f32 %v4001, %v5286
        %v5288 = vpop.f32.mrb[0].mxu0
        %v5289 = vadd.f32 %v4006, %v5288
        %v5290 = vpop.f32.mrb[0].mxu0
        %v5291 = vadd.f32 %v4006, %v5290
        %5292 = vmatprep.mubr.bf16.mxu0 %v4331
        %5293 = vmatmul.mubr.bf16.gmra.mrb[0].mxu0 %v4330
        %v5294 = vpop.f32.mrb[0].mxu0
        %v5295 = vadd.f32 %v4011, %v5294
        %v5296 = vpop.f32.mrb[0].mxu0
        %v5297 = vadd.f32 %v4011, %v5296
        %v5298 = vpop.f32.mrb[0].mxu0
        %v5299 = vadd.f32 %v4016, %v5298
        %v5300 = vpop.f32.mrb[0].mxu0
        %v5301 = vadd.f32 %v4016, %v5300
        %5302 = vmatprep.mubr.bf16.mxu0 %v4335
        %5303 = vmatmul.mubr.bf16.gmra.mrb[0].mxu0 %v4334
        %v5304 = vpop.f32.mrb[0].mxu0
        %v5305 = vadd.f32 %v4021, %v5304
        %v5306 = vpop.f32.mrb[0].mxu0
        %v5307 = vadd.f32 %v4021, %v5306
        %v5308 = vpop.f32.mrb[0].mxu0
        %v5309 = vadd.f32 %v4026, %v5308
        %v5310 = vpop.f32.mrb[0].mxu0
        %v5311 = vadd.f32 %v4026, %v5310
        %5312 = vmatprep.mubr.bf16.mxu0 %v4339
        %5313 = vmatmul.mubr.bf16.gmra.mrb[0].mxu0 %v4338
        %v5314 = vpop.f32.mrb[0].mxu0
        %v5315 = vadd.f32 %v4031, %v5314
        %v5316 = vpop.f32.mrb[0].mxu0
        %v5317 = vadd.f32 %v4031, %v5316
        %v5318 = vpop.f32.mrb[0].mxu0
        %v5319 = vadd.f32 %v4036, %v5318
        %v5320 = vpop.f32.mrb[0].mxu0
        %v5321 = vadd.f32 %v4036, %v5320
        %5322 = vmatprep.mubr.bf16.mxu0 %v4343
        %5323 = vmatmul.mubr.bf16.gmra.mrb[0].mxu0 %v4342
        %v5324 = vpop.f32.mrb[0].mxu0
        %v5325 = vadd.f32 %v4041, %v5324
        %v5326 = vpop.f32.mrb[0].mxu0
        %v5327 = vadd.f32 %v4041, %v5326
        %v5328 = vpop.f32.mrb[0].mxu0
        %v5329 = vadd.f32 %v4046, %v5328
        %v5330 = vpop.f32.mrb[0].mxu0
        %v5331 = vadd.f32 %v4046, %v5330
        %5332 = vmatprep.mubr.bf16.mxu0 %v4347
        %5333 = vmatmul.mubr.bf16.gmra.mrb[0].mxu0 %v4346
        %v5334 = vpop.f32.mrb[0].mxu0
        %v5335 = vadd.f32 %v4051, %v5334
        %v5336 = vpop.f32.mrb[0].mxu0
        %v5337 = vadd.f32 %v4051, %v5336
        %v5338 = vpop.f32.mrb[0].mxu0
        %v5339 = vadd.f32 %v4056, %v5338
        %v5340 = vpop.f32.mrb[0].mxu0
        %v5341 = vadd.f32 %v4056, %v5340
        %5342 = vmatprep.mubr.bf16.mxu0 %v4351
        %5343 = vmatmul.mubr.bf16.gmra.mrb[0].mxu0 %v4350
        %v5344 = vpop.f32.mrb[0].mxu0
        %v5345 = vadd.f32 %v4061, %v5344
        %v5346 = vpop.f32.mrb[0].mxu0
        %v5347 = vadd.f32 %v4061, %v5346
        %v5348 = vpop.f32.mrb[0].mxu0
        %v5349 = vadd.f32 %v4066, %v5348
        %v5350 = vpop.f32.mrb[0].mxu0
        %v5351 = vadd.f32 %v4066, %v5350
        %5352 = vmatprep.mubr.bf16.mxu0 %v4355
        %5353 = vmatmul.mubr.bf16.gmra.mrb[0].mxu0 %v4354
        %v5354 = vpop.f32.mrb[0].mxu0
        %v5355 = vadd.f32 %v4071, %v5354
        %v5356 = vpop.f32.mrb[0].mxu0
        %v5357 = vadd.f32 %v4071, %v5356
        %v5358 = vpop.f32.mrb[0].mxu0
        %v5359 = vadd.f32 %v4076, %v5358
        %v5360 = vpop.f32.mrb[0].mxu0
        %v5361 = vadd.f32 %v4076, %v5360
        %5362 = vmatprep.mubr.bf16.mxu0 %v4359
        %5363 = vmatmul.mubr.bf16.gmra.mrb[0].mxu0 %v4358
        %v5364 = vpop.f32.mrb[0].mxu0
        %v5365 = vadd.f32 %v4081, %v5364
        %v5366 = vpop.f32.mrb[0].mxu0
        %v5367 = vadd.f32 %v4081, %v5366
        %v5368 = vpop.f32.mrb[0].mxu0
        %v5369 = vadd.f32 %v4086, %v5368
        %v5370 = vpop.f32.mrb[0].mxu0
        %v5371 = vadd.f32 %v4086, %v5370
        %5372 = vmatprep.mubr.bf16.mxu0 %v4363
        %5373 = vmatmul.mubr.bf16.gmra.mrb[0].mxu0 %v4362
        %v5374 = vpop.f32.mrb[0].mxu0
        %v5375 = vadd.f32 %v4091, %v5374
        %v5376 = vpop.f32.mrb[0].mxu0
        %v5377 = vadd.f32 %v4091, %v5376
        %v5378 = vpop.f32.mrb[0].mxu0
        %v5379 = vadd.f32 %v4096, %v5378
        %v5380 = vpop.f32.mrb[0].mxu0
        %v5381 = vadd.f32 %v4096, %v5380
        %5382 = vmatprep.mubr.bf16.mxu0 %v4367
        %5383 = vmatmul.mubr.bf16.gmra.mrb[0].mxu0 %v4366
        %v5384 = vpop.f32.mrb[0].mxu0
        %v5385 = vadd.f32 %v4101, %v5384
        %v5386 = vpop.f32.mrb[0].mxu0
        %v5387 = vadd.f32 %v4101, %v5386
        %v5388 = vpop.f32.mrb[0].mxu0
        %v5389 = vadd.f32 %v4106, %v5388
        %v5390 = vpop.f32.mrb[0].mxu0
        %v5391 = vadd.f32 %v4106, %v5390
        %5392 = vmatprep.mubr.bf16.mxu0 %v4371
        %5393 = vmatmul.mubr.bf16.gmra.mrb[0].mxu0 %v4370
        %v5394 = vpop.f32.mrb[0].mxu0
        %v5395 = vadd.f32 %v4111, %v5394
        %v5396 = vpop.f32.mrb[0].mxu0
        %v5397 = vadd.f32 %v4111, %v5396
        %v5398 = vpop.f32.mrb[0].mxu0
        %v5399 = vadd.f32 %v4116, %v5398
        %v5400 = vpop.f32.mrb[0].mxu0
        %v5401 = vadd.f32 %v4116, %v5400
        %5402 = vdwg.mxu0
        %5403 = vmatprep.subr.bf16.mxu0 %v3739
        %5404 = vmatpush1.bf16.msra.mxu0 %v3738
        %5405 = vmatprep.subr.bf16.mxu0 %v3747
        %5406 = vmatpush1.bf16.msra.mxu0 %v3746
        %5407 = vmatprep.subr.bf16.mxu0 %v3755
        %5408 = vmatpush1.bf16.msra.mxu0 %v3754
        %5409 = vmatprep.subr.bf16.mxu0 %v3763
        %5410 = vmatpush1.bf16.msra.mxu0 %v3762
        %5411 = vmatprep.subr.bf16.mxu0 %v3771
        %5412 = vmatpush1.bf16.msra.mxu0 %v3770
        %5413 = vmatprep.subr.bf16.mxu0 %v3779
        %5414 = vmatpush1.bf16.msra.mxu0 %v3778
        %5415 = vmatprep.subr.bf16.mxu0 %v3787
        %5416 = vmatpush1.bf16.msra.mxu0 %v3786
        %5417 = vmatprep.subr.bf16.mxu0 %v3795
        %5418 = vmatpush1.bf16.msra.mxu0 %v3794
        %5419 = vmatprep.subr.bf16.mxu0 %v3803
        %5420 = vmatpush1.bf16.msra.mxu0 %v3802
        %5421 = vmatprep.subr.bf16.mxu0 %v3811
        %5422 = vmatpush1.bf16.msra.mxu0 %v3810
        %5423 = vmatprep.subr.bf16.mxu0 %v3819
        %5424 = vmatpush1.bf16.msra.mxu0 %v3818
        %5425 = vmatprep.subr.bf16.mxu0 %v3827
        %5426 = vmatpush1.bf16.msra.mxu0 %v3826
        %5427 = vmatprep.subr.bf16.mxu0 %v3835
        %5428 = vmatpush1.bf16.msra.mxu0 %v3834
        %5429 = vmatprep.subr.bf16.mxu0 %v3843
        %5430 = vmatpush1.bf16.msra.mxu0 %v3842
        %5431 = vmatprep.subr.bf16.mxu0 %v3851
        %5432 = vmatpush1.bf16.msra.mxu0 %v3850
        %5433 = vmatprep.subr.bf16.mxu0 %v3859
        %5434 = vmatpush1.bf16.msra.mxu0 %v3858
        %5435 = vmatprep.mubr.bf16.mxu0 %v4313
        %5436 = vmatmul.mubr.bf16.gmra.mrb[0].mxu0 %v4312
        %v5437 = vpop.f32.mrb[0].mxu0
        %v5438 = vadd.f32 %v5245, %v5437
        %v5439 = vpop.f32.mrb[0].mxu0
        %v5440 = vadd.f32 %v5247, %v5439
        %v5441 = vpop.f32.mrb[0].mxu0
        %v5442 = vadd.f32 %v5249, %v5441
        %v5443 = vpop.f32.mrb[0].mxu0
        %v5444 = vadd.f32 %v5251, %v5443
        %5445 = vmatprep.mubr.bf16.mxu0 %v4317
        %5446 = vmatmul.mubr.bf16.gmra.mrb[0].mxu0 %v4316
        %v5447 = vpop.f32.mrb[0].mxu0
        %v5448 = vadd.f32 %v5255, %v5447
        %v5449 = vpop.f32.mrb[0].mxu0
        %v5450 = vadd.f32 %v5257, %v5449
        %v5451 = vpop.f32.mrb[0].mxu0
        %v5452 = vadd.f32 %v5259, %v5451
        %v5453 = vpop.f32.mrb[0].mxu0
        %v5454 = vadd.f32 %v5261, %v5453
        %5455 = vmatprep.mubr.bf16.mxu0 %v4321
        %5456 = vmatmul.mubr.bf16.gmra.mrb[0].mxu0 %v4320
        %v5457 = vpop.f32.mrb[0].mxu0
        %v5458 = vadd.f32 %v5265, %v5457
        %v5459 = vpop.f32.mrb[0].mxu0
        %v5460 = vadd.f32 %v5267, %v5459
        %v5461 = vpop.f32.mrb[0].mxu0
        %v5462 = vadd.f32 %v5269, %v5461
        %v5463 = vpop.f32.mrb[0].mxu0
        %v5464 = vadd.f32 %v5271, %v5463
        %5465 = vmatprep.mubr.bf16.mxu0 %v4325
        %5466 = vmatmul.mubr.bf16.gmra.mrb[0].mxu0 %v4324
        %v5467 = vpop.f32.mrb[0].mxu0
        %v5468 = vadd.f32 %v5275, %v5467
        %v5469 = vpop.f32.mrb[0].mxu0
        %v5470 = vadd.f32 %v5277, %v5469
        %v5471 = vpop.f32.mrb[0].mxu0
        %v5472 = vadd.f32 %v5279, %v5471
        %v5473 = vpop.f32.mrb[0].mxu0
        %v5474 = vadd.f32 %v5281, %v5473
        %5475 = vmatprep.mubr.bf16.mxu0 %v4329
        %5476 = vmatmul.mubr.bf16.gmra.mrb[0].mxu0 %v4328
        %v5477 = vpop.f32.mrb[0].mxu0
        %v5478 = vadd.f32 %v5285, %v5477
        %v5479 = vpop.f32.mrb[0].mxu0
        %v5480 = vadd.f32 %v5287, %v5479
        %v5481 = vpop.f32.mrb[0].mxu0
        %v5482 = vadd.f32 %v5289, %v5481
        %v5483 = vpop.f32.mrb[0].mxu0
        %v5484 = vadd.f32 %v5291, %v5483
        %5485 = vmatprep.mubr.bf16.mxu0 %v4333
        %5486 = vmatmul.mubr.bf16.gmra.mrb[0].mxu0 %v4332
        %v5487 = vpop.f32.mrb[0].mxu0
        %v5488 = vadd.f32 %v5295, %v5487
        %v5489 = vpop.f32.mrb[0].mxu0
        %v5490 = vadd.f32 %v5297, %v5489
        %v5491 = vpop.f32.mrb[0].mxu0
        %v5492 = vadd.f32 %v5299, %v5491
        %v5493 = vpop.f32.mrb[0].mxu0
        %v5494 = vadd.f32 %v5301, %v5493
        %5495 = vmatprep.mubr.bf16.mxu0 %v4337
        %5496 = vmatmul.mubr.bf16.gmra.mrb[0].mxu0 %v4336
        %v5497 = vpop.f32.mrb[0].mxu0
        %v5498 = vadd.f32 %v5305, %v5497
        %v5499 = vpop.f32.mrb[0].mxu0
        %v5500 = vadd.f32 %v5307, %v5499
        %v5501 = vpop.f32.mrb[0].mxu0
        %v5502 = vadd.f32 %v5309, %v5501
        %v5503 = vpop.f32.mrb[0].mxu0
        %v5504 = vadd.f32 %v5311, %v5503
        %5505 = vmatprep.mubr.bf16.mxu0 %v4341
        %5506 = vmatmul.mubr.bf16.gmra.mrb[0].mxu0 %v4340
        %v5507 = vpop.f32.mrb[0].mxu0
        %v5508 = vadd.f32 %v5315, %v5507
        %v5509 = vpop.f32.mrb[0].mxu0
        %v5510 = vadd.f32 %v5317, %v5509
        %v5511 = vpop.f32.mrb[0].mxu0
        %v5512 = vadd.f32 %v5319, %v5511
        %v5513 = vpop.f32.mrb[0].mxu0
        %v5514 = vadd.f32 %v5321, %v5513
        %5515 = vmatprep.mubr.bf16.mxu0 %v4345
        %5516 = vmatmul.mubr.bf16.gmra.mrb[0].mxu0 %v4344
        %v5517 = vpop.f32.mrb[0].mxu0
        %v5518 = vadd.f32 %v5325, %v5517
        %v5519 = vpop.f32.mrb[0].mxu0
        %v5520 = vadd.f32 %v5327, %v5519
        %v5521 = vpop.f32.mrb[0].mxu0
        %v5522 = vadd.f32 %v5329, %v5521
        %v5523 = vpop.f32.mrb[0].mxu0
        %v5524 = vadd.f32 %v5331, %v5523
        %5525 = vmatprep.mubr.bf16.mxu0 %v4349
        %5526 = vmatmul.mubr.bf16.gmra.mrb[0].mxu0 %v4348
        %v5527 = vpop.f32.mrb[0].mxu0
        %v5528 = vadd.f32 %v5335, %v5527
        %v5529 = vpop.f32.mrb[0].mxu0
        %v5530 = vadd.f32 %v5337, %v5529
        %v5531 = vpop.f32.mrb[0].mxu0
        %v5532 = vadd.f32 %v5339, %v5531
        %v5533 = vpop.f32.mrb[0].mxu0
        %v5534 = vadd.f32 %v5341, %v5533
        %5535 = vmatprep.mubr.bf16.mxu0 %v4353
        %5536 = vmatmul.mubr.bf16.gmra.mrb[0].mxu0 %v4352
        %v5537 = vpop.f32.mrb[0].mxu0
        %v5538 = vadd.f32 %v5345, %v5537
        %v5539 = vpop.f32.mrb[0].mxu0
        %v5540 = vadd.f32 %v5347, %v5539
        %v5541 = vpop.f32.mrb[0].mxu0
        %v5542 = vadd.f32 %v5349, %v5541
        %v5543 = vpop.f32.mrb[0].mxu0
        %v5544 = vadd.f32 %v5351, %v5543
        %5545 = vmatprep.mubr.bf16.mxu0 %v4357
        %5546 = vmatmul.mubr.bf16.gmra.mrb[0].mxu0 %v4356
        %v5547 = vpop.f32.mrb[0].mxu0
        %v5548 = vadd.f32 %v5355, %v5547
        %v5549 = vpop.f32.mrb[0].mxu0
        %v5550 = vadd.f32 %v5357, %v5549
        %v5551 = vpop.f32.mrb[0].mxu0
        %v5552 = vadd.f32 %v5359, %v5551
        %v5553 = vpop.f32.mrb[0].mxu0
        %v5554 = vadd.f32 %v5361, %v5553
        %5555 = vmatprep.mubr.bf16.mxu0 %v4361
        %5556 = vmatmul.mubr.bf16.gmra.mrb[0].mxu0 %v4360
        %v5557 = vpop.f32.mrb[0].mxu0
        %v5558 = vadd.f32 %v5365, %v5557
        %v5559 = vpop.f32.mrb[0].mxu0
        %v5560 = vadd.f32 %v5367, %v5559
        %v5561 = vpop.f32.mrb[0].mxu0
        %v5562 = vadd.f32 %v5369, %v5561
        %v5563 = vpop.f32.mrb[0].mxu0
        %v5564 = vadd.f32 %v5371, %v5563
        %5565 = vmatprep.mubr.bf16.mxu0 %v4365
        %5566 = vmatmul.mubr.bf16.gmra.mrb[0].mxu0 %v4364
        %v5567 = vpop.f32.mrb[0].mxu0
        %v5568 = vadd.f32 %v5375, %v5567
        %v5569 = vpop.f32.mrb[0].mxu0
        %v5570 = vadd.f32 %v5377, %v5569
        %v5571 = vpop.f32.mrb[0].mxu0
        %v5572 = vadd.f32 %v5379, %v5571
        %v5573 = vpop.f32.mrb[0].mxu0
        %v5574 = vadd.f32 %v5381, %v5573
        %5575 = vmatprep.mubr.bf16.mxu0 %v4369
        %5576 = vmatmul.mubr.bf16.gmra.mrb[0].mxu0 %v4368
        %v5577 = vpop.f32.mrb[0].mxu0
        %v5578 = vadd.f32 %v5385, %v5577
        %v5579 = vpop.f32.mrb[0].mxu0
        %v5580 = vadd.f32 %v5387, %v5579
        %v5581 = vpop.f32.mrb[0].mxu0
        %v5582 = vadd.f32 %v5389, %v5581
        %v5583 = vpop.f32.mrb[0].mxu0
        %v5584 = vadd.f32 %v5391, %v5583
        %5585 = vmatprep.mubr.bf16.mxu0 %v4373
        %5586 = vmatmul.mubr.bf16.gmra.mrb[0].mxu0 %v4372
        %v5587 = vpop.f32.mrb[0].mxu0
        %v5588 = vadd.f32 %v5395, %v5587
        %v5589 = vpop.f32.mrb[0].mxu0
        %v5590 = vadd.f32 %v5397, %v5589
        %v5591 = vpop.f32.mrb[0].mxu0
        %v5592 = vadd.f32 %v5399, %v5591
        %v5593 = vpop.f32.mrb[0].mxu0
        %v5594 = vadd.f32 %v5401, %v5593
        %5595 = vdwg.mxu0
        %5596 = vmatprep.subr.bf16.mxu0 %v3613
        %5597 = vmatpush1.bf16.msra.mxu0 %v3612
        %5598 = vmatprep.subr.bf16.mxu0 %v3621
        %5599 = vmatpush1.bf16.msra.mxu0 %v3620
        %5600 = vmatprep.subr.bf16.mxu0 %v3629
        %5601 = vmatpush1.bf16.msra.mxu0 %v3628
        %5602 = vmatprep.subr.bf16.mxu0 %v3637
        %5603 = vmatpush1.bf16.msra.mxu0 %v3636
        %5604 = vmatprep.subr.bf16.mxu0 %v3645
        %5605 = vmatpush1.bf16.msra.mxu0 %v3644
        %5606 = vmatprep.subr.bf16.mxu0 %v3653
        %5607 = vmatpush1.bf16.msra.mxu0 %v3652
        %5608 = vmatprep.subr.bf16.mxu0 %v3661
        %5609 = vmatpush1.bf16.msra.mxu0 %v3660
        %5610 = vmatprep.subr.bf16.mxu0 %v3669
        %5611 = vmatpush1.bf16.msra.mxu0 %v3668
        %5612 = vmatprep.subr.bf16.mxu0 %v3677
        %5613 = vmatpush1.bf16.msra.mxu0 %v3676
        %5614 = vmatprep.subr.bf16.mxu0 %v3685
        %5615 = vmatpush1.bf16.msra.mxu0 %v3684
        %5616 = vmatprep.subr.bf16.mxu0 %v3693
        %5617 = vmatpush1.bf16.msra.mxu0 %v3692
        %5618 = vmatprep.subr.bf16.mxu0 %v3701
        %5619 = vmatpush1.bf16.msra.mxu0 %v3700
        %5620 = vmatprep.subr.bf16.mxu0 %v3709
        %5621 = vmatpush1.bf16.msra.mxu0 %v3708
        %5622 = vmatprep.subr.bf16.mxu0 %v3717
        %5623 = vmatpush1.bf16.msra.mxu0 %v3716
        %5624 = vmatprep.subr.bf16.mxu0 %v3725
        %5625 = vmatpush1.bf16.msra.mxu0 %v3724
        %5626 = vmatprep.subr.bf16.mxu0 %v3733
        %5627 = vmatpush1.bf16.msra.mxu0 %v3732
        %5628 = vmatprep.mubr.bf16.mxu0 %v4311
        %5629 = vmatmul.mubr.bf16.gmra.mrb[0].mxu0 %v4310
        %v5630 = vpop.f32.mrb[0].mxu0
        %v5631 = vadd.f32 %v3961, %v5630
        %v5632 = vpop.f32.mrb[0].mxu0
        %v5633 = vadd.f32 %v3961, %v5632
        %v5634 = vpop.f32.mrb[0].mxu0
        %v5635 = vadd.f32 %v3966, %v5634
        %v5636 = vpop.f32.mrb[0].mxu0
        %v5637 = vadd.f32 %v3966, %v5636
        %5638 = vmatprep.mubr.bf16.mxu0 %v4315
        %5639 = vmatmul.mubr.bf16.gmra.mrb[0].mxu0 %v4314
        %v5640 = vpop.f32.mrb[0].mxu0
        %v5641 = vadd.f32 %v3971, %v5640
        %v5642 = vpop.f32.mrb[0].mxu0
        %v5643 = vadd.f32 %v3971, %v5642
        %v5644 = vpop.f32.mrb[0].mxu0
        %v5645 = vadd.f32 %v3976, %v5644
        %v5646 = vpop.f32.mrb[0].mxu0
        %v5647 = vadd.f32 %v3976, %v5646
        %5648 = vmatprep.mubr.bf16.mxu0 %v4319
        %5649 = vmatmul.mubr.bf16.gmra.mrb[0].mxu0 %v4318
        %v5650 = vpop.f32.mrb[0].mxu0
        %v5651 = vadd.f32 %v3981, %v5650
        %v5652 = vpop.f32.mrb[0].mxu0
        %v5653 = vadd.f32 %v3981, %v5652
        %v5654 = vpop.f32.mrb[0].mxu0
        %v5655 = vadd.f32 %v3986, %v5654
        %v5656 = vpop.f32.mrb[0].mxu0
        %v5657 = vadd.f32 %v3986, %v5656
        %5658 = vmatprep.mubr.bf16.mxu0 %v4323
        %5659 = vmatmul.mubr.bf16.gmra.mrb[0].mxu0 %v4322
        %v5660 = vpop.f32.mrb[0].mxu0
        %v5661 = vadd.f32 %v3991, %v5660
        %v5662 = vpop.f32.mrb[0].mxu0
        %v5663 = vadd.f32 %v3991, %v5662
        %v5664 = vpop.f32.mrb[0].mxu0
        %v5665 = vadd.f32 %v3996, %v5664
        %v5666 = vpop.f32.mrb[0].mxu0
        %v5667 = vadd.f32 %v3996, %v5666
        %5668 = vmatprep.mubr.bf16.mxu0 %v4327
        %5669 = vmatmul.mubr.bf16.gmra.mrb[0].mxu0 %v4326
        %v5670 = vpop.f32.mrb[0].mxu0
        %v5671 = vadd.f32 %v4001, %v5670
        %v5672 = vpop.f32.mrb[0].mxu0
        %v5673 = vadd.f32 %v4001, %v5672
        %v5674 = vpop.f32.mrb[0].mxu0
        %v5675 = vadd.f32 %v4006, %v5674
        %v5676 = vpop.f32.mrb[0].mxu0
        %v5677 = vadd.f32 %v4006, %v5676
        %5678 = vmatprep.mubr.bf16.mxu0 %v4331
        %5679 = vmatmul.mubr.bf16.gmra.mrb[0].mxu0 %v4330
        %v5680 = vpop.f32.mrb[0].mxu0
        %v5681 = vadd.f32 %v4011, %v5680
        %v5682 = vpop.f32.mrb[0].mxu0
        %v5683 = vadd.f32 %v4011, %v5682
        %v5684 = vpop.f32.mrb[0].mxu0
        %v5685 = vadd.f32 %v4016, %v5684
        %v5686 = vpop.f32.mrb[0].mxu0
        %v5687 = vadd.f32 %v4016, %v5686
        %5688 = vmatprep.mubr.bf16.mxu0 %v4335
        %5689 = vmatmul.mubr.bf16.gmra.mrb[0].mxu0 %v4334
        %v5690 = vpop.f32.mrb[0].mxu0
        %v5691 = vadd.f32 %v4021, %v5690
        %v5692 = vpop.f32.mrb[0].mxu0
        %v5693 = vadd.f32 %v4021, %v5692
        %v5694 = vpop.f32.mrb[0].mxu0
        %v5695 = vadd.f32 %v4026, %v5694
        %v5696 = vpop.f32.mrb[0].mxu0
        %v5697 = vadd.f32 %v4026, %v5696
        %5698 = vmatprep.mubr.bf16.mxu0 %v4339
        %5699 = vmatmul.mubr.bf16.gmra.mrb[0].mxu0 %v4338
        %v5700 = vpop.f32.mrb[0].mxu0
        %v5701 = vadd.f32 %v4031, %v5700
        %v5702 = vpop.f32.mrb[0].mxu0
        %v5703 = vadd.f32 %v4031, %v5702
        %v5704 = vpop.f32.mrb[0].mxu0
        %v5705 = vadd.f32 %v4036, %v5704
        %v5706 = vpop.f32.mrb[0].mxu0
        %v5707 = vadd.f32 %v4036, %v5706
        %5708 = vmatprep.mubr.bf16.mxu0 %v4343
        %5709 = vmatmul.mubr.bf16.gmra.mrb[0].mxu0 %v4342
        %v5710 = vpop.f32.mrb[0].mxu0
        %v5711 = vadd.f32 %v4041, %v5710
        %v5712 = vpop.f32.mrb[0].mxu0
        %v5713 = vadd.f32 %v4041, %v5712
        %v5714 = vpop.f32.mrb[0].mxu0
        %v5715 = vadd.f32 %v4046, %v5714
        %v5716 = vpop.f32.mrb[0].mxu0
        %v5717 = vadd.f32 %v4046, %v5716
        %5718 = vmatprep.mubr.bf16.mxu0 %v4347
        %5719 = vmatmul.mubr.bf16.gmra.mrb[0].mxu0 %v4346
        %v5720 = vpop.f32.mrb[0].mxu0
        %v5721 = vadd.f32 %v4051, %v5720
        %v5722 = vpop.f32.mrb[0].mxu0
        %v5723 = vadd.f32 %v4051, %v5722
        %v5724 = vpop.f32.mrb[0].mxu0
        %v5725 = vadd.f32 %v4056, %v5724
        %v5726 = vpop.f32.mrb[0].mxu0
        %v5727 = vadd.f32 %v4056, %v5726
        %5728 = vmatprep.mubr.bf16.mxu0 %v4351
        %5729 = vmatmul.mubr.bf16.gmra.mrb[0].mxu0 %v4350
        %v5730 = vpop.f32.mrb[0].mxu0
        %v5731 = vadd.f32 %v4061, %v5730
        %v5732 = vpop.f32.mrb[0].mxu0
        %v5733 = vadd.f32 %v4061, %v5732
        %v5734 = vpop.f32.mrb[0].mxu0
        %v5735 = vadd.f32 %v4066, %v5734
        %v5736 = vpop.f32.mrb[0].mxu0
        %v5737 = vadd.f32 %v4066, %v5736
        %5738 = vmatprep.mubr.bf16.mxu0 %v4355
        %5739 = vmatmul.mubr.bf16.gmra.mrb[0].mxu0 %v4354
        %v5740 = vpop.f32.mrb[0].mxu0
        %v5741 = vadd.f32 %v4071, %v5740
        %v5742 = vpop.f32.mrb[0].mxu0
        %v5743 = vadd.f32 %v4071, %v5742
        %v5744 = vpop.f32.mrb[0].mxu0
        %v5745 = vadd.f32 %v4076, %v5744
        %v5746 = vpop.f32.mrb[0].mxu0
        %v5747 = vadd.f32 %v4076, %v5746
        %5748 = vmatprep.mubr.bf16.mxu0 %v4359
        %5749 = vmatmul.mubr.bf16.gmra.mrb[0].mxu0 %v4358
        %v5750 = vpop.f32.mrb[0].mxu0
        %v5751 = vadd.f32 %v4081, %v5750
        %v5752 = vpop.f32.mrb[0].mxu0
        %v5753 = vadd.f32 %v4081, %v5752
        %v5754 = vpop.f32.mrb[0].mxu0
        %v5755 = vadd.f32 %v4086, %v5754
        %v5756 = vpop.f32.mrb[0].mxu0
        %v5757 = vadd.f32 %v4086, %v5756
        %5758 = vmatprep.mubr.bf16.mxu0 %v4363
        %5759 = vmatmul.mubr.bf16.gmra.mrb[0].mxu0 %v4362
        %v5760 = vpop.f32.mrb[0].mxu0
        %v5761 = vadd.f32 %v4091, %v5760
        %v5762 = vpop.f32.mrb[0].mxu0
        %v5763 = vadd.f32 %v4091, %v5762
        %v5764 = vpop.f32.mrb[0].mxu0
        %v5765 = vadd.f32 %v4096, %v5764
        %v5766 = vpop.f32.mrb[0].mxu0
        %v5767 = vadd.f32 %v4096, %v5766
        %5768 = vmatprep.mubr.bf16.mxu0 %v4367
        %5769 = vmatmul.mubr.bf16.gmra.mrb[0].mxu0 %v4366
        %v5770 = vpop.f32.mrb[0].mxu0
        %v5771 = vadd.f32 %v4101, %v5770
        %v5772 = vpop.f32.mrb[0].mxu0
        %v5773 = vadd.f32 %v4101, %v5772
        %v5774 = vpop.f32.mrb[0].mxu0
        %v5775 = vadd.f32 %v4106, %v5774
        %v5776 = vpop.f32.mrb[0].mxu0
        %v5777 = vadd.f32 %v4106, %v5776
        %5778 = vmatprep.mubr.bf16.mxu0 %v4371
        %5779 = vmatmul.mubr.bf16.gmra.mrb[0].mxu0 %v4370
        %v5780 = vpop.f32.mrb[0].mxu0
        %v5781 = vadd.f32 %v4111, %v5780
        %v5782 = vpop.f32.mrb[0].mxu0
        %v5783 = vadd.f32 %v4111, %v5782
        %v5784 = vpop.f32.mrb[0].mxu0
        %v5785 = vadd.f32 %v4116, %v5784
        %v5786 = vpop.f32.mrb[0].mxu0
        %v5787 = vadd.f32 %v4116, %v5786
        %5788 = vdwg.mxu0
        %5789 = vmatprep.subr.bf16.mxu0 %v3741
        %5790 = vmatpush1.bf16.msra.mxu0 %v3740
        %5791 = vmatprep.subr.bf16.mxu0 %v3749
        %5792 = vmatpush1.bf16.msra.mxu0 %v3748
        %5793 = vmatprep.subr.bf16.mxu0 %v3757
        %5794 = vmatpush1.bf16.msra.mxu0 %v3756
        %5795 = vmatprep.subr.bf16.mxu0 %v3765
        %5796 = vmatpush1.bf16.msra.mxu0 %v3764
        %5797 = vmatprep.subr.bf16.mxu0 %v3773
        %5798 = vmatpush1.bf16.msra.mxu0 %v3772
        %5799 = vmatprep.subr.bf16.mxu0 %v3781
        %5800 = vmatpush1.bf16.msra.mxu0 %v3780
        %5801 = vmatprep.subr.bf16.mxu0 %v3789
        %5802 = vmatpush1.bf16.msra.mxu0 %v3788
        %5803 = vmatprep.subr.bf16.mxu0 %v3797
        %5804 = vmatpush1.bf16.msra.mxu0 %v3796
        %5805 = vmatprep.subr.bf16.mxu0 %v3805
        %5806 = vmatpush1.bf16.msra.mxu0 %v3804
        %5807 = vmatprep.subr.bf16.mxu0 %v3813
        %5808 = vmatpush1.bf16.msra.mxu0 %v3812
        %5809 = vmatprep.subr.bf16.mxu0 %v3821
        %5810 = vmatpush1.bf16.msra.mxu0 %v3820
        %5811 = vmatprep.subr.bf16.mxu0 %v3829
        %5812 = vmatpush1.bf16.msra.mxu0 %v3828
        %5813 = vmatprep.subr.bf16.mxu0 %v3837
        %5814 = vmatpush1.bf16.msra.mxu0 %v3836
        %5815 = vmatprep.subr.bf16.mxu0 %v3845
        %5816 = vmatpush1.bf16.msra.mxu0 %v3844
        %5817 = vmatprep.subr.bf16.mxu0 %v3853
        %5818 = vmatpush1.bf16.msra.mxu0 %v3852
        %5819 = vmatprep.subr.bf16.mxu0 %v3861
        %5820 = vmatpush1.bf16.msra.mxu0 %v3860
        %5821 = vmatprep.mubr.bf16.mxu0 %v4313
        %5822 = vmatmul.mubr.bf16.gmra.mrb[0].mxu0 %v4312
        %v5823 = vpop.f32.mrb[0].mxu0
        %v5824 = vadd.f32 %v5631, %v5823
        %v5825 = vpop.f32.mrb[0].mxu0
        %v5826 = vadd.f32 %v5633, %v5825
        %v5827 = vpop.f32.mrb[0].mxu0
        %v5828 = vadd.f32 %v5635, %v5827
        %v5829 = vpop.f32.mrb[0].mxu0
        %v5830 = vadd.f32 %v5637, %v5829
        %5831 = vmatprep.mubr.bf16.mxu0 %v4317
        %5832 = vmatmul.mubr.bf16.gmra.mrb[0].mxu0 %v4316
        %v5833 = vpop.f32.mrb[0].mxu0
        %v5834 = vadd.f32 %v5641, %v5833
        %v5835 = vpop.f32.mrb[0].mxu0
        %v5836 = vadd.f32 %v5643, %v5835
        %v5837 = vpop.f32.mrb[0].mxu0
        %v5838 = vadd.f32 %v5645, %v5837
        %v5839 = vpop.f32.mrb[0].mxu0
        %v5840 = vadd.f32 %v5647, %v5839
        %5841 = vmatprep.mubr.bf16.mxu0 %v4321
        %5842 = vmatmul.mubr.bf16.gmra.mrb[0].mxu0 %v4320
        %v5843 = vpop.f32.mrb[0].mxu0
        %v5844 = vadd.f32 %v5651, %v5843
        %v5845 = vpop.f32.mrb[0].mxu0
        %v5846 = vadd.f32 %v5653, %v5845
        %v5847 = vpop.f32.mrb[0].mxu0
        %v5848 = vadd.f32 %v5655, %v5847
        %v5849 = vpop.f32.mrb[0].mxu0
        %v5850 = vadd.f32 %v5657, %v5849
        %5851 = vmatprep.mubr.bf16.mxu0 %v4325
        %5852 = vmatmul.mubr.bf16.gmra.mrb[0].mxu0 %v4324
        %v5853 = vpop.f32.mrb[0].mxu0
        %v5854 = vadd.f32 %v5661, %v5853
        %v5855 = vpop.f32.mrb[0].mxu0
        %v5856 = vadd.f32 %v5663, %v5855
        %v5857 = vpop.f32.mrb[0].mxu0
        %v5858 = vadd.f32 %v5665, %v5857
        %v5859 = vpop.f32.mrb[0].mxu0
        %v5860 = vadd.f32 %v5667, %v5859
        %5861 = vmatprep.mubr.bf16.mxu0 %v4329
        %5862 = vmatmul.mubr.bf16.gmra.mrb[0].mxu0 %v4328
        %v5863 = vpop.f32.mrb[0].mxu0
        %v5864 = vadd.f32 %v5671, %v5863
        %v5865 = vpop.f32.mrb[0].mxu0
        %v5866 = vadd.f32 %v5673, %v5865
        %v5867 = vpop.f32.mrb[0].mxu0
        %v5868 = vadd.f32 %v5675, %v5867
        %v5869 = vpop.f32.mrb[0].mxu0
        %v5870 = vadd.f32 %v5677, %v5869
        %5871 = vmatprep.mubr.bf16.mxu0 %v4333
        %5872 = vmatmul.mubr.bf16.gmra.mrb[0].mxu0 %v4332
        %v5873 = vpop.f32.mrb[0].mxu0
        %v5874 = vadd.f32 %v5681, %v5873
        %v5875 = vpop.f32.mrb[0].mxu0
        %v5876 = vadd.f32 %v5683, %v5875
        %v5877 = vpop.f32.mrb[0].mxu0
        %v5878 = vadd.f32 %v5685, %v5877
        %v5879 = vpop.f32.mrb[0].mxu0
        %v5880 = vadd.f32 %v5687, %v5879
        %5881 = vmatprep.mubr.bf16.mxu0 %v4337
        %5882 = vmatmul.mubr.bf16.gmra.mrb[0].mxu0 %v4336
        %v5883 = vpop.f32.mrb[0].mxu0
        %v5884 = vadd.f32 %v5691, %v5883
        %v5885 = vpop.f32.mrb[0].mxu0
        %v5886 = vadd.f32 %v5693, %v5885
        %v5887 = vpop.f32.mrb[0].mxu0
        %v5888 = vadd.f32 %v5695, %v5887
        %v5889 = vpop.f32.mrb[0].mxu0
        %v5890 = vadd.f32 %v5697, %v5889
        %5891 = vmatprep.mubr.bf16.mxu0 %v4341
        %5892 = vmatmul.mubr.bf16.gmra.mrb[0].mxu0 %v4340
        %v5893 = vpop.f32.mrb[0].mxu0
        %v5894 = vadd.f32 %v5701, %v5893
        %v5895 = vpop.f32.mrb[0].mxu0
        %v5896 = vadd.f32 %v5703, %v5895
        %v5897 = vpop.f32.mrb[0].mxu0
        %v5898 = vadd.f32 %v5705, %v5897
        %v5899 = vpop.f32.mrb[0].mxu0
        %v5900 = vadd.f32 %v5707, %v5899
        %5901 = vmatprep.mubr.bf16.mxu0 %v4345
        %5902 = vmatmul.mubr.bf16.gmra.mrb[0].mxu0 %v4344
        %v5903 = vpop.f32.mrb[0].mxu0
        %v5904 = vadd.f32 %v5711, %v5903
        %v5905 = vpop.f32.mrb[0].mxu0
        %v5906 = vadd.f32 %v5713, %v5905
        %v5907 = vpop.f32.mrb[0].mxu0
        %v5908 = vadd.f32 %v5715, %v5907
        %v5909 = vpop.f32.mrb[0].mxu0
        %v5910 = vadd.f32 %v5717, %v5909
        %5911 = vmatprep.mubr.bf16.mxu0 %v4349
        %5912 = vmatmul.mubr.bf16.gmra.mrb[0].mxu0 %v4348
        %v5913 = vpop.f32.mrb[0].mxu0
        %v5914 = vadd.f32 %v5721, %v5913
        %v5915 = vpop.f32.mrb[0].mxu0
        %v5916 = vadd.f32 %v5723, %v5915
        %v5917 = vpop.f32.mrb[0].mxu0
        %v5918 = vadd.f32 %v5725, %v5917
        %v5919 = vpop.f32.mrb[0].mxu0
        %v5920 = vadd.f32 %v5727, %v5919
        %5921 = vmatprep.mubr.bf16.mxu0 %v4353
        %5922 = vmatmul.mubr.bf16.gmra.mrb[0].mxu0 %v4352
        %v5923 = vpop.f32.mrb[0].mxu0
        %v5924 = vadd.f32 %v5731, %v5923
        %v5925 = vpop.f32.mrb[0].mxu0
        %v5926 = vadd.f32 %v5733, %v5925
        %v5927 = vpop.f32.mrb[0].mxu0
        %v5928 = vadd.f32 %v5735, %v5927
        %v5929 = vpop.f32.mrb[0].mxu0
        %v5930 = vadd.f32 %v5737, %v5929
        %5931 = vmatprep.mubr.bf16.mxu0 %v4357
        %5932 = vmatmul.mubr.bf16.gmra.mrb[0].mxu0 %v4356
        %v5933 = vpop.f32.mrb[0].mxu0
        %v5934 = vadd.f32 %v5741, %v5933
        %v5935 = vpop.f32.mrb[0].mxu0
        %v5936 = vadd.f32 %v5743, %v5935
        %v5937 = vpop.f32.mrb[0].mxu0
        %v5938 = vadd.f32 %v5745, %v5937
        %v5939 = vpop.f32.mrb[0].mxu0
        %v5940 = vadd.f32 %v5747, %v5939
        %5941 = vmatprep.mubr.bf16.mxu0 %v4361
        %5942 = vmatmul.mubr.bf16.gmra.mrb[0].mxu0 %v4360
        %v5943 = vpop.f32.mrb[0].mxu0
        %v5944 = vadd.f32 %v5751, %v5943
        %v5945 = vpop.f32.mrb[0].mxu0
        %v5946 = vadd.f32 %v5753, %v5945
        %v5947 = vpop.f32.mrb[0].mxu0
        %v5948 = vadd.f32 %v5755, %v5947
        %v5949 = vpop.f32.mrb[0].mxu0
        %v5950 = vadd.f32 %v5757, %v5949
        %5951 = vmatprep.mubr.bf16.mxu0 %v4365
        %5952 = vmatmul.mubr.bf16.gmra.mrb[0].mxu0 %v4364
        %v5953 = vpop.f32.mrb[0].mxu0
        %v5954 = vadd.f32 %v5761, %v5953
        %v5955 = vpop.f32.mrb[0].mxu0
        %v5956 = vadd.f32 %v5763, %v5955
        %v5957 = vpop.f32.mrb[0].mxu0
        %v5958 = vadd.f32 %v5765, %v5957
        %v5959 = vpop.f32.mrb[0].mxu0
        %v5960 = vadd.f32 %v5767, %v5959
        %5961 = vmatprep.mubr.bf16.mxu0 %v4369
        %5962 = vmatmul.mubr.bf16.gmra.mrb[0].mxu0 %v4368
        %v5963 = vpop.f32.mrb[0].mxu0
        %v5964 = vadd.f32 %v5771, %v5963
        %v5965 = vpop.f32.mrb[0].mxu0
        %v5966 = vadd.f32 %v5773, %v5965
        %v5967 = vpop.f32.mrb[0].mxu0
        %v5968 = vadd.f32 %v5775, %v5967
        %v5969 = vpop.f32.mrb[0].mxu0
        %v5970 = vadd.f32 %v5777, %v5969
        %5971 = vmatprep.mubr.bf16.mxu0 %v4373
        %5972 = vmatmul.mubr.bf16.gmra.mrb[0].mxu0 %v4372
        %v5973 = vpop.f32.mrb[0].mxu0
        %v5974 = vadd.f32 %v5781, %v5973
        %v5975 = vpop.f32.mrb[0].mxu0
        %v5976 = vadd.f32 %v5783, %v5975
        %v5977 = vpop.f32.mrb[0].mxu0
        %v5978 = vadd.f32 %v5785, %v5977
        %v5979 = vpop.f32.mrb[0].mxu0
        %v5980 = vadd.f32 %v5787, %v5979
        %5981 = vdwg.mxu0
        %v5982 = vmax.f32 %v4666, 0.0
        %v5983 = vmax.f32 %v4668, 0.0
        %v5984 = vmax.f32 %v5052, 0.0
        %v5985 = vmax.f32 %v5054, 0.0
        %v5986 = vmax.f32 %v5438, 0.0
        %v5987 = vmax.f32 %v5440, 0.0
        %v5988 = vmax.f32 %v5824, 0.0
        %v5989 = vmax.f32 %v5826, 0.0
        %v5990 = vmax.f32 %v4670, 0.0
        %v5991 = vmax.f32 %v4672, 0.0
        %v5992 = vmax.f32 %v5056, 0.0
        %v5993 = vmax.f32 %v5058, 0.0
        %v5994 = vmax.f32 %v5442, 0.0
        %v5995 = vmax.f32 %v5444, 0.0
        %v5996 = vmax.f32 %v5828, 0.0
        %v5997 = vmax.f32 %v5830, 0.0
        %v5998 = vmax.f32 %v4676, 0.0
        %v5999 = vmax.f32 %v4678, 0.0
        %v6000 = vmax.f32 %v5062, 0.0
        %v6001 = vmax.f32 %v5064, 0.0
        %v6002 = vmax.f32 %v5448, 0.0
        %v6003 = vmax.f32 %v5450, 0.0
        %v6004 = vmax.f32 %v5834, 0.0
        %v6005 = vmax.f32 %v5836, 0.0
        %v6006 = vmax.f32 %v4680, 0.0
        %v6007 = vmax.f32 %v4682, 0.0
        %v6008 = vmax.f32 %v5066, 0.0
        %v6009 = vmax.f32 %v5068, 0.0
        %v6010 = vmax.f32 %v5452, 0.0
        %v6011 = vmax.f32 %v5454, 0.0
        %v6012 = vmax.f32 %v5838, 0.0
        %v6013 = vmax.f32 %v5840, 0.0
        %v6014 = vmax.f32 %v4686, 0.0
        %v6015 = vmax.f32 %v4688, 0.0
        %v6016 = vmax.f32 %v5072, 0.0
        %v6017 = vmax.f32 %v5074, 0.0
        %v6018 = vmax.f32 %v5458, 0.0
        %v6019 = vmax.f32 %v5460, 0.0
        %v6020 = vmax.f32 %v5844, 0.0
        %v6021 = vmax.f32 %v5846, 0.0
        %v6022 = vmax.f32 %v4690, 0.0
        %v6023 = vmax.f32 %v4692, 0.0
        %v6024 = vmax.f32 %v5076, 0.0
        %v6025 = vmax.f32 %v5078, 0.0
        %v6026 = vmax.f32 %v5462, 0.0
        %v6027 = vmax.f32 %v5464, 0.0
        %v6028 = vmax.f32 %v5848, 0.0
        %v6029 = vmax.f32 %v5850, 0.0
        %v6030 = vmax.f32 %v4696, 0.0
        %v6031 = vmax.f32 %v4698, 0.0
        %v6032 = vmax.f32 %v5082, 0.0
        %v6033 = vmax.f32 %v5084, 0.0
        %v6034 = vmax.f32 %v5468, 0.0
        %v6035 = vmax.f32 %v5470, 0.0
        %v6036 = vmax.f32 %v5854, 0.0
        %v6037 = vmax.f32 %v5856, 0.0
        %v6038 = vmax.f32 %v4700, 0.0
        %v6039 = vmax.f32 %v4702, 0.0
        %v6040 = vmax.f32 %v5086, 0.0
        %v6041 = vmax.f32 %v5088, 0.0
        %v6042 = vmax.f32 %v5472, 0.0
        %v6043 = vmax.f32 %v5474, 0.0
        %v6044 = vmax.f32 %v5858, 0.0
        %v6045 = vmax.f32 %v5860, 0.0
        %v6046 = vmax.f32 %v4706, 0.0
        %v6047 = vmax.f32 %v4708, 0.0
        %v6048 = vmax.f32 %v5092, 0.0
        %v6049 = vmax.f32 %v5094, 0.0
        %v6050 = vmax.f32 %v5478, 0.0
        %v6051 = vmax.f32 %v5480, 0.0
        %v6052 = vmax.f32 %v5864, 0.0
        %v6053 = vmax.f32 %v5866, 0.0
        %v6054 = vmax.f32 %v4710, 0.0
        %v6055 = vmax.f32 %v4712, 0.0
        %v6056 = vmax.f32 %v5096, 0.0
        %v6057 = vmax.f32 %v5098, 0.0
        %v6058 = vmax.f32 %v5482, 0.0
        %v6059 = vmax.f32 %v5484, 0.0
        %v6060 = vmax.f32 %v5868, 0.0
        %v6061 = vmax.f32 %v5870, 0.0
        %v6062 = vmax.f32 %v4716, 0.0
        %v6063 = vmax.f32 %v4718, 0.0
        %v6064 = vmax.f32 %v5102, 0.0
        %v6065 = vmax.f32 %v5104, 0.0
        %v6066 = vmax.f32 %v5488, 0.0
        %v6067 = vmax.f32 %v5490, 0.0
        %v6068 = vmax.f32 %v5874, 0.0
        %v6069 = vmax.f32 %v5876, 0.0
        %v6070 = vmax.f32 %v4720, 0.0
        %v6071 = vmax.f32 %v4722, 0.0
        %v6072 = vmax.f32 %v5106, 0.0
        %v6073 = vmax.f32 %v5108, 0.0
        %v6074 = vmax.f32 %v5492, 0.0
        %v6075 = vmax.f32 %v5494, 0.0
        %v6076 = vmax.f32 %v5878, 0.0
        %v6077 = vmax.f32 %v5880, 0.0
        %v6078 = vmax.f32 %v4726, 0.0
        %v6079 = vmax.f32 %v4728, 0.0
        %v6080 = vmax.f32 %v5112, 0.0
        %v6081 = vmax.f32 %v5114, 0.0
        %v6082 = vmax.f32 %v5498, 0.0
        %v6083 = vmax.f32 %v5500, 0.0
        %v6084 = vmax.f32 %v5884, 0.0
        %v6085 = vmax.f32 %v5886, 0.0
        %v6086 = vmax.f32 %v4730, 0.0
        %v6087 = vmax.f32 %v4732, 0.0
        %v6088 = vmax.f32 %v5116, 0.0
        %v6089 = vmax.f32 %v5118, 0.0
        %v6090 = vmax.f32 %v5502, 0.0
        %v6091 = vmax.f32 %v5504, 0.0
        %v6092 = vmax.f32 %v5888, 0.0
        %v6093 = vmax.f32 %v5890, 0.0
        %v6094 = vmax.f32 %v4736, 0.0
        %v6095 = vmax.f32 %v4738, 0.0
        %v6096 = vmax.f32 %v5122, 0.0
        %v6097 = vmax.f32 %v5124, 0.0
        %v6098 = vmax.f32 %v5508, 0.0
        %v6099 = vmax.f32 %v5510, 0.0
        %v6100 = vmax.f32 %v5894, 0.0
        %v6101 = vmax.f32 %v5896, 0.0
        %v6102 = vmax.f32 %v4740, 0.0
        %v6103 = vmax.f32 %v4742, 0.0
        %v6104 = vmax.f32 %v5126, 0.0
        %v6105 = vmax.f32 %v5128, 0.0
        %v6106 = vmax.f32 %v5512, 0.0
        %v6107 = vmax.f32 %v5514, 0.0
        %v6108 = vmax.f32 %v5898, 0.0
        %v6109 = vmax.f32 %v5900, 0.0
        %v6110 = vmax.f32 %v4746, 0.0
        %v6111 = vmax.f32 %v4748, 0.0
        %v6112 = vmax.f32 %v5132, 0.0
        %v6113 = vmax.f32 %v5134, 0.0
        %v6114 = vmax.f32 %v5518, 0.0
        %v6115 = vmax.f32 %v5520, 0.0
        %v6116 = vmax.f32 %v5904, 0.0
        %v6117 = vmax.f32 %v5906, 0.0
        %v6118 = vmax.f32 %v4750, 0.0
        %v6119 = vmax.f32 %v4752, 0.0
        %v6120 = vmax.f32 %v5136, 0.0
        %v6121 = vmax.f32 %v5138, 0.0
        %v6122 = vmax.f32 %v5522, 0.0
        %v6123 = vmax.f32 %v5524, 0.0
        %v6124 = vmax.f32 %v5908, 0.0
        %v6125 = vmax.f32 %v5910, 0.0
        %v6126 = vmax.f32 %v4756, 0.0
        %v6127 = vmax.f32 %v4758, 0.0
        %v6128 = vmax.f32 %v5142, 0.0
        %v6129 = vmax.f32 %v5144, 0.0
        %v6130 = vmax.f32 %v5528, 0.0
        %v6131 = vmax.f32 %v5530, 0.0
        %v6132 = vmax.f32 %v5914, 0.0
        %v6133 = vmax.f32 %v5916, 0.0
        %v6134 = vmax.f32 %v4760, 0.0
        %v6135 = vmax.f32 %v4762, 0.0
        %v6136 = vmax.f32 %v5146, 0.0
        %v6137 = vmax.f32 %v5148, 0.0
        %v6138 = vmax.f32 %v5532, 0.0
        %v6139 = vmax.f32 %v5534, 0.0
        %v6140 = vmax.f32 %v5918, 0.0
        %v6141 = vmax.f32 %v5920, 0.0
        %v6142 = vmax.f32 %v4766, 0.0
        %v6143 = vmax.f32 %v4768, 0.0
        %v6144 = vmax.f32 %v5152, 0.0
        %v6145 = vmax.f32 %v5154, 0.0
        %v6146 = vmax.f32 %v5538, 0.0
        %v6147 = vmax.f32 %v5540, 0.0
        %v6148 = vmax.f32 %v5924, 0.0
        %v6149 = vmax.f32 %v5926, 0.0
        %v6150 = vmax.f32 %v4770, 0.0
        %v6151 = vmax.f32 %v4772, 0.0
        %v6152 = vmax.f32 %v5156, 0.0
        %v6153 = vmax.f32 %v5158, 0.0
        %v6154 = vmax.f32 %v5542, 0.0
        %v6155 = vmax.f32 %v5544, 0.0
        %v6156 = vmax.f32 %v5928, 0.0
        %v6157 = vmax.f32 %v5930, 0.0
        %v6158 = vmax.f32 %v4776, 0.0
        %v6159 = vmax.f32 %v4778, 0.0
        %v6160 = vmax.f32 %v5162, 0.0
        %v6161 = vmax.f32 %v5164, 0.0
        %v6162 = vmax.f32 %v5548, 0.0
        %v6163 = vmax.f32 %v5550, 0.0
        %v6164 = vmax.f32 %v5934, 0.0
        %v6165 = vmax.f32 %v5936, 0.0
        %v6166 = vmax.f32 %v4780, 0.0
        %v6167 = vmax.f32 %v4782, 0.0
        %v6168 = vmax.f32 %v5166, 0.0
        %v6169 = vmax.f32 %v5168, 0.0
        %v6170 = vmax.f32 %v5552, 0.0
        %v6171 = vmax.f32 %v5554, 0.0
        %v6172 = vmax.f32 %v5938, 0.0
        %v6173 = vmax.f32 %v5940, 0.0
        %v6174 = vmax.f32 %v4786, 0.0
        %v6175 = vmax.f32 %v4788, 0.0
        %v6176 = vmax.f32 %v5172, 0.0
        %v6177 = vmax.f32 %v5174, 0.0
        %v6178 = vmax.f32 %v5558, 0.0
        %v6179 = vmax.f32 %v5560, 0.0
        %v6180 = vmax.f32 %v5944, 0.0
        %v6181 = vmax.f32 %v5946, 0.0
        %v6182 = vmax.f32 %v4790, 0.0
        %v6183 = vmax.f32 %v4792, 0.0
        %v6184 = vmax.f32 %v5176, 0.0
        %v6185 = vmax.f32 %v5178, 0.0
        %v6186 = vmax.f32 %v5562, 0.0
        %v6187 = vmax.f32 %v5564, 0.0
        %v6188 = vmax.f32 %v5948, 0.0
        %v6189 = vmax.f32 %v5950, 0.0
        %v6190 = vmax.f32 %v4796, 0.0
        %v6191 = vmax.f32 %v4798, 0.0
        %v6192 = vmax.f32 %v5182, 0.0
        %v6193 = vmax.f32 %v5184, 0.0
        %v6194 = vmax.f32 %v5568, 0.0
        %v6195 = vmax.f32 %v5570, 0.0
        %v6196 = vmax.f32 %v5954, 0.0
        %v6197 = vmax.f32 %v5956, 0.0
        %v6198 = vmax.f32 %v4800, 0.0
        %v6199 = vmax.f32 %v4802, 0.0
        %v6200 = vmax.f32 %v5186, 0.0
        %v6201 = vmax.f32 %v5188, 0.0
        %v6202 = vmax.f32 %v5572, 0.0
        %v6203 = vmax.f32 %v5574, 0.0
        %v6204 = vmax.f32 %v5958, 0.0
        %v6205 = vmax.f32 %v5960, 0.0
        %v6206 = vmax.f32 %v4806, 0.0
        %v6207 = vmax.f32 %v4808, 0.0
        %v6208 = vmax.f32 %v5192, 0.0
        %v6209 = vmax.f32 %v5194, 0.0
        %v6210 = vmax.f32 %v5578, 0.0
        %v6211 = vmax.f32 %v5580, 0.0
        %v6212 = vmax.f32 %v5964, 0.0
        %v6213 = vmax.f32 %v5966, 0.0
        %v6214 = vmax.f32 %v4810, 0.0
        %v6215 = vmax.f32 %v4812, 0.0
        %v6216 = vmax.f32 %v5196, 0.0
        %v6217 = vmax.f32 %v5198, 0.0
        %v6218 = vmax.f32 %v5582, 0.0
        %v6219 = vmax.f32 %v5584, 0.0
        %v6220 = vmax.f32 %v5968, 0.0
        %v6221 = vmax.f32 %v5970, 0.0
        %v6222 = vmax.f32 %v4816, 0.0
        %v6223 = vmax.f32 %v4818, 0.0
        %v6224 = vmax.f32 %v5202, 0.0
        %v6225 = vmax.f32 %v5204, 0.0
        %v6226 = vmax.f32 %v5588, 0.0
        %v6227 = vmax.f32 %v5590, 0.0
        %v6228 = vmax.f32 %v5974, 0.0
        %v6229 = vmax.f32 %v5976, 0.0
        %v6230 = vmax.f32 %v4820, 0.0
        %v6231 = vmax.f32 %v4822, 0.0
        %v6232 = vmax.f32 %v5206, 0.0
        %v6233 = vmax.f32 %v5208, 0.0
        %v6234 = vmax.f32 %v5592, 0.0
        %v6235 = vmax.f32 %v5594, 0.0
        %v6236 = vmax.f32 %v5978, 0.0
        %v6237 = vmax.f32 %v5980, 0.0
        %v6238 = vpack.c.bf16 %v5990, %v5982
        %v6239 = vpack.c.bf16 %v5991, %v5983
        %v6240 = vpack.c.bf16 %v5992, %v5984
        %v6241 = vpack.c.bf16 %v5993, %v5985
        %v6242 = vpack.c.bf16 %v5994, %v5986
        %v6243 = vpack.c.bf16 %v5995, %v5987
        %v6244 = vpack.c.bf16 %v5996, %v5988
        %v6245 = vpack.c.bf16 %v5997, %v5989
        %v6246 = vpack.c.bf16 %v6006, %v5998
        %v6247 = vpack.c.bf16 %v6007, %v5999
        %v6248 = vpack.c.bf16 %v6008, %v6000
        %v6249 = vpack.c.bf16 %v6009, %v6001
        %v6250 = vpack.c.bf16 %v6010, %v6002
        %v6251 = vpack.c.bf16 %v6011, %v6003
        %v6252 = vpack.c.bf16 %v6012, %v6004
        %v6253 = vpack.c.bf16 %v6013, %v6005
        %v6254 = vpack.c.bf16 %v6022, %v6014
        %v6255 = vpack.c.bf16 %v6023, %v6015
        %v6256 = vpack.c.bf16 %v6024, %v6016
        %v6257 = vpack.c.bf16 %v6025, %v6017
        %v6258 = vpack.c.bf16 %v6026, %v6018
        %v6259 = vpack.c.bf16 %v6027, %v6019
        %v6260 = vpack.c.bf16 %v6028, %v6020
        %v6261 = vpack.c.bf16 %v6029, %v6021
        %v6262 = vpack.c.bf16 %v6038, %v6030
        %v6263 = vpack.c.bf16 %v6039, %v6031
        %v6264 = vpack.c.bf16 %v6040, %v6032
        %v6265 = vpack.c.bf16 %v6041, %v6033
        %v6266 = vpack.c.bf16 %v6042, %v6034
        %v6267 = vpack.c.bf16 %v6043, %v6035
        %v6268 = vpack.c.bf16 %v6044, %v6036
        %v6269 = vpack.c.bf16 %v6045, %v6037
        %v6270 = vpack.c.bf16 %v6054, %v6046
        %v6271 = vpack.c.bf16 %v6055, %v6047
        %v6272 = vpack.c.bf16 %v6056, %v6048
        %v6273 = vpack.c.bf16 %v6057, %v6049
        %v6274 = vpack.c.bf16 %v6058, %v6050
        %v6275 = vpack.c.bf16 %v6059, %v6051
        %v6276 = vpack.c.bf16 %v6060, %v6052
        %v6277 = vpack.c.bf16 %v6061, %v6053
        %v6278 = vpack.c.bf16 %v6070, %v6062
        %v6279 = vpack.c.bf16 %v6071, %v6063
        %v6280 = vpack.c.bf16 %v6072, %v6064
        %v6281 = vpack.c.bf16 %v6073, %v6065
        %v6282 = vpack.c.bf16 %v6074, %v6066
        %v6283 = vpack.c.bf16 %v6075, %v6067
        %v6284 = vpack.c.bf16 %v6076, %v6068
        %v6285 = vpack.c.bf16 %v6077, %v6069
        %v6286 = vpack.c.bf16 %v6086, %v6078
        %v6287 = vpack.c.bf16 %v6087, %v6079
        %v6288 = vpack.c.bf16 %v6088, %v6080
        %v6289 = vpack.c.bf16 %v6089, %v6081
        %v6290 = vpack.c.bf16 %v6090, %v6082
        %v6291 = vpack.c.bf16 %v6091, %v6083
        %v6292 = vpack.c.bf16 %v6092, %v6084
        %v6293 = vpack.c.bf16 %v6093, %v6085
        %v6294 = vpack.c.bf16 %v6102, %v6094
        %v6295 = vpack.c.bf16 %v6103, %v6095
        %v6296 = vpack.c.bf16 %v6104, %v6096
        %v6297 = vpack.c.bf16 %v6105, %v6097
        %v6298 = vpack.c.bf16 %v6106, %v6098
        %v6299 = vpack.c.bf16 %v6107, %v6099
        %v6300 = vpack.c.bf16 %v6108, %v6100
        %v6301 = vpack.c.bf16 %v6109, %v6101
        %v6302 = vpack.c.bf16 %v6118, %v6110
        %v6303 = vpack.c.bf16 %v6119, %v6111
        %v6304 = vpack.c.bf16 %v6120, %v6112
        %v6305 = vpack.c.bf16 %v6121, %v6113
        %v6306 = vpack.c.bf16 %v6122, %v6114
        %v6307 = vpack.c.bf16 %v6123, %v6115
        %v6308 = vpack.c.bf16 %v6124, %v6116
        %v6309 = vpack.c.bf16 %v6125, %v6117
        %v6310 = vpack.c.bf16 %v6134, %v6126
        %v6311 = vpack.c.bf16 %v6135, %v6127
        %v6312 = vpack.c.bf16 %v6136, %v6128
        %v6313 = vpack.c.bf16 %v6137, %v6129
        %v6314 = vpack.c.bf16 %v6138, %v6130
        %v6315 = vpack.c.bf16 %v6139, %v6131
        %v6316 = vpack.c.bf16 %v6140, %v6132
        %v6317 = vpack.c.bf16 %v6141, %v6133
        %v6318 = vpack.c.bf16 %v6150, %v6142
        %v6319 = vpack.c.bf16 %v6151, %v6143
        %v6320 = vpack.c.bf16 %v6152, %v6144
        %v6321 = vpack.c.bf16 %v6153, %v6145
        %v6322 = vpack.c.bf16 %v6154, %v6146
        %v6323 = vpack.c.bf16 %v6155, %v6147
        %v6324 = vpack.c.bf16 %v6156, %v6148
        %v6325 = vpack.c.bf16 %v6157, %v6149
        %v6326 = vpack.c.bf16 %v6166, %v6158
        %v6327 = vpack.c.bf16 %v6167, %v6159
        %v6328 = vpack.c.bf16 %v6168, %v6160
        %v6329 = vpack.c.bf16 %v6169, %v6161
        %v6330 = vpack.c.bf16 %v6170, %v6162
        %v6331 = vpack.c.bf16 %v6171, %v6163
        %v6332 = vpack.c.bf16 %v6172, %v6164
        %v6333 = vpack.c.bf16 %v6173, %v6165
        %v6334 = vpack.c.bf16 %v6182, %v6174
        %v6335 = vpack.c.bf16 %v6183, %v6175
        %v6336 = vpack.c.bf16 %v6184, %v6176
        %v6337 = vpack.c.bf16 %v6185, %v6177
        %v6338 = vpack.c.bf16 %v6186, %v6178
        %v6339 = vpack.c.bf16 %v6187, %v6179
        %v6340 = vpack.c.bf16 %v6188, %v6180
        %v6341 = vpack.c.bf16 %v6189, %v6181
        %v6342 = vpack.c.bf16 %v6198, %v6190
        %v6343 = vpack.c.bf16 %v6199, %v6191
        %v6344 = vpack.c.bf16 %v6200, %v6192
        %v6345 = vpack.c.bf16 %v6201, %v6193
        %v6346 = vpack.c.bf16 %v6202, %v6194
        %v6347 = vpack.c.bf16 %v6203, %v6195
        %v6348 = vpack.c.bf16 %v6204, %v6196
        %v6349 = vpack.c.bf16 %v6205, %v6197
        %v6350 = vpack.c.bf16 %v6214, %v6206
        %v6351 = vpack.c.bf16 %v6215, %v6207
        %v6352 = vpack.c.bf16 %v6216, %v6208
        %v6353 = vpack.c.bf16 %v6217, %v6209
        %v6354 = vpack.c.bf16 %v6218, %v6210
        %v6355 = vpack.c.bf16 %v6219, %v6211
        %v6356 = vpack.c.bf16 %v6220, %v6212
        %v6357 = vpack.c.bf16 %v6221, %v6213
        %v6358 = vpack.c.bf16 %v6230, %v6222
        %v6359 = vpack.c.bf16 %v6231, %v6223
        %v6360 = vpack.c.bf16 %v6232, %v6224
        %v6361 = vpack.c.bf16 %v6233, %v6225
        %v6362 = vpack.c.bf16 %v6234, %v6226
        %v6363 = vpack.c.bf16 %v6235, %v6227
        %v6364 = vpack.c.bf16 %v6236, %v6228
        %v6365 = vpack.c.bf16 %v6237, %v6229
        %v6366 = vld [vmem:[%s5] sm:$0xff]
        %v6367 = vld [vmem:[%s5 + $0x8] sm:$0xff]
        %v6368 = vld [vmem:[%s5 + $0x10] sm:$0xff]
        %v6369 = vld [vmem:[%s5 + $0x18] sm:$0xff]
        %v6370 = vld [vmem:[%s5 + $0x20] sm:$0xff]
        %v6371 = vld [vmem:[%s5 + $0x28] sm:$0xff]
        %v6372 = vld [vmem:[%s5 + $0x30] sm:$0xff]
        %v6373 = vld [vmem:[%s5 + $0x38] sm:$0xff]
        %v6374 = vld [vmem:[%s5 + $0x40] sm:$0xff]
        %v6375 = vld [vmem:[%s5 + $0x48] sm:$0xff]
        %v6376 = vld [vmem:[%s5 + $0x50] sm:$0xff]
        %v6377 = vld [vmem:[%s5 + $0x58] sm:$0xff]
        %v6378 = vld [vmem:[%s5 + $0x60] sm:$0xff]
        %v6379 = vld [vmem:[%s5 + $0x68] sm:$0xff]
        %v6380 = vld [vmem:[%s5 + $0x70] sm:$0xff]
        %v6381 = vld [vmem:[%s5 + $0x78] sm:$0xff]
        %v6382 = vld [vmem:[%s6] sm:$0xff]
        %v6383 = vld [vmem:[%s6 + $0x8] sm:$0xff]
        %v6384 = vld [vmem:[%s6 + $0x10] sm:$0xff]
        %v6385 = vld [vmem:[%s6 + $0x18] sm:$0xff]
        %v6386 = vld [vmem:[%s6 + $0x20] sm:$0xff]
        %v6387 = vld [vmem:[%s6 + $0x28] sm:$0xff]
        %v6388 = vld [vmem:[%s6 + $0x30] sm:$0xff]
        %v6389 = vld [vmem:[%s6 + $0x38] sm:$0xff]
        %v6390 = vld [vmem:[%s6 + $0x40] sm:$0xff]
        %v6391 = vld [vmem:[%s6 + $0x48] sm:$0xff]
        %v6392 = vld [vmem:[%s6 + $0x50] sm:$0xff]
        %v6393 = vld [vmem:[%s6 + $0x58] sm:$0xff]
        %v6394 = vld [vmem:[%s6 + $0x60] sm:$0xff]
        %v6395 = vld [vmem:[%s6 + $0x68] sm:$0xff]
        %v6396 = vld [vmem:[%s6 + $0x70] sm:$0xff]
        %v6397 = vld [vmem:[%s6 + $0x78] sm:$0xff]
        %6399 = vset.pattern.permute.xlu0 0
        %6400 = vperm.xlu0 %6399, %v6382
        %v6401 = vpop.permute.xlu0 %6400
        %6404 = vset.pattern.permute.xlu0 0
        %6405 = vperm.xlu0 %6404, %v6383
        %v6406 = vpop.permute.xlu0 %6405
        %6409 = vset.pattern.permute.xlu0 0
        %6410 = vperm.xlu0 %6409, %v6384
        %v6411 = vpop.permute.xlu0 %6410
        %6414 = vset.pattern.permute.xlu0 0
        %6415 = vperm.xlu0 %6414, %v6385
        %v6416 = vpop.permute.xlu0 %6415
        %6419 = vset.pattern.permute.xlu0 0
        %6420 = vperm.xlu0 %6419, %v6386
        %v6421 = vpop.permute.xlu0 %6420
        %6424 = vset.pattern.permute.xlu0 0
        %6425 = vperm.xlu0 %6424, %v6387
        %v6426 = vpop.permute.xlu0 %6425
        %6429 = vset.pattern.permute.xlu0 0
        %6430 = vperm.xlu0 %6429, %v6388
        %v6431 = vpop.permute.xlu0 %6430
        %6434 = vset.pattern.permute.xlu0 0
        %6435 = vperm.xlu0 %6434, %v6389
        %v6436 = vpop.permute.xlu0 %6435
        %6439 = vset.pattern.permute.xlu0 0
        %6440 = vperm.xlu0 %6439, %v6390
        %v6441 = vpop.permute.xlu0 %6440
        %6444 = vset.pattern.permute.xlu0 0
        %6445 = vperm.xlu0 %6444, %v6391
        %v6446 = vpop.permute.xlu0 %6445
        %6449 = vset.pattern.permute.xlu0 0
        %6450 = vperm.xlu0 %6449, %v6392
        %v6451 = vpop.permute.xlu0 %6450
        %6454 = vset.pattern.permute.xlu0 0
        %6455 = vperm.xlu0 %6454, %v6393
        %v6456 = vpop.permute.xlu0 %6455
        %6459 = vset.pattern.permute.xlu0 0
        %6460 = vperm.xlu0 %6459, %v6394
        %v6461 = vpop.permute.xlu0 %6460
        %6464 = vset.pattern.permute.xlu0 0
        %6465 = vperm.xlu0 %6464, %v6395
        %v6466 = vpop.permute.xlu0 %6465
        %6469 = vset.pattern.permute.xlu0 0
        %6470 = vperm.xlu0 %6469, %v6396
        %v6471 = vpop.permute.xlu0 %6470
        %6474 = vset.pattern.permute.xlu0 0
        %6475 = vperm.xlu0 %6474, %v6397
        %v6476 = vpop.permute.xlu0 %6475
        %v6494 = vunpack.c.l.b16 %v6366
        %v6495 = vunpack.c.h.b16 %v6366
        %v6496 = vunpack.c.l.b16 %v6367
        %v6497 = vunpack.c.h.b16 %v6367
        %v6498 = vunpack.c.l.b16 %v6368
        %v6499 = vunpack.c.h.b16 %v6368
        %v6500 = vunpack.c.l.b16 %v6369
        %v6501 = vunpack.c.h.b16 %v6369
        %v6502 = vunpack.c.l.b16 %v6370
        %v6503 = vunpack.c.h.b16 %v6370
        %v6504 = vunpack.c.l.b16 %v6371
        %v6505 = vunpack.c.h.b16 %v6371
        %v6506 = vunpack.c.l.b16 %v6372
        %v6507 = vunpack.c.h.b16 %v6372
        %v6508 = vunpack.c.l.b16 %v6373
        %v6509 = vunpack.c.h.b16 %v6373
        %v6510 = vunpack.c.l.b16 %v6374
        %v6511 = vunpack.c.h.b16 %v6374
        %v6512 = vunpack.c.l.b16 %v6375
        %v6513 = vunpack.c.h.b16 %v6375
        %v6514 = vunpack.c.l.b16 %v6376
        %v6515 = vunpack.c.h.b16 %v6376
        %v6516 = vunpack.c.l.b16 %v6377
        %v6517 = vunpack.c.h.b16 %v6377
        %v6518 = vunpack.c.l.b16 %v6378
        %v6519 = vunpack.c.h.b16 %v6378
        %v6520 = vunpack.c.l.b16 %v6379
        %v6521 = vunpack.c.h.b16 %v6379
        %v6522 = vunpack.c.l.b16 %v6380
        %v6523 = vunpack.c.h.b16 %v6380
        %v6524 = vunpack.c.l.b16 %v6381
        %v6525 = vunpack.c.h.b16 %v6381
        %v6526 = vpack.c.b16 %v6496, %v6494
        %v6527 = vpack.c.b16 %v6497, %v6495
        %v6528 = vpack.c.b16 %v6500, %v6498
        %v6529 = vpack.c.b16 %v6501, %v6499
        %v6530 = vpack.c.b16 %v6504, %v6502
        %v6531 = vpack.c.b16 %v6505, %v6503
        %v6532 = vpack.c.b16 %v6508, %v6506
        %v6533 = vpack.c.b16 %v6509, %v6507
        %v6534 = vpack.c.b16 %v6512, %v6510
        %v6535 = vpack.c.b16 %v6513, %v6511
        %v6536 = vpack.c.b16 %v6516, %v6514
        %v6537 = vpack.c.b16 %v6517, %v6515
        %v6538 = vpack.c.b16 %v6520, %v6518
        %v6539 = vpack.c.b16 %v6521, %v6519
        %v6540 = vpack.c.b16 %v6524, %v6522
        %v6541 = vpack.c.b16 %v6525, %v6523
        %6558 = vmatprep.subr.bf16.mxu0 %v6239
        %6559 = vmatpush1.bf16.msra.mxu0 %v6238
        %6560 = vmatprep.subr.bf16.mxu0 %v6247
        %6561 = vmatpush1.bf16.msra.mxu0 %v6246
        %6562 = vmatprep.subr.bf16.mxu0 %v6255
        %6563 = vmatpush1.bf16.msra.mxu0 %v6254
        %6564 = vmatprep.subr.bf16.mxu0 %v6263
        %6565 = vmatpush1.bf16.msra.mxu0 %v6262
        %6566 = vmatprep.subr.bf16.mxu0 %v6271
        %6567 = vmatpush1.bf16.msra.mxu0 %v6270
        %6568 = vmatprep.subr.bf16.mxu0 %v6279
        %6569 = vmatpush1.bf16.msra.mxu0 %v6278
        %6570 = vmatprep.subr.bf16.mxu0 %v6287
        %6571 = vmatpush1.bf16.msra.mxu0 %v6286
        %6572 = vmatprep.subr.bf16.mxu0 %v6295
        %6573 = vmatpush1.bf16.msra.mxu0 %v6294
        %6574 = vmatprep.subr.bf16.mxu0 %v6303
        %6575 = vmatpush1.bf16.msra.mxu0 %v6302
        %6576 = vmatprep.subr.bf16.mxu0 %v6311
        %6577 = vmatpush1.bf16.msra.mxu0 %v6310
        %6578 = vmatprep.subr.bf16.mxu0 %v6319
        %6579 = vmatpush1.bf16.msra.mxu0 %v6318
        %6580 = vmatprep.subr.bf16.mxu0 %v6327
        %6581 = vmatpush1.bf16.msra.mxu0 %v6326
        %6582 = vmatprep.subr.bf16.mxu0 %v6335
        %6583 = vmatpush1.bf16.msra.mxu0 %v6334
        %6584 = vmatprep.subr.bf16.mxu0 %v6343
        %6585 = vmatpush1.bf16.msra.mxu0 %v6342
        %6586 = vmatprep.subr.bf16.mxu0 %v6351
        %6587 = vmatpush1.bf16.msra.mxu0 %v6350
        %6588 = vmatprep.subr.bf16.mxu0 %v6359
        %6589 = vmatpush1.bf16.msra.mxu0 %v6358
        %6590 = vmatprep.mubr.bf16.mxu0 %v6527
        %6591 = vmatmul.mubr.bf16.gmra.mrb[0].mxu0 %v6526
        %v6592 = vpop.f32.mrb[0].mxu0
        %v6593 = vadd.f32 %v6401, %v6592
        %v6594 = vpop.f32.mrb[0].mxu0
        %v6595 = vadd.f32 %v6401, %v6594
        %v6596 = vpop.f32.mrb[0].mxu0
        %v6597 = vadd.f32 %v6406, %v6596
        %v6598 = vpop.f32.mrb[0].mxu0
        %v6599 = vadd.f32 %v6406, %v6598
        %6600 = vmatprep.mubr.bf16.mxu0 %v6529
        %6601 = vmatmul.mubr.bf16.gmra.mrb[0].mxu0 %v6528
        %v6602 = vpop.f32.mrb[0].mxu0
        %v6603 = vadd.f32 %v6411, %v6602
        %v6604 = vpop.f32.mrb[0].mxu0
        %v6605 = vadd.f32 %v6411, %v6604
        %v6606 = vpop.f32.mrb[0].mxu0
        %v6607 = vadd.f32 %v6416, %v6606
        %v6608 = vpop.f32.mrb[0].mxu0
        %v6609 = vadd.f32 %v6416, %v6608
        %6610 = vmatprep.mubr.bf16.mxu0 %v6531
        %6611 = vmatmul.mubr.bf16.gmra.mrb[0].mxu0 %v6530
        %v6612 = vpop.f32.mrb[0].mxu0
        %v6613 = vadd.f32 %v6421, %v6612
        %v6614 = vpop.f32.mrb[0].mxu0
        %v6615 = vadd.f32 %v6421, %v6614
        %v6616 = vpop.f32.mrb[0].mxu0
        %v6617 = vadd.f32 %v6426, %v6616
        %v6618 = vpop.f32.mrb[0].mxu0
        %v6619 = vadd.f32 %v6426, %v6618
        %6620 = vmatprep.mubr.bf16.mxu0 %v6533
        %6621 = vmatmul.mubr.bf16.gmra.mrb[0].mxu0 %v6532
        %v6622 = vpop.f32.mrb[0].mxu0
        %v6623 = vadd.f32 %v6431, %v6622
        %v6624 = vpop.f32.mrb[0].mxu0
        %v6625 = vadd.f32 %v6431, %v6624
        %v6626 = vpop.f32.mrb[0].mxu0
        %v6627 = vadd.f32 %v6436, %v6626
        %v6628 = vpop.f32.mrb[0].mxu0
        %v6629 = vadd.f32 %v6436, %v6628
        %6630 = vmatprep.mubr.bf16.mxu0 %v6535
        %6631 = vmatmul.mubr.bf16.gmra.mrb[0].mxu0 %v6534
        %v6632 = vpop.f32.mrb[0].mxu0
        %v6633 = vadd.f32 %v6441, %v6632
        %v6634 = vpop.f32.mrb[0].mxu0
        %v6635 = vadd.f32 %v6441, %v6634
        %v6636 = vpop.f32.mrb[0].mxu0
        %v6637 = vadd.f32 %v6446, %v6636
        %v6638 = vpop.f32.mrb[0].mxu0
        %v6639 = vadd.f32 %v6446, %v6638
        %6640 = vmatprep.mubr.bf16.mxu0 %v6537
        %6641 = vmatmul.mubr.bf16.gmra.mrb[0].mxu0 %v6536
        %v6642 = vpop.f32.mrb[0].mxu0
        %v6643 = vadd.f32 %v6451, %v6642
        %v6644 = vpop.f32.mrb[0].mxu0
        %v6645 = vadd.f32 %v6451, %v6644
        %v6646 = vpop.f32.mrb[0].mxu0
        %v6647 = vadd.f32 %v6456, %v6646
        %v6648 = vpop.f32.mrb[0].mxu0
        %v6649 = vadd.f32 %v6456, %v6648
        %6650 = vmatprep.mubr.bf16.mxu0 %v6539
        %6651 = vmatmul.mubr.bf16.gmra.mrb[0].mxu0 %v6538
        %v6652 = vpop.f32.mrb[0].mxu0
        %v6653 = vadd.f32 %v6461, %v6652
        %v6654 = vpop.f32.mrb[0].mxu0
        %v6655 = vadd.f32 %v6461, %v6654
        %v6656 = vpop.f32.mrb[0].mxu0
        %v6657 = vadd.f32 %v6466, %v6656
        %v6658 = vpop.f32.mrb[0].mxu0
        %v6659 = vadd.f32 %v6466, %v6658
        %6660 = vmatprep.mubr.bf16.mxu0 %v6541
        %6661 = vmatmul.mubr.bf16.gmra.mrb[0].mxu0 %v6540
        %v6662 = vpop.f32.mrb[0].mxu0
        %v6663 = vadd.f32 %v6471, %v6662
        %v6664 = vpop.f32.mrb[0].mxu0
        %v6665 = vadd.f32 %v6471, %v6664
        %v6666 = vpop.f32.mrb[0].mxu0
        %v6667 = vadd.f32 %v6476, %v6666
        %v6668 = vpop.f32.mrb[0].mxu0
        %v6669 = vadd.f32 %v6476, %v6668
        %6670 = vdwg.mxu0
        %6671 = vmatprep.subr.bf16.mxu0 %v6241
        %6672 = vmatpush1.bf16.msra.mxu0 %v6240
        %6673 = vmatprep.subr.bf16.mxu0 %v6249
        %6674 = vmatpush1.bf16.msra.mxu0 %v6248
        %6675 = vmatprep.subr.bf16.mxu0 %v6257
        %6676 = vmatpush1.bf16.msra.mxu0 %v6256
        %6677 = vmatprep.subr.bf16.mxu0 %v6265
        %6678 = vmatpush1.bf16.msra.mxu0 %v6264
        %6679 = vmatprep.subr.bf16.mxu0 %v6273
        %6680 = vmatpush1.bf16.msra.mxu0 %v6272
        %6681 = vmatprep.subr.bf16.mxu0 %v6281
        %6682 = vmatpush1.bf16.msra.mxu0 %v6280
        %6683 = vmatprep.subr.bf16.mxu0 %v6289
        %6684 = vmatpush1.bf16.msra.mxu0 %v6288
        %6685 = vmatprep.subr.bf16.mxu0 %v6297
        %6686 = vmatpush1.bf16.msra.mxu0 %v6296
        %6687 = vmatprep.subr.bf16.mxu0 %v6305
        %6688 = vmatpush1.bf16.msra.mxu0 %v6304
        %6689 = vmatprep.subr.bf16.mxu0 %v6313
        %6690 = vmatpush1.bf16.msra.mxu0 %v6312
        %6691 = vmatprep.subr.bf16.mxu0 %v6321
        %6692 = vmatpush1.bf16.msra.mxu0 %v6320
        %6693 = vmatprep.subr.bf16.mxu0 %v6329
        %6694 = vmatpush1.bf16.msra.mxu0 %v6328
        %6695 = vmatprep.subr.bf16.mxu0 %v6337
        %6696 = vmatpush1.bf16.msra.mxu0 %v6336
        %6697 = vmatprep.subr.bf16.mxu0 %v6345
        %6698 = vmatpush1.bf16.msra.mxu0 %v6344
        %6699 = vmatprep.subr.bf16.mxu0 %v6353
        %6700 = vmatpush1.bf16.msra.mxu0 %v6352
        %6701 = vmatprep.subr.bf16.mxu0 %v6361
        %6702 = vmatpush1.bf16.msra.mxu0 %v6360
        %6703 = vmatprep.mubr.bf16.mxu0 %v6527
        %6704 = vmatmul.mubr.bf16.gmra.mrb[0].mxu0 %v6526
        %v6705 = vpop.f32.mrb[0].mxu0
        %v6706 = vadd.f32 %v6401, %v6705
        %v6707 = vpop.f32.mrb[0].mxu0
        %v6708 = vadd.f32 %v6401, %v6707
        %v6709 = vpop.f32.mrb[0].mxu0
        %v6710 = vadd.f32 %v6406, %v6709
        %v6711 = vpop.f32.mrb[0].mxu0
        %v6712 = vadd.f32 %v6406, %v6711
        %6713 = vmatprep.mubr.bf16.mxu0 %v6529
        %6714 = vmatmul.mubr.bf16.gmra.mrb[0].mxu0 %v6528
        %v6715 = vpop.f32.mrb[0].mxu0
        %v6716 = vadd.f32 %v6411, %v6715
        %v6717 = vpop.f32.mrb[0].mxu0
        %v6718 = vadd.f32 %v6411, %v6717
        %v6719 = vpop.f32.mrb[0].mxu0
        %v6720 = vadd.f32 %v6416, %v6719
        %v6721 = vpop.f32.mrb[0].mxu0
        %v6722 = vadd.f32 %v6416, %v6721
        %6723 = vmatprep.mubr.bf16.mxu0 %v6531
        %6724 = vmatmul.mubr.bf16.gmra.mrb[0].mxu0 %v6530
        %v6725 = vpop.f32.mrb[0].mxu0
        %v6726 = vadd.f32 %v6421, %v6725
        %v6727 = vpop.f32.mrb[0].mxu0
        %v6728 = vadd.f32 %v6421, %v6727
        %v6729 = vpop.f32.mrb[0].mxu0
        %v6730 = vadd.f32 %v6426, %v6729
        %v6731 = vpop.f32.mrb[0].mxu0
        %v6732 = vadd.f32 %v6426, %v6731
        %6733 = vmatprep.mubr.bf16.mxu0 %v6533
        %6734 = vmatmul.mubr.bf16.gmra.mrb[0].mxu0 %v6532
        %v6735 = vpop.f32.mrb[0].mxu0
        %v6736 = vadd.f32 %v6431, %v6735
        %v6737 = vpop.f32.mrb[0].mxu0
        %v6738 = vadd.f32 %v6431, %v6737
        %v6739 = vpop.f32.mrb[0].mxu0
        %v6740 = vadd.f32 %v6436, %v6739
        %v6741 = vpop.f32.mrb[0].mxu0
        %v6742 = vadd.f32 %v6436, %v6741
        %6743 = vmatprep.mubr.bf16.mxu0 %v6535
        %6744 = vmatmul.mubr.bf16.gmra.mrb[0].mxu0 %v6534
        %v6745 = vpop.f32.mrb[0].mxu0
        %v6746 = vadd.f32 %v6441, %v6745
        %v6747 = vpop.f32.mrb[0].mxu0
        %v6748 = vadd.f32 %v6441, %v6747
        %v6749 = vpop.f32.mrb[0].mxu0
        %v6750 = vadd.f32 %v6446, %v6749
        %v6751 = vpop.f32.mrb[0].mxu0
        %v6752 = vadd.f32 %v6446, %v6751
        %6753 = vmatprep.mubr.bf16.mxu0 %v6537
        %6754 = vmatmul.mubr.bf16.gmra.mrb[0].mxu0 %v6536
        %v6755 = vpop.f32.mrb[0].mxu0
        %v6756 = vadd.f32 %v6451, %v6755
        %v6757 = vpop.f32.mrb[0].mxu0
        %v6758 = vadd.f32 %v6451, %v6757
        %v6759 = vpop.f32.mrb[0].mxu0
        %v6760 = vadd.f32 %v6456, %v6759
        %v6761 = vpop.f32.mrb[0].mxu0
        %v6762 = vadd.f32 %v6456, %v6761
        %6763 = vmatprep.mubr.bf16.mxu0 %v6539
        %6764 = vmatmul.mubr.bf16.gmra.mrb[0].mxu0 %v6538
        %v6765 = vpop.f32.mrb[0].mxu0
        %v6766 = vadd.f32 %v6461, %v6765
        %v6767 = vpop.f32.mrb[0].mxu0
        %v6768 = vadd.f32 %v6461, %v6767
        %v6769 = vpop.f32.mrb[0].mxu0
        %v6770 = vadd.f32 %v6466, %v6769
        %v6771 = vpop.f32.mrb[0].mxu0
        %v6772 = vadd.f32 %v6466, %v6771
        %6773 = vmatprep.mubr.bf16.mxu0 %v6541
        %6774 = vmatmul.mubr.bf16.gmra.mrb[0].mxu0 %v6540
        %v6775 = vpop.f32.mrb[0].mxu0
        %v6776 = vadd.f32 %v6471, %v6775
        %v6777 = vpop.f32.mrb[0].mxu0
        %v6778 = vadd.f32 %v6471, %v6777
        %v6779 = vpop.f32.mrb[0].mxu0
        %v6780 = vadd.f32 %v6476, %v6779
        %v6781 = vpop.f32.mrb[0].mxu0
        %v6782 = vadd.f32 %v6476, %v6781
        %6783 = vdwg.mxu0
        %6784 = vmatprep.subr.bf16.mxu0 %v6243
        %6785 = vmatpush1.bf16.msra.mxu0 %v6242
        %6786 = vmatprep.subr.bf16.mxu0 %v6251
        %6787 = vmatpush1.bf16.msra.mxu0 %v6250
        %6788 = vmatprep.subr.bf16.mxu0 %v6259
        %6789 = vmatpush1.bf16.msra.mxu0 %v6258
        %6790 = vmatprep.subr.bf16.mxu0 %v6267
        %6791 = vmatpush1.bf16.msra.mxu0 %v6266
        %6792 = vmatprep.subr.bf16.mxu0 %v6275
        %6793 = vmatpush1.bf16.msra.mxu0 %v6274
        %6794 = vmatprep.subr.bf16.mxu0 %v6283
        %6795 = vmatpush1.bf16.msra.mxu0 %v6282
        %6796 = vmatprep.subr.bf16.mxu0 %v6291
        %6797 = vmatpush1.bf16.msra.mxu0 %v6290
        %6798 = vmatprep.subr.bf16.mxu0 %v6299
        %6799 = vmatpush1.bf16.msra.mxu0 %v6298
        %6800 = vmatprep.subr.bf16.mxu0 %v6307
        %6801 = vmatpush1.bf16.msra.mxu0 %v6306
        %6802 = vmatprep.subr.bf16.mxu0 %v6315
        %6803 = vmatpush1.bf16.msra.mxu0 %v6314
        %6804 = vmatprep.subr.bf16.mxu0 %v6323
        %6805 = vmatpush1.bf16.msra.mxu0 %v6322
        %6806 = vmatprep.subr.bf16.mxu0 %v6331
        %6807 = vmatpush1.bf16.msra.mxu0 %v6330
        %6808 = vmatprep.subr.bf16.mxu0 %v6339
        %6809 = vmatpush1.bf16.msra.mxu0 %v6338
        %6810 = vmatprep.subr.bf16.mxu0 %v6347
        %6811 = vmatpush1.bf16.msra.mxu0 %v6346
        %6812 = vmatprep.subr.bf16.mxu0 %v6355
        %6813 = vmatpush1.bf16.msra.mxu0 %v6354
        %6814 = vmatprep.subr.bf16.mxu0 %v6363
        %6815 = vmatpush1.bf16.msra.mxu0 %v6362
        %6816 = vmatprep.mubr.bf16.mxu0 %v6527
        %6817 = vmatmul.mubr.bf16.gmra.mrb[0].mxu0 %v6526
        %v6818 = vpop.f32.mrb[0].mxu0
        %v6819 = vadd.f32 %v6401, %v6818
        %v6820 = vpop.f32.mrb[0].mxu0
        %v6821 = vadd.f32 %v6401, %v6820
        %v6822 = vpop.f32.mrb[0].mxu0
        %v6823 = vadd.f32 %v6406, %v6822
        %v6824 = vpop.f32.mrb[0].mxu0
        %v6825 = vadd.f32 %v6406, %v6824
        %6826 = vmatprep.mubr.bf16.mxu0 %v6529
        %6827 = vmatmul.mubr.bf16.gmra.mrb[0].mxu0 %v6528
        %v6828 = vpop.f32.mrb[0].mxu0
        %v6829 = vadd.f32 %v6411, %v6828
        %v6830 = vpop.f32.mrb[0].mxu0
        %v6831 = vadd.f32 %v6411, %v6830
        %v6832 = vpop.f32.mrb[0].mxu0
        %v6833 = vadd.f32 %v6416, %v6832
        %v6834 = vpop.f32.mrb[0].mxu0
        %v6835 = vadd.f32 %v6416, %v6834
        %6836 = vmatprep.mubr.bf16.mxu0 %v6531
        %6837 = vmatmul.mubr.bf16.gmra.mrb[0].mxu0 %v6530
        %v6838 = vpop.f32.mrb[0].mxu0
        %v6839 = vadd.f32 %v6421, %v6838
        %v6840 = vpop.f32.mrb[0].mxu0
        %v6841 = vadd.f32 %v6421, %v6840
        %v6842 = vpop.f32.mrb[0].mxu0
        %v6843 = vadd.f32 %v6426, %v6842
        %v6844 = vpop.f32.mrb[0].mxu0
        %v6845 = vadd.f32 %v6426, %v6844
        %6846 = vmatprep.mubr.bf16.mxu0 %v6533
        %6847 = vmatmul.mubr.bf16.gmra.mrb[0].mxu0 %v6532
        %v6848 = vpop.f32.mrb[0].mxu0
        %v6849 = vadd.f32 %v6431, %v6848
        %v6850 = vpop.f32.mrb[0].mxu0
        %v6851 = vadd.f32 %v6431, %v6850
        %v6852 = vpop.f32.mrb[0].mxu0
        %v6853 = vadd.f32 %v6436, %v6852
        %v6854 = vpop.f32.mrb[0].mxu0
        %v6855 = vadd.f32 %v6436, %v6854
        %6856 = vmatprep.mubr.bf16.mxu0 %v6535
        %6857 = vmatmul.mubr.bf16.gmra.mrb[0].mxu0 %v6534
        %v6858 = vpop.f32.mrb[0].mxu0
        %v6859 = vadd.f32 %v6441, %v6858
        %v6860 = vpop.f32.mrb[0].mxu0
        %v6861 = vadd.f32 %v6441, %v6860
        %v6862 = vpop.f32.mrb[0].mxu0
        %v6863 = vadd.f32 %v6446, %v6862
        %v6864 = vpop.f32.mrb[0].mxu0
        %v6865 = vadd.f32 %v6446, %v6864
        %6866 = vmatprep.mubr.bf16.mxu0 %v6537
        %6867 = vmatmul.mubr.bf16.gmra.mrb[0].mxu0 %v6536
        %v6868 = vpop.f32.mrb[0].mxu0
        %v6869 = vadd.f32 %v6451, %v6868
        %v6870 = vpop.f32.mrb[0].mxu0
        %v6871 = vadd.f32 %v6451, %v6870
        %v6872 = vpop.f32.mrb[0].mxu0
        %v6873 = vadd.f32 %v6456, %v6872
        %v6874 = vpop.f32.mrb[0].mxu0
        %v6875 = vadd.f32 %v6456, %v6874
        %6876 = vmatprep.mubr.bf16.mxu0 %v6539
        %6877 = vmatmul.mubr.bf16.gmra.mrb[0].mxu0 %v6538
        %v6878 = vpop.f32.mrb[0].mxu0
        %v6879 = vadd.f32 %v6461, %v6878
        %v6880 = vpop.f32.mrb[0].mxu0
        %v6881 = vadd.f32 %v6461, %v6880
        %v6882 = vpop.f32.mrb[0].mxu0
        %v6883 = vadd.f32 %v6466, %v6882
        %v6884 = vpop.f32.mrb[0].mxu0
        %v6885 = vadd.f32 %v6466, %v6884
        %6886 = vmatprep.mubr.bf16.mxu0 %v6541
        %6887 = vmatmul.mubr.bf16.gmra.mrb[0].mxu0 %v6540
        %v6888 = vpop.f32.mrb[0].mxu0
        %v6889 = vadd.f32 %v6471, %v6888
        %v6890 = vpop.f32.mrb[0].mxu0
        %v6891 = vadd.f32 %v6471, %v6890
        %v6892 = vpop.f32.mrb[0].mxu0
        %v6893 = vadd.f32 %v6476, %v6892
        %v6894 = vpop.f32.mrb[0].mxu0
        %v6895 = vadd.f32 %v6476, %v6894
        %6896 = vdwg.mxu0
        %6897 = vmatprep.subr.bf16.mxu0 %v6245
        %6898 = vmatpush1.bf16.msra.mxu0 %v6244
        %6899 = vmatprep.subr.bf16.mxu0 %v6253
        %6900 = vmatpush1.bf16.msra.mxu0 %v6252
        %6901 = vmatprep.subr.bf16.mxu0 %v6261
        %6902 = vmatpush1.bf16.msra.mxu0 %v6260
        %6903 = vmatprep.subr.bf16.mxu0 %v6269
        %6904 = vmatpush1.bf16.msra.mxu0 %v6268
        %6905 = vmatprep.subr.bf16.mxu0 %v6277
        %6906 = vmatpush1.bf16.msra.mxu0 %v6276
        %6907 = vmatprep.subr.bf16.mxu0 %v6285
        %6908 = vmatpush1.bf16.msra.mxu0 %v6284
        %6909 = vmatprep.subr.bf16.mxu0 %v6293
        %6910 = vmatpush1.bf16.msra.mxu0 %v6292
        %6911 = vmatprep.subr.bf16.mxu0 %v6301
        %6912 = vmatpush1.bf16.msra.mxu0 %v6300
        %6913 = vmatprep.subr.bf16.mxu0 %v6309
        %6914 = vmatpush1.bf16.msra.mxu0 %v6308
        %6915 = vmatprep.subr.bf16.mxu0 %v6317
        %6916 = vmatpush1.bf16.msra.mxu0 %v6316
        %6917 = vmatprep.subr.bf16.mxu0 %v6325
        %6918 = vmatpush1.bf16.msra.mxu0 %v6324
        %6919 = vmatprep.subr.bf16.mxu0 %v6333
        %6920 = vmatpush1.bf16.msra.mxu0 %v6332
        %6921 = vmatprep.subr.bf16.mxu0 %v6341
        %6922 = vmatpush1.bf16.msra.mxu0 %v6340
        %6923 = vmatprep.subr.bf16.mxu0 %v6349
        %6924 = vmatpush1.bf16.msra.mxu0 %v6348
        %6925 = vmatprep.subr.bf16.mxu0 %v6357
        %6926 = vmatpush1.bf16.msra.mxu0 %v6356
        %6927 = vmatprep.subr.bf16.mxu0 %v6365
        %6928 = vmatpush1.bf16.msra.mxu0 %v6364
        %6929 = vmatprep.mubr.bf16.mxu0 %v6527
        %6930 = vmatmul.mubr.bf16.gmra.mrb[0].mxu0 %v6526
        %v6931 = vpop.f32.mrb[0].mxu0
        %v6932 = vadd.f32 %v6401, %v6931
        %v6933 = vpop.f32.mrb[0].mxu0
        %v6934 = vadd.f32 %v6401, %v6933
        %v6935 = vpop.f32.mrb[0].mxu0
        %v6936 = vadd.f32 %v6406, %v6935
        %v6937 = vpop.f32.mrb[0].mxu0
        %v6938 = vadd.f32 %v6406, %v6937
        %6939 = vmatprep.mubr.bf16.mxu0 %v6529
        %6940 = vmatmul.mubr.bf16.gmra.mrb[0].mxu0 %v6528
        %v6941 = vpop.f32.mrb[0].mxu0
        %v6942 = vadd.f32 %v6411, %v6941
        %v6943 = vpop.f32.mrb[0].mxu0
        %v6944 = vadd.f32 %v6411, %v6943
        %v6945 = vpop.f32.mrb[0].mxu0
        %v6946 = vadd.f32 %v6416, %v6945
        %v6947 = vpop.f32.mrb[0].mxu0
        %v6948 = vadd.f32 %v6416, %v6947
        %6949 = vmatprep.mubr.bf16.mxu0 %v6531
        %6950 = vmatmul.mubr.bf16.gmra.mrb[0].mxu0 %v6530
        %v6951 = vpop.f32.mrb[0].mxu0
        %v6952 = vadd.f32 %v6421, %v6951
        %v6953 = vpop.f32.mrb[0].mxu0
        %v6954 = vadd.f32 %v6421, %v6953
        %v6955 = vpop.f32.mrb[0].mxu0
        %v6956 = vadd.f32 %v6426, %v6955
        %v6957 = vpop.f32.mrb[0].mxu0
        %v6958 = vadd.f32 %v6426, %v6957
        %6959 = vmatprep.mubr.bf16.mxu0 %v6533
        %6960 = vmatmul.mubr.bf16.gmra.mrb[0].mxu0 %v6532
        %v6961 = vpop.f32.mrb[0].mxu0
        %v6962 = vadd.f32 %v6431, %v6961
        %v6963 = vpop.f32.mrb[0].mxu0
        %v6964 = vadd.f32 %v6431, %v6963
        %v6965 = vpop.f32.mrb[0].mxu0
        %v6966 = vadd.f32 %v6436, %v6965
        %v6967 = vpop.f32.mrb[0].mxu0
        %v6968 = vadd.f32 %v6436, %v6967
        %6969 = vmatprep.mubr.bf16.mxu0 %v6535
        %6970 = vmatmul.mubr.bf16.gmra.mrb[0].mxu0 %v6534
        %v6971 = vpop.f32.mrb[0].mxu0
        %v6972 = vadd.f32 %v6441, %v6971
        %v6973 = vpop.f32.mrb[0].mxu0
        %v6974 = vadd.f32 %v6441, %v6973
        %v6975 = vpop.f32.mrb[0].mxu0
        %v6976 = vadd.f32 %v6446, %v6975
        %v6977 = vpop.f32.mrb[0].mxu0
        %v6978 = vadd.f32 %v6446, %v6977
        %6979 = vmatprep.mubr.bf16.mxu0 %v6537
        %6980 = vmatmul.mubr.bf16.gmra.mrb[0].mxu0 %v6536
        %v6981 = vpop.f32.mrb[0].mxu0
        %v6982 = vadd.f32 %v6451, %v6981
        %v6983 = vpop.f32.mrb[0].mxu0
        %v6984 = vadd.f32 %v6451, %v6983
        %v6985 = vpop.f32.mrb[0].mxu0
        %v6986 = vadd.f32 %v6456, %v6985
        %v6987 = vpop.f32.mrb[0].mxu0
        %v6988 = vadd.f32 %v6456, %v6987
        %6989 = vmatprep.mubr.bf16.mxu0 %v6539
        %6990 = vmatmul.mubr.bf16.gmra.mrb[0].mxu0 %v6538
        %v6991 = vpop.f32.mrb[0].mxu0
        %v6992 = vadd.f32 %v6461, %v6991
        %v6993 = vpop.f32.mrb[0].mxu0
        %v6994 = vadd.f32 %v6461, %v6993
        %v6995 = vpop.f32.mrb[0].mxu0
        %v6996 = vadd.f32 %v6466, %v6995
        %v6997 = vpop.f32.mrb[0].mxu0
        %v6998 = vadd.f32 %v6466, %v6997
        %6999 = vmatprep.mubr.bf16.mxu0 %v6541
        %7000 = vmatmul.mubr.bf16.gmra.mrb[0].mxu0 %v6540
        %v7001 = vpop.f32.mrb[0].mxu0
        %v7002 = vadd.f32 %v6471, %v7001
        %v7003 = vpop.f32.mrb[0].mxu0
        %v7004 = vadd.f32 %v6471, %v7003
        %v7005 = vpop.f32.mrb[0].mxu0
        %v7006 = vadd.f32 %v6476, %v7005
        %v7007 = vpop.f32.mrb[0].mxu0
        %v7008 = vadd.f32 %v6476, %v7007
        %7009 = vdwg.mxu0
        %v7010 = vmax.f32 %v6593, 0.0
        %v7011 = vmax.f32 %v6595, 0.0
        %v7012 = vmax.f32 %v6706, 0.0
        %v7013 = vmax.f32 %v6708, 0.0
        %v7014 = vmax.f32 %v6819, 0.0
        %v7015 = vmax.f32 %v6821, 0.0
        %v7016 = vmax.f32 %v6932, 0.0
        %v7017 = vmax.f32 %v6934, 0.0
        %v7018 = vmax.f32 %v6597, 0.0
        %v7019 = vmax.f32 %v6599, 0.0
        %v7020 = vmax.f32 %v6710, 0.0
        %v7021 = vmax.f32 %v6712, 0.0
        %v7022 = vmax.f32 %v6823, 0.0
        %v7023 = vmax.f32 %v6825, 0.0
        %v7024 = vmax.f32 %v6936, 0.0
        %v7025 = vmax.f32 %v6938, 0.0
        %v7026 = vmax.f32 %v6603, 0.0
        %v7027 = vmax.f32 %v6605, 0.0
        %v7028 = vmax.f32 %v6716, 0.0
        %v7029 = vmax.f32 %v6718, 0.0
        %v7030 = vmax.f32 %v6829, 0.0
        %v7031 = vmax.f32 %v6831, 0.0
        %v7032 = vmax.f32 %v6942, 0.0
        %v7033 = vmax.f32 %v6944, 0.0
        %v7034 = vmax.f32 %v6607, 0.0
        %v7035 = vmax.f32 %v6609, 0.0
        %v7036 = vmax.f32 %v6720, 0.0
        %v7037 = vmax.f32 %v6722, 0.0
        %v7038 = vmax.f32 %v6833, 0.0
        %v7039 = vmax.f32 %v6835, 0.0
        %v7040 = vmax.f32 %v6946, 0.0
        %v7041 = vmax.f32 %v6948, 0.0
        %v7042 = vmax.f32 %v6613, 0.0
        %v7043 = vmax.f32 %v6615, 0.0
        %v7044 = vmax.f32 %v6726, 0.0
        %v7045 = vmax.f32 %v6728, 0.0
        %v7046 = vmax.f32 %v6839, 0.0
        %v7047 = vmax.f32 %v6841, 0.0
        %v7048 = vmax.f32 %v6952, 0.0
        %v7049 = vmax.f32 %v6954, 0.0
        %v7050 = vmax.f32 %v6617, 0.0
        %v7051 = vmax.f32 %v6619, 0.0
        %v7052 = vmax.f32 %v6730, 0.0
        %v7053 = vmax.f32 %v6732, 0.0
        %v7054 = vmax.f32 %v6843, 0.0
        %v7055 = vmax.f32 %v6845, 0.0
        %v7056 = vmax.f32 %v6956, 0.0
        %v7057 = vmax.f32 %v6958, 0.0
        %v7058 = vmax.f32 %v6623, 0.0
        %v7059 = vmax.f32 %v6625, 0.0
        %v7060 = vmax.f32 %v6736, 0.0
        %v7061 = vmax.f32 %v6738, 0.0
        %v7062 = vmax.f32 %v6849, 0.0
        %v7063 = vmax.f32 %v6851, 0.0
        %v7064 = vmax.f32 %v6962, 0.0
        %v7065 = vmax.f32 %v6964, 0.0
        %v7066 = vmax.f32 %v6627, 0.0
        %v7067 = vmax.f32 %v6629, 0.0
        %v7068 = vmax.f32 %v6740, 0.0
        %v7069 = vmax.f32 %v6742, 0.0
        %v7070 = vmax.f32 %v6853, 0.0
        %v7071 = vmax.f32 %v6855, 0.0
        %v7072 = vmax.f32 %v6966, 0.0
        %v7073 = vmax.f32 %v6968, 0.0
        %v7074 = vmax.f32 %v6633, 0.0
        %v7075 = vmax.f32 %v6635, 0.0
        %v7076 = vmax.f32 %v6746, 0.0
        %v7077 = vmax.f32 %v6748, 0.0
        %v7078 = vmax.f32 %v6859, 0.0
        %v7079 = vmax.f32 %v6861, 0.0
        %v7080 = vmax.f32 %v6972, 0.0
        %v7081 = vmax.f32 %v6974, 0.0
        %v7082 = vmax.f32 %v6637, 0.0
        %v7083 = vmax.f32 %v6639, 0.0
        %v7084 = vmax.f32 %v6750, 0.0
        %v7085 = vmax.f32 %v6752, 0.0
        %v7086 = vmax.f32 %v6863, 0.0
        %v7087 = vmax.f32 %v6865, 0.0
        %v7088 = vmax.f32 %v6976, 0.0
        %v7089 = vmax.f32 %v6978, 0.0
        %v7090 = vmax.f32 %v6643, 0.0
        %v7091 = vmax.f32 %v6645, 0.0
        %v7092 = vmax.f32 %v6756, 0.0
        %v7093 = vmax.f32 %v6758, 0.0
        %v7094 = vmax.f32 %v6869, 0.0
        %v7095 = vmax.f32 %v6871, 0.0
        %v7096 = vmax.f32 %v6982, 0.0
        %v7097 = vmax.f32 %v6984, 0.0
        %v7098 = vmax.f32 %v6647, 0.0
        %v7099 = vmax.f32 %v6649, 0.0
        %v7100 = vmax.f32 %v6760, 0.0
        %v7101 = vmax.f32 %v6762, 0.0
        %v7102 = vmax.f32 %v6873, 0.0
        %v7103 = vmax.f32 %v6875, 0.0
        %v7104 = vmax.f32 %v6986, 0.0
        %v7105 = vmax.f32 %v6988, 0.0
        %v7106 = vmax.f32 %v6653, 0.0
        %v7107 = vmax.f32 %v6655, 0.0
        %v7108 = vmax.f32 %v6766, 0.0
        %v7109 = vmax.f32 %v6768, 0.0
        %v7110 = vmax.f32 %v6879, 0.0
        %v7111 = vmax.f32 %v6881, 0.0
        %v7112 = vmax.f32 %v6992, 0.0
        %v7113 = vmax.f32 %v6994, 0.0
        %v7114 = vmax.f32 %v6657, 0.0
        %v7115 = vmax.f32 %v6659, 0.0
        %v7116 = vmax.f32 %v6770, 0.0
        %v7117 = vmax.f32 %v6772, 0.0
        %v7118 = vmax.f32 %v6883, 0.0
        %v7119 = vmax.f32 %v6885, 0.0
        %v7120 = vmax.f32 %v6996, 0.0
        %v7121 = vmax.f32 %v6998, 0.0
        %v7122 = vmax.f32 %v6663, 0.0
        %v7123 = vmax.f32 %v6665, 0.0
        %v7124 = vmax.f32 %v6776, 0.0
        %v7125 = vmax.f32 %v6778, 0.0
        %v7126 = vmax.f32 %v6889, 0.0
        %v7127 = vmax.f32 %v6891, 0.0
        %v7128 = vmax.f32 %v7002, 0.0
        %v7129 = vmax.f32 %v7004, 0.0
        %v7130 = vmax.f32 %v6667, 0.0
        %v7131 = vmax.f32 %v6669, 0.0
        %v7132 = vmax.f32 %v6780, 0.0
        %v7133 = vmax.f32 %v6782, 0.0
        %v7134 = vmax.f32 %v6893, 0.0
        %v7135 = vmax.f32 %v6895, 0.0
        %v7136 = vmax.f32 %v7006, 0.0
        %v7137 = vmax.f32 %v7008, 0.0
        %v7138 = vld [vmem:[%s7] sm:$0xff]
        %v7139 = vld [vmem:[%s7 + $0x8] sm:$0xff]
        %v7140 = vld [vmem:[%s7 + $0x10] sm:$0xff]
        %v7141 = vld [vmem:[%s7 + $0x18] sm:$0xff]
        %v7142 = vld [vmem:[%s7 + $0x20] sm:$0xff]
        %v7143 = vld [vmem:[%s7 + $0x28] sm:$0xff]
        %v7144 = vld [vmem:[%s7 + $0x30] sm:$0xff]
        %v7145 = vld [vmem:[%s7 + $0x38] sm:$0xff]
        %v7146 = vld [vmem:[%s7 + $0x40] sm:$0xff]
        %v7147 = vld [vmem:[%s7 + $0x48] sm:$0xff]
        %v7148 = vld [vmem:[%s7 + $0x50] sm:$0xff]
        %v7149 = vld [vmem:[%s7 + $0x58] sm:$0xff]
        %v7150 = vld [vmem:[%s7 + $0x60] sm:$0xff]
        %v7151 = vld [vmem:[%s7 + $0x68] sm:$0xff]
        %v7152 = vld [vmem:[%s7 + $0x70] sm:$0xff]
        %v7153 = vld [vmem:[%s7 + $0x78] sm:$0xff]
        %7155 = vset.pattern.permute.xlu0 0
        %7156 = vperm.xlu0 %7155, %v7138
        %v7157 = vpop.permute.xlu0 %7156
        %7160 = vset.pattern.permute.xlu0 0
        %7161 = vperm.xlu0 %7160, %v7139
        %v7162 = vpop.permute.xlu0 %7161
        %7165 = vset.pattern.permute.xlu0 0
        %7166 = vperm.xlu0 %7165, %v7140
        %v7167 = vpop.permute.xlu0 %7166
        %7170 = vset.pattern.permute.xlu0 0
        %7171 = vperm.xlu0 %7170, %v7141
        %v7172 = vpop.permute.xlu0 %7171
        %7175 = vset.pattern.permute.xlu0 0
        %7176 = vperm.xlu0 %7175, %v7142
        %v7177 = vpop.permute.xlu0 %7176
        %7180 = vset.pattern.permute.xlu0 0
        %7181 = vperm.xlu0 %7180, %v7143
        %v7182 = vpop.permute.xlu0 %7181
        %7185 = vset.pattern.permute.xlu0 0
        %7186 = vperm.xlu0 %7185, %v7144
        %v7187 = vpop.permute.xlu0 %7186
        %7190 = vset.pattern.permute.xlu0 0
        %7191 = vperm.xlu0 %7190, %v7145
        %v7192 = vpop.permute.xlu0 %7191
        %7195 = vset.pattern.permute.xlu0 0
        %7196 = vperm.xlu0 %7195, %v7146
        %v7197 = vpop.permute.xlu0 %7196
        %7200 = vset.pattern.permute.xlu0 0
        %7201 = vperm.xlu0 %7200, %v7147
        %v7202 = vpop.permute.xlu0 %7201
        %7205 = vset.pattern.permute.xlu0 0
        %7206 = vperm.xlu0 %7205, %v7148
        %v7207 = vpop.permute.xlu0 %7206
        %7210 = vset.pattern.permute.xlu0 0
        %7211 = vperm.xlu0 %7210, %v7149
        %v7212 = vpop.permute.xlu0 %7211
        %7215 = vset.pattern.permute.xlu0 0
        %7216 = vperm.xlu0 %7215, %v7150
        %v7217 = vpop.permute.xlu0 %7216
        %7220 = vset.pattern.permute.xlu0 0
        %7221 = vperm.xlu0 %7220, %v7151
        %v7222 = vpop.permute.xlu0 %7221
        %7225 = vset.pattern.permute.xlu0 0
        %7226 = vperm.xlu0 %7225, %v7152
        %v7227 = vpop.permute.xlu0 %7226
        %7230 = vset.pattern.permute.xlu0 0
        %7231 = vperm.xlu0 %7230, %v7153
        %v7232 = vpop.permute.xlu0 %7231
        %v7234 = vmul.f32 %v7010, %v7157
        %v7235 = vmul.f32 %v7011, %v7157
        %v7236 = vmul.f32 %v7012, %v7157
        %v7237 = vmul.f32 %v7013, %v7157
        %v7238 = vmul.f32 %v7014, %v7157
        %v7239 = vmul.f32 %v7015, %v7157
        %v7240 = vmul.f32 %v7016, %v7157
        %v7241 = vmul.f32 %v7017, %v7157
        %v7242 = vmul.f32 %v7018, %v7162
        %v7243 = vmul.f32 %v7019, %v7162
        %v7244 = vmul.f32 %v7020, %v7162
        %v7245 = vmul.f32 %v7021, %v7162
        %v7246 = vmul.f32 %v7022, %v7162
        %v7247 = vmul.f32 %v7023, %v7162
        %v7248 = vmul.f32 %v7024, %v7162
        %v7249 = vmul.f32 %v7025, %v7162
        %v7250 = vmul.f32 %v7026, %v7167
        %v7251 = vmul.f32 %v7027, %v7167
        %v7252 = vmul.f32 %v7028, %v7167
        %v7253 = vmul.f32 %v7029, %v7167
        %v7254 = vmul.f32 %v7030, %v7167
        %v7255 = vmul.f32 %v7031, %v7167
        %v7256 = vmul.f32 %v7032, %v7167
        %v7257 = vmul.f32 %v7033, %v7167
        %v7258 = vmul.f32 %v7034, %v7172
        %v7259 = vmul.f32 %v7035, %v7172
        %v7260 = vmul.f32 %v7036, %v7172
        %v7261 = vmul.f32 %v7037, %v7172
        %v7262 = vmul.f32 %v7038, %v7172
        %v7263 = vmul.f32 %v7039, %v7172
        %v7264 = vmul.f32 %v7040, %v7172
        %v7265 = vmul.f32 %v7041, %v7172
        %v7266 = vmul.f32 %v7042, %v7177
        %v7267 = vmul.f32 %v7043, %v7177
        %v7268 = vmul.f32 %v7044, %v7177
        %v7269 = vmul.f32 %v7045, %v7177
        %v7270 = vmul.f32 %v7046, %v7177
        %v7271 = vmul.f32 %v7047, %v7177
        %v7272 = vmul.f32 %v7048, %v7177
        %v7273 = vmul.f32 %v7049, %v7177
        %v7274 = vmul.f32 %v7050, %v7182
        %v7275 = vmul.f32 %v7051, %v7182
        %v7276 = vmul.f32 %v7052, %v7182
        %v7277 = vmul.f32 %v7053, %v7182
        %v7278 = vmul.f32 %v7054, %v7182
        %v7279 = vmul.f32 %v7055, %v7182
        %v7280 = vmul.f32 %v7056, %v7182
        %v7281 = vmul.f32 %v7057, %v7182
        %v7282 = vmul.f32 %v7058, %v7187
        %v7283 = vmul.f32 %v7059, %v7187
        %v7284 = vmul.f32 %v7060, %v7187
        %v7285 = vmul.f32 %v7061, %v7187
        %v7286 = vmul.f32 %v7062, %v7187
        %v7287 = vmul.f32 %v7063, %v7187
        %v7288 = vmul.f32 %v7064, %v7187
        %v7289 = vmul.f32 %v7065, %v7187
        %v7290 = vmul.f32 %v7066, %v7192
        %v7291 = vmul.f32 %v7067, %v7192
        %v7292 = vmul.f32 %v7068, %v7192
        %v7293 = vmul.f32 %v7069, %v7192
        %v7294 = vmul.f32 %v7070, %v7192
        %v7295 = vmul.f32 %v7071, %v7192
        %v7296 = vmul.f32 %v7072, %v7192
        %v7297 = vmul.f32 %v7073, %v7192
        %v7298 = vmul.f32 %v7074, %v7197
        %v7299 = vmul.f32 %v7075, %v7197
        %v7300 = vmul.f32 %v7076, %v7197
        %v7301 = vmul.f32 %v7077, %v7197
        %v7302 = vmul.f32 %v7078, %v7197
        %v7303 = vmul.f32 %v7079, %v7197
        %v7304 = vmul.f32 %v7080, %v7197
        %v7305 = vmul.f32 %v7081, %v7197
        %v7306 = vmul.f32 %v7082, %v7202
        %v7307 = vmul.f32 %v7083, %v7202
        %v7308 = vmul.f32 %v7084, %v7202
        %v7309 = vmul.f32 %v7085, %v7202
        %v7310 = vmul.f32 %v7086, %v7202
        %v7311 = vmul.f32 %v7087, %v7202
        %v7312 = vmul.f32 %v7088, %v7202
        %v7313 = vmul.f32 %v7089, %v7202
        %v7314 = vmul.f32 %v7090, %v7207
        %v7315 = vmul.f32 %v7091, %v7207
        %v7316 = vmul.f32 %v7092, %v7207
        %v7317 = vmul.f32 %v7093, %v7207
        %v7318 = vmul.f32 %v7094, %v7207
        %v7319 = vmul.f32 %v7095, %v7207
        %v7320 = vmul.f32 %v7096, %v7207
        %v7321 = vmul.f32 %v7097, %v7207
        %v7322 = vmul.f32 %v7098, %v7212
        %v7323 = vmul.f32 %v7099, %v7212
        %v7324 = vmul.f32 %v7100, %v7212
        %v7325 = vmul.f32 %v7101, %v7212
        %v7326 = vmul.f32 %v7102, %v7212
        %v7327 = vmul.f32 %v7103, %v7212
        %v7328 = vmul.f32 %v7104, %v7212
        %v7329 = vmul.f32 %v7105, %v7212
        %v7330 = vmul.f32 %v7106, %v7217
        %v7331 = vmul.f32 %v7107, %v7217
        %v7332 = vmul.f32 %v7108, %v7217
        %v7333 = vmul.f32 %v7109, %v7217
        %v7334 = vmul.f32 %v7110, %v7217
        %v7335 = vmul.f32 %v7111, %v7217
        %v7336 = vmul.f32 %v7112, %v7217
        %v7337 = vmul.f32 %v7113, %v7217
        %v7338 = vmul.f32 %v7114, %v7222
        %v7339 = vmul.f32 %v7115, %v7222
        %v7340 = vmul.f32 %v7116, %v7222
        %v7341 = vmul.f32 %v7117, %v7222
        %v7342 = vmul.f32 %v7118, %v7222
        %v7343 = vmul.f32 %v7119, %v7222
        %v7344 = vmul.f32 %v7120, %v7222
        %v7345 = vmul.f32 %v7121, %v7222
        %v7346 = vmul.f32 %v7122, %v7227
        %v7347 = vmul.f32 %v7123, %v7227
        %v7348 = vmul.f32 %v7124, %v7227
        %v7349 = vmul.f32 %v7125, %v7227
        %v7350 = vmul.f32 %v7126, %v7227
        %v7351 = vmul.f32 %v7127, %v7227
        %v7352 = vmul.f32 %v7128, %v7227
        %v7353 = vmul.f32 %v7129, %v7227
        %v7354 = vmul.f32 %v7130, %v7232
        %v7355 = vmul.f32 %v7131, %v7232
        %v7356 = vmul.f32 %v7132, %v7232
        %v7357 = vmul.f32 %v7133, %v7232
        %v7358 = vmul.f32 %v7134, %v7232
        %v7359 = vmul.f32 %v7135, %v7232
        %v7360 = vmul.f32 %v7136, %v7232
        %v7361 = vmul.f32 %v7137, %v7232
        %v7362 = vadd.f32 %v7234, %v7242
        %v7363 = vadd.f32 %v7362, %v7250
        %v7364 = vadd.f32 %v7363, %v7258
        %v7365 = vadd.f32 %v7364, %v7266
        %v7366 = vadd.f32 %v7365, %v7274
        %v7367 = vadd.f32 %v7366, %v7282
        %v7368 = vadd.f32 %v7367, %v7290
        %v7369 = vadd.f32 %v7368, %v7298
        %v7370 = vadd.f32 %v7369, %v7306
        %v7371 = vadd.f32 %v7370, %v7314
        %v7372 = vadd.f32 %v7371, %v7322
        %v7373 = vadd.f32 %v7372, %v7330
        %v7374 = vadd.f32 %v7373, %v7338
        %v7375 = vadd.f32 %v7374, %v7346
        %v7376 = vadd.f32 %v7375, %v7354
        %v7377 = vrot.slane %v7376, 4
        %v7378 = vadd.f32 %v7376, %v7377
        %v7379 = vrot.slane %v7378, 2
        %v7380 = vadd.f32 %v7378, %v7379
        %v7381 = vrot.slane %v7380, 1
        %v7382 = vadd.f32 %v7380, %v7381
        %v7383 = vadd.f32 %v7235, %v7243
        %v7384 = vadd.f32 %v7383, %v7251
        %v7385 = vadd.f32 %v7384, %v7259
        %v7386 = vadd.f32 %v7385, %v7267
        %v7387 = vadd.f32 %v7386, %v7275
        %v7388 = vadd.f32 %v7387, %v7283
        %v7389 = vadd.f32 %v7388, %v7291
        %v7390 = vadd.f32 %v7389, %v7299
        %v7391 = vadd.f32 %v7390, %v7307
        %v7392 = vadd.f32 %v7391, %v7315
        %v7393 = vadd.f32 %v7392, %v7323
        %v7394 = vadd.f32 %v7393, %v7331
        %v7395 = vadd.f32 %v7394, %v7339
        %v7396 = vadd.f32 %v7395, %v7347
        %v7397 = vadd.f32 %v7396, %v7355
        %v7398 = vrot.slane %v7397, 4
        %v7399 = vadd.f32 %v7397, %v7398
        %v7400 = vrot.slane %v7399, 2
        %v7401 = vadd.f32 %v7399, %v7400
        %v7402 = vrot.slane %v7401, 1
        %v7403 = vadd.f32 %v7401, %v7402
        %v7404 = vadd.f32 %v7236, %v7244
        %v7405 = vadd.f32 %v7404, %v7252
        %v7406 = vadd.f32 %v7405, %v7260
        %v7407 = vadd.f32 %v7406, %v7268
        %v7408 = vadd.f32 %v7407, %v7276
        %v7409 = vadd.f32 %v7408, %v7284
        %v7410 = vadd.f32 %v7409, %v7292
        %v7411 = vadd.f32 %v7410, %v7300
        %v7412 = vadd.f32 %v7411, %v7308
        %v7413 = vadd.f32 %v7412, %v7316
        %v7414 = vadd.f32 %v7413, %v7324
        %v7415 = vadd.f32 %v7414, %v7332
        %v7416 = vadd.f32 %v7415, %v7340
        %v7417 = vadd.f32 %v7416, %v7348
        %v7418 = vadd.f32 %v7417, %v7356
        %v7419 = vrot.slane %v7418, 4
        %v7420 = vadd.f32 %v7418, %v7419
        %v7421 = vrot.slane %v7420, 2
        %v7422 = vadd.f32 %v7420, %v7421
        %v7423 = vrot.slane %v7422, 1
        %v7424 = vadd.f32 %v7422, %v7423
        %v7425 = vadd.f32 %v7237, %v7245
        %v7426 = vadd.f32 %v7425, %v7253
        %v7427 = vadd.f32 %v7426, %v7261
        %v7428 = vadd.f32 %v7427, %v7269
        %v7429 = vadd.f32 %v7428, %v7277
        %v7430 = vadd.f32 %v7429, %v7285
        %v7431 = vadd.f32 %v7430, %v7293
        %v7432 = vadd.f32 %v7431, %v7301
        %v7433 = vadd.f32 %v7432, %v7309
        %v7434 = vadd.f32 %v7433, %v7317
        %v7435 = vadd.f32 %v7434, %v7325
        %v7436 = vadd.f32 %v7435, %v7333
        %v7437 = vadd.f32 %v7436, %v7341
        %v7438 = vadd.f32 %v7437, %v7349
        %v7439 = vadd.f32 %v7438, %v7357
        %v7440 = vrot.slane %v7439, 4
        %v7441 = vadd.f32 %v7439, %v7440
        %v7442 = vrot.slane %v7441, 2
        %v7443 = vadd.f32 %v7441, %v7442
        %v7444 = vrot.slane %v7443, 1
        %v7445 = vadd.f32 %v7443, %v7444
        %v7446 = vadd.f32 %v7238, %v7246
        %v7447 = vadd.f32 %v7446, %v7254
        %v7448 = vadd.f32 %v7447, %v7262
        %v7449 = vadd.f32 %v7448, %v7270
        %v7450 = vadd.f32 %v7449, %v7278
        %v7451 = vadd.f32 %v7450, %v7286
        %v7452 = vadd.f32 %v7451, %v7294
        %v7453 = vadd.f32 %v7452, %v7302
        %v7454 = vadd.f32 %v7453, %v7310
        %v7455 = vadd.f32 %v7454, %v7318
        %v7456 = vadd.f32 %v7455, %v7326
        %v7457 = vadd.f32 %v7456, %v7334
        %v7458 = vadd.f32 %v7457, %v7342
        %v7459 = vadd.f32 %v7458, %v7350
        %v7460 = vadd.f32 %v7459, %v7358
        %v7461 = vrot.slane %v7460, 4
        %v7462 = vadd.f32 %v7460, %v7461
        %v7463 = vrot.slane %v7462, 2
        %v7464 = vadd.f32 %v7462, %v7463
        %v7465 = vrot.slane %v7464, 1
        %v7466 = vadd.f32 %v7464, %v7465
        %v7467 = vadd.f32 %v7239, %v7247
        %v7468 = vadd.f32 %v7467, %v7255
        %v7469 = vadd.f32 %v7468, %v7263
        %v7470 = vadd.f32 %v7469, %v7271
        %v7471 = vadd.f32 %v7470, %v7279
        %v7472 = vadd.f32 %v7471, %v7287
        %v7473 = vadd.f32 %v7472, %v7295
        %v7474 = vadd.f32 %v7473, %v7303
        %v7475 = vadd.f32 %v7474, %v7311
        %v7476 = vadd.f32 %v7475, %v7319
        %v7477 = vadd.f32 %v7476, %v7327
        %v7478 = vadd.f32 %v7477, %v7335
        %v7479 = vadd.f32 %v7478, %v7343
        %v7480 = vadd.f32 %v7479, %v7351
        %v7481 = vadd.f32 %v7480, %v7359
        %v7482 = vrot.slane %v7481, 4
        %v7483 = vadd.f32 %v7481, %v7482
        %v7484 = vrot.slane %v7483, 2
        %v7485 = vadd.f32 %v7483, %v7484
        %v7486 = vrot.slane %v7485, 1
        %v7487 = vadd.f32 %v7485, %v7486
        %v7488 = vadd.f32 %v7240, %v7248
        %v7489 = vadd.f32 %v7488, %v7256
        %v7490 = vadd.f32 %v7489, %v7264
        %v7491 = vadd.f32 %v7490, %v7272
        %v7492 = vadd.f32 %v7491, %v7280
        %v7493 = vadd.f32 %v7492, %v7288
        %v7494 = vadd.f32 %v7493, %v7296
        %v7495 = vadd.f32 %v7494, %v7304
        %v7496 = vadd.f32 %v7495, %v7312
        %v7497 = vadd.f32 %v7496, %v7320
        %v7498 = vadd.f32 %v7497, %v7328
        %v7499 = vadd.f32 %v7498, %v7336
        %v7500 = vadd.f32 %v7499, %v7344
        %v7501 = vadd.f32 %v7500, %v7352
        %v7502 = vadd.f32 %v7501, %v7360
        %v7503 = vrot.slane %v7502, 4
        %v7504 = vadd.f32 %v7502, %v7503
        %v7505 = vrot.slane %v7504, 2
        %v7506 = vadd.f32 %v7504, %v7505
        %v7507 = vrot.slane %v7506, 1
        %v7508 = vadd.f32 %v7506, %v7507
        %v7509 = vadd.f32 %v7241, %v7249
        %v7510 = vadd.f32 %v7509, %v7257
        %v7511 = vadd.f32 %v7510, %v7265
        %v7512 = vadd.f32 %v7511, %v7273
        %v7513 = vadd.f32 %v7512, %v7281
        %v7514 = vadd.f32 %v7513, %v7289
        %v7515 = vadd.f32 %v7514, %v7297
        %v7516 = vadd.f32 %v7515, %v7305
        %v7517 = vadd.f32 %v7516, %v7313
        %v7518 = vadd.f32 %v7517, %v7321
        %v7519 = vadd.f32 %v7518, %v7329
        %v7520 = vadd.f32 %v7519, %v7337
        %v7521 = vadd.f32 %v7520, %v7345
        %v7522 = vadd.f32 %v7521, %v7353
        %v7523 = vadd.f32 %v7522, %v7361
        %v7524 = vrot.slane %v7523, 4
        %v7525 = vadd.f32 %v7523, %v7524
        %v7526 = vrot.slane %v7525, 2
        %v7527 = vadd.f32 %v7525, %v7526
        %v7528 = vrot.slane %v7527, 1
        %v7529 = vadd.f32 %v7527, %v7528
        %v7530 = vld [vmem:[#allocation2] sm:$0x1]
        %7532 = vset.pattern.permute.xlu0 0
        %7533 = vperm.xlu0 %7532, %v7530
        %v7534 = vpop.permute.xlu0 %7533
        %v7536 = vlaneseq
        %v7537 = vshrl.u32 %v7536, 7
        %v7538 = vsub.s32 0, %v7537
        %v7539 = vrot.slane %v7534, %v7538
        %v7540 = vadd.f32 %v7382, %v7539
        %v7541 = vadd.f32 %v7403, %v7539
        %v7542 = vadd.f32 %v7424, %v7539
        %v7543 = vadd.f32 %v7445, %v7539
        %v7544 = vadd.f32 %v7466, %v7539
        %v7545 = vadd.f32 %v7487, %v7539
        %v7546 = vadd.f32 %v7508, %v7539
        %v7547 = vadd.f32 %v7529, %v7539
        %v7556 = vcombine.low %v7540, %v7541
        %v7557 = vcombine.low %v7542, %v7543
        %v7558 = vcombine.low %v7544, %v7545
        %v7559 = vcombine.low %v7546, %v7547
        %v7561 = vunpack.c.l.s4 1966171168
        %v7562 = vunpack.c.0.s8 %v7561
        %v7563 = vlaneseq
        %v7564 = vshrl.u32 %v7563, 7
        %v7565 = vsub.s32 %v7562, %v7564
        %v7566 = vrot.slane %v7556, %v7565
        %v7568 = vunpack.c.l.s4 1966171168
        %v7569 = vunpack.c.0.s8 %v7568
        %v7570 = vlaneseq
        %v7571 = vshrl.u32 %v7570, 7
        %v7572 = vsub.s32 %v7569, %v7571
        %v7573 = vrot.slane %v7557, %v7572
        %v7575 = vunpack.c.l.s4 1966171168
        %v7576 = vunpack.c.0.s8 %v7575
        %v7577 = vlaneseq
        %v7578 = vshrl.u32 %v7577, 7
        %v7579 = vsub.s32 %v7576, %v7578
        %v7580 = vrot.slane %v7558, %v7579
        %v7582 = vunpack.c.l.s4 1966171168
        %v7583 = vunpack.c.0.s8 %v7582
        %v7584 = vlaneseq
        %v7585 = vshrl.u32 %v7584, 7
        %v7586 = vsub.s32 %v7583, %v7585
        %v7587 = vrot.slane %v7559, %v7586
        %v7588 = vcombine.low %v7566, %v7573
        %v7589 = vcombine.low %v7580, %v7587
        %v7591 = vunpack.c.l.s4 1966171168
        %v7592 = vunpack.c.0.s8 %v7591
        %v7593 = vlaneseq
        %v7594 = vshrl.u32 %v7593, 7
        %v7595 = vsub.s32 %v7592, %v7594
        %v7596 = vrot.slane %v7588, %v7595
        %v7598 = vunpack.c.l.s4 1966171168
        %v7599 = vunpack.c.0.s8 %v7598
        %v7600 = vlaneseq
        %v7601 = vshrl.u32 %v7600, 7
        %v7602 = vsub.s32 %v7599, %v7601
        %v7603 = vrot.slane %v7589, %v7602
        %v7604 = vcombine.low %v7596, %v7603
        %7606 = vst [vmem:[%s328] sm:$0xff] %v7604
        %s7607 = sand.u32 %s227, 1
        %s7608 = scalar_lea.sflag [#allocation4], %s7607
        %s7609 = sand.u32 %s227, 1
        %s7610 = smul.addr %s7609, 8
        %s7611 = scalar_lea.vmem [#allocation3], %s7610
        // Predicated region
        $region57: #{tpu_custom_call.1} parent=55 // pred_check
          %p7612 = pneg %p237
        $region58: #{tpu_custom_call.1} parent=55 // pred_check_branch
          %7614 = sbr.rel (%p7612) target = $region60
        $region59: #{tpu_custom_call.1} parent=55 // pred_region
          %s7615 = smul.u32 8, %s25
          %s7617 = ssub.s32 128, 128
          %7618 = vsyncadd %s7608, %s7617
          %s7619 = smul.addr %s7615, 16
          %s7620 = scalar_lea.hbm %s9, %s7619
          %s7622 = sshll.u32 %s7611, 4
          %s7623 = int_to_ptr.vmem [resolvable:$true] %s7622
          %7625 = dma.vmem_to_hbm [thread:$0]  %s7623, 128, %s7620, %s7608
        $region60: #{tpu_custom_call.1} parent=55 // pred_fallthru
          _
      $region56: #{tpu_custom_call.1} parent=5 // pred_fallthru
        _
      %p7626 = scmp.le.s32.totalorder 2, %s20
      // Predicated region
      $region61: #{tpu_custom_call.1} parent=5 // pred_check
        %p7627 = pneg %p7626
      $region62: #{tpu_custom_call.1} parent=5 // pred_check_branch
        %7629 = sbr.rel (%p7627) target = $region64
      $region63: #{tpu_custom_call.1} parent=5 // pred_region
        %s7630 = ssub.s32 %s20, 2
        // Predicated region
        $region65: #{tpu_custom_call.1} parent=63 // pred_check
          %p7631 = pneg %p243
        $region66: #{tpu_custom_call.1} parent=63 // pred_check_branch
          %7633 = sbr.rel (%p7631) target = $region68
        $region67: #{tpu_custom_call.1} parent=63 // pred_region
          %s7634 = sand.u32 %s228, 1
          %s7635 = scalar_lea.sflag [#allocation4], %s7634
          %s7636 = sand.u32 %s228, 1
          %s7637 = smul.addr %s7636, 8
          %s7638 = scalar_lea.vmem [#allocation3], %s7637
          %7639 = dma.done %s7635, 128
        $region68: #{tpu_custom_call.1} parent=63 // pred_fallthru
          _
      $region64: #{tpu_custom_call.1} parent=5 // pred_fallthru
        _
    $region6: #{tpu_custom_call.1} parent=1 // loop_footer
      %s24 = sadd.s32 1, %s20
    $region7: #{tpu_custom_call.1} parent=1 // loop_footer_branch
      %19 = sbr.rel target = $region3
    $region8: #{tpu_custom_call.1} parent=1 // loop_exit
      _
    %7640 = vsyncpa [#allocation4], 1
    %s7641 = scalar_lea.sflag [#allocation4], 1
    %7642 = vsyncpa %s7641, 1

</llo_original>
